<compile_context>
chip_gen: v5e
topology: v5e:2x2
jax: 0.10.0
libtpu: 0.0.40
codegen_flags: <defaults>
</compile_context>

<pallas_src>
import jax
import jax.numpy as jnp
from jax.experimental import pallas as pl
from jax.experimental.pallas import tpu as pltpu

BN_EPS = 1e-5
LANE = 128


def _bn_train(x, gamma, beta):
    """Training-mode BN over rows of (M, C): single-pass stats, all f32."""
    m = x.shape[0]
    s1 = jnp.sum(x, axis=0, keepdims=True)
    s2 = jnp.sum(x * x, axis=0, keepdims=True)
    mean = s1 * (1.0 / m)
    var = s2 * (1.0 / m) - mean * mean          # biased variance (PyTorch norm)
    inv = jax.lax.rsqrt(var + BN_EPS)           # rsqrt -> EUP slot
    return (x - mean) * (inv * gamma) + beta


def make_basic_block_kernel(projection, n, ho, wo, cp):
    m = n * ho * wo

    def kernel(*refs):
        if projection:
            (p1_ref, sc_ref, w1_ref, g1_ref, b1_ref,
             w2_ref, g2_ref, b2_ref, wsc_ref, gsc_ref, bsc_ref,
             out_ref, pad_scr, tap_scr) = refs
        else:
            (p1_ref, sc_ref, w1_ref, g1_ref, b1_ref,
             w2_ref, g2_ref, b2_ref,
             out_ref, pad_scr, tap_scr) = refs

        # ---- conv1: one stacked-tap matmul (M, 9*Cin) x (9*Cin, CP) -------
        out1 = jnp.dot(p1_ref[...], w1_ref[...],
                       preferred_element_type=jnp.float32)
        out1 = jnp.maximum(_bn_train(out1, g1_ref[...], b1_ref[...]), 0.0)

        # ---- padded activation for conv2: zero only the 1-pixel halo ------
        zrow = jnp.zeros((n, 1, wo + 2, cp), jnp.float32)
        zcol = jnp.zeros((n, ho + 2, 1, cp), jnp.float32)
        pad_scr[:, 0:1, :, :] = zrow
        pad_scr[:, ho + 1:ho + 2, :, :] = zrow
        pad_scr[:, :, 0:1, :] = zcol
        pad_scr[:, :, wo + 1:wo + 2, :] = zcol
        pad_scr[:, 1:ho + 1, 1:wo + 1, :] = out1.reshape(n, ho, wo, cp)

        # ---- stack the 9 conv2 taps along the contraction axis ------------
        # (lane-aligned bf16 writes; every element of tap_scr is written once)
        for t in range(9):
            di, dj = t // 3, t % 3
            tap_scr[:, :, :, t * cp:(t + 1) * cp] = (
                pad_scr[:, di:di + ho, dj:dj + wo, :].astype(jnp.bfloat16))

        # ---- conv2: one matmul (M, 9*CP) x (9*CP, CP) -> BN2 ---------------
        out2 = jnp.dot(tap_scr[...].reshape(m, 9 * cp), w2_ref[...],
                       preferred_element_type=jnp.float32)
        out2 = _bn_train(out2, g2_ref[...], b2_ref[...])

        # ---- shortcut ------------------------------------------------------
        if projection:
            sc = jnp.dot(sc_ref[...], wsc_ref[...],
                         preferred_element_type=jnp.float32)
            sc = _bn_train(sc, gsc_ref[...], bsc_ref[...])
        else:
            sc = sc_ref[...]

        out_ref[...] = jnp.maximum(out2 + sc, 0.0)

    return kernel


def _im2col_3x3(x_nhwc, stride):
    """Stacked-tap operand for a 3x3/pad=1 conv; wrapper-side layout glue."""
    n, h, w, c = x_nhwc.shape
    ho = (h - 1) // stride + 1
    wo = (w - 1) // stride + 1
    xp = jnp.pad(x_nhwc, ((0, 0), (1, 1), (1, 1), (0, 0)))
    taps = []
    for di in range(3):
        for dj in range(3):
            taps.append(xp[:, di:di + (ho - 1) * stride + 1:stride,
                              dj:dj + (wo - 1) * stride + 1:stride, :])
    patches = jnp.concatenate(taps, axis=-1)          # (n, ho, wo, 9c)
    return patches.reshape(n * ho * wo, 9 * c), ho, wo


def _pad_lanes(a, cp):
    return jnp.pad(a, [(0, 0)] * (a.ndim - 1) + [(0, cp - a.shape[-1])])


def basic_block_forward(x_nchw, params, stride=1):
    """x_nchw: (N, Cin, H, W) float32; params hold PyTorch-layout weights."""
    w1 = params["w1"]                    # (Cout, Cin, 3, 3)
    w2 = params["w2"]                    # (Cout, Cout, 3, 3)
    cout, cin = w1.shape[0], w1.shape[1]
    projection = (stride != 1) or (cin != cout)
    cp = -(-cout // LANE) * LANE         # channels padded to lane multiple

    n = x_nchw.shape[0]
    x_nhwc = jnp.transpose(x_nchw, (0, 2, 3, 1)).astype(jnp.float32)

    p1, ho, wo = _im2col_3x3(x_nhwc, stride)
    m = n * ho * wo
    p1 = p1.astype(jnp.bfloat16)

    # Weights as (K, CP) matrices, output channels zero-padded to cp lanes.
    w1m = _pad_lanes(jnp.transpose(w1, (2, 3, 1, 0)).reshape(9 * cin, cout),
                     cp).astype(jnp.bfloat16)
    w2t = jnp.transpose(w2, (2, 3, 1, 0))                       # (3,3,Cout,Cout)
    w2t = jnp.pad(w2t, ((0, 0), (0, 0), (0, cp - cout), (0, cp - cout)))
    w2m = w2t.reshape(9 * cp, cp).astype(jnp.bfloat16)

    def bn_params(g, b):
        return (_pad_lanes(g.reshape(1, cout), cp).astype(jnp.float32),
                _pad_lanes(b.reshape(1, cout), cp).astype(jnp.float32))

    g1, b1 = bn_params(params["g1"], params["b1"])
    g2, b2 = bn_params(params["g2"], params["b2"])

    if projection:
        xsc = x_nhwc[:, ::stride, ::stride, :].reshape(m, cin)
        xsc = xsc.astype(jnp.bfloat16)
        wscm = _pad_lanes(params["wsc"][:, :, 0, 0].T, cp).astype(jnp.bfloat16)
        gsc, bsc = bn_params(params["gsc"], params["bsc"])
        inputs = [p1, xsc, w1m, g1, b1, w2m, g2, b2, wscm, gsc, bsc]
    else:
        xsc = _pad_lanes(x_nhwc.reshape(m, cout), cp).astype(jnp.float32)
        inputs = [p1, xsc, w1m, g1, b1, w2m, g2, b2]

    out_mat = pl.pallas_call(
        make_basic_block_kernel(projection, n, ho, wo, cp),
        out_shape=jax.ShapeDtypeStruct((m, cp), jnp.float32),
        in_specs=[pl.BlockSpec(memory_space=pltpu.MemorySpace.VMEM)
                  for _ in inputs],
        out_specs=pl.BlockSpec(memory_space=pltpu.MemorySpace.VMEM),
        scratch_shapes=[
            pltpu.VMEM((n, ho + 2, wo + 2, cp), jnp.float32),    # padded act
            pltpu.VMEM((n, ho, wo, 9 * cp), jnp.bfloat16),       # stacked taps
        ],
        compiler_params=pltpu.CompilerParams(
            vmem_limit_bytes=32 * 1024 * 1024),
    )(*inputs)

    out_nhwc = out_mat.reshape(n, ho, wo, cp)[..., :cout]
    return jnp.transpose(out_nhwc, (0, 3, 1, 2))                 # back to NCHW


def basic_block_reference(x, params, stride=1):
    """Plain-JAX NCHW reference mirroring the PyTorch forward (train-mode BN)."""
    def conv(x, w, s, pad):
        return jax.lax.conv_general_dilated(
            x, w, (s, s), [(pad, pad), (pad, pad)],
            dimension_numbers=("NCHW", "OIHW", "NCHW"),
            precision=jax.lax.Precision.HIGHEST)

    def bn(x, g, b):
        mean = x.mean(axis=(0, 2, 3), keepdims=True)
        var = ((x - mean) ** 2).mean(axis=(0, 2, 3), keepdims=True)
        return ((x - mean) * jax.lax.rsqrt(var + BN_EPS)
                * g.reshape(1, -1, 1, 1) + b.reshape(1, -1, 1, 1))

    out = jax.nn.relu(bn(conv(x, params["w1"], stride, 1),
                         params["g1"], params["b1"]))
    out = bn(conv(out, params["w2"], 1, 1), params["g2"], params["b2"])
    cin, cout = params["w1"].shape[1], params["w1"].shape[0]
    if stride != 1 or cin != cout:
        sc = bn(conv(x, params["wsc"], stride, 0), params["gsc"], params["bsc"])
    else:
        sc = x
    return jax.nn.relu(out + sc)


def _make_params(key, cin, cout, projection):
    k_w1, k_w2, k_wsc = jax.random.split(key, 3)
    p = {
        "w1": 0.1 * jax.random.normal(k_w1, (cout, cin, 3, 3), jnp.float32),
        "g1": jnp.ones((cout,), jnp.float32),
        "b1": jnp.zeros((cout,), jnp.float32),
        "w2": 0.1 * jax.random.normal(k_w2, (cout, cout, 3, 3), jnp.float32),
        "g2": jnp.ones((cout,), jnp.float32),
        "b2": jnp.zeros((cout,), jnp.float32),
    }
    if projection:
        p["wsc"] = 0.1 * jax.random.normal(k_wsc, (cout, cin, 1, 1), jnp.float32)
        p["gsc"] = jnp.ones((cout,), jnp.float32)
        p["bsc"] = jnp.zeros((cout,), jnp.float32)
    return p


if __name__ == "__main__":
    key = jax.random.PRNGKey(0)
    k0, k1, k2, k3 = jax.random.split(key, 4)

    # bf16 MXU operands (f32 accumulation / f32 BN stats) vs. an f32 HIGHEST
    # reference -> tolerance loosened accordingly.
    ATOL = RTOL = 3e-2

    # Case 1: projection shortcut (Cin != Cout), stride 1.  N=2, 4->8, 16x16.
    N, CIN, COUT, H, W, STRIDE = 2, 4, 8, 16, 16, 1
    x = jax.random.normal(k0, (N, CIN, H, W), jnp.float32)
    params = _make_params(k1, CIN, COUT, projection=True)

    out = jax.block_until_ready(basic_block_forward(x, params, stride=STRIDE))
    ref = jax.block_until_ready(basic_block_reference(x, params, stride=STRIDE))
    assert out.shape == (N, COUT, H // STRIDE, W // STRIDE), out.shape
    assert jnp.allclose(out, ref, atol=ATOL, rtol=RTOL), float(
        jnp.max(jnp.abs(out - ref)))

    # Case 2: identity shortcut (Cin == Cout, stride 1).  N=2, 8->8, 8x8.
    N2, C2, H2 = 2, 8, 8
    x2 = jax.random.normal(k2, (N2, C2, H2, H2), jnp.float32)
    params2 = _make_params(k3, C2, C2, projection=False)

    out2 = jax.block_until_ready(basic_block_forward(x2, params2, stride=1))
    ref2 = jax.block_until_ready(basic_block_reference(x2, params2, stride=1))
    assert out2.shape == (N2, C2, H2, H2), out2.shape
    assert jnp.allclose(out2, ref2, atol=ATOL, rtol=RTOL), float(
        jnp.max(jnp.abs(out2 - ref2)))

    print("KERNEL_OK")
</pallas_src>

<mosaic_0001>
module attributes {stable_mosaic.version = 11 : i64} {
  func.func @kernel(%arg0: memref<512x36xbf16, #tpu.memory_space<vmem>>, %arg1: memref<512x4xbf16, #tpu.memory_space<vmem>>, %arg2: memref<36x128xbf16, #tpu.memory_space<vmem>>, %arg3: memref<1x128xf32, #tpu.memory_space<vmem>>, %arg4: memref<1x128xf32, #tpu.memory_space<vmem>>, %arg5: memref<1152x128xbf16, #tpu.memory_space<vmem>>, %arg6: memref<1x128xf32, #tpu.memory_space<vmem>>, %arg7: memref<1x128xf32, #tpu.memory_space<vmem>>, %arg8: memref<4x128xbf16, #tpu.memory_space<vmem>>, %arg9: memref<1x128xf32, #tpu.memory_space<vmem>>, %arg10: memref<1x128xf32, #tpu.memory_space<vmem>>, %arg11: memref<512x128xf32, #tpu.memory_space<vmem>>, %arg12: memref<2x18x18x128xf32, #tpu.memory_space<vmem>>, %arg13: memref<2x16x16x1152xbf16, #tpu.memory_space<vmem>>) attributes {dimension_semantics = [], scalar_prefetch = 0 : i64, scratch_operands = 2 : i64, tpu.core_type = #tpu.core_type<tc>} {
    %c0 = arith.constant 0 : index
    %c0_0 = arith.constant 0 : index
    %0 = vector.load %arg0[%c0, %c0_0] : memref<512x36xbf16, #tpu.memory_space<vmem>>, vector<512x36xbf16>
    %c0_1 = arith.constant 0 : index
    %c0_2 = arith.constant 0 : index
    %1 = vector.load %arg2[%c0_1, %c0_2] : memref<36x128xbf16, #tpu.memory_space<vmem>>, vector<36x128xbf16>
    %cst = arith.constant dense<0.000000e+00> : vector<512x128xf32>
    %2 = tpu.matmul %0, %1, %cst {dimension_numbers = #tpu.dot_dimension_numbers<[1], [0], [0], [1], [0, 0, 1, 1], [], []>} : vector<512x36xbf16>, vector<36x128xbf16>, vector<512x128xf32> -> vector<512x128xf32>
    %c0_3 = arith.constant 0 : index
    %c0_4 = arith.constant 0 : index
    %3 = vector.load %arg3[%c0_3, %c0_4] : memref<1x128xf32, #tpu.memory_space<vmem>>, vector<1x128xf32>
    %c0_5 = arith.constant 0 : index
    %c0_6 = arith.constant 0 : index
    %4 = vector.load %arg4[%c0_5, %c0_6] : memref<1x128xf32, #tpu.memory_space<vmem>>, vector<1x128xf32>
    %cst_7 = arith.constant dense<0.000000e+00> : vector<128xf32>
    %5 = vector.multi_reduction <add>, %2, %cst_7 [0] : vector<512x128xf32> to vector<128xf32>
    %6 = vector.shape_cast %5 : vector<128xf32> to vector<1x128xf32>
    %7 = arith.mulf %2, %2 : vector<512x128xf32>
    %cst_8 = arith.constant dense<0.000000e+00> : vector<128xf32>
    %8 = vector.multi_reduction <add>, %7, %cst_8 [0] : vector<512x128xf32> to vector<128xf32>
    %9 = vector.shape_cast %8 : vector<128xf32> to vector<1x128xf32>
    %cst_9 = arith.constant 0.001953125 : f32
    %10 = vector.broadcast %cst_9 : f32 to vector<1x128xf32>
    %11 = arith.mulf %6, %10 : vector<1x128xf32>
    %cst_10 = arith.constant 0.001953125 : f32
    %12 = vector.broadcast %cst_10 : f32 to vector<1x128xf32>
    %13 = arith.mulf %9, %12 : vector<1x128xf32>
    %14 = arith.mulf %11, %11 : vector<1x128xf32>
    %15 = arith.subf %13, %14 : vector<1x128xf32>
    %cst_11 = arith.constant 9.99999974E-6 : f32
    %16 = vector.broadcast %cst_11 : f32 to vector<1x128xf32>
    %17 = arith.addf %15, %16 : vector<1x128xf32>
    %18 = math.rsqrt %17 : vector<1x128xf32>
    %19 = vector.broadcast %11 : vector<1x128xf32> to vector<512x128xf32>
    %20 = arith.subf %2, %19 : vector<512x128xf32>
    %21 = arith.mulf %18, %3 : vector<1x128xf32>
    %22 = vector.broadcast %21 : vector<1x128xf32> to vector<512x128xf32>
    %23 = arith.mulf %20, %22 : vector<512x128xf32>
    %24 = vector.broadcast %4 : vector<1x128xf32> to vector<512x128xf32>
    %25 = arith.addf %23, %24 : vector<512x128xf32>
    %cst_12 = arith.constant 0.000000e+00 : f32
    %26 = vector.broadcast %cst_12 : f32 to vector<512x128xf32>
    %27 = arith.maximumf %25, %26 : vector<512x128xf32>
    %cst_13 = arith.constant 0.000000e+00 : f32
    %28 = vector.broadcast %cst_13 : f32 to vector<2x1x18x128xf32>
    %cst_14 = arith.constant 0.000000e+00 : f32
    %29 = vector.broadcast %cst_14 : f32 to vector<2x18x1x128xf32>
    %c0_15 = arith.constant 0 : index
    %c0_16 = arith.constant 0 : index
    %c0_17 = arith.constant 0 : index
    %c0_18 = arith.constant 0 : index
    %30 = vector.load %arg12[%c0_15, %c0_16, %c0_17, %c0_18] : memref<2x18x18x128xf32, #tpu.memory_space<vmem>>, vector<2x1x18x128xf32>
    tpu.vector_store %arg12[%c0_15, %c0_16, %c0_17, %c0_18], %28 {strides = array<i32>} : memref<2x18x18x128xf32, #tpu.memory_space<vmem>>, vector<2x1x18x128xf32>,
    %c0_19 = arith.constant 0 : index
    %c17 = arith.constant 17 : index
    %c0_20 = arith.constant 0 : index
    %c0_21 = arith.constant 0 : index
    %31 = vector.load %arg12[%c0_19, %c17, %c0_20, %c0_21] : memref<2x18x18x128xf32, #tpu.memory_space<vmem>>, vector<2x1x18x128xf32>
    tpu.vector_store %arg12[%c0_19, %c17, %c0_20, %c0_21], %28 {strides = array<i32>} : memref<2x18x18x128xf32, #tpu.memory_space<vmem>>, vector<2x1x18x128xf32>,
    %c0_22 = arith.constant 0 : index
    %c0_23 = arith.constant 0 : index
    %c0_24 = arith.constant 0 : index
    %c0_25 = arith.constant 0 : index
    %32 = vector.load %arg12[%c0_22, %c0_23, %c0_24, %c0_25] : memref<2x18x18x128xf32, #tpu.memory_space<vmem>>, vector<2x18x1x128xf32>
    tpu.vector_store %arg12[%c0_22, %c0_23, %c0_24, %c0_25], %29 {strides = array<i32>} : memref<2x18x18x128xf32, #tpu.memory_space<vmem>>, vector<2x18x1x128xf32>,
    %c0_26 = arith.constant 0 : index
    %c0_27 = arith.constant 0 : index
    %c17_28 = arith.constant 17 : index
    %c0_29 = arith.constant 0 : index
    %33 = vector.load %arg12[%c0_26, %c0_27, %c17_28, %c0_29] : memref<2x18x18x128xf32, #tpu.memory_space<vmem>>, vector<2x18x1x128xf32>
    tpu.vector_store %arg12[%c0_26, %c0_27, %c17_28, %c0_29], %29 {strides = array<i32>} : memref<2x18x18x128xf32, #tpu.memory_space<vmem>>, vector<2x18x1x128xf32>,
    %34 = vector.shape_cast %27 : vector<512x128xf32> to vector<2x16x16x128xf32>
    %c0_30 = arith.constant 0 : index
    %c1 = arith.constant 1 : index
    %c1_31 = arith.constant 1 : index
    %c0_32 = arith.constant 0 : index
    %35 = vector.load %arg12[%c0_30, %c1, %c1_31, %c0_32] : memref<2x18x18x128xf32, #tpu.memory_space<vmem>>, vector<2x16x16x128xf32>
    tpu.vector_store %arg12[%c0_30, %c1, %c1_31, %c0_32], %34 {strides = array<i32>} : memref<2x18x18x128xf32, #tpu.memory_space<vmem>>, vector<2x16x16x128xf32>,
    %c0_33 = arith.constant 0 : index
    %c0_34 = arith.constant 0 : index
    %c0_35 = arith.constant 0 : index
    %c0_36 = arith.constant 0 : index
    %36 = vector.load %arg12[%c0_33, %c0_34, %c0_35, %c0_36] : memref<2x18x18x128xf32, #tpu.memory_space<vmem>>, vector<2x16x16x128xf32>
    %37 = arith.truncf %36 : vector<2x16x16x128xf32> to vector<2x16x16x128xbf16>
    %c0_37 = arith.constant 0 : index
    %c0_38 = arith.constant 0 : index
    %c0_39 = arith.constant 0 : index
    %c0_40 = arith.constant 0 : index
    %38 = vector.load %arg13[%c0_37, %c0_38, %c0_39, %c0_40] : memref<2x16x16x1152xbf16, #tpu.memory_space<vmem>>, vector<2x16x16x128xbf16>
    tpu.vector_store %arg13[%c0_37, %c0_38, %c0_39, %c0_40], %37 {strides = array<i32>} : memref<2x16x16x1152xbf16, #tpu.memory_space<vmem>>, vector<2x16x16x128xbf16>,
    %c0_41 = arith.constant 0 : index
    %c0_42 = arith.constant 0 : index
    %c1_43 = arith.constant 1 : index
    %c0_44 = arith.constant 0 : index
    %39 = vector.load %arg12[%c0_41, %c0_42, %c1_43, %c0_44] : memref<2x18x18x128xf32, #tpu.memory_space<vmem>>, vector<2x16x16x128xf32>
    %40 = arith.truncf %39 : vector<2x16x16x128xf32> to vector<2x16x16x128xbf16>
    %c0_45 = arith.constant 0 : index
    %c0_46 = arith.constant 0 : index
    %c0_47 = arith.constant 0 : index
    %c128 = arith.constant 128 : index
    %41 = vector.load %arg13[%c0_45, %c0_46, %c0_47, %c128] : memref<2x16x16x1152xbf16, #tpu.memory_space<vmem>>, vector<2x16x16x128xbf16>
    tpu.vector_store %arg13[%c0_45, %c0_46, %c0_47, %c128], %40 {strides = array<i32>} : memref<2x16x16x1152xbf16, #tpu.memory_space<vmem>>, vector<2x16x16x128xbf16>,
    %c0_48 = arith.constant 0 : index
    %c0_49 = arith.constant 0 : index
    %c2 = arith.constant 2 : index
    %c0_50 = arith.constant 0 : index
    %42 = vector.load %arg12[%c0_48, %c0_49, %c2, %c0_50] : memref<2x18x18x128xf32, #tpu.memory_space<vmem>>, vector<2x16x16x128xf32>
    %43 = arith.truncf %42 : vector<2x16x16x128xf32> to vector<2x16x16x128xbf16>
    %c0_51 = arith.constant 0 : index
    %c0_52 = arith.constant 0 : index
    %c0_53 = arith.constant 0 : index
    %c256 = arith.constant 256 : index
    %44 = vector.load %arg13[%c0_51, %c0_52, %c0_53, %c256] : memref<2x16x16x1152xbf16, #tpu.memory_space<vmem>>, vector<2x16x16x128xbf16>
    tpu.vector_store %arg13[%c0_51, %c0_52, %c0_53, %c256], %43 {strides = array<i32>} : memref<2x16x16x1152xbf16, #tpu.memory_space<vmem>>, vector<2x16x16x128xbf16>,
    %c0_54 = arith.constant 0 : index
    %c1_55 = arith.constant 1 : index
    %c0_56 = arith.constant 0 : index
    %c0_57 = arith.constant 0 : index
    %45 = vector.load %arg12[%c0_54, %c1_55, %c0_56, %c0_57] : memref<2x18x18x128xf32, #tpu.memory_space<vmem>>, vector<2x16x16x128xf32>
    %46 = arith.truncf %45 : vector<2x16x16x128xf32> to vector<2x16x16x128xbf16>
    %c0_58 = arith.constant 0 : index
    %c0_59 = arith.constant 0 : index
    %c0_60 = arith.constant 0 : index
    %c384 = arith.constant 384 : index
    %47 = vector.load %arg13[%c0_58, %c0_59, %c0_60, %c384] : memref<2x16x16x1152xbf16, #tpu.memory_space<vmem>>, vector<2x16x16x128xbf16>
    tpu.vector_store %arg13[%c0_58, %c0_59, %c0_60, %c384], %46 {strides = array<i32>} : memref<2x16x16x1152xbf16, #tpu.memory_space<vmem>>, vector<2x16x16x128xbf16>,
    %c0_61 = arith.constant 0 : index
    %c1_62 = arith.constant 1 : index
    %c1_63 = arith.constant 1 : index
    %c0_64 = arith.constant 0 : index
    %48 = vector.load %arg12[%c0_61, %c1_62, %c1_63, %c0_64] : memref<2x18x18x128xf32, #tpu.memory_space<vmem>>, vector<2x16x16x128xf32>
    %49 = arith.truncf %48 : vector<2x16x16x128xf32> to vector<2x16x16x128xbf16>
    %c0_65 = arith.constant 0 : index
    %c0_66 = arith.constant 0 : index
    %c0_67 = arith.constant 0 : index
    %c512 = arith.constant 512 : index
    %50 = vector.load %arg13[%c0_65, %c0_66, %c0_67, %c512] : memref<2x16x16x1152xbf16, #tpu.memory_space<vmem>>, vector<2x16x16x128xbf16>
    tpu.vector_store %arg13[%c0_65, %c0_66, %c0_67, %c512], %49 {strides = array<i32>} : memref<2x16x16x1152xbf16, #tpu.memory_space<vmem>>, vector<2x16x16x128xbf16>,
    %c0_68 = arith.constant 0 : index
    %c1_69 = arith.constant 1 : index
    %c2_70 = arith.constant 2 : index
    %c0_71 = arith.constant 0 : index
    %51 = vector.load %arg12[%c0_68, %c1_69, %c2_70, %c0_71] : memref<2x18x18x128xf32, #tpu.memory_space<vmem>>, vector<2x16x16x128xf32>
    %52 = arith.truncf %51 : vector<2x16x16x128xf32> to vector<2x16x16x128xbf16>
    %c0_72 = arith.constant 0 : index
    %c0_73 = arith.constant 0 : index
    %c0_74 = arith.constant 0 : index
    %c640 = arith.constant 640 : index
    %53 = vector.load %arg13[%c0_72, %c0_73, %c0_74, %c640] : memref<2x16x16x1152xbf16, #tpu.memory_space<vmem>>, vector<2x16x16x128xbf16>
    tpu.vector_store %arg13[%c0_72, %c0_73, %c0_74, %c640], %52 {strides = array<i32>} : memref<2x16x16x1152xbf16, #tpu.memory_space<vmem>>, vector<2x16x16x128xbf16>,
    %c0_75 = arith.constant 0 : index
    %c2_76 = arith.constant 2 : index
    %c0_77 = arith.constant 0 : index
    %c0_78 = arith.constant 0 : index
    %54 = vector.load %arg12[%c0_75, %c2_76, %c0_77, %c0_78] : memref<2x18x18x128xf32, #tpu.memory_space<vmem>>, vector<2x16x16x128xf32>
    %55 = arith.truncf %54 : vector<2x16x16x128xf32> to vector<2x16x16x128xbf16>
    %c0_79 = arith.constant 0 : index
    %c0_80 = arith.constant 0 : index
    %c0_81 = arith.constant 0 : index
    %c768 = arith.constant 768 : index
    %56 = vector.load %arg13[%c0_79, %c0_80, %c0_81, %c768] : memref<2x16x16x1152xbf16, #tpu.memory_space<vmem>>, vector<2x16x16x128xbf16>
    tpu.vector_store %arg13[%c0_79, %c0_80, %c0_81, %c768], %55 {strides = array<i32>} : memref<2x16x16x1152xbf16, #tpu.memory_space<vmem>>, vector<2x16x16x128xbf16>,
    %c0_82 = arith.constant 0 : index
    %c2_83 = arith.constant 2 : index
    %c1_84 = arith.constant 1 : index
    %c0_85 = arith.constant 0 : index
    %57 = vector.load %arg12[%c0_82, %c2_83, %c1_84, %c0_85] : memref<2x18x18x128xf32, #tpu.memory_space<vmem>>, vector<2x16x16x128xf32>
    %58 = arith.truncf %57 : vector<2x16x16x128xf32> to vector<2x16x16x128xbf16>
    %c0_86 = arith.constant 0 : index
    %c0_87 = arith.constant 0 : index
    %c0_88 = arith.constant 0 : index
    %c896 = arith.constant 896 : index
    %59 = vector.load %arg13[%c0_86, %c0_87, %c0_88, %c896] : memref<2x16x16x1152xbf16, #tpu.memory_space<vmem>>, vector<2x16x16x128xbf16>
    tpu.vector_store %arg13[%c0_86, %c0_87, %c0_88, %c896], %58 {strides = array<i32>} : memref<2x16x16x1152xbf16, #tpu.memory_space<vmem>>, vector<2x16x16x128xbf16>,
    %c0_89 = arith.constant 0 : index
    %c2_90 = arith.constant 2 : index
    %c2_91 = arith.constant 2 : index
    %c0_92 = arith.constant 0 : index
    %60 = vector.load %arg12[%c0_89, %c2_90, %c2_91, %c0_92] : memref<2x18x18x128xf32, #tpu.memory_space<vmem>>, vector<2x16x16x128xf32>
    %61 = arith.truncf %60 : vector<2x16x16x128xf32> to vector<2x16x16x128xbf16>
    %c0_93 = arith.constant 0 : index
    %c0_94 = arith.constant 0 : index
    %c0_95 = arith.constant 0 : index
    %c1024 = arith.constant 1024 : index
    %62 = vector.load %arg13[%c0_93, %c0_94, %c0_95, %c1024] : memref<2x16x16x1152xbf16, #tpu.memory_space<vmem>>, vector<2x16x16x128xbf16>
    tpu.vector_store %arg13[%c0_93, %c0_94, %c0_95, %c1024], %61 {strides = array<i32>} : memref<2x16x16x1152xbf16, #tpu.memory_space<vmem>>, vector<2x16x16x128xbf16>,
    %c0_96 = arith.constant 0 : index
    %c0_97 = arith.constant 0 : index
    %c0_98 = arith.constant 0 : index
    %c0_99 = arith.constant 0 : index
    %63 = vector.load %arg13[%c0_96, %c0_97, %c0_98, %c0_99] : memref<2x16x16x1152xbf16, #tpu.memory_space<vmem>>, vector<2x16x16x1152xbf16>
    %64 = vector.shape_cast %63 : vector<2x16x16x1152xbf16> to vector<512x1152xbf16>
    %c0_100 = arith.constant 0 : index
    %c0_101 = arith.constant 0 : index
    %65 = vector.load %arg5[%c0_100, %c0_101] : memref<1152x128xbf16, #tpu.memory_space<vmem>>, vector<1152x128xbf16>
    %cst_102 = arith.constant dense<0.000000e+00> : vector<512x128xf32>
    %66 = tpu.matmul %64, %65, %cst_102 {dimension_numbers = #tpu.dot_dimension_numbers<[1], [0], [0], [1], [0, 0, 1, 1], [], []>} : vector<512x1152xbf16>, vector<1152x128xbf16>, vector<512x128xf32> -> vector<512x128xf32>
    %c0_103 = arith.constant 0 : index
    %c0_104 = arith.constant 0 : index
    %67 = vector.load %arg6[%c0_103, %c0_104] : memref<1x128xf32, #tpu.memory_space<vmem>>, vector<1x128xf32>
    %c0_105 = arith.constant 0 : index
    %c0_106 = arith.constant 0 : index
    %68 = vector.load %arg7[%c0_105, %c0_106] : memref<1x128xf32, #tpu.memory_space<vmem>>, vector<1x128xf32>
    %cst_107 = arith.constant dense<0.000000e+00> : vector<128xf32>
    %69 = vector.multi_reduction <add>, %66, %cst_107 [0] : vector<512x128xf32> to vector<128xf32>
    %70 = vector.shape_cast %69 : vector<128xf32> to vector<1x128xf32>
    %71 = arith.mulf %66, %66 : vector<512x128xf32>
    %cst_108 = arith.constant dense<0.000000e+00> : vector<128xf32>
    %72 = vector.multi_reduction <add>, %71, %cst_108 [0] : vector<512x128xf32> to vector<128xf32>
    %73 = vector.shape_cast %72 : vector<128xf32> to vector<1x128xf32>
    %cst_109 = arith.constant 0.001953125 : f32
    %74 = vector.broadcast %cst_109 : f32 to vector<1x128xf32>
    %75 = arith.mulf %70, %74 : vector<1x128xf32>
    %cst_110 = arith.constant 0.001953125 : f32
    %76 = vector.broadcast %cst_110 : f32 to vector<1x128xf32>
    %77 = arith.mulf %73, %76 : vector<1x128xf32>
    %78 = arith.mulf %75, %75 : vector<1x128xf32>
    %79 = arith.subf %77, %78 : vector<1x128xf32>
    %cst_111 = arith.constant 9.99999974E-6 : f32
    %80 = vector.broadcast %cst_111 : f32 to vector<1x128xf32>
    %81 = arith.addf %79, %80 : vector<1x128xf32>
    %82 = math.rsqrt %81 : vector<1x128xf32>
    %83 = vector.broadcast %75 : vector<1x128xf32> to vector<512x128xf32>
    %84 = arith.subf %66, %83 : vector<512x128xf32>
    %85 = arith.mulf %82, %67 : vector<1x128xf32>
    %86 = vector.broadcast %85 : vector<1x128xf32> to vector<512x128xf32>
    %87 = arith.mulf %84, %86 : vector<512x128xf32>
    %88 = vector.broadcast %68 : vector<1x128xf32> to vector<512x128xf32>
    %89 = arith.addf %87, %88 : vector<512x128xf32>
    %c0_112 = arith.constant 0 : index
    %c0_113 = arith.constant 0 : index
    %90 = vector.load %arg1[%c0_112, %c0_113] : memref<512x4xbf16, #tpu.memory_space<vmem>>, vector<512x4xbf16>
    %c0_114 = arith.constant 0 : index
    %c0_115 = arith.constant 0 : index
    %91 = vector.load %arg8[%c0_114, %c0_115] : memref<4x128xbf16, #tpu.memory_space<vmem>>, vector<4x128xbf16>
    %cst_116 = arith.constant dense<0.000000e+00> : vector<512x128xf32>
    %92 = tpu.matmul %90, %91, %cst_116 {dimension_numbers = #tpu.dot_dimension_numbers<[1], [0], [0], [1], [0, 0, 1, 1], [], []>} : vector<512x4xbf16>, vector<4x128xbf16>, vector<512x128xf32> -> vector<512x128xf32>
    %c0_117 = arith.constant 0 : index
    %c0_118 = arith.constant 0 : index
    %93 = vector.load %arg9[%c0_117, %c0_118] : memref<1x128xf32, #tpu.memory_space<vmem>>, vector<1x128xf32>
    %c0_119 = arith.constant 0 : index
    %c0_120 = arith.constant 0 : index
    %94 = vector.load %arg10[%c0_119, %c0_120] : memref<1x128xf32, #tpu.memory_space<vmem>>, vector<1x128xf32>
    %cst_121 = arith.constant dense<0.000000e+00> : vector<128xf32>
    %95 = vector.multi_reduction <add>, %92, %cst_121 [0] : vector<512x128xf32> to vector<128xf32>
    %96 = vector.shape_cast %95 : vector<128xf32> to vector<1x128xf32>
    %97 = arith.mulf %92, %92 : vector<512x128xf32>
    %cst_122 = arith.constant dense<0.000000e+00> : vector<128xf32>
    %98 = vector.multi_reduction <add>, %97, %cst_122 [0] : vector<512x128xf32> to vector<128xf32>
    %99 = vector.shape_cast %98 : vector<128xf32> to vector<1x128xf32>
    %cst_123 = arith.constant 0.001953125 : f32
    %100 = vector.broadcast %cst_123 : f32 to vector<1x128xf32>
    %101 = arith.mulf %96, %100 : vector<1x128xf32>
    %cst_124 = arith.constant 0.001953125 : f32
    %102 = vector.broadcast %cst_124 : f32 to vector<1x128xf32>
    %103 = arith.mulf %99, %102 : vector<1x128xf32>
    %104 = arith.mulf %101, %101 : vector<1x128xf32>
    %105 = arith.subf %103, %104 : vector<1x128xf32>
    %cst_125 = arith.constant 9.99999974E-6 : f32
    %106 = vector.broadcast %cst_125 : f32 to vector<1x128xf32>
    %107 = arith.addf %105, %106 : vector<1x128xf32>
    %108 = math.rsqrt %107 : vector<1x128xf32>
    %109 = vector.broadcast %101 : vector<1x128xf32> to vector<512x128xf32>
    %110 = arith.subf %92, %109 : vector<512x128xf32>
    %111 = arith.mulf %108, %93 : vector<1x128xf32>
    %112 = vector.broadcast %111 : vector<1x128xf32> to vector<512x128xf32>
    %113 = arith.mulf %110, %112 : vector<512x128xf32>
    %114 = vector.broadcast %94 : vector<1x128xf32> to vector<512x128xf32>
    %115 = arith.addf %113, %114 : vector<512x128xf32>
    %116 = arith.addf %89, %115 : vector<512x128xf32>
    %cst_126 = arith.constant 0.000000e+00 : f32
    %117 = vector.broadcast %cst_126 : f32 to vector<512x128xf32>
    %118 = arith.maximumf %116, %117 : vector<512x128xf32>
    %c0_127 = arith.constant 0 : index
    %c0_128 = arith.constant 0 : index
    %119 = vector.load %arg11[%c0_127, %c0_128] : memref<512x128xf32, #tpu.memory_space<vmem>>, vector<512x128xf32>
    tpu.vector_store %arg11[%c0_127, %c0_128], %118 {strides = array<i32>} : memref<512x128xf32, #tpu.memory_space<vmem>>, vector<512x128xf32>,
    return
  }
}

</mosaic_0001>

<llo_original>
// kernel: tpu_custom_call.1
$region0: #{tpu_custom_call.1}
  #allocation0 [shape = 'u32[]', space=smem, size = 0x4, offset = 0x4, fixed_abs, tag = 'smem constant byte address 0x4 - core index']
  #allocation1 [shape = 'u32[72,128]{1,0:T(1,128)}', space=vmem, size = 0x9000, scoped, tag = 'internal scratch']
  #allocation2 [shape = 'f32[2,18,18,128]{3,2,1,0:T(8,128)}', space=vmem, size = 0x6c000, scoped, tag = 'scratch operand']
  #allocation3 [shape = 'bf16[2,16,16,1152]{3,2,1,0:T(8,128)(2,1)}', space=vmem, size = 0x120000, scoped, tag = 'scratch operand']
  %s0 = inlined_call_operand.vmem [shape: bf16[512,36], index: 0, kind: input, shape index: {}]
  %s1 = inlined_call_operand.vmem [shape: bf16[512,4], index: 1, kind: input, shape index: {}]
  %s2 = inlined_call_operand.hbm [shape: bf16[36,128], index: 2, kind: input, shape index: {}]
  %s3 = inlined_call_operand.vmem [shape: f32[1,128], index: 3, kind: input, shape index: {}]
  %s4 = inlined_call_operand.vmem [shape: f32[1,128], index: 4, kind: input, shape index: {}]
  %s5 = inlined_call_operand.vmem [shape: bf16[1152,128], index: 5, kind: input, shape index: {}]
  %s6 = inlined_call_operand.vmem [shape: f32[1,128], index: 6, kind: input, shape index: {}]
  %s7 = inlined_call_operand.vmem [shape: f32[1,128], index: 7, kind: input, shape index: {}]
  %s8 = inlined_call_operand.vmem [shape: bf16[4,128], index: 8, kind: input, shape index: {}]
  %s9 = inlined_call_operand.vmem [shape: f32[1,128], index: 9, kind: input, shape index: {}]
  %s10 = inlined_call_operand.vmem [shape: f32[1,128], index: 10, kind: input, shape index: {}]
  %s11 = inlined_call_operand.hbm [shape: f32[512,128], index: 11, kind: output, shape index: {}]
  %s12 = sld [smem:[#allocation0]]
  $region58: #{tpu_custom_call.1} parent=0
    _
  %s14 = ssub.s32 1, %s12
  %s15 = scalar_select 0, %s14, %s12
  $region1: #{tpu_custom_call.1} parent=0
    #allocation4 [shape = 'u8[10240]{0}', space=vmem, size = 0x2800, scoped, tag = 'input window, operand 2, single buffered']
    #allocation5 [shape = 's32[1]{0}', space=sflag, size = 0x4, scoped, tag = 'scoped memory for tpu_custom_call.1']
    #allocation6 [shape = 's32[1]{0}', space=sflag, size = 0x4, scoped, tag = 'scoped memory for tpu_custom_call.1']
    #allocation7 [shape = 'u8[262144]{0}', space=vmem, size = 0x40000, scoped, tag = 'output window, operand 0, single buffered']
    %16 = vsyncpa [#allocation5], 0
    %17 = vsyncpa [#allocation6], 0
    // Predicated region
    $region2: #{tpu_custom_call.1} parent=1 // pred_check
      _
    $region3: #{tpu_custom_call.1} parent=1 // pred_check_branch
      %19 = sbr.rel (0) target = $region5
    $region4: #{tpu_custom_call.1} parent=1 // pred_region
      _
    $region5: #{tpu_custom_call.1} parent=1 // pred_fallthru
      _
    // Predicated region
    $region6: #{tpu_custom_call.1} parent=1 // pred_check
      _
    $region7: #{tpu_custom_call.1} parent=1 // pred_check_branch
      %21 = sbr.rel (0) target = $region9
    $region8: #{tpu_custom_call.1} parent=1 // pred_region
      _
    $region9: #{tpu_custom_call.1} parent=1 // pred_fallthru
      _
    // Predicated region
    $region10: #{tpu_custom_call.1} parent=1 // pred_check
      _
    $region11: #{tpu_custom_call.1} parent=1 // pred_check_branch
      %23 = sbr.rel (0) target = $region13
    $region12: #{tpu_custom_call.1} parent=1 // pred_region
      %25 = vsyncadd [#allocation5], 0
      %s26 = sshll.u32 %s2, 4
      %s27 = int_to_ptr.hbm [resolvable:$true] %s26
      %s28 = sshll.u32 [#allocation4], 4
      %s29 = int_to_ptr.vmem [resolvable:$true] %s28
      %34 = dma.hbm_to_vmem [thread:$0]  %s27, 320, %s29, [#allocation5], 64, 64, 4
    $region13: #{tpu_custom_call.1} parent=1 // pred_fallthru
      _
    // Predicated region
    $region14: #{tpu_custom_call.1} parent=1 // pred_check
      _
    $region15: #{tpu_custom_call.1} parent=1 // pred_check_branch
      %36 = sbr.rel (0) target = $region17
    $region16: #{tpu_custom_call.1} parent=1 // pred_region
      _
    $region17: #{tpu_custom_call.1} parent=1 // pred_fallthru
      _
    // Predicated region
    $region18: #{tpu_custom_call.1} parent=1 // pred_check
      _
    $region19: #{tpu_custom_call.1} parent=1 // pred_check_branch
      %38 = sbr.rel (0) target = $region21
    $region20: #{tpu_custom_call.1} parent=1 // pred_region
      _
    $region21: #{tpu_custom_call.1} parent=1 // pred_fallthru
      _
    // Predicated region
    $region22: #{tpu_custom_call.1} parent=1 // pred_check
      _
    $region23: #{tpu_custom_call.1} parent=1 // pred_check_branch
      %40 = sbr.rel (0) target = $region25
    $region24: #{tpu_custom_call.1} parent=1 // pred_region
      _
    $region25: #{tpu_custom_call.1} parent=1 // pred_fallthru
      _
    // Predicated region
    $region26: #{tpu_custom_call.1} parent=1 // pred_check
      _
    $region27: #{tpu_custom_call.1} parent=1 // pred_check_branch
      %42 = sbr.rel (0) target = $region29
    $region28: #{tpu_custom_call.1} parent=1 // pred_region
      _
    $region29: #{tpu_custom_call.1} parent=1 // pred_fallthru
      _
    // Predicated region
    $region30: #{tpu_custom_call.1} parent=1 // pred_check
      _
    $region31: #{tpu_custom_call.1} parent=1 // pred_check_branch
      %44 = sbr.rel (0) target = $region33
    $region32: #{tpu_custom_call.1} parent=1 // pred_region
      _
    $region33: #{tpu_custom_call.1} parent=1 // pred_fallthru
      _
    // Predicated region
    $region34: #{tpu_custom_call.1} parent=1 // pred_check
      _
    $region35: #{tpu_custom_call.1} parent=1 // pred_check_branch
      %46 = sbr.rel (0) target = $region37
    $region36: #{tpu_custom_call.1} parent=1 // pred_region
      _
    $region37: #{tpu_custom_call.1} parent=1 // pred_fallthru
      _
    // Predicated region
    $region38: #{tpu_custom_call.1} parent=1 // pred_check
      _
    $region39: #{tpu_custom_call.1} parent=1 // pred_check_branch
      %48 = sbr.rel (0) target = $region41
    $region40: #{tpu_custom_call.1} parent=1 // pred_region
      _
    $region41: #{tpu_custom_call.1} parent=1 // pred_fallthru
      _
    // Predicated region
    $region42: #{tpu_custom_call.1} parent=1 // pred_check
      _
    $region43: #{tpu_custom_call.1} parent=1 // pred_check_branch
      %50 = sbr.rel (0) target = $region45
    $region44: #{tpu_custom_call.1} parent=1 // pred_region
      _
    $region45: #{tpu_custom_call.1} parent=1 // pred_fallthru
      _
    // Predicated region
    $region46: #{tpu_custom_call.1} parent=1 // pred_check
      _
    $region47: #{tpu_custom_call.1} parent=1 // pred_check_branch
      %52 = sbr.rel (0) target = $region49
    $region48: #{tpu_custom_call.1} parent=1 // pred_region
      %54 = dma.done [#allocation5], 320
    $region49: #{tpu_custom_call.1} parent=1 // pred_fallthru
      _
    %v56 = vld [vmem:[%s0] sm:$0xf]
    %v57 = vld [vmem:[%s0 + $0x4] sm:$0xf]
    %v58 = vld [vmem:[%s0 + $0x8] sm:$0xf]
    %v59 = vld [vmem:[%s0 + $0xc] sm:$0xf]
    %v60 = vld [vmem:[%s0 + $0x10] sm:$0xf]
    %v61 = vld [vmem:[%s0 + $0x14] sm:$0xf]
    %v62 = vld [vmem:[%s0 + $0x18] sm:$0xf]
    %v63 = vld [vmem:[%s0 + $0x1c] sm:$0xf]
    %v64 = vld [vmem:[%s0 + $0x20] sm:$0xf]
    %v65 = vld [vmem:[%s0 + $0x24] sm:$0xf]
    %v66 = vld [vmem:[%s0 + $0x28] sm:$0xf]
    %v67 = vld [vmem:[%s0 + $0x2c] sm:$0xf]
    %v68 = vld [vmem:[%s0 + $0x30] sm:$0xf]
    %v69 = vld [vmem:[%s0 + $0x34] sm:$0xf]
    %v70 = vld [vmem:[%s0 + $0x38] sm:$0xf]
    %v71 = vld [vmem:[%s0 + $0x3c] sm:$0xf]
    %v72 = vld [vmem:[%s0 + $0x40] sm:$0xf]
    %v73 = vld [vmem:[%s0 + $0x44] sm:$0xf]
    %v74 = vld [vmem:[%s0 + $0x48] sm:$0xf]
    %v75 = vld [vmem:[%s0 + $0x4c] sm:$0xf]
    %v76 = vld [vmem:[%s0 + $0x50] sm:$0xf]
    %v77 = vld [vmem:[%s0 + $0x54] sm:$0xf]
    %v78 = vld [vmem:[%s0 + $0x58] sm:$0xf]
    %v79 = vld [vmem:[%s0 + $0x5c] sm:$0xf]
    %v80 = vld [vmem:[%s0 + $0x60] sm:$0xf]
    %v81 = vld [vmem:[%s0 + $0x64] sm:$0xf]
    %v82 = vld [vmem:[%s0 + $0x68] sm:$0xf]
    %v83 = vld [vmem:[%s0 + $0x6c] sm:$0xf]
    %v84 = vld [vmem:[%s0 + $0x70] sm:$0xf]
    %v85 = vld [vmem:[%s0 + $0x74] sm:$0xf]
    %v86 = vld [vmem:[%s0 + $0x78] sm:$0xf]
    %v87 = vld [vmem:[%s0 + $0x7c] sm:$0xf]
    %v88 = vld [vmem:[%s0 + $0x80] sm:$0xf]
    %v89 = vld [vmem:[%s0 + $0x84] sm:$0xf]
    %v90 = vld [vmem:[%s0 + $0x88] sm:$0xf]
    %v91 = vld [vmem:[%s0 + $0x8c] sm:$0xf]
    %v92 = vld [vmem:[%s0 + $0x90] sm:$0xf]
    %v93 = vld [vmem:[%s0 + $0x94] sm:$0xf]
    %v94 = vld [vmem:[%s0 + $0x98] sm:$0xf]
    %v95 = vld [vmem:[%s0 + $0x9c] sm:$0xf]
    %v96 = vld [vmem:[%s0 + $0xa0] sm:$0xf]
    %v97 = vld [vmem:[%s0 + $0xa4] sm:$0xf]
    %v98 = vld [vmem:[%s0 + $0xa8] sm:$0xf]
    %v99 = vld [vmem:[%s0 + $0xac] sm:$0xf]
    %v100 = vld [vmem:[%s0 + $0xb0] sm:$0xf]
    %v101 = vld [vmem:[%s0 + $0xb4] sm:$0xf]
    %v102 = vld [vmem:[%s0 + $0xb8] sm:$0xf]
    %v103 = vld [vmem:[%s0 + $0xbc] sm:$0xf]
    %v104 = vld [vmem:[%s0 + $0xc0] sm:$0xf]
    %v105 = vld [vmem:[%s0 + $0xc4] sm:$0xf]
    %v106 = vld [vmem:[%s0 + $0xc8] sm:$0xf]
    %v107 = vld [vmem:[%s0 + $0xcc] sm:$0xf]
    %v108 = vld [vmem:[%s0 + $0xd0] sm:$0xf]
    %v109 = vld [vmem:[%s0 + $0xd4] sm:$0xf]
    %v110 = vld [vmem:[%s0 + $0xd8] sm:$0xf]
    %v111 = vld [vmem:[%s0 + $0xdc] sm:$0xf]
    %v112 = vld [vmem:[%s0 + $0xe0] sm:$0xf]
    %v113 = vld [vmem:[%s0 + $0xe4] sm:$0xf]
    %v114 = vld [vmem:[%s0 + $0xe8] sm:$0xf]
    %v115 = vld [vmem:[%s0 + $0xec] sm:$0xf]
    %v116 = vld [vmem:[%s0 + $0xf0] sm:$0xf]
    %v117 = vld [vmem:[%s0 + $0xf4] sm:$0xf]
    %v118 = vld [vmem:[%s0 + $0xf8] sm:$0xf]
    %v119 = vld [vmem:[%s0 + $0xfc] sm:$0xf]
    %v120 = vld [vmem:[#allocation4] sm:$0xf]
    %v121 = vld [vmem:[#allocation4 + $0x4] sm:$0xf]
    %v122 = vld [vmem:[#allocation4 + $0x8] sm:$0xf]
    %v123 = vld [vmem:[#allocation4 + $0xc] sm:$0xf]
    %v124 = vld [vmem:[#allocation4 + $0x10] sm:$0x3]
    %v189 = vunpack.c.l.b16 %v56
    %v190 = vunpack.c.l.b16 %v57
    %v191 = vunpack.c.l.b16 %v58
    %v192 = vunpack.c.l.b16 %v59
    %v193 = vunpack.c.l.b16 %v60
    %v194 = vunpack.c.l.b16 %v61
    %v195 = vunpack.c.l.b16 %v62
    %v196 = vunpack.c.l.b16 %v63
    %v197 = vunpack.c.l.b16 %v64
    %v198 = vunpack.c.l.b16 %v65
    %v199 = vunpack.c.l.b16 %v66
    %v200 = vunpack.c.l.b16 %v67
    %v201 = vunpack.c.l.b16 %v68
    %v202 = vunpack.c.l.b16 %v69
    %v203 = vunpack.c.l.b16 %v70
    %v204 = vunpack.c.l.b16 %v71
    %v205 = vunpack.c.l.b16 %v72
    %v206 = vunpack.c.l.b16 %v73
    %v207 = vunpack.c.l.b16 %v74
    %v208 = vunpack.c.l.b16 %v75
    %v209 = vunpack.c.l.b16 %v76
    %v210 = vunpack.c.l.b16 %v77
    %v211 = vunpack.c.l.b16 %v78
    %v212 = vunpack.c.l.b16 %v79
    %v213 = vunpack.c.l.b16 %v80
    %v214 = vunpack.c.l.b16 %v81
    %v215 = vunpack.c.l.b16 %v82
    %v216 = vunpack.c.l.b16 %v83
    %v217 = vunpack.c.l.b16 %v84
    %v218 = vunpack.c.l.b16 %v85
    %v219 = vunpack.c.l.b16 %v86
    %v220 = vunpack.c.l.b16 %v87
    %v221 = vunpack.c.l.b16 %v88
    %v222 = vunpack.c.l.b16 %v89
    %v223 = vunpack.c.l.b16 %v90
    %v224 = vunpack.c.l.b16 %v91
    %v225 = vunpack.c.l.b16 %v92
    %v226 = vunpack.c.l.b16 %v93
    %v227 = vunpack.c.l.b16 %v94
    %v228 = vunpack.c.l.b16 %v95
    %v229 = vunpack.c.l.b16 %v96
    %v230 = vunpack.c.l.b16 %v97
    %v231 = vunpack.c.l.b16 %v98
    %v232 = vunpack.c.l.b16 %v99
    %v233 = vunpack.c.l.b16 %v100
    %v234 = vunpack.c.l.b16 %v101
    %v235 = vunpack.c.l.b16 %v102
    %v236 = vunpack.c.l.b16 %v103
    %v237 = vunpack.c.l.b16 %v104
    %v238 = vunpack.c.l.b16 %v105
    %v239 = vunpack.c.l.b16 %v106
    %v240 = vunpack.c.l.b16 %v107
    %v241 = vunpack.c.l.b16 %v108
    %v242 = vunpack.c.l.b16 %v109
    %v243 = vunpack.c.l.b16 %v110
    %v244 = vunpack.c.l.b16 %v111
    %v245 = vunpack.c.l.b16 %v112
    %v246 = vunpack.c.l.b16 %v113
    %v247 = vunpack.c.l.b16 %v114
    %v248 = vunpack.c.l.b16 %v115
    %v249 = vunpack.c.l.b16 %v116
    %v250 = vunpack.c.l.b16 %v117
    %v251 = vunpack.c.l.b16 %v118
    %v252 = vunpack.c.l.b16 %v119
    %v253 = vpack.c.b16 %v190, %v189
    %v254 = vpack.c.b16 %v192, %v191
    %v255 = vpack.c.b16 %v194, %v193
    %v256 = vpack.c.b16 %v196, %v195
    %v257 = vpack.c.b16 %v198, %v197
    %v258 = vpack.c.b16 %v200, %v199
    %v259 = vpack.c.b16 %v202, %v201
    %v260 = vpack.c.b16 %v204, %v203
    %v261 = vpack.c.b16 %v206, %v205
    %v262 = vpack.c.b16 %v208, %v207
    %v263 = vpack.c.b16 %v210, %v209
    %v264 = vpack.c.b16 %v212, %v211
    %v265 = vpack.c.b16 %v214, %v213
    %v266 = vpack.c.b16 %v216, %v215
    %v267 = vpack.c.b16 %v218, %v217
    %v268 = vpack.c.b16 %v220, %v219
    %v269 = vpack.c.b16 %v222, %v221
    %v270 = vpack.c.b16 %v224, %v223
    %v271 = vpack.c.b16 %v226, %v225
    %v272 = vpack.c.b16 %v228, %v227
    %v273 = vpack.c.b16 %v230, %v229
    %v274 = vpack.c.b16 %v232, %v231
    %v275 = vpack.c.b16 %v234, %v233
    %v276 = vpack.c.b16 %v236, %v235
    %v277 = vpack.c.b16 %v238, %v237
    %v278 = vpack.c.b16 %v240, %v239
    %v279 = vpack.c.b16 %v242, %v241
    %v280 = vpack.c.b16 %v244, %v243
    %v281 = vpack.c.b16 %v246, %v245
    %v282 = vpack.c.b16 %v248, %v247
    %v283 = vpack.c.b16 %v250, %v249
    %v284 = vpack.c.b16 %v252, %v251
    %v290 = vunpack.c.l.b16 %v120
    %v291 = vunpack.c.l.b16 %v121
    %v292 = vunpack.c.l.b16 %v122
    %v293 = vunpack.c.l.b16 %v123
    %v294 = vunpack.c.l.b16 %v124
    %v295 = vpack.c.b16 %v291, %v290
    %v296 = vpack.c.b16 %v293, %v292
    %v297 = vpack.c.b16 %v294, %v294
    %vm300 = vcmask 293888
    %v302 = vsel %vm300, %v253, 0
    %v305 = vsel %vm300, %v254, 0
    %v308 = vsel %vm300, %v255, 0
    %v311 = vsel %vm300, %v256, 0
    %v314 = vsel %vm300, %v257, 0
    %v317 = vsel %vm300, %v258, 0
    %v320 = vsel %vm300, %v259, 0
    %v323 = vsel %vm300, %v260, 0
    %v326 = vsel %vm300, %v261, 0
    %v329 = vsel %vm300, %v262, 0
    %v332 = vsel %vm300, %v263, 0
    %v335 = vsel %vm300, %v264, 0
    %v338 = vsel %vm300, %v265, 0
    %v341 = vsel %vm300, %v266, 0
    %v344 = vsel %vm300, %v267, 0
    %v347 = vsel %vm300, %v268, 0
    %v350 = vsel %vm300, %v269, 0
    %v353 = vsel %vm300, %v270, 0
    %v356 = vsel %vm300, %v271, 0
    %v359 = vsel %vm300, %v272, 0
    %v362 = vsel %vm300, %v273, 0
    %v365 = vsel %vm300, %v274, 0
    %v368 = vsel %vm300, %v275, 0
    %v371 = vsel %vm300, %v276, 0
    %v374 = vsel %vm300, %v277, 0
    %v377 = vsel %vm300, %v278, 0
    %v380 = vsel %vm300, %v279, 0
    %v383 = vsel %vm300, %v280, 0
    %v386 = vsel %vm300, %v281, 0
    %v389 = vsel %vm300, %v282, 0
    %v392 = vsel %vm300, %v283, 0
    %v395 = vsel %vm300, %v284, 0
    %vm397 = vcmask 1041408
    %v399 = vsel %vm397, %v297, 0
    %401 = vmatpush.bf16.msra.mxu0 0
    %402 = vmatpush.bf16.msra.mxu0 0
    %403 = vmatpush.bf16.msra.mxu0 0
    %404 = vmatpush.bf16.msra.mxu0 0
    %405 = vmatpush.bf16.msra.mxu0 0
    %406 = vmatpush.bf16.msra.mxu0 %v399
    %407 = vmatpush.bf16.msra.mxu0 %v296
    %408 = vmatpush.bf16.msra.mxu0 %v295
    %409 = vmatmul.bf16.gmra.mxu0 %v302
    %v410 = vpop.f32.mrf.mxu0
    %v411 = vadd.f32 0.0, %v410
    %v412 = vpop.f32.mrf.mxu0
    %v413 = vadd.f32 0.0, %v412
    %414 = vmatmul.bf16.gmra.mxu0 %v305
    %v415 = vpop.f32.mrf.mxu0
    %v416 = vadd.f32 0.0, %v415
    %v417 = vpop.f32.mrf.mxu0
    %v418 = vadd.f32 0.0, %v417
    %419 = vmatmul.bf16.gmra.mxu0 %v308
    %v420 = vpop.f32.mrf.mxu0
    %v421 = vadd.f32 0.0, %v420
    %v422 = vpop.f32.mrf.mxu0
    %v423 = vadd.f32 0.0, %v422
    %424 = vmatmul.bf16.gmra.mxu0 %v311
    %v425 = vpop.f32.mrf.mxu0
    %v426 = vadd.f32 0.0, %v425
    %v427 = vpop.f32.mrf.mxu0
    %v428 = vadd.f32 0.0, %v427
    %429 = vmatmul.bf16.gmra.mxu0 %v314
    %v430 = vpop.f32.mrf.mxu0
    %v431 = vadd.f32 0.0, %v430
    %v432 = vpop.f32.mrf.mxu0
    %v433 = vadd.f32 0.0, %v432
    %434 = vmatmul.bf16.gmra.mxu0 %v317
    %v435 = vpop.f32.mrf.mxu0
    %v436 = vadd.f32 0.0, %v435
    %v437 = vpop.f32.mrf.mxu0
    %v438 = vadd.f32 0.0, %v437
    %439 = vmatmul.bf16.gmra.mxu0 %v320
    %v440 = vpop.f32.mrf.mxu0
    %v441 = vadd.f32 0.0, %v440
    %v442 = vpop.f32.mrf.mxu0
    %v443 = vadd.f32 0.0, %v442
    %444 = vmatmul.bf16.gmra.mxu0 %v323
    %v445 = vpop.f32.mrf.mxu0
    %v446 = vadd.f32 0.0, %v445
    %v447 = vpop.f32.mrf.mxu0
    %v448 = vadd.f32 0.0, %v447
    %449 = vmatmul.bf16.gmra.mxu0 %v326
    %v450 = vpop.f32.mrf.mxu0
    %v451 = vadd.f32 0.0, %v450
    %v452 = vpop.f32.mrf.mxu0
    %v453 = vadd.f32 0.0, %v452
    %454 = vmatmul.bf16.gmra.mxu0 %v329
    %v455 = vpop.f32.mrf.mxu0
    %v456 = vadd.f32 0.0, %v455
    %v457 = vpop.f32.mrf.mxu0
    %v458 = vadd.f32 0.0, %v457
    %459 = vmatmul.bf16.gmra.mxu0 %v332
    %v460 = vpop.f32.mrf.mxu0
    %v461 = vadd.f32 0.0, %v460
    %v462 = vpop.f32.mrf.mxu0
    %v463 = vadd.f32 0.0, %v462
    %464 = vmatmul.bf16.gmra.mxu0 %v335
    %v465 = vpop.f32.mrf.mxu0
    %v466 = vadd.f32 0.0, %v465
    %v467 = vpop.f32.mrf.mxu0
    %v468 = vadd.f32 0.0, %v467
    %469 = vmatmul.bf16.gmra.mxu0 %v338
    %v470 = vpop.f32.mrf.mxu0
    %v471 = vadd.f32 0.0, %v470
    %v472 = vpop.f32.mrf.mxu0
    %v473 = vadd.f32 0.0, %v472
    %474 = vmatmul.bf16.gmra.mxu0 %v341
    %v475 = vpop.f32.mrf.mxu0
    %v476 = vadd.f32 0.0, %v475
    %v477 = vpop.f32.mrf.mxu0
    %v478 = vadd.f32 0.0, %v477
    %479 = vmatmul.bf16.gmra.mxu0 %v344
    %v480 = vpop.f32.mrf.mxu0
    %v481 = vadd.f32 0.0, %v480
    %v482 = vpop.f32.mrf.mxu0
    %v483 = vadd.f32 0.0, %v482
    %484 = vmatmul.bf16.gmra.mxu0 %v347
    %v485 = vpop.f32.mrf.mxu0
    %v486 = vadd.f32 0.0, %v485
    %v487 = vpop.f32.mrf.mxu0
    %v488 = vadd.f32 0.0, %v487
    %489 = vmatmul.bf16.gmra.mxu0 %v350
    %v490 = vpop.f32.mrf.mxu0
    %v491 = vadd.f32 0.0, %v490
    %v492 = vpop.f32.mrf.mxu0
    %v493 = vadd.f32 0.0, %v492
    %494 = vmatmul.bf16.gmra.mxu0 %v353
    %v495 = vpop.f32.mrf.mxu0
    %v496 = vadd.f32 0.0, %v495
    %v497 = vpop.f32.mrf.mxu0
    %v498 = vadd.f32 0.0, %v497
    %499 = vmatmul.bf16.gmra.mxu0 %v356
    %v500 = vpop.f32.mrf.mxu0
    %v501 = vadd.f32 0.0, %v500
    %v502 = vpop.f32.mrf.mxu0
    %v503 = vadd.f32 0.0, %v502
    %504 = vmatmul.bf16.gmra.mxu0 %v359
    %v505 = vpop.f32.mrf.mxu0
    %v506 = vadd.f32 0.0, %v505
    %v507 = vpop.f32.mrf.mxu0
    %v508 = vadd.f32 0.0, %v507
    %509 = vmatmul.bf16.gmra.mxu0 %v362
    %v510 = vpop.f32.mrf.mxu0
    %v511 = vadd.f32 0.0, %v510
    %v512 = vpop.f32.mrf.mxu0
    %v513 = vadd.f32 0.0, %v512
    %514 = vmatmul.bf16.gmra.mxu0 %v365
    %v515 = vpop.f32.mrf.mxu0
    %v516 = vadd.f32 0.0, %v515
    %v517 = vpop.f32.mrf.mxu0
    %v518 = vadd.f32 0.0, %v517
    %519 = vmatmul.bf16.gmra.mxu0 %v368
    %v520 = vpop.f32.mrf.mxu0
    %v521 = vadd.f32 0.0, %v520
    %v522 = vpop.f32.mrf.mxu0
    %v523 = vadd.f32 0.0, %v522
    %524 = vmatmul.bf16.gmra.mxu0 %v371
    %v525 = vpop.f32.mrf.mxu0
    %v526 = vadd.f32 0.0, %v525
    %v527 = vpop.f32.mrf.mxu0
    %v528 = vadd.f32 0.0, %v527
    %529 = vmatmul.bf16.gmra.mxu0 %v374
    %v530 = vpop.f32.mrf.mxu0
    %v531 = vadd.f32 0.0, %v530
    %v532 = vpop.f32.mrf.mxu0
    %v533 = vadd.f32 0.0, %v532
    %534 = vmatmul.bf16.gmra.mxu0 %v377
    %v535 = vpop.f32.mrf.mxu0
    %v536 = vadd.f32 0.0, %v535
    %v537 = vpop.f32.mrf.mxu0
    %v538 = vadd.f32 0.0, %v537
    %539 = vmatmul.bf16.gmra.mxu0 %v380
    %v540 = vpop.f32.mrf.mxu0
    %v541 = vadd.f32 0.0, %v540
    %v542 = vpop.f32.mrf.mxu0
    %v543 = vadd.f32 0.0, %v542
    %544 = vmatmul.bf16.gmra.mxu0 %v383
    %v545 = vpop.f32.mrf.mxu0
    %v546 = vadd.f32 0.0, %v545
    %v547 = vpop.f32.mrf.mxu0
    %v548 = vadd.f32 0.0, %v547
    %549 = vmatmul.bf16.gmra.mxu0 %v386
    %v550 = vpop.f32.mrf.mxu0
    %v551 = vadd.f32 0.0, %v550
    %v552 = vpop.f32.mrf.mxu0
    %v553 = vadd.f32 0.0, %v552
    %554 = vmatmul.bf16.gmra.mxu0 %v389
    %v555 = vpop.f32.mrf.mxu0
    %v556 = vadd.f32 0.0, %v555
    %v557 = vpop.f32.mrf.mxu0
    %v558 = vadd.f32 0.0, %v557
    %559 = vmatmul.bf16.gmra.mxu0 %v392
    %v560 = vpop.f32.mrf.mxu0
    %v561 = vadd.f32 0.0, %v560
    %v562 = vpop.f32.mrf.mxu0
    %v563 = vadd.f32 0.0, %v562
    %564 = vmatmul.bf16.gmra.mxu0 %v395
    %v565 = vpop.f32.mrf.mxu0
    %v566 = vadd.f32 0.0, %v565
    %v567 = vpop.f32.mrf.mxu0
    %v568 = vadd.f32 0.0, %v567
    %569 = vdwg.mxu0
    %v570 = vld [vmem:[%s3] sm:$0x1]
    %v571 = vld [vmem:[%s4] sm:$0x1]
    %v572 = vadd.f32 %v411, %v413
    %v573 = vadd.f32 %v572, %v416
    %v574 = vadd.f32 %v573, %v418
    %v575 = vadd.f32 %v574, %v421
    %v576 = vadd.f32 %v575, %v423
    %v577 = vadd.f32 %v576, %v426
    %v578 = vadd.f32 %v577, %v428
    %v579 = vadd.f32 %v578, %v431
    %v580 = vadd.f32 %v579, %v433
    %v581 = vadd.f32 %v580, %v436
    %v582 = vadd.f32 %v581, %v438
    %v583 = vadd.f32 %v582, %v441
    %v584 = vadd.f32 %v583, %v443
    %v585 = vadd.f32 %v584, %v446
    %v586 = vadd.f32 %v585, %v448
    %v587 = vadd.f32 %v586, %v451
    %v588 = vadd.f32 %v587, %v453
    %v589 = vadd.f32 %v588, %v456
    %v590 = vadd.f32 %v589, %v458
    %v591 = vadd.f32 %v590, %v461
    %v592 = vadd.f32 %v591, %v463
    %v593 = vadd.f32 %v592, %v466
    %v594 = vadd.f32 %v593, %v468
    %v595 = vadd.f32 %v594, %v471
    %v596 = vadd.f32 %v595, %v473
    %v597 = vadd.f32 %v596, %v476
    %v598 = vadd.f32 %v597, %v478
    %v599 = vadd.f32 %v598, %v481
    %v600 = vadd.f32 %v599, %v483
    %v601 = vadd.f32 %v600, %v486
    %v602 = vadd.f32 %v601, %v488
    %v603 = vadd.f32 %v602, %v491
    %v604 = vadd.f32 %v603, %v493
    %v605 = vadd.f32 %v604, %v496
    %v606 = vadd.f32 %v605, %v498
    %v607 = vadd.f32 %v606, %v501
    %v608 = vadd.f32 %v607, %v503
    %v609 = vadd.f32 %v608, %v506
    %v610 = vadd.f32 %v609, %v508
    %v611 = vadd.f32 %v610, %v511
    %v612 = vadd.f32 %v611, %v513
    %v613 = vadd.f32 %v612, %v516
    %v614 = vadd.f32 %v613, %v518
    %v615 = vadd.f32 %v614, %v521
    %v616 = vadd.f32 %v615, %v523
    %v617 = vadd.f32 %v616, %v526
    %v618 = vadd.f32 %v617, %v528
    %v619 = vadd.f32 %v618, %v531
    %v620 = vadd.f32 %v619, %v533
    %v621 = vadd.f32 %v620, %v536
    %v622 = vadd.f32 %v621, %v538
    %v623 = vadd.f32 %v622, %v541
    %v624 = vadd.f32 %v623, %v543
    %v625 = vadd.f32 %v624, %v546
    %v626 = vadd.f32 %v625, %v548
    %v627 = vadd.f32 %v626, %v551
    %v628 = vadd.f32 %v627, %v553
    %v629 = vadd.f32 %v628, %v556
    %v630 = vadd.f32 %v629, %v558
    %v631 = vadd.f32 %v630, %v561
    %v632 = vadd.f32 %v631, %v563
    %v633 = vadd.f32 %v632, %v566
    %v634 = vadd.f32 %v633, %v568
    %v635 = vrot.slane %v634, 4
    %v636 = vadd.f32 %v634, %v635
    %v637 = vrot.slane %v636, 2
    %v638 = vadd.f32 %v636, %v637
    %v639 = vrot.slane %v638, 1
    %v640 = vadd.f32 %v638, %v639
    %v641 = vmul.f32 %v411, %v411
    %v642 = vmul.f32 %v413, %v413
    %v643 = vmul.f32 %v416, %v416
    %v644 = vmul.f32 %v418, %v418
    %v645 = vmul.f32 %v421, %v421
    %v646 = vmul.f32 %v423, %v423
    %v647 = vmul.f32 %v426, %v426
    %v648 = vmul.f32 %v428, %v428
    %v649 = vmul.f32 %v431, %v431
    %v650 = vmul.f32 %v433, %v433
    %v651 = vmul.f32 %v436, %v436
    %v652 = vmul.f32 %v438, %v438
    %v653 = vmul.f32 %v441, %v441
    %v654 = vmul.f32 %v443, %v443
    %v655 = vmul.f32 %v446, %v446
    %v656 = vmul.f32 %v448, %v448
    %v657 = vmul.f32 %v451, %v451
    %v658 = vmul.f32 %v453, %v453
    %v659 = vmul.f32 %v456, %v456
    %v660 = vmul.f32 %v458, %v458
    %v661 = vmul.f32 %v461, %v461
    %v662 = vmul.f32 %v463, %v463
    %v663 = vmul.f32 %v466, %v466
    %v664 = vmul.f32 %v468, %v468
    %v665 = vmul.f32 %v471, %v471
    %v666 = vmul.f32 %v473, %v473
    %v667 = vmul.f32 %v476, %v476
    %v668 = vmul.f32 %v478, %v478
    %v669 = vmul.f32 %v481, %v481
    %v670 = vmul.f32 %v483, %v483
    %v671 = vmul.f32 %v486, %v486
    %v672 = vmul.f32 %v488, %v488
    %v673 = vmul.f32 %v491, %v491
    %v674 = vmul.f32 %v493, %v493
    %v675 = vmul.f32 %v496, %v496
    %v676 = vmul.f32 %v498, %v498
    %v677 = vmul.f32 %v501, %v501
    %v678 = vmul.f32 %v503, %v503
    %v679 = vmul.f32 %v506, %v506
    %v680 = vmul.f32 %v508, %v508
    %v681 = vmul.f32 %v511, %v511
    %v682 = vmul.f32 %v513, %v513
    %v683 = vmul.f32 %v516, %v516
    %v684 = vmul.f32 %v518, %v518
    %v685 = vmul.f32 %v521, %v521
    %v686 = vmul.f32 %v523, %v523
    %v687 = vmul.f32 %v526, %v526
    %v688 = vmul.f32 %v528, %v528
    %v689 = vmul.f32 %v531, %v531
    %v690 = vmul.f32 %v533, %v533
    %v691 = vmul.f32 %v536, %v536
    %v692 = vmul.f32 %v538, %v538
    %v693 = vmul.f32 %v541, %v541
    %v694 = vmul.f32 %v543, %v543
    %v695 = vmul.f32 %v546, %v546
    %v696 = vmul.f32 %v548, %v548
    %v697 = vmul.f32 %v551, %v551
    %v698 = vmul.f32 %v553, %v553
    %v699 = vmul.f32 %v556, %v556
    %v700 = vmul.f32 %v558, %v558
    %v701 = vmul.f32 %v561, %v561
    %v702 = vmul.f32 %v563, %v563
    %v703 = vmul.f32 %v566, %v566
    %v704 = vmul.f32 %v568, %v568
    %v705 = vadd.f32 %v641, %v642
    %v706 = vadd.f32 %v705, %v643
    %v707 = vadd.f32 %v706, %v644
    %v708 = vadd.f32 %v707, %v645
    %v709 = vadd.f32 %v708, %v646
    %v710 = vadd.f32 %v709, %v647
    %v711 = vadd.f32 %v710, %v648
    %v712 = vadd.f32 %v711, %v649
    %v713 = vadd.f32 %v712, %v650
    %v714 = vadd.f32 %v713, %v651
    %v715 = vadd.f32 %v714, %v652
    %v716 = vadd.f32 %v715, %v653
    %v717 = vadd.f32 %v716, %v654
    %v718 = vadd.f32 %v717, %v655
    %v719 = vadd.f32 %v718, %v656
    %v720 = vadd.f32 %v719, %v657
    %v721 = vadd.f32 %v720, %v658
    %v722 = vadd.f32 %v721, %v659
    %v723 = vadd.f32 %v722, %v660
    %v724 = vadd.f32 %v723, %v661
    %v725 = vadd.f32 %v724, %v662
    %v726 = vadd.f32 %v725, %v663
    %v727 = vadd.f32 %v726, %v664
    %v728 = vadd.f32 %v727, %v665
    %v729 = vadd.f32 %v728, %v666
    %v730 = vadd.f32 %v729, %v667
    %v731 = vadd.f32 %v730, %v668
    %v732 = vadd.f32 %v731, %v669
    %v733 = vadd.f32 %v732, %v670
    %v734 = vadd.f32 %v733, %v671
    %v735 = vadd.f32 %v734, %v672
    %v736 = vadd.f32 %v735, %v673
    %v737 = vadd.f32 %v736, %v674
    %v738 = vadd.f32 %v737, %v675
    %v739 = vadd.f32 %v738, %v676
    %v740 = vadd.f32 %v739, %v677
    %v741 = vadd.f32 %v740, %v678
    %v742 = vadd.f32 %v741, %v679
    %v743 = vadd.f32 %v742, %v680
    %v744 = vadd.f32 %v743, %v681
    %v745 = vadd.f32 %v744, %v682
    %v746 = vadd.f32 %v745, %v683
    %v747 = vadd.f32 %v746, %v684
    %v748 = vadd.f32 %v747, %v685
    %v749 = vadd.f32 %v748, %v686
    %v750 = vadd.f32 %v749, %v687
    %v751 = vadd.f32 %v750, %v688
    %v752 = vadd.f32 %v751, %v689
    %v753 = vadd.f32 %v752, %v690
    %v754 = vadd.f32 %v753, %v691
    %v755 = vadd.f32 %v754, %v692
    %v756 = vadd.f32 %v755, %v693
    %v757 = vadd.f32 %v756, %v694
    %v758 = vadd.f32 %v757, %v695
    %v759 = vadd.f32 %v758, %v696
    %v760 = vadd.f32 %v759, %v697
    %v761 = vadd.f32 %v760, %v698
    %v762 = vadd.f32 %v761, %v699
    %v763 = vadd.f32 %v762, %v700
    %v764 = vadd.f32 %v763, %v701
    %v765 = vadd.f32 %v764, %v702
    %v766 = vadd.f32 %v765, %v703
    %v767 = vadd.f32 %v766, %v704
    %v768 = vrot.slane %v767, 4
    %v769 = vadd.f32 %v767, %v768
    %v770 = vrot.slane %v769, 2
    %v771 = vadd.f32 %v769, %v770
    %v772 = vrot.slane %v771, 1
    %v773 = vadd.f32 %v771, %v772
    %v774 = vmul.f32 %v640, 0.001953125
    %v775 = vmul.f32 %v773, 0.001953125
    %v776 = vmul.f32 %v774, %v774
    %v777 = vsub.f32 %v775, %v776
    %v778 = vadd.f32 %v777, 1e-05
    %v779 = vrsqrt.pop %v778
    %v780 = vmul.f32 %v779, %v778
    %v781 = vmul.f32 %v780, %v779
    %v782 = vmul.f32 0.5, %v781
    %v783 = vsub.f32 1.5, %v782
    %v784 = vmul.f32 %v779, %v783
    %vm785 = vweird.f32 %v778
    %vm786 = vweird.f32 %v779
    %vm787 = vmor %vm785, %vm786
    %v788 = vsel %vm787, %v779, %v784
    %v789 = vsub.f32 %v411, %v774
    %v790 = vsub.f32 %v413, %v774
    %v791 = vsub.f32 %v416, %v774
    %v792 = vsub.f32 %v418, %v774
    %v793 = vsub.f32 %v421, %v774
    %v794 = vsub.f32 %v423, %v774
    %v795 = vsub.f32 %v426, %v774
    %v796 = vsub.f32 %v428, %v774
    %v797 = vsub.f32 %v431, %v774
    %v798 = vsub.f32 %v433, %v774
    %v799 = vsub.f32 %v436, %v774
    %v800 = vsub.f32 %v438, %v774
    %v801 = vsub.f32 %v441, %v774
    %v802 = vsub.f32 %v443, %v774
    %v803 = vsub.f32 %v446, %v774
    %v804 = vsub.f32 %v448, %v774
    %v805 = vsub.f32 %v451, %v774
    %v806 = vsub.f32 %v453, %v774
    %v807 = vsub.f32 %v456, %v774
    %v808 = vsub.f32 %v458, %v774
    %v809 = vsub.f32 %v461, %v774
    %v810 = vsub.f32 %v463, %v774
    %v811 = vsub.f32 %v466, %v774
    %v812 = vsub.f32 %v468, %v774
    %v813 = vsub.f32 %v471, %v774
    %v814 = vsub.f32 %v473, %v774
    %v815 = vsub.f32 %v476, %v774
    %v816 = vsub.f32 %v478, %v774
    %v817 = vsub.f32 %v481, %v774
    %v818 = vsub.f32 %v483, %v774
    %v819 = vsub.f32 %v486, %v774
    %v820 = vsub.f32 %v488, %v774
    %v821 = vsub.f32 %v491, %v774
    %v822 = vsub.f32 %v493, %v774
    %v823 = vsub.f32 %v496, %v774
    %v824 = vsub.f32 %v498, %v774
    %v825 = vsub.f32 %v501, %v774
    %v826 = vsub.f32 %v503, %v774
    %v827 = vsub.f32 %v506, %v774
    %v828 = vsub.f32 %v508, %v774
    %v829 = vsub.f32 %v511, %v774
    %v830 = vsub.f32 %v513, %v774
    %v831 = vsub.f32 %v516, %v774
    %v832 = vsub.f32 %v518, %v774
    %v833 = vsub.f32 %v521, %v774
    %v834 = vsub.f32 %v523, %v774
    %v835 = vsub.f32 %v526, %v774
    %v836 = vsub.f32 %v528, %v774
    %v837 = vsub.f32 %v531, %v774
    %v838 = vsub.f32 %v533, %v774
    %v839 = vsub.f32 %v536, %v774
    %v840 = vsub.f32 %v538, %v774
    %v841 = vsub.f32 %v541, %v774
    %v842 = vsub.f32 %v543, %v774
    %v843 = vsub.f32 %v546, %v774
    %v844 = vsub.f32 %v548, %v774
    %v845 = vsub.f32 %v551, %v774
    %v846 = vsub.f32 %v553, %v774
    %v847 = vsub.f32 %v556, %v774
    %v848 = vsub.f32 %v558, %v774
    %v849 = vsub.f32 %v561, %v774
    %v850 = vsub.f32 %v563, %v774
    %v851 = vsub.f32 %v566, %v774
    %v852 = vsub.f32 %v568, %v774
    %v853 = vmul.f32 %v788, %v570
    %v854 = vperm.slane %v853, 0
    %v855 = vmul.f32 %v789, %v854
    %v856 = vmul.f32 %v790, %v854
    %v857 = vmul.f32 %v791, %v854
    %v858 = vmul.f32 %v792, %v854
    %v859 = vmul.f32 %v793, %v854
    %v860 = vmul.f32 %v794, %v854
    %v861 = vmul.f32 %v795, %v854
    %v862 = vmul.f32 %v796, %v854
    %v863 = vmul.f32 %v797, %v854
    %v864 = vmul.f32 %v798, %v854
    %v865 = vmul.f32 %v799, %v854
    %v866 = vmul.f32 %v800, %v854
    %v867 = vmul.f32 %v801, %v854
    %v868 = vmul.f32 %v802, %v854
    %v869 = vmul.f32 %v803, %v854
    %v870 = vmul.f32 %v804, %v854
    %v871 = vmul.f32 %v805, %v854
    %v872 = vmul.f32 %v806, %v854
    %v873 = vmul.f32 %v807, %v854
    %v874 = vmul.f32 %v808, %v854
    %v875 = vmul.f32 %v809, %v854
    %v876 = vmul.f32 %v810, %v854
    %v877 = vmul.f32 %v811, %v854
    %v878 = vmul.f32 %v812, %v854
    %v879 = vmul.f32 %v813, %v854
    %v880 = vmul.f32 %v814, %v854
    %v881 = vmul.f32 %v815, %v854
    %v882 = vmul.f32 %v816, %v854
    %v883 = vmul.f32 %v817, %v854
    %v884 = vmul.f32 %v818, %v854
    %v885 = vmul.f32 %v819, %v854
    %v886 = vmul.f32 %v820, %v854
    %v887 = vmul.f32 %v821, %v854
    %v888 = vmul.f32 %v822, %v854
    %v889 = vmul.f32 %v823, %v854
    %v890 = vmul.f32 %v824, %v854
    %v891 = vmul.f32 %v825, %v854
    %v892 = vmul.f32 %v826, %v854
    %v893 = vmul.f32 %v827, %v854
    %v894 = vmul.f32 %v828, %v854
    %v895 = vmul.f32 %v829, %v854
    %v896 = vmul.f32 %v830, %v854
    %v897 = vmul.f32 %v831, %v854
    %v898 = vmul.f32 %v832, %v854
    %v899 = vmul.f32 %v833, %v854
    %v900 = vmul.f32 %v834, %v854
    %v901 = vmul.f32 %v835, %v854
    %v902 = vmul.f32 %v836, %v854
    %v903 = vmul.f32 %v837, %v854
    %v904 = vmul.f32 %v838, %v854
    %v905 = vmul.f32 %v839, %v854
    %v906 = vmul.f32 %v840, %v854
    %v907 = vmul.f32 %v841, %v854
    %v908 = vmul.f32 %v842, %v854
    %v909 = vmul.f32 %v843, %v854
    %v910 = vmul.f32 %v844, %v854
    %v911 = vmul.f32 %v845, %v854
    %v912 = vmul.f32 %v846, %v854
    %v913 = vmul.f32 %v847, %v854
    %v914 = vmul.f32 %v848, %v854
    %v915 = vmul.f32 %v849, %v854
    %v916 = vmul.f32 %v850, %v854
    %v917 = vmul.f32 %v851, %v854
    %v918 = vmul.f32 %v852, %v854
    %v920 = vperm.slane %v571, 0
    %v922 = vadd.f32 %v855, %v920
    %v923 = vadd.f32 %v856, %v920
    %v924 = vadd.f32 %v857, %v920
    %v925 = vadd.f32 %v858, %v920
    %v926 = vadd.f32 %v859, %v920
    %v927 = vadd.f32 %v860, %v920
    %v928 = vadd.f32 %v861, %v920
    %v929 = vadd.f32 %v862, %v920
    %v930 = vadd.f32 %v863, %v920
    %v931 = vadd.f32 %v864, %v920
    %v932 = vadd.f32 %v865, %v920
    %v933 = vadd.f32 %v866, %v920
    %v934 = vadd.f32 %v867, %v920
    %v935 = vadd.f32 %v868, %v920
    %v936 = vadd.f32 %v869, %v920
    %v937 = vadd.f32 %v870, %v920
    %v938 = vadd.f32 %v871, %v920
    %v939 = vadd.f32 %v872, %v920
    %v940 = vadd.f32 %v873, %v920
    %v941 = vadd.f32 %v874, %v920
    %v942 = vadd.f32 %v875, %v920
    %v943 = vadd.f32 %v876, %v920
    %v944 = vadd.f32 %v877, %v920
    %v945 = vadd.f32 %v878, %v920
    %v946 = vadd.f32 %v879, %v920
    %v947 = vadd.f32 %v880, %v920
    %v948 = vadd.f32 %v881, %v920
    %v949 = vadd.f32 %v882, %v920
    %v950 = vadd.f32 %v883, %v920
    %v951 = vadd.f32 %v884, %v920
    %v952 = vadd.f32 %v885, %v920
    %v953 = vadd.f32 %v886, %v920
    %v954 = vadd.f32 %v887, %v920
    %v955 = vadd.f32 %v888, %v920
    %v956 = vadd.f32 %v889, %v920
    %v957 = vadd.f32 %v890, %v920
    %v958 = vadd.f32 %v891, %v920
    %v959 = vadd.f32 %v892, %v920
    %v960 = vadd.f32 %v893, %v920
    %v961 = vadd.f32 %v894, %v920
    %v962 = vadd.f32 %v895, %v920
    %v963 = vadd.f32 %v896, %v920
    %v964 = vadd.f32 %v897, %v920
    %v965 = vadd.f32 %v898, %v920
    %v966 = vadd.f32 %v899, %v920
    %v967 = vadd.f32 %v900, %v920
    %v968 = vadd.f32 %v901, %v920
    %v969 = vadd.f32 %v902, %v920
    %v970 = vadd.f32 %v903, %v920
    %v971 = vadd.f32 %v904, %v920
    %v972 = vadd.f32 %v905, %v920
    %v973 = vadd.f32 %v906, %v920
    %v974 = vadd.f32 %v907, %v920
    %v975 = vadd.f32 %v908, %v920
    %v976 = vadd.f32 %v909, %v920
    %v977 = vadd.f32 %v910, %v920
    %v978 = vadd.f32 %v911, %v920
    %v979 = vadd.f32 %v912, %v920
    %v980 = vadd.f32 %v913, %v920
    %v981 = vadd.f32 %v914, %v920
    %v982 = vadd.f32 %v915, %v920
    %v983 = vadd.f32 %v916, %v920
    %v984 = vadd.f32 %v917, %v920
    %v985 = vadd.f32 %v918, %v920
    %v986 = vmax.f32 %v922, 0.0
    %v987 = vmax.f32 %v923, 0.0
    %v988 = vmax.f32 %v924, 0.0
    %v989 = vmax.f32 %v925, 0.0
    %v990 = vmax.f32 %v926, 0.0
    %v991 = vmax.f32 %v927, 0.0
    %v992 = vmax.f32 %v928, 0.0
    %v993 = vmax.f32 %v929, 0.0
    %v994 = vmax.f32 %v930, 0.0
    %v995 = vmax.f32 %v931, 0.0
    %v996 = vmax.f32 %v932, 0.0
    %v997 = vmax.f32 %v933, 0.0
    %v998 = vmax.f32 %v934, 0.0
    %v999 = vmax.f32 %v935, 0.0
    %v1000 = vmax.f32 %v936, 0.0
    %v1001 = vmax.f32 %v937, 0.0
    %v1002 = vmax.f32 %v938, 0.0
    %v1003 = vmax.f32 %v939, 0.0
    %v1004 = vmax.f32 %v940, 0.0
    %v1005 = vmax.f32 %v941, 0.0
    %v1006 = vmax.f32 %v942, 0.0
    %v1007 = vmax.f32 %v943, 0.0
    %v1008 = vmax.f32 %v944, 0.0
    %v1009 = vmax.f32 %v945, 0.0
    %v1010 = vmax.f32 %v946, 0.0
    %v1011 = vmax.f32 %v947, 0.0
    %v1012 = vmax.f32 %v948, 0.0
    %v1013 = vmax.f32 %v949, 0.0
    %v1014 = vmax.f32 %v950, 0.0
    %v1015 = vmax.f32 %v951, 0.0
    %v1016 = vmax.f32 %v952, 0.0
    %v1017 = vmax.f32 %v953, 0.0
    %v1018 = vmax.f32 %v954, 0.0
    %v1019 = vmax.f32 %v955, 0.0
    %v1020 = vmax.f32 %v956, 0.0
    %v1021 = vmax.f32 %v957, 0.0
    %v1022 = vmax.f32 %v958, 0.0
    %v1023 = vmax.f32 %v959, 0.0
    %v1024 = vmax.f32 %v960, 0.0
    %v1025 = vmax.f32 %v961, 0.0
    %v1026 = vmax.f32 %v962, 0.0
    %v1027 = vmax.f32 %v963, 0.0
    %v1028 = vmax.f32 %v964, 0.0
    %v1029 = vmax.f32 %v965, 0.0
    %v1030 = vmax.f32 %v966, 0.0
    %v1031 = vmax.f32 %v967, 0.0
    %v1032 = vmax.f32 %v968, 0.0
    %v1033 = vmax.f32 %v969, 0.0
    %v1034 = vmax.f32 %v970, 0.0
    %v1035 = vmax.f32 %v971, 0.0
    %v1036 = vmax.f32 %v972, 0.0
    %v1037 = vmax.f32 %v973, 0.0
    %v1038 = vmax.f32 %v974, 0.0
    %v1039 = vmax.f32 %v975, 0.0
    %v1040 = vmax.f32 %v976, 0.0
    %v1041 = vmax.f32 %v977, 0.0
    %v1042 = vmax.f32 %v978, 0.0
    %v1043 = vmax.f32 %v979, 0.0
    %v1044 = vmax.f32 %v980, 0.0
    %v1045 = vmax.f32 %v981, 0.0
    %v1046 = vmax.f32 %v982, 0.0
    %v1047 = vmax.f32 %v983, 0.0
    %v1048 = vmax.f32 %v984, 0.0
    %v1049 = vmax.f32 %v985, 0.0
    %1050 = vst [vmem:[#allocation2] sm:$0xff] 0.0
    %1051 = vst [vmem:[#allocation2 + $0x8] sm:$0xff] 0.0
    %1052 = vst [vmem:[#allocation2 + $0x10] sm:$0x3] 0.0
    %1053 = vst [vmem:[#allocation2 + $0x1b0] sm:$0xff] 0.0
    %1054 = vst [vmem:[#allocation2 + $0x1b8] sm:$0xff] 0.0
    %1055 = vst [vmem:[#allocation2 + $0x1c0] sm:$0x3] 0.0
    %s1056 = scalar_lea.vmem [#allocation2], 408
    %1057 = vst [vmem:[%s1056] sm:$0xff] 0.0
    %1058 = vst [vmem:[%s1056 + $0x8] sm:$0xff] 0.0
    %1059 = vst [vmem:[%s1056 + $0x10] sm:$0x3] 0.0
    %1060 = vst [vmem:[%s1056 + $0x1b0] sm:$0xff] 0.0
    %1061 = vst [vmem:[%s1056 + $0x1b8] sm:$0xff] 0.0
    %1062 = vst [vmem:[%s1056 + $0x1c0] sm:$0x3] 0.0
    %1063 = vst [vmem:[#allocation2] sm:$0x1] 0.0
    %1064 = vst [vmem:[#allocation2 + $0x18] sm:$0x1] 0.0
    %1065 = vst [vmem:[#allocation2 + $0x30] sm:$0x1] 0.0
    %1066 = vst [vmem:[#allocation2 + $0x48] sm:$0x1] 0.0
    %1067 = vst [vmem:[#allocation2 + $0x60] sm:$0x1] 0.0
    %1068 = vst [vmem:[#allocation2 + $0x78] sm:$0x1] 0.0
    %1069 = vst [vmem:[#allocation2 + $0x90] sm:$0x1] 0.0
    %1070 = vst [vmem:[#allocation2 + $0xa8] sm:$0x1] 0.0
    %1071 = vst [vmem:[#allocation2 + $0xc0] sm:$0x1] 0.0
    %1072 = vst [vmem:[#allocation2 + $0xd8] sm:$0x1] 0.0
    %1073 = vst [vmem:[#allocation2 + $0xf0] sm:$0x1] 0.0
    %1074 = vst [vmem:[#allocation2 + $0x108] sm:$0x1] 0.0
    %1075 = vst [vmem:[#allocation2 + $0x120] sm:$0x1] 0.0
    %1076 = vst [vmem:[#allocation2 + $0x138] sm:$0x1] 0.0
    %1077 = vst [vmem:[#allocation2 + $0x150] sm:$0x1] 0.0
    %1078 = vst [vmem:[#allocation2 + $0x168] sm:$0x1] 0.0
    %1079 = vst [vmem:[#allocation2 + $0x180] sm:$0x1] 0.0
    %1080 = vst [vmem:[#allocation2 + $0x198] sm:$0x1] 0.0
    %1081 = vst [vmem:[#allocation2 + $0x1b0] sm:$0x1] 0.0
    %1082 = vst [vmem:[#allocation2 + $0x1c8] sm:$0x1] 0.0
    %1083 = vst [vmem:[#allocation2 + $0x1e0] sm:$0x1] 0.0
    %1084 = vst [vmem:[#allocation2 + $0x1f8] sm:$0x1] 0.0
    %1085 = vst [vmem:[#allocation2 + $0x210] sm:$0x1] 0.0
    %1086 = vst [vmem:[#allocation2 + $0x228] sm:$0x1] 0.0
    %1087 = vst [vmem:[#allocation2 + $0x240] sm:$0x1] 0.0
    %1088 = vst [vmem:[#allocation2 + $0x258] sm:$0x1] 0.0
    %1089 = vst [vmem:[#allocation2 + $0x270] sm:$0x1] 0.0
    %1090 = vst [vmem:[#allocation2 + $0x288] sm:$0x1] 0.0
    %1091 = vst [vmem:[#allocation2 + $0x2a0] sm:$0x1] 0.0
    %1092 = vst [vmem:[#allocation2 + $0x2b8] sm:$0x1] 0.0
    %1093 = vst [vmem:[#allocation2 + $0x2d0] sm:$0x1] 0.0
    %1094 = vst [vmem:[#allocation2 + $0x2e8] sm:$0x1] 0.0
    %1095 = vst [vmem:[#allocation2 + $0x300] sm:$0x1] 0.0
    %1096 = vst [vmem:[#allocation2 + $0x318] sm:$0x1] 0.0
    %1097 = vst [vmem:[#allocation2 + $0x330] sm:$0x1] 0.0
    %1098 = vst [vmem:[#allocation2 + $0x348] sm:$0x1] 0.0
    %1099 = vst [vmem:[#allocation2 + $0x11] sm:$0x1] 0.0
    %1100 = vst [vmem:[#allocation2 + $0x29] sm:$0x1] 0.0
    %1101 = vst [vmem:[#allocation2 + $0x41] sm:$0x1] 0.0
    %1102 = vst [vmem:[#allocation2 + $0x59] sm:$0x1] 0.0
    %1103 = vst [vmem:[#allocation2 + $0x71] sm:$0x1] 0.0
    %1104 = vst [vmem:[#allocation2 + $0x89] sm:$0x1] 0.0
    %1105 = vst [vmem:[#allocation2 + $0xa1] sm:$0x1] 0.0
    %1106 = vst [vmem:[#allocation2 + $0xb9] sm:$0x1] 0.0
    %1107 = vst [vmem:[#allocation2 + $0xd1] sm:$0x1] 0.0
    %1108 = vst [vmem:[#allocation2 + $0xe9] sm:$0x1] 0.0
    %1109 = vst [vmem:[#allocation2 + $0x101] sm:$0x1] 0.0
    %1110 = vst [vmem:[#allocation2 + $0x119] sm:$0x1] 0.0
    %1111 = vst [vmem:[#allocation2 + $0x131] sm:$0x1] 0.0
    %1112 = vst [vmem:[#allocation2 + $0x149] sm:$0x1] 0.0
    %1113 = vst [vmem:[#allocation2 + $0x161] sm:$0x1] 0.0
    %1114 = vst [vmem:[#allocation2 + $0x179] sm:$0x1] 0.0
    %1115 = vst [vmem:[#allocation2 + $0x191] sm:$0x1] 0.0
    %1116 = vst [vmem:[#allocation2 + $0x1a9] sm:$0x1] 0.0
    %1117 = vst [vmem:[#allocation2 + $0x1c1] sm:$0x1] 0.0
    %1118 = vst [vmem:[#allocation2 + $0x1d9] sm:$0x1] 0.0
    %1119 = vst [vmem:[#allocation2 + $0x1f1] sm:$0x1] 0.0
    %1120 = vst [vmem:[#allocation2 + $0x209] sm:$0x1] 0.0
    %1121 = vst [vmem:[#allocation2 + $0x221] sm:$0x1] 0.0
    %1122 = vst [vmem:[#allocation2 + $0x239] sm:$0x1] 0.0
    %1123 = vst [vmem:[#allocation2 + $0x251] sm:$0x1] 0.0
    %1124 = vst [vmem:[#allocation2 + $0x269] sm:$0x1] 0.0
    %1125 = vst [vmem:[#allocation2 + $0x281] sm:$0x1] 0.0
    %1126 = vst [vmem:[#allocation2 + $0x299] sm:$0x1] 0.0
    %1127 = vst [vmem:[#allocation2 + $0x2b1] sm:$0x1] 0.0
    %1128 = vst [vmem:[#allocation2 + $0x2c9] sm:$0x1] 0.0
    %1129 = vst [vmem:[#allocation2 + $0x2e1] sm:$0x1] 0.0
    %1130 = vst [vmem:[#allocation2 + $0x2f9] sm:$0x1] 0.0
    %1131 = vst [vmem:[#allocation2 + $0x311] sm:$0x1] 0.0
    %1132 = vst [vmem:[#allocation2 + $0x329] sm:$0x1] 0.0
    %1133 = vst [vmem:[#allocation2 + $0x341] sm:$0x1] 0.0
    %1134 = vst [vmem:[#allocation2 + $0x359] sm:$0x1] 0.0
    %s1135 = scalar_lea.vmem [#allocation2], 24
    %1136 = vst [vmem:[%s1135 + $0x1] sm:$0xff] %v986
    %1137 = vst [vmem:[%s1135 + $0x9] sm:$0xff] %v987
    %1138 = vst [vmem:[%s1135 + $0x19] sm:$0xff] %v988
    %1139 = vst [vmem:[%s1135 + $0x21] sm:$0xff] %v989
    %1140 = vst [vmem:[%s1135 + $0x31] sm:$0xff] %v990
    %1141 = vst [vmem:[%s1135 + $0x39] sm:$0xff] %v991
    %1142 = vst [vmem:[%s1135 + $0x49] sm:$0xff] %v992
    %1143 = vst [vmem:[%s1135 + $0x51] sm:$0xff] %v993
    %1144 = vst [vmem:[%s1135 + $0x61] sm:$0xff] %v994
    %1145 = vst [vmem:[%s1135 + $0x69] sm:$0xff] %v995
    %1146 = vst [vmem:[%s1135 + $0x79] sm:$0xff] %v996
    %1147 = vst [vmem:[%s1135 + $0x81] sm:$0xff] %v997
    %1148 = vst [vmem:[%s1135 + $0x91] sm:$0xff] %v998
    %1149 = vst [vmem:[%s1135 + $0x99] sm:$0xff] %v999
    %1150 = vst [vmem:[%s1135 + $0xa9] sm:$0xff] %v1000
    %1151 = vst [vmem:[%s1135 + $0xb1] sm:$0xff] %v1001
    %1152 = vst [vmem:[%s1135 + $0xc1] sm:$0xff] %v1002
    %1153 = vst [vmem:[%s1135 + $0xc9] sm:$0xff] %v1003
    %1154 = vst [vmem:[%s1135 + $0xd9] sm:$0xff] %v1004
    %1155 = vst [vmem:[%s1135 + $0xe1] sm:$0xff] %v1005
    %1156 = vst [vmem:[%s1135 + $0xf1] sm:$0xff] %v1006
    %1157 = vst [vmem:[%s1135 + $0xf9] sm:$0xff] %v1007
    %1158 = vst [vmem:[%s1135 + $0x109] sm:$0xff] %v1008
    %1159 = vst [vmem:[%s1135 + $0x111] sm:$0xff] %v1009
    %1160 = vst [vmem:[%s1135 + $0x121] sm:$0xff] %v1010
    %1161 = vst [vmem:[%s1135 + $0x129] sm:$0xff] %v1011
    %1162 = vst [vmem:[%s1135 + $0x139] sm:$0xff] %v1012
    %1163 = vst [vmem:[%s1135 + $0x141] sm:$0xff] %v1013
    %1164 = vst [vmem:[%s1135 + $0x151] sm:$0xff] %v1014
    %1165 = vst [vmem:[%s1135 + $0x159] sm:$0xff] %v1015
    %1166 = vst [vmem:[%s1135 + $0x169] sm:$0xff] %v1016
    %1167 = vst [vmem:[%s1135 + $0x171] sm:$0xff] %v1017
    %1168 = vst [vmem:[%s1135 + $0x1b1] sm:$0xff] %v1018
    %1169 = vst [vmem:[%s1135 + $0x1b9] sm:$0xff] %v1019
    %1170 = vst [vmem:[%s1135 + $0x1c9] sm:$0xff] %v1020
    %1171 = vst [vmem:[%s1135 + $0x1d1] sm:$0xff] %v1021
    %1172 = vst [vmem:[%s1135 + $0x1e1] sm:$0xff] %v1022
    %1173 = vst [vmem:[%s1135 + $0x1e9] sm:$0xff] %v1023
    %1174 = vst [vmem:[%s1135 + $0x1f9] sm:$0xff] %v1024
    %1175 = vst [vmem:[%s1135 + $0x201] sm:$0xff] %v1025
    %1176 = vst [vmem:[%s1135 + $0x211] sm:$0xff] %v1026
    %1177 = vst [vmem:[%s1135 + $0x219] sm:$0xff] %v1027
    %1178 = vst [vmem:[%s1135 + $0x229] sm:$0xff] %v1028
    %1179 = vst [vmem:[%s1135 + $0x231] sm:$0xff] %v1029
    %1180 = vst [vmem:[%s1135 + $0x241] sm:$0xff] %v1030
    %1181 = vst [vmem:[%s1135 + $0x249] sm:$0xff] %v1031
    %1182 = vst [vmem:[%s1135 + $0x259] sm:$0xff] %v1032
    %1183 = vst [vmem:[%s1135 + $0x261] sm:$0xff] %v1033
    %1184 = vst [vmem:[%s1135 + $0x271] sm:$0xff] %v1034
    %1185 = vst [vmem:[%s1135 + $0x279] sm:$0xff] %v1035
    %1186 = vst [vmem:[%s1135 + $0x289] sm:$0xff] %v1036
    %1187 = vst [vmem:[%s1135 + $0x291] sm:$0xff] %v1037
    %1188 = vst [vmem:[%s1135 + $0x2a1] sm:$0xff] %v1038
    %1189 = vst [vmem:[%s1135 + $0x2a9] sm:$0xff] %v1039
    %1190 = vst [vmem:[%s1135 + $0x2b9] sm:$0xff] %v1040
    %1191 = vst [vmem:[%s1135 + $0x2c1] sm:$0xff] %v1041
    %1192 = vst [vmem:[%s1135 + $0x2d1] sm:$0xff] %v1042
    %1193 = vst [vmem:[%s1135 + $0x2d9] sm:$0xff] %v1043
    %1194 = vst [vmem:[%s1135 + $0x2e9] sm:$0xff] %v1044
    %1195 = vst [vmem:[%s1135 + $0x2f1] sm:$0xff] %v1045
    %1196 = vst [vmem:[%s1135 + $0x301] sm:$0xff] %v1046
    %1197 = vst [vmem:[%s1135 + $0x309] sm:$0xff] %v1047
    %1198 = vst [vmem:[%s1135 + $0x319] sm:$0xff] %v1048
    %1199 = vst [vmem:[%s1135 + $0x321] sm:$0xff] %v1049
    %v1200 = vld [vmem:[#allocation2] sm:$0xff]
    %v1201 = vld [vmem:[#allocation2 + $0x8] sm:$0xff]
    %v1202 = vld [vmem:[#allocation2 + $0x18] sm:$0xff]
    %v1203 = vld [vmem:[#allocation2 + $0x20] sm:$0xff]
    %v1204 = vld [vmem:[#allocation2 + $0x30] sm:$0xff]
    %v1205 = vld [vmem:[#allocation2 + $0x38] sm:$0xff]
    %v1206 = vld [vmem:[#allocation2 + $0x48] sm:$0xff]
    %v1207 = vld [vmem:[#allocation2 + $0x50] sm:$0xff]
    %v1208 = vld [vmem:[#allocation2 + $0x60] sm:$0xff]
    %v1209 = vld [vmem:[#allocation2 + $0x68] sm:$0xff]
    %v1210 = vld [vmem:[#allocation2 + $0x78] sm:$0xff]
    %v1211 = vld [vmem:[#allocation2 + $0x80] sm:$0xff]
    %v1212 = vld [vmem:[#allocation2 + $0x90] sm:$0xff]
    %v1213 = vld [vmem:[#allocation2 + $0x98] sm:$0xff]
    %v1214 = vld [vmem:[#allocation2 + $0xa8] sm:$0xff]
    %v1215 = vld [vmem:[#allocation2 + $0xb0] sm:$0xff]
    %v1216 = vld [vmem:[#allocation2 + $0xc0] sm:$0xff]
    %v1217 = vld [vmem:[#allocation2 + $0xc8] sm:$0xff]
    %v1218 = vld [vmem:[#allocation2 + $0xd8] sm:$0xff]
    %v1219 = vld [vmem:[#allocation2 + $0xe0] sm:$0xff]
    %v1220 = vld [vmem:[#allocation2 + $0xf0] sm:$0xff]
    %v1221 = vld [vmem:[#allocation2 + $0xf8] sm:$0xff]
    %v1222 = vld [vmem:[#allocation2 + $0x108] sm:$0xff]
    %v1223 = vld [vmem:[#allocation2 + $0x110] sm:$0xff]
    %v1224 = vld [vmem:[#allocation2 + $0x120] sm:$0xff]
    %v1225 = vld [vmem:[#allocation2 + $0x128] sm:$0xff]
    %v1226 = vld [vmem:[#allocation2 + $0x138] sm:$0xff]
    %v1227 = vld [vmem:[#allocation2 + $0x140] sm:$0xff]
    %v1228 = vld [vmem:[#allocation2 + $0x150] sm:$0xff]
    %v1229 = vld [vmem:[#allocation2 + $0x158] sm:$0xff]
    %v1230 = vld [vmem:[#allocation2 + $0x168] sm:$0xff]
    %v1231 = vld [vmem:[#allocation2 + $0x170] sm:$0xff]
    %v1232 = vld [vmem:[#allocation2 + $0x1b0] sm:$0xff]
    %v1233 = vld [vmem:[#allocation2 + $0x1b8] sm:$0xff]
    %v1234 = vld [vmem:[#allocation2 + $0x1c8] sm:$0xff]
    %v1235 = vld [vmem:[#allocation2 + $0x1d0] sm:$0xff]
    %v1236 = vld [vmem:[#allocation2 + $0x1e0] sm:$0xff]
    %v1237 = vld [vmem:[#allocation2 + $0x1e8] sm:$0xff]
    %v1238 = vld [vmem:[#allocation2 + $0x1f8] sm:$0xff]
    %v1239 = vld [vmem:[#allocation2 + $0x200] sm:$0xff]
    %v1240 = vld [vmem:[#allocation2 + $0x210] sm:$0xff]
    %v1241 = vld [vmem:[#allocation2 + $0x218] sm:$0xff]
    %v1242 = vld [vmem:[#allocation2 + $0x228] sm:$0xff]
    %v1243 = vld [vmem:[#allocation2 + $0x230] sm:$0xff]
    %v1244 = vld [vmem:[#allocation2 + $0x240] sm:$0xff]
    %v1245 = vld [vmem:[#allocation2 + $0x248] sm:$0xff]
    %v1246 = vld [vmem:[#allocation2 + $0x258] sm:$0xff]
    %v1247 = vld [vmem:[#allocation2 + $0x260] sm:$0xff]
    %v1248 = vld [vmem:[#allocation2 + $0x270] sm:$0xff]
    %v1249 = vld [vmem:[#allocation2 + $0x278] sm:$0xff]
    %v1250 = vld [vmem:[#allocation2 + $0x288] sm:$0xff]
    %v1251 = vld [vmem:[#allocation2 + $0x290] sm:$0xff]
    %v1252 = vld [vmem:[#allocation2 + $0x2a0] sm:$0xff]
    %v1253 = vld [vmem:[#allocation2 + $0x2a8] sm:$0xff]
    %v1254 = vld [vmem:[#allocation2 + $0x2b8] sm:$0xff]
    %v1255 = vld [vmem:[#allocation2 + $0x2c0] sm:$0xff]
    %v1256 = vld [vmem:[#allocation2 + $0x2d0] sm:$0xff]
    %v1257 = vld [vmem:[#allocation2 + $0x2d8] sm:$0xff]
    %v1258 = vld [vmem:[#allocation2 + $0x2e8] sm:$0xff]
    %v1259 = vld [vmem:[#allocation2 + $0x2f0] sm:$0xff]
    %v1260 = vld [vmem:[#allocation2 + $0x300] sm:$0xff]
    %v1261 = vld [vmem:[#allocation2 + $0x308] sm:$0xff]
    %v1262 = vld [vmem:[#allocation2 + $0x318] sm:$0xff]
    %v1263 = vld [vmem:[#allocation2 + $0x320] sm:$0xff]
    %v1264 = vpack.c.bf16 %v1200, %v1200
    %v1265 = vpack.c.bf16 %v1201, %v1201
    %v1266 = vpack.c.bf16 %v1202, %v1202
    %v1267 = vpack.c.bf16 %v1203, %v1203
    %v1268 = vpack.c.bf16 %v1204, %v1204
    %v1269 = vpack.c.bf16 %v1205, %v1205
    %v1270 = vpack.c.bf16 %v1206, %v1206
    %v1271 = vpack.c.bf16 %v1207, %v1207
    %v1272 = vpack.c.bf16 %v1208, %v1208
    %v1273 = vpack.c.bf16 %v1209, %v1209
    %v1274 = vpack.c.bf16 %v1210, %v1210
    %v1275 = vpack.c.bf16 %v1211, %v1211
    %v1276 = vpack.c.bf16 %v1212, %v1212
    %v1277 = vpack.c.bf16 %v1213, %v1213
    %v1278 = vpack.c.bf16 %v1214, %v1214
    %v1279 = vpack.c.bf16 %v1215, %v1215
    %v1280 = vpack.c.bf16 %v1216, %v1216
    %v1281 = vpack.c.bf16 %v1217, %v1217
    %v1282 = vpack.c.bf16 %v1218, %v1218
    %v1283 = vpack.c.bf16 %v1219, %v1219
    %v1284 = vpack.c.bf16 %v1220, %v1220
    %v1285 = vpack.c.bf16 %v1221, %v1221
    %v1286 = vpack.c.bf16 %v1222, %v1222
    %v1287 = vpack.c.bf16 %v1223, %v1223
    %v1288 = vpack.c.bf16 %v1224, %v1224
    %v1289 = vpack.c.bf16 %v1225, %v1225
    %v1290 = vpack.c.bf16 %v1226, %v1226
    %v1291 = vpack.c.bf16 %v1227, %v1227
    %v1292 = vpack.c.bf16 %v1228, %v1228
    %v1293 = vpack.c.bf16 %v1229, %v1229
    %v1294 = vpack.c.bf16 %v1230, %v1230
    %v1295 = vpack.c.bf16 %v1231, %v1231
    %v1296 = vpack.c.bf16 %v1232, %v1232
    %v1297 = vpack.c.bf16 %v1233, %v1233
    %v1298 = vpack.c.bf16 %v1234, %v1234
    %v1299 = vpack.c.bf16 %v1235, %v1235
    %v1300 = vpack.c.bf16 %v1236, %v1236
    %v1301 = vpack.c.bf16 %v1237, %v1237
    %v1302 = vpack.c.bf16 %v1238, %v1238
    %v1303 = vpack.c.bf16 %v1239, %v1239
    %v1304 = vpack.c.bf16 %v1240, %v1240
    %v1305 = vpack.c.bf16 %v1241, %v1241
    %v1306 = vpack.c.bf16 %v1242, %v1242
    %v1307 = vpack.c.bf16 %v1243, %v1243
    %v1308 = vpack.c.bf16 %v1244, %v1244
    %v1309 = vpack.c.bf16 %v1245, %v1245
    %v1310 = vpack.c.bf16 %v1246, %v1246
    %v1311 = vpack.c.bf16 %v1247, %v1247
    %v1312 = vpack.c.bf16 %v1248, %v1248
    %v1313 = vpack.c.bf16 %v1249, %v1249
    %v1314 = vpack.c.bf16 %v1250, %v1250
    %v1315 = vpack.c.bf16 %v1251, %v1251
    %v1316 = vpack.c.bf16 %v1252, %v1252
    %v1317 = vpack.c.bf16 %v1253, %v1253
    %v1318 = vpack.c.bf16 %v1254, %v1254
    %v1319 = vpack.c.bf16 %v1255, %v1255
    %v1320 = vpack.c.bf16 %v1256, %v1256
    %v1321 = vpack.c.bf16 %v1257, %v1257
    %v1322 = vpack.c.bf16 %v1258, %v1258
    %v1323 = vpack.c.bf16 %v1259, %v1259
    %v1324 = vpack.c.bf16 %v1260, %v1260
    %v1325 = vpack.c.bf16 %v1261, %v1261
    %v1326 = vpack.c.bf16 %v1262, %v1262
    %v1327 = vpack.c.bf16 %v1263, %v1263
    %1328 = vst [vmem:[#allocation3] sm:$0xf] %v1264
    %1329 = vst [vmem:[#allocation3 + $0x24] sm:$0xf] %v1265
    %1330 = vst [vmem:[#allocation3 + $0x48] sm:$0xf] %v1266
    %1331 = vst [vmem:[#allocation3 + $0x6c] sm:$0xf] %v1267
    %1332 = vst [vmem:[#allocation3 + $0x90] sm:$0xf] %v1268
    %1333 = vst [vmem:[#allocation3 + $0xb4] sm:$0xf] %v1269
    %1334 = vst [vmem:[#allocation3 + $0xd8] sm:$0xf] %v1270
    %1335 = vst [vmem:[#allocation3 + $0xfc] sm:$0xf] %v1271
    %1336 = vst [vmem:[#allocation3 + $0x120] sm:$0xf] %v1272
    %1337 = vst [vmem:[#allocation3 + $0x144] sm:$0xf] %v1273
    %1338 = vst [vmem:[#allocation3 + $0x168] sm:$0xf] %v1274
    %1339 = vst [vmem:[#allocation3 + $0x18c] sm:$0xf] %v1275
    %1340 = vst [vmem:[#allocation3 + $0x1b0] sm:$0xf] %v1276
    %1341 = vst [vmem:[#allocation3 + $0x1d4] sm:$0xf] %v1277
    %1342 = vst [vmem:[#allocation3 + $0x1f8] sm:$0xf] %v1278
    %1343 = vst [vmem:[#allocation3 + $0x21c] sm:$0xf] %v1279
    %1344 = vst [vmem:[#allocation3 + $0x240] sm:$0xf] %v1280
    %1345 = vst [vmem:[#allocation3 + $0x264] sm:$0xf] %v1281
    %1346 = vst [vmem:[#allocation3 + $0x288] sm:$0xf] %v1282
    %1347 = vst [vmem:[#allocation3 + $0x2ac] sm:$0xf] %v1283
    %1348 = vst [vmem:[#allocation3 + $0x2d0] sm:$0xf] %v1284
    %1349 = vst [vmem:[#allocation3 + $0x2f4] sm:$0xf] %v1285
    %1350 = vst [vmem:[#allocation3 + $0x318] sm:$0xf] %v1286
    %1351 = vst [vmem:[#allocation3 + $0x33c] sm:$0xf] %v1287
    %1352 = vst [vmem:[#allocation3 + $0x360] sm:$0xf] %v1288
    %1353 = vst [vmem:[#allocation3 + $0x384] sm:$0xf] %v1289
    %1354 = vst [vmem:[#allocation3 + $0x3a8] sm:$0xf] %v1290
    %1355 = vst [vmem:[#allocation3 + $0x3cc] sm:$0xf] %v1291
    %1356 = vst [vmem:[#allocation3 + $0x3f0] sm:$0xf] %v1292
    %1357 = vst [vmem:[#allocation3 + $0x414] sm:$0xf] %v1293
    %1358 = vst [vmem:[#allocation3 + $0x438] sm:$0xf] %v1294
    %1359 = vst [vmem:[#allocation3 + $0x45c] sm:$0xf] %v1295
    %1360 = vst [vmem:[#allocation3 + $0x480] sm:$0xf] %v1296
    %1361 = vst [vmem:[#allocation3 + $0x4a4] sm:$0xf] %v1297
    %1362 = vst [vmem:[#allocation3 + $0x4c8] sm:$0xf] %v1298
    %1363 = vst [vmem:[#allocation3 + $0x4ec] sm:$0xf] %v1299
    %1364 = vst [vmem:[#allocation3 + $0x510] sm:$0xf] %v1300
    %1365 = vst [vmem:[#allocation3 + $0x534] sm:$0xf] %v1301
    %1366 = vst [vmem:[#allocation3 + $0x558] sm:$0xf] %v1302
    %1367 = vst [vmem:[#allocation3 + $0x57c] sm:$0xf] %v1303
    %1368 = vst [vmem:[#allocation3 + $0x5a0] sm:$0xf] %v1304
    %1369 = vst [vmem:[#allocation3 + $0x5c4] sm:$0xf] %v1305
    %1370 = vst [vmem:[#allocation3 + $0x5e8] sm:$0xf] %v1306
    %1371 = vst [vmem:[#allocation3 + $0x60c] sm:$0xf] %v1307
    %1372 = vst [vmem:[#allocation3 + $0x630] sm:$0xf] %v1308
    %1373 = vst [vmem:[#allocation3 + $0x654] sm:$0xf] %v1309
    %1374 = vst [vmem:[#allocation3 + $0x678] sm:$0xf] %v1310
    %1375 = vst [vmem:[#allocation3 + $0x69c] sm:$0xf] %v1311
    %1376 = vst [vmem:[#allocation3 + $0x6c0] sm:$0xf] %v1312
    %1377 = vst [vmem:[#allocation3 + $0x6e4] sm:$0xf] %v1313
    %1378 = vst [vmem:[#allocation3 + $0x708] sm:$0xf] %v1314
    %1379 = vst [vmem:[#allocation3 + $0x72c] sm:$0xf] %v1315
    %1380 = vst [vmem:[#allocation3 + $0x750] sm:$0xf] %v1316
    %1381 = vst [vmem:[#allocation3 + $0x774] sm:$0xf] %v1317
    %1382 = vst [vmem:[#allocation3 + $0x798] sm:$0xf] %v1318
    %1383 = vst [vmem:[#allocation3 + $0x7bc] sm:$0xf] %v1319
    %1384 = vst [vmem:[#allocation3 + $0x7e0] sm:$0xf] %v1320
    %1385 = vst [vmem:[#allocation3 + $0x804] sm:$0xf] %v1321
    %1386 = vst [vmem:[#allocation3 + $0x828] sm:$0xf] %v1322
    %1387 = vst [vmem:[#allocation3 + $0x84c] sm:$0xf] %v1323
    %1388 = vst [vmem:[#allocation3 + $0x870] sm:$0xf] %v1324
    %1389 = vst [vmem:[#allocation3 + $0x894] sm:$0xf] %v1325
    %1390 = vst [vmem:[#allocation3 + $0x8b8] sm:$0xf] %v1326
    %1391 = vst [vmem:[#allocation3 + $0x8dc] sm:$0xf] %v1327
    %v1392 = vld [vmem:[#allocation2 + $0x1] sm:$0xff]
    %v1393 = vld [vmem:[#allocation2 + $0x9] sm:$0xff]
    %v1394 = vld [vmem:[#allocation2 + $0x19] sm:$0xff]
    %v1395 = vld [vmem:[#allocation2 + $0x21] sm:$0xff]
    %v1396 = vld [vmem:[#allocation2 + $0x31] sm:$0xff]
    %v1397 = vld [vmem:[#allocation2 + $0x39] sm:$0xff]
    %v1398 = vld [vmem:[#allocation2 + $0x49] sm:$0xff]
    %v1399 = vld [vmem:[#allocation2 + $0x51] sm:$0xff]
    %v1400 = vld [vmem:[#allocation2 + $0x61] sm:$0xff]
    %v1401 = vld [vmem:[#allocation2 + $0x69] sm:$0xff]
    %v1402 = vld [vmem:[#allocation2 + $0x79] sm:$0xff]
    %v1403 = vld [vmem:[#allocation2 + $0x81] sm:$0xff]
    %v1404 = vld [vmem:[#allocation2 + $0x91] sm:$0xff]
    %v1405 = vld [vmem:[#allocation2 + $0x99] sm:$0xff]
    %v1406 = vld [vmem:[#allocation2 + $0xa9] sm:$0xff]
    %v1407 = vld [vmem:[#allocation2 + $0xb1] sm:$0xff]
    %v1408 = vld [vmem:[#allocation2 + $0xc1] sm:$0xff]
    %v1409 = vld [vmem:[#allocation2 + $0xc9] sm:$0xff]
    %v1410 = vld [vmem:[#allocation2 + $0xd9] sm:$0xff]
    %v1411 = vld [vmem:[#allocation2 + $0xe1] sm:$0xff]
    %v1412 = vld [vmem:[#allocation2 + $0xf1] sm:$0xff]
    %v1413 = vld [vmem:[#allocation2 + $0xf9] sm:$0xff]
    %v1414 = vld [vmem:[#allocation2 + $0x109] sm:$0xff]
    %v1415 = vld [vmem:[#allocation2 + $0x111] sm:$0xff]
    %v1416 = vld [vmem:[#allocation2 + $0x121] sm:$0xff]
    %v1417 = vld [vmem:[#allocation2 + $0x129] sm:$0xff]
    %v1418 = vld [vmem:[#allocation2 + $0x139] sm:$0xff]
    %v1419 = vld [vmem:[#allocation2 + $0x141] sm:$0xff]
    %v1420 = vld [vmem:[#allocation2 + $0x151] sm:$0xff]
    %v1421 = vld [vmem:[#allocation2 + $0x159] sm:$0xff]
    %v1422 = vld [vmem:[#allocation2 + $0x169] sm:$0xff]
    %v1423 = vld [vmem:[#allocation2 + $0x171] sm:$0xff]
    %v1424 = vld [vmem:[#allocation2 + $0x1b1] sm:$0xff]
    %v1425 = vld [vmem:[#allocation2 + $0x1b9] sm:$0xff]
    %v1426 = vld [vmem:[#allocation2 + $0x1c9] sm:$0xff]
    %v1427 = vld [vmem:[#allocation2 + $0x1d1] sm:$0xff]
    %v1428 = vld [vmem:[#allocation2 + $0x1e1] sm:$0xff]
    %v1429 = vld [vmem:[#allocation2 + $0x1e9] sm:$0xff]
    %v1430 = vld [vmem:[#allocation2 + $0x1f9] sm:$0xff]
    %v1431 = vld [vmem:[#allocation2 + $0x201] sm:$0xff]
    %v1432 = vld [vmem:[#allocation2 + $0x211] sm:$0xff]
    %v1433 = vld [vmem:[#allocation2 + $0x219] sm:$0xff]
    %v1434 = vld [vmem:[#allocation2 + $0x229] sm:$0xff]
    %v1435 = vld [vmem:[#allocation2 + $0x231] sm:$0xff]
    %v1436 = vld [vmem:[#allocation2 + $0x241] sm:$0xff]
    %v1437 = vld [vmem:[#allocation2 + $0x249] sm:$0xff]
    %v1438 = vld [vmem:[#allocation2 + $0x259] sm:$0xff]
    %v1439 = vld [vmem:[#allocation2 + $0x261] sm:$0xff]
    %v1440 = vld [vmem:[#allocation2 + $0x271] sm:$0xff]
    %v1441 = vld [vmem:[#allocation2 + $0x279] sm:$0xff]
    %v1442 = vld [vmem:[#allocation2 + $0x289] sm:$0xff]
    %v1443 = vld [vmem:[#allocation2 + $0x291] sm:$0xff]
    %v1444 = vld [vmem:[#allocation2 + $0x2a1] sm:$0xff]
    %v1445 = vld [vmem:[#allocation2 + $0x2a9] sm:$0xff]
    %v1446 = vld [vmem:[#allocation2 + $0x2b9] sm:$0xff]
    %v1447 = vld [vmem:[#allocation2 + $0x2c1] sm:$0xff]
    %v1448 = vld [vmem:[#allocation2 + $0x2d1] sm:$0xff]
    %v1449 = vld [vmem:[#allocation2 + $0x2d9] sm:$0xff]
    %v1450 = vld [vmem:[#allocation2 + $0x2e9] sm:$0xff]
    %v1451 = vld [vmem:[#allocation2 + $0x2f1] sm:$0xff]
    %v1452 = vld [vmem:[#allocation2 + $0x301] sm:$0xff]
    %v1453 = vld [vmem:[#allocation2 + $0x309] sm:$0xff]
    %v1454 = vld [vmem:[#allocation2 + $0x319] sm:$0xff]
    %v1455 = vld [vmem:[#allocation2 + $0x321] sm:$0xff]
    %v1456 = vpack.c.bf16 %v1392, %v1392
    %v1457 = vpack.c.bf16 %v1393, %v1393
    %v1458 = vpack.c.bf16 %v1394, %v1394
    %v1459 = vpack.c.bf16 %v1395, %v1395
    %v1460 = vpack.c.bf16 %v1396, %v1396
    %v1461 = vpack.c.bf16 %v1397, %v1397
    %v1462 = vpack.c.bf16 %v1398, %v1398
    %v1463 = vpack.c.bf16 %v1399, %v1399
    %v1464 = vpack.c.bf16 %v1400, %v1400
    %v1465 = vpack.c.bf16 %v1401, %v1401
    %v1466 = vpack.c.bf16 %v1402, %v1402
    %v1467 = vpack.c.bf16 %v1403, %v1403
    %v1468 = vpack.c.bf16 %v1404, %v1404
    %v1469 = vpack.c.bf16 %v1405, %v1405
    %v1470 = vpack.c.bf16 %v1406, %v1406
    %v1471 = vpack.c.bf16 %v1407, %v1407
    %v1472 = vpack.c.bf16 %v1408, %v1408
    %v1473 = vpack.c.bf16 %v1409, %v1409
    %v1474 = vpack.c.bf16 %v1410, %v1410
    %v1475 = vpack.c.bf16 %v1411, %v1411
    %v1476 = vpack.c.bf16 %v1412, %v1412
    %v1477 = vpack.c.bf16 %v1413, %v1413
    %v1478 = vpack.c.bf16 %v1414, %v1414
    %v1479 = vpack.c.bf16 %v1415, %v1415
    %v1480 = vpack.c.bf16 %v1416, %v1416
    %v1481 = vpack.c.bf16 %v1417, %v1417
    %v1482 = vpack.c.bf16 %v1418, %v1418
    %v1483 = vpack.c.bf16 %v1419, %v1419
    %v1484 = vpack.c.bf16 %v1420, %v1420
    %v1485 = vpack.c.bf16 %v1421, %v1421
    %v1486 = vpack.c.bf16 %v1422, %v1422
    %v1487 = vpack.c.bf16 %v1423, %v1423
    %v1488 = vpack.c.bf16 %v1424, %v1424
    %v1489 = vpack.c.bf16 %v1425, %v1425
    %v1490 = vpack.c.bf16 %v1426, %v1426
    %v1491 = vpack.c.bf16 %v1427, %v1427
    %v1492 = vpack.c.bf16 %v1428, %v1428
    %v1493 = vpack.c.bf16 %v1429, %v1429
    %v1494 = vpack.c.bf16 %v1430, %v1430
    %v1495 = vpack.c.bf16 %v1431, %v1431
    %v1496 = vpack.c.bf16 %v1432, %v1432
    %v1497 = vpack.c.bf16 %v1433, %v1433
    %v1498 = vpack.c.bf16 %v1434, %v1434
    %v1499 = vpack.c.bf16 %v1435, %v1435
    %v1500 = vpack.c.bf16 %v1436, %v1436
    %v1501 = vpack.c.bf16 %v1437, %v1437
    %v1502 = vpack.c.bf16 %v1438, %v1438
    %v1503 = vpack.c.bf16 %v1439, %v1439
    %v1504 = vpack.c.bf16 %v1440, %v1440
    %v1505 = vpack.c.bf16 %v1441, %v1441
    %v1506 = vpack.c.bf16 %v1442, %v1442
    %v1507 = vpack.c.bf16 %v1443, %v1443
    %v1508 = vpack.c.bf16 %v1444, %v1444
    %v1509 = vpack.c.bf16 %v1445, %v1445
    %v1510 = vpack.c.bf16 %v1446, %v1446
    %v1511 = vpack.c.bf16 %v1447, %v1447
    %v1512 = vpack.c.bf16 %v1448, %v1448
    %v1513 = vpack.c.bf16 %v1449, %v1449
    %v1514 = vpack.c.bf16 %v1450, %v1450
    %v1515 = vpack.c.bf16 %v1451, %v1451
    %v1516 = vpack.c.bf16 %v1452, %v1452
    %v1517 = vpack.c.bf16 %v1453, %v1453
    %v1518 = vpack.c.bf16 %v1454, %v1454
    %v1519 = vpack.c.bf16 %v1455, %v1455
    %1520 = vst [vmem:[#allocation3 + $0x4] sm:$0xf] %v1456
    %1521 = vst [vmem:[#allocation3 + $0x28] sm:$0xf] %v1457
    %1522 = vst [vmem:[#allocation3 + $0x4c] sm:$0xf] %v1458
    %1523 = vst [vmem:[#allocation3 + $0x70] sm:$0xf] %v1459
    %1524 = vst [vmem:[#allocation3 + $0x94] sm:$0xf] %v1460
    %1525 = vst [vmem:[#allocation3 + $0xb8] sm:$0xf] %v1461
    %1526 = vst [vmem:[#allocation3 + $0xdc] sm:$0xf] %v1462
    %1527 = vst [vmem:[#allocation3 + $0x100] sm:$0xf] %v1463
    %1528 = vst [vmem:[#allocation3 + $0x124] sm:$0xf] %v1464
    %1529 = vst [vmem:[#allocation3 + $0x148] sm:$0xf] %v1465
    %1530 = vst [vmem:[#allocation3 + $0x16c] sm:$0xf] %v1466
    %1531 = vst [vmem:[#allocation3 + $0x190] sm:$0xf] %v1467
    %1532 = vst [vmem:[#allocation3 + $0x1b4] sm:$0xf] %v1468
    %1533 = vst [vmem:[#allocation3 + $0x1d8] sm:$0xf] %v1469
    %1534 = vst [vmem:[#allocation3 + $0x1fc] sm:$0xf] %v1470
    %1535 = vst [vmem:[#allocation3 + $0x220] sm:$0xf] %v1471
    %1536 = vst [vmem:[#allocation3 + $0x244] sm:$0xf] %v1472
    %1537 = vst [vmem:[#allocation3 + $0x268] sm:$0xf] %v1473
    %1538 = vst [vmem:[#allocation3 + $0x28c] sm:$0xf] %v1474
    %1539 = vst [vmem:[#allocation3 + $0x2b0] sm:$0xf] %v1475
    %1540 = vst [vmem:[#allocation3 + $0x2d4] sm:$0xf] %v1476
    %1541 = vst [vmem:[#allocation3 + $0x2f8] sm:$0xf] %v1477
    %1542 = vst [vmem:[#allocation3 + $0x31c] sm:$0xf] %v1478
    %1543 = vst [vmem:[#allocation3 + $0x340] sm:$0xf] %v1479
    %1544 = vst [vmem:[#allocation3 + $0x364] sm:$0xf] %v1480
    %1545 = vst [vmem:[#allocation3 + $0x388] sm:$0xf] %v1481
    %1546 = vst [vmem:[#allocation3 + $0x3ac] sm:$0xf] %v1482
    %1547 = vst [vmem:[#allocation3 + $0x3d0] sm:$0xf] %v1483
    %1548 = vst [vmem:[#allocation3 + $0x3f4] sm:$0xf] %v1484
    %1549 = vst [vmem:[#allocation3 + $0x418] sm:$0xf] %v1485
    %1550 = vst [vmem:[#allocation3 + $0x43c] sm:$0xf] %v1486
    %1551 = vst [vmem:[#allocation3 + $0x460] sm:$0xf] %v1487
    %1552 = vst [vmem:[#allocation3 + $0x484] sm:$0xf] %v1488
    %1553 = vst [vmem:[#allocation3 + $0x4a8] sm:$0xf] %v1489
    %1554 = vst [vmem:[#allocation3 + $0x4cc] sm:$0xf] %v1490
    %1555 = vst [vmem:[#allocation3 + $0x4f0] sm:$0xf] %v1491
    %1556 = vst [vmem:[#allocation3 + $0x514] sm:$0xf] %v1492
    %1557 = vst [vmem:[#allocation3 + $0x538] sm:$0xf] %v1493
    %1558 = vst [vmem:[#allocation3 + $0x55c] sm:$0xf] %v1494
    %1559 = vst [vmem:[#allocation3 + $0x580] sm:$0xf] %v1495
    %1560 = vst [vmem:[#allocation3 + $0x5a4] sm:$0xf] %v1496
    %1561 = vst [vmem:[#allocation3 + $0x5c8] sm:$0xf] %v1497
    %1562 = vst [vmem:[#allocation3 + $0x5ec] sm:$0xf] %v1498
    %1563 = vst [vmem:[#allocation3 + $0x610] sm:$0xf] %v1499
    %1564 = vst [vmem:[#allocation3 + $0x634] sm:$0xf] %v1500
    %1565 = vst [vmem:[#allocation3 + $0x658] sm:$0xf] %v1501
    %1566 = vst [vmem:[#allocation3 + $0x67c] sm:$0xf] %v1502
    %1567 = vst [vmem:[#allocation3 + $0x6a0] sm:$0xf] %v1503
    %1568 = vst [vmem:[#allocation3 + $0x6c4] sm:$0xf] %v1504
    %1569 = vst [vmem:[#allocation3 + $0x6e8] sm:$0xf] %v1505
    %1570 = vst [vmem:[#allocation3 + $0x70c] sm:$0xf] %v1506
    %1571 = vst [vmem:[#allocation3 + $0x730] sm:$0xf] %v1507
    %1572 = vst [vmem:[#allocation3 + $0x754] sm:$0xf] %v1508
    %1573 = vst [vmem:[#allocation3 + $0x778] sm:$0xf] %v1509
    %1574 = vst [vmem:[#allocation3 + $0x79c] sm:$0xf] %v1510
    %1575 = vst [vmem:[#allocation3 + $0x7c0] sm:$0xf] %v1511
    %1576 = vst [vmem:[#allocation3 + $0x7e4] sm:$0xf] %v1512
    %1577 = vst [vmem:[#allocation3 + $0x808] sm:$0xf] %v1513
    %1578 = vst [vmem:[#allocation3 + $0x82c] sm:$0xf] %v1514
    %1579 = vst [vmem:[#allocation3 + $0x850] sm:$0xf] %v1515
    %1580 = vst [vmem:[#allocation3 + $0x874] sm:$0xf] %v1516
    %1581 = vst [vmem:[#allocation3 + $0x898] sm:$0xf] %v1517
    %1582 = vst [vmem:[#allocation3 + $0x8bc] sm:$0xf] %v1518
    %1583 = vst [vmem:[#allocation3 + $0x8e0] sm:$0xf] %v1519
    %v1584 = vld [vmem:[#allocation2 + $0x2] sm:$0xff]
    %v1585 = vld [vmem:[#allocation2 + $0xa] sm:$0xff]
    %v1586 = vld [vmem:[#allocation2 + $0x1a] sm:$0xff]
    %v1587 = vld [vmem:[#allocation2 + $0x22] sm:$0xff]
    %v1588 = vld [vmem:[#allocation2 + $0x32] sm:$0xff]
    %v1589 = vld [vmem:[#allocation2 + $0x3a] sm:$0xff]
    %v1590 = vld [vmem:[#allocation2 + $0x4a] sm:$0xff]
    %v1591 = vld [vmem:[#allocation2 + $0x52] sm:$0xff]
    %v1592 = vld [vmem:[#allocation2 + $0x62] sm:$0xff]
    %v1593 = vld [vmem:[#allocation2 + $0x6a] sm:$0xff]
    %v1594 = vld [vmem:[#allocation2 + $0x7a] sm:$0xff]
    %v1595 = vld [vmem:[#allocation2 + $0x82] sm:$0xff]
    %v1596 = vld [vmem:[#allocation2 + $0x92] sm:$0xff]
    %v1597 = vld [vmem:[#allocation2 + $0x9a] sm:$0xff]
    %v1598 = vld [vmem:[#allocation2 + $0xaa] sm:$0xff]
    %v1599 = vld [vmem:[#allocation2 + $0xb2] sm:$0xff]
    %v1600 = vld [vmem:[#allocation2 + $0xc2] sm:$0xff]
    %v1601 = vld [vmem:[#allocation2 + $0xca] sm:$0xff]
    %v1602 = vld [vmem:[#allocation2 + $0xda] sm:$0xff]
    %v1603 = vld [vmem:[#allocation2 + $0xe2] sm:$0xff]
    %v1604 = vld [vmem:[#allocation2 + $0xf2] sm:$0xff]
    %v1605 = vld [vmem:[#allocation2 + $0xfa] sm:$0xff]
    %v1606 = vld [vmem:[#allocation2 + $0x10a] sm:$0xff]
    %v1607 = vld [vmem:[#allocation2 + $0x112] sm:$0xff]
    %v1608 = vld [vmem:[#allocation2 + $0x122] sm:$0xff]
    %v1609 = vld [vmem:[#allocation2 + $0x12a] sm:$0xff]
    %v1610 = vld [vmem:[#allocation2 + $0x13a] sm:$0xff]
    %v1611 = vld [vmem:[#allocation2 + $0x142] sm:$0xff]
    %v1612 = vld [vmem:[#allocation2 + $0x152] sm:$0xff]
    %v1613 = vld [vmem:[#allocation2 + $0x15a] sm:$0xff]
    %v1614 = vld [vmem:[#allocation2 + $0x16a] sm:$0xff]
    %v1615 = vld [vmem:[#allocation2 + $0x172] sm:$0xff]
    %v1616 = vld [vmem:[#allocation2 + $0x1b2] sm:$0xff]
    %v1617 = vld [vmem:[#allocation2 + $0x1ba] sm:$0xff]
    %v1618 = vld [vmem:[#allocation2 + $0x1ca] sm:$0xff]
    %v1619 = vld [vmem:[#allocation2 + $0x1d2] sm:$0xff]
    %v1620 = vld [vmem:[#allocation2 + $0x1e2] sm:$0xff]
    %v1621 = vld [vmem:[#allocation2 + $0x1ea] sm:$0xff]
    %v1622 = vld [vmem:[#allocation2 + $0x1fa] sm:$0xff]
    %v1623 = vld [vmem:[#allocation2 + $0x202] sm:$0xff]
    %v1624 = vld [vmem:[#allocation2 + $0x212] sm:$0xff]
    %v1625 = vld [vmem:[#allocation2 + $0x21a] sm:$0xff]
    %v1626 = vld [vmem:[#allocation2 + $0x22a] sm:$0xff]
    %v1627 = vld [vmem:[#allocation2 + $0x232] sm:$0xff]
    %v1628 = vld [vmem:[#allocation2 + $0x242] sm:$0xff]
    %v1629 = vld [vmem:[#allocation2 + $0x24a] sm:$0xff]
    %v1630 = vld [vmem:[#allocation2 + $0x25a] sm:$0xff]
    %v1631 = vld [vmem:[#allocation2 + $0x262] sm:$0xff]
    %v1632 = vld [vmem:[#allocation2 + $0x272] sm:$0xff]
    %v1633 = vld [vmem:[#allocation2 + $0x27a] sm:$0xff]
    %v1634 = vld [vmem:[#allocation2 + $0x28a] sm:$0xff]
    %v1635 = vld [vmem:[#allocation2 + $0x292] sm:$0xff]
    %v1636 = vld [vmem:[#allocation2 + $0x2a2] sm:$0xff]
    %v1637 = vld [vmem:[#allocation2 + $0x2aa] sm:$0xff]
    %v1638 = vld [vmem:[#allocation2 + $0x2ba] sm:$0xff]
    %v1639 = vld [vmem:[#allocation2 + $0x2c2] sm:$0xff]
    %v1640 = vld [vmem:[#allocation2 + $0x2d2] sm:$0xff]
    %v1641 = vld [vmem:[#allocation2 + $0x2da] sm:$0xff]
    %v1642 = vld [vmem:[#allocation2 + $0x2ea] sm:$0xff]
    %v1643 = vld [vmem:[#allocation2 + $0x2f2] sm:$0xff]
    %v1644 = vld [vmem:[#allocation2 + $0x302] sm:$0xff]
    %v1645 = vld [vmem:[#allocation2 + $0x30a] sm:$0xff]
    %v1646 = vld [vmem:[#allocation2 + $0x31a] sm:$0xff]
    %v1647 = vld [vmem:[#allocation2 + $0x322] sm:$0xff]
    %v1648 = vpack.c.bf16 %v1584, %v1584
    %v1649 = vpack.c.bf16 %v1585, %v1585
    %v1650 = vpack.c.bf16 %v1586, %v1586
    %v1651 = vpack.c.bf16 %v1587, %v1587
    %v1652 = vpack.c.bf16 %v1588, %v1588
    %v1653 = vpack.c.bf16 %v1589, %v1589
    %v1654 = vpack.c.bf16 %v1590, %v1590
    %v1655 = vpack.c.bf16 %v1591, %v1591
    %v1656 = vpack.c.bf16 %v1592, %v1592
    %v1657 = vpack.c.bf16 %v1593, %v1593
    %v1658 = vpack.c.bf16 %v1594, %v1594
    %v1659 = vpack.c.bf16 %v1595, %v1595
    %v1660 = vpack.c.bf16 %v1596, %v1596
    %v1661 = vpack.c.bf16 %v1597, %v1597
    %v1662 = vpack.c.bf16 %v1598, %v1598
    %v1663 = vpack.c.bf16 %v1599, %v1599
    %v1664 = vpack.c.bf16 %v1600, %v1600
    %v1665 = vpack.c.bf16 %v1601, %v1601
    %v1666 = vpack.c.bf16 %v1602, %v1602
    %v1667 = vpack.c.bf16 %v1603, %v1603
    %v1668 = vpack.c.bf16 %v1604, %v1604
    %v1669 = vpack.c.bf16 %v1605, %v1605
    %v1670 = vpack.c.bf16 %v1606, %v1606
    %v1671 = vpack.c.bf16 %v1607, %v1607
    %v1672 = vpack.c.bf16 %v1608, %v1608
    %v1673 = vpack.c.bf16 %v1609, %v1609
    %v1674 = vpack.c.bf16 %v1610, %v1610
    %v1675 = vpack.c.bf16 %v1611, %v1611
    %v1676 = vpack.c.bf16 %v1612, %v1612
    %v1677 = vpack.c.bf16 %v1613, %v1613
    %v1678 = vpack.c.bf16 %v1614, %v1614
    %v1679 = vpack.c.bf16 %v1615, %v1615
    %v1680 = vpack.c.bf16 %v1616, %v1616
    %v1681 = vpack.c.bf16 %v1617, %v1617
    %v1682 = vpack.c.bf16 %v1618, %v1618
    %v1683 = vpack.c.bf16 %v1619, %v1619
    %v1684 = vpack.c.bf16 %v1620, %v1620
    %v1685 = vpack.c.bf16 %v1621, %v1621
    %v1686 = vpack.c.bf16 %v1622, %v1622
    %v1687 = vpack.c.bf16 %v1623, %v1623
    %v1688 = vpack.c.bf16 %v1624, %v1624
    %v1689 = vpack.c.bf16 %v1625, %v1625
    %v1690 = vpack.c.bf16 %v1626, %v1626
    %v1691 = vpack.c.bf16 %v1627, %v1627
    %v1692 = vpack.c.bf16 %v1628, %v1628
    %v1693 = vpack.c.bf16 %v1629, %v1629
    %v1694 = vpack.c.bf16 %v1630, %v1630
    %v1695 = vpack.c.bf16 %v1631, %v1631
    %v1696 = vpack.c.bf16 %v1632, %v1632
    %v1697 = vpack.c.bf16 %v1633, %v1633
    %v1698 = vpack.c.bf16 %v1634, %v1634
    %v1699 = vpack.c.bf16 %v1635, %v1635
    %v1700 = vpack.c.bf16 %v1636, %v1636
    %v1701 = vpack.c.bf16 %v1637, %v1637
    %v1702 = vpack.c.bf16 %v1638, %v1638
    %v1703 = vpack.c.bf16 %v1639, %v1639
    %v1704 = vpack.c.bf16 %v1640, %v1640
    %v1705 = vpack.c.bf16 %v1641, %v1641
    %v1706 = vpack.c.bf16 %v1642, %v1642
    %v1707 = vpack.c.bf16 %v1643, %v1643
    %v1708 = vpack.c.bf16 %v1644, %v1644
    %v1709 = vpack.c.bf16 %v1645, %v1645
    %v1710 = vpack.c.bf16 %v1646, %v1646
    %v1711 = vpack.c.bf16 %v1647, %v1647
    %1712 = vst [vmem:[#allocation3 + $0x8] sm:$0xf] %v1648
    %1713 = vst [vmem:[#allocation3 + $0x2c] sm:$0xf] %v1649
    %1714 = vst [vmem:[#allocation3 + $0x50] sm:$0xf] %v1650
    %1715 = vst [vmem:[#allocation3 + $0x74] sm:$0xf] %v1651
    %1716 = vst [vmem:[#allocation3 + $0x98] sm:$0xf] %v1652
    %1717 = vst [vmem:[#allocation3 + $0xbc] sm:$0xf] %v1653
    %1718 = vst [vmem:[#allocation3 + $0xe0] sm:$0xf] %v1654
    %1719 = vst [vmem:[#allocation3 + $0x104] sm:$0xf] %v1655
    %1720 = vst [vmem:[#allocation3 + $0x128] sm:$0xf] %v1656
    %1721 = vst [vmem:[#allocation3 + $0x14c] sm:$0xf] %v1657
    %1722 = vst [vmem:[#allocation3 + $0x170] sm:$0xf] %v1658
    %1723 = vst [vmem:[#allocation3 + $0x194] sm:$0xf] %v1659
    %1724 = vst [vmem:[#allocation3 + $0x1b8] sm:$0xf] %v1660
    %1725 = vst [vmem:[#allocation3 + $0x1dc] sm:$0xf] %v1661
    %1726 = vst [vmem:[#allocation3 + $0x200] sm:$0xf] %v1662
    %1727 = vst [vmem:[#allocation3 + $0x224] sm:$0xf] %v1663
    %1728 = vst [vmem:[#allocation3 + $0x248] sm:$0xf] %v1664
    %1729 = vst [vmem:[#allocation3 + $0x26c] sm:$0xf] %v1665
    %1730 = vst [vmem:[#allocation3 + $0x290] sm:$0xf] %v1666
    %1731 = vst [vmem:[#allocation3 + $0x2b4] sm:$0xf] %v1667
    %1732 = vst [vmem:[#allocation3 + $0x2d8] sm:$0xf] %v1668
    %1733 = vst [vmem:[#allocation3 + $0x2fc] sm:$0xf] %v1669
    %1734 = vst [vmem:[#allocation3 + $0x320] sm:$0xf] %v1670
    %1735 = vst [vmem:[#allocation3 + $0x344] sm:$0xf] %v1671
    %1736 = vst [vmem:[#allocation3 + $0x368] sm:$0xf] %v1672
    %1737 = vst [vmem:[#allocation3 + $0x38c] sm:$0xf] %v1673
    %1738 = vst [vmem:[#allocation3 + $0x3b0] sm:$0xf] %v1674
    %1739 = vst [vmem:[#allocation3 + $0x3d4] sm:$0xf] %v1675
    %1740 = vst [vmem:[#allocation3 + $0x3f8] sm:$0xf] %v1676
    %1741 = vst [vmem:[#allocation3 + $0x41c] sm:$0xf] %v1677
    %1742 = vst [vmem:[#allocation3 + $0x440] sm:$0xf] %v1678
    %1743 = vst [vmem:[#allocation3 + $0x464] sm:$0xf] %v1679
    %1744 = vst [vmem:[#allocation3 + $0x488] sm:$0xf] %v1680
    %1745 = vst [vmem:[#allocation3 + $0x4ac] sm:$0xf] %v1681
    %1746 = vst [vmem:[#allocation3 + $0x4d0] sm:$0xf] %v1682
    %1747 = vst [vmem:[#allocation3 + $0x4f4] sm:$0xf] %v1683
    %1748 = vst [vmem:[#allocation3 + $0x518] sm:$0xf] %v1684
    %1749 = vst [vmem:[#allocation3 + $0x53c] sm:$0xf] %v1685
    %1750 = vst [vmem:[#allocation3 + $0x560] sm:$0xf] %v1686
    %1751 = vst [vmem:[#allocation3 + $0x584] sm:$0xf] %v1687
    %1752 = vst [vmem:[#allocation3 + $0x5a8] sm:$0xf] %v1688
    %1753 = vst [vmem:[#allocation3 + $0x5cc] sm:$0xf] %v1689
    %1754 = vst [vmem:[#allocation3 + $0x5f0] sm:$0xf] %v1690
    %1755 = vst [vmem:[#allocation3 + $0x614] sm:$0xf] %v1691
    %1756 = vst [vmem:[#allocation3 + $0x638] sm:$0xf] %v1692
    %1757 = vst [vmem:[#allocation3 + $0x65c] sm:$0xf] %v1693
    %1758 = vst [vmem:[#allocation3 + $0x680] sm:$0xf] %v1694
    %1759 = vst [vmem:[#allocation3 + $0x6a4] sm:$0xf] %v1695
    %1760 = vst [vmem:[#allocation3 + $0x6c8] sm:$0xf] %v1696
    %1761 = vst [vmem:[#allocation3 + $0x6ec] sm:$0xf] %v1697
    %1762 = vst [vmem:[#allocation3 + $0x710] sm:$0xf] %v1698
    %1763 = vst [vmem:[#allocation3 + $0x734] sm:$0xf] %v1699
    %1764 = vst [vmem:[#allocation3 + $0x758] sm:$0xf] %v1700
    %1765 = vst [vmem:[#allocation3 + $0x77c] sm:$0xf] %v1701
    %1766 = vst [vmem:[#allocation3 + $0x7a0] sm:$0xf] %v1702
    %1767 = vst [vmem:[#allocation3 + $0x7c4] sm:$0xf] %v1703
    %1768 = vst [vmem:[#allocation3 + $0x7e8] sm:$0xf] %v1704
    %1769 = vst [vmem:[#allocation3 + $0x80c] sm:$0xf] %v1705
    %1770 = vst [vmem:[#allocation3 + $0x830] sm:$0xf] %v1706
    %1771 = vst [vmem:[#allocation3 + $0x854] sm:$0xf] %v1707
    %1772 = vst [vmem:[#allocation3 + $0x878] sm:$0xf] %v1708
    %1773 = vst [vmem:[#allocation3 + $0x89c] sm:$0xf] %v1709
    %1774 = vst [vmem:[#allocation3 + $0x8c0] sm:$0xf] %v1710
    %1775 = vst [vmem:[#allocation3 + $0x8e4] sm:$0xf] %v1711
    %v1776 = vld [vmem:[%s1135] sm:$0xff]
    %v1777 = vld [vmem:[%s1135 + $0x8] sm:$0xff]
    %v1778 = vld [vmem:[%s1135 + $0x18] sm:$0xff]
    %v1779 = vld [vmem:[%s1135 + $0x20] sm:$0xff]
    %v1780 = vld [vmem:[%s1135 + $0x30] sm:$0xff]
    %v1781 = vld [vmem:[%s1135 + $0x38] sm:$0xff]
    %v1782 = vld [vmem:[%s1135 + $0x48] sm:$0xff]
    %v1783 = vld [vmem:[%s1135 + $0x50] sm:$0xff]
    %v1784 = vld [vmem:[%s1135 + $0x60] sm:$0xff]
    %v1785 = vld [vmem:[%s1135 + $0x68] sm:$0xff]
    %v1786 = vld [vmem:[%s1135 + $0x78] sm:$0xff]
    %v1787 = vld [vmem:[%s1135 + $0x80] sm:$0xff]
    %v1788 = vld [vmem:[%s1135 + $0x90] sm:$0xff]
    %v1789 = vld [vmem:[%s1135 + $0x98] sm:$0xff]
    %v1790 = vld [vmem:[%s1135 + $0xa8] sm:$0xff]
    %v1791 = vld [vmem:[%s1135 + $0xb0] sm:$0xff]
    %v1792 = vld [vmem:[%s1135 + $0xc0] sm:$0xff]
    %v1793 = vld [vmem:[%s1135 + $0xc8] sm:$0xff]
    %v1794 = vld [vmem:[%s1135 + $0xd8] sm:$0xff]
    %v1795 = vld [vmem:[%s1135 + $0xe0] sm:$0xff]
    %v1796 = vld [vmem:[%s1135 + $0xf0] sm:$0xff]
    %v1797 = vld [vmem:[%s1135 + $0xf8] sm:$0xff]
    %v1798 = vld [vmem:[%s1135 + $0x108] sm:$0xff]
    %v1799 = vld [vmem:[%s1135 + $0x110] sm:$0xff]
    %v1800 = vld [vmem:[%s1135 + $0x120] sm:$0xff]
    %v1801 = vld [vmem:[%s1135 + $0x128] sm:$0xff]
    %v1802 = vld [vmem:[%s1135 + $0x138] sm:$0xff]
    %v1803 = vld [vmem:[%s1135 + $0x140] sm:$0xff]
    %v1804 = vld [vmem:[%s1135 + $0x150] sm:$0xff]
    %v1805 = vld [vmem:[%s1135 + $0x158] sm:$0xff]
    %v1806 = vld [vmem:[%s1135 + $0x168] sm:$0xff]
    %v1807 = vld [vmem:[%s1135 + $0x170] sm:$0xff]
    %v1808 = vld [vmem:[%s1135 + $0x1b0] sm:$0xff]
    %v1809 = vld [vmem:[%s1135 + $0x1b8] sm:$0xff]
    %v1810 = vld [vmem:[%s1135 + $0x1c8] sm:$0xff]
    %v1811 = vld [vmem:[%s1135 + $0x1d0] sm:$0xff]
    %v1812 = vld [vmem:[%s1135 + $0x1e0] sm:$0xff]
    %v1813 = vld [vmem:[%s1135 + $0x1e8] sm:$0xff]
    %v1814 = vld [vmem:[%s1135 + $0x1f8] sm:$0xff]
    %v1815 = vld [vmem:[%s1135 + $0x200] sm:$0xff]
    %v1816 = vld [vmem:[%s1135 + $0x210] sm:$0xff]
    %v1817 = vld [vmem:[%s1135 + $0x218] sm:$0xff]
    %v1818 = vld [vmem:[%s1135 + $0x228] sm:$0xff]
    %v1819 = vld [vmem:[%s1135 + $0x230] sm:$0xff]
    %v1820 = vld [vmem:[%s1135 + $0x240] sm:$0xff]
    %v1821 = vld [vmem:[%s1135 + $0x248] sm:$0xff]
    %v1822 = vld [vmem:[%s1135 + $0x258] sm:$0xff]
    %v1823 = vld [vmem:[%s1135 + $0x260] sm:$0xff]
    %v1824 = vld [vmem:[%s1135 + $0x270] sm:$0xff]
    %v1825 = vld [vmem:[%s1135 + $0x278] sm:$0xff]
    %v1826 = vld [vmem:[%s1135 + $0x288] sm:$0xff]
    %v1827 = vld [vmem:[%s1135 + $0x290] sm:$0xff]
    %v1828 = vld [vmem:[%s1135 + $0x2a0] sm:$0xff]
    %v1829 = vld [vmem:[%s1135 + $0x2a8] sm:$0xff]
    %v1830 = vld [vmem:[%s1135 + $0x2b8] sm:$0xff]
    %v1831 = vld [vmem:[%s1135 + $0x2c0] sm:$0xff]
    %v1832 = vld [vmem:[%s1135 + $0x2d0] sm:$0xff]
    %v1833 = vld [vmem:[%s1135 + $0x2d8] sm:$0xff]
    %v1834 = vld [vmem:[%s1135 + $0x2e8] sm:$0xff]
    %v1835 = vld [vmem:[%s1135 + $0x2f0] sm:$0xff]
    %v1836 = vld [vmem:[%s1135 + $0x300] sm:$0xff]
    %v1837 = vld [vmem:[%s1135 + $0x308] sm:$0xff]
    %v1838 = vld [vmem:[%s1135 + $0x318] sm:$0xff]
    %v1839 = vld [vmem:[%s1135 + $0x320] sm:$0xff]
    %v1840 = vpack.c.bf16 %v1776, %v1776
    %v1841 = vpack.c.bf16 %v1777, %v1777
    %v1842 = vpack.c.bf16 %v1778, %v1778
    %v1843 = vpack.c.bf16 %v1779, %v1779
    %v1844 = vpack.c.bf16 %v1780, %v1780
    %v1845 = vpack.c.bf16 %v1781, %v1781
    %v1846 = vpack.c.bf16 %v1782, %v1782
    %v1847 = vpack.c.bf16 %v1783, %v1783
    %v1848 = vpack.c.bf16 %v1784, %v1784
    %v1849 = vpack.c.bf16 %v1785, %v1785
    %v1850 = vpack.c.bf16 %v1786, %v1786
    %v1851 = vpack.c.bf16 %v1787, %v1787
    %v1852 = vpack.c.bf16 %v1788, %v1788
    %v1853 = vpack.c.bf16 %v1789, %v1789
    %v1854 = vpack.c.bf16 %v1790, %v1790
    %v1855 = vpack.c.bf16 %v1791, %v1791
    %v1856 = vpack.c.bf16 %v1792, %v1792
    %v1857 = vpack.c.bf16 %v1793, %v1793
    %v1858 = vpack.c.bf16 %v1794, %v1794
    %v1859 = vpack.c.bf16 %v1795, %v1795
    %v1860 = vpack.c.bf16 %v1796, %v1796
    %v1861 = vpack.c.bf16 %v1797, %v1797
    %v1862 = vpack.c.bf16 %v1798, %v1798
    %v1863 = vpack.c.bf16 %v1799, %v1799
    %v1864 = vpack.c.bf16 %v1800, %v1800
    %v1865 = vpack.c.bf16 %v1801, %v1801
    %v1866 = vpack.c.bf16 %v1802, %v1802
    %v1867 = vpack.c.bf16 %v1803, %v1803
    %v1868 = vpack.c.bf16 %v1804, %v1804
    %v1869 = vpack.c.bf16 %v1805, %v1805
    %v1870 = vpack.c.bf16 %v1806, %v1806
    %v1871 = vpack.c.bf16 %v1807, %v1807
    %v1872 = vpack.c.bf16 %v1808, %v1808
    %v1873 = vpack.c.bf16 %v1809, %v1809
    %v1874 = vpack.c.bf16 %v1810, %v1810
    %v1875 = vpack.c.bf16 %v1811, %v1811
    %v1876 = vpack.c.bf16 %v1812, %v1812
    %v1877 = vpack.c.bf16 %v1813, %v1813
    %v1878 = vpack.c.bf16 %v1814, %v1814
    %v1879 = vpack.c.bf16 %v1815, %v1815
    %v1880 = vpack.c.bf16 %v1816, %v1816
    %v1881 = vpack.c.bf16 %v1817, %v1817
    %v1882 = vpack.c.bf16 %v1818, %v1818
    %v1883 = vpack.c.bf16 %v1819, %v1819
    %v1884 = vpack.c.bf16 %v1820, %v1820
    %v1885 = vpack.c.bf16 %v1821, %v1821
    %v1886 = vpack.c.bf16 %v1822, %v1822
    %v1887 = vpack.c.bf16 %v1823, %v1823
    %v1888 = vpack.c.bf16 %v1824, %v1824
    %v1889 = vpack.c.bf16 %v1825, %v1825
    %v1890 = vpack.c.bf16 %v1826, %v1826
    %v1891 = vpack.c.bf16 %v1827, %v1827
    %v1892 = vpack.c.bf16 %v1828, %v1828
    %v1893 = vpack.c.bf16 %v1829, %v1829
    %v1894 = vpack.c.bf16 %v1830, %v1830
    %v1895 = vpack.c.bf16 %v1831, %v1831
    %v1896 = vpack.c.bf16 %v1832, %v1832
    %v1897 = vpack.c.bf16 %v1833, %v1833
    %v1898 = vpack.c.bf16 %v1834, %v1834
    %v1899 = vpack.c.bf16 %v1835, %v1835
    %v1900 = vpack.c.bf16 %v1836, %v1836
    %v1901 = vpack.c.bf16 %v1837, %v1837
    %v1902 = vpack.c.bf16 %v1838, %v1838
    %v1903 = vpack.c.bf16 %v1839, %v1839
    %1904 = vst [vmem:[#allocation3 + $0xc] sm:$0xf] %v1840
    %1905 = vst [vmem:[#allocation3 + $0x30] sm:$0xf] %v1841
    %1906 = vst [vmem:[#allocation3 + $0x54] sm:$0xf] %v1842
    %1907 = vst [vmem:[#allocation3 + $0x78] sm:$0xf] %v1843
    %1908 = vst [vmem:[#allocation3 + $0x9c] sm:$0xf] %v1844
    %1909 = vst [vmem:[#allocation3 + $0xc0] sm:$0xf] %v1845
    %1910 = vst [vmem:[#allocation3 + $0xe4] sm:$0xf] %v1846
    %1911 = vst [vmem:[#allocation3 + $0x108] sm:$0xf] %v1847
    %1912 = vst [vmem:[#allocation3 + $0x12c] sm:$0xf] %v1848
    %1913 = vst [vmem:[#allocation3 + $0x150] sm:$0xf] %v1849
    %1914 = vst [vmem:[#allocation3 + $0x174] sm:$0xf] %v1850
    %1915 = vst [vmem:[#allocation3 + $0x198] sm:$0xf] %v1851
    %1916 = vst [vmem:[#allocation3 + $0x1bc] sm:$0xf] %v1852
    %1917 = vst [vmem:[#allocation3 + $0x1e0] sm:$0xf] %v1853
    %1918 = vst [vmem:[#allocation3 + $0x204] sm:$0xf] %v1854
    %1919 = vst [vmem:[#allocation3 + $0x228] sm:$0xf] %v1855
    %1920 = vst [vmem:[#allocation3 + $0x24c] sm:$0xf] %v1856
    %1921 = vst [vmem:[#allocation3 + $0x270] sm:$0xf] %v1857
    %1922 = vst [vmem:[#allocation3 + $0x294] sm:$0xf] %v1858
    %1923 = vst [vmem:[#allocation3 + $0x2b8] sm:$0xf] %v1859
    %1924 = vst [vmem:[#allocation3 + $0x2dc] sm:$0xf] %v1860
    %1925 = vst [vmem:[#allocation3 + $0x300] sm:$0xf] %v1861
    %1926 = vst [vmem:[#allocation3 + $0x324] sm:$0xf] %v1862
    %1927 = vst [vmem:[#allocation3 + $0x348] sm:$0xf] %v1863
    %1928 = vst [vmem:[#allocation3 + $0x36c] sm:$0xf] %v1864
    %1929 = vst [vmem:[#allocation3 + $0x390] sm:$0xf] %v1865
    %1930 = vst [vmem:[#allocation3 + $0x3b4] sm:$0xf] %v1866
    %1931 = vst [vmem:[#allocation3 + $0x3d8] sm:$0xf] %v1867
    %1932 = vst [vmem:[#allocation3 + $0x3fc] sm:$0xf] %v1868
    %1933 = vst [vmem:[#allocation3 + $0x420] sm:$0xf] %v1869
    %1934 = vst [vmem:[#allocation3 + $0x444] sm:$0xf] %v1870
    %1935 = vst [vmem:[#allocation3 + $0x468] sm:$0xf] %v1871
    %1936 = vst [vmem:[#allocation3 + $0x48c] sm:$0xf] %v1872
    %1937 = vst [vmem:[#allocation3 + $0x4b0] sm:$0xf] %v1873
    %1938 = vst [vmem:[#allocation3 + $0x4d4] sm:$0xf] %v1874
    %1939 = vst [vmem:[#allocation3 + $0x4f8] sm:$0xf] %v1875
    %1940 = vst [vmem:[#allocation3 + $0x51c] sm:$0xf] %v1876
    %1941 = vst [vmem:[#allocation3 + $0x540] sm:$0xf] %v1877
    %1942 = vst [vmem:[#allocation3 + $0x564] sm:$0xf] %v1878
    %1943 = vst [vmem:[#allocation3 + $0x588] sm:$0xf] %v1879
    %1944 = vst [vmem:[#allocation3 + $0x5ac] sm:$0xf] %v1880
    %1945 = vst [vmem:[#allocation3 + $0x5d0] sm:$0xf] %v1881
    %1946 = vst [vmem:[#allocation3 + $0x5f4] sm:$0xf] %v1882
    %1947 = vst [vmem:[#allocation3 + $0x618] sm:$0xf] %v1883
    %1948 = vst [vmem:[#allocation3 + $0x63c] sm:$0xf] %v1884
    %1949 = vst [vmem:[#allocation3 + $0x660] sm:$0xf] %v1885
    %1950 = vst [vmem:[#allocation3 + $0x684] sm:$0xf] %v1886
    %1951 = vst [vmem:[#allocation3 + $0x6a8] sm:$0xf] %v1887
    %1952 = vst [vmem:[#allocation3 + $0x6cc] sm:$0xf] %v1888
    %1953 = vst [vmem:[#allocation3 + $0x6f0] sm:$0xf] %v1889
    %1954 = vst [vmem:[#allocation3 + $0x714] sm:$0xf] %v1890
    %1955 = vst [vmem:[#allocation3 + $0x738] sm:$0xf] %v1891
    %1956 = vst [vmem:[#allocation3 + $0x75c] sm:$0xf] %v1892
    %1957 = vst [vmem:[#allocation3 + $0x780] sm:$0xf] %v1893
    %1958 = vst [vmem:[#allocation3 + $0x7a4] sm:$0xf] %v1894
    %1959 = vst [vmem:[#allocation3 + $0x7c8] sm:$0xf] %v1895
    %1960 = vst [vmem:[#allocation3 + $0x7ec] sm:$0xf] %v1896
    %1961 = vst [vmem:[#allocation3 + $0x810] sm:$0xf] %v1897
    %1962 = vst [vmem:[#allocation3 + $0x834] sm:$0xf] %v1898
    %1963 = vst [vmem:[#allocation3 + $0x858] sm:$0xf] %v1899
    %1964 = vst [vmem:[#allocation3 + $0x87c] sm:$0xf] %v1900
    %1965 = vst [vmem:[#allocation3 + $0x8a0] sm:$0xf] %v1901
    %1966 = vst [vmem:[#allocation3 + $0x8c4] sm:$0xf] %v1902
    %1967 = vst [vmem:[#allocation3 + $0x8e8] sm:$0xf] %v1903
    %v1968 = vld [vmem:[%s1135 + $0x1] sm:$0xff]
    %v1969 = vld [vmem:[%s1135 + $0x9] sm:$0xff]
    %v1970 = vld [vmem:[%s1135 + $0x19] sm:$0xff]
    %v1971 = vld [vmem:[%s1135 + $0x21] sm:$0xff]
    %v1972 = vld [vmem:[%s1135 + $0x31] sm:$0xff]
    %v1973 = vld [vmem:[%s1135 + $0x39] sm:$0xff]
    %v1974 = vld [vmem:[%s1135 + $0x49] sm:$0xff]
    %v1975 = vld [vmem:[%s1135 + $0x51] sm:$0xff]
    %v1976 = vld [vmem:[%s1135 + $0x61] sm:$0xff]
    %v1977 = vld [vmem:[%s1135 + $0x69] sm:$0xff]
    %v1978 = vld [vmem:[%s1135 + $0x79] sm:$0xff]
    %v1979 = vld [vmem:[%s1135 + $0x81] sm:$0xff]
    %v1980 = vld [vmem:[%s1135 + $0x91] sm:$0xff]
    %v1981 = vld [vmem:[%s1135 + $0x99] sm:$0xff]
    %v1982 = vld [vmem:[%s1135 + $0xa9] sm:$0xff]
    %v1983 = vld [vmem:[%s1135 + $0xb1] sm:$0xff]
    %v1984 = vld [vmem:[%s1135 + $0xc1] sm:$0xff]
    %v1985 = vld [vmem:[%s1135 + $0xc9] sm:$0xff]
    %v1986 = vld [vmem:[%s1135 + $0xd9] sm:$0xff]
    %v1987 = vld [vmem:[%s1135 + $0xe1] sm:$0xff]
    %v1988 = vld [vmem:[%s1135 + $0xf1] sm:$0xff]
    %v1989 = vld [vmem:[%s1135 + $0xf9] sm:$0xff]
    %v1990 = vld [vmem:[%s1135 + $0x109] sm:$0xff]
    %v1991 = vld [vmem:[%s1135 + $0x111] sm:$0xff]
    %v1992 = vld [vmem:[%s1135 + $0x121] sm:$0xff]
    %v1993 = vld [vmem:[%s1135 + $0x129] sm:$0xff]
    %v1994 = vld [vmem:[%s1135 + $0x139] sm:$0xff]
    %v1995 = vld [vmem:[%s1135 + $0x141] sm:$0xff]
    %v1996 = vld [vmem:[%s1135 + $0x151] sm:$0xff]
    %v1997 = vld [vmem:[%s1135 + $0x159] sm:$0xff]
    %v1998 = vld [vmem:[%s1135 + $0x169] sm:$0xff]
    %v1999 = vld [vmem:[%s1135 + $0x171] sm:$0xff]
    %v2000 = vld [vmem:[%s1135 + $0x1b1] sm:$0xff]
    %v2001 = vld [vmem:[%s1135 + $0x1b9] sm:$0xff]
    %v2002 = vld [vmem:[%s1135 + $0x1c9] sm:$0xff]
    %v2003 = vld [vmem:[%s1135 + $0x1d1] sm:$0xff]
    %v2004 = vld [vmem:[%s1135 + $0x1e1] sm:$0xff]
    %v2005 = vld [vmem:[%s1135 + $0x1e9] sm:$0xff]
    %v2006 = vld [vmem:[%s1135 + $0x1f9] sm:$0xff]
    %v2007 = vld [vmem:[%s1135 + $0x201] sm:$0xff]
    %v2008 = vld [vmem:[%s1135 + $0x211] sm:$0xff]
    %v2009 = vld [vmem:[%s1135 + $0x219] sm:$0xff]
    %v2010 = vld [vmem:[%s1135 + $0x229] sm:$0xff]
    %v2011 = vld [vmem:[%s1135 + $0x231] sm:$0xff]
    %v2012 = vld [vmem:[%s1135 + $0x241] sm:$0xff]
    %v2013 = vld [vmem:[%s1135 + $0x249] sm:$0xff]
    %v2014 = vld [vmem:[%s1135 + $0x259] sm:$0xff]
    %v2015 = vld [vmem:[%s1135 + $0x261] sm:$0xff]
    %v2016 = vld [vmem:[%s1135 + $0x271] sm:$0xff]
    %v2017 = vld [vmem:[%s1135 + $0x279] sm:$0xff]
    %v2018 = vld [vmem:[%s1135 + $0x289] sm:$0xff]
    %v2019 = vld [vmem:[%s1135 + $0x291] sm:$0xff]
    %v2020 = vld [vmem:[%s1135 + $0x2a1] sm:$0xff]
    %v2021 = vld [vmem:[%s1135 + $0x2a9] sm:$0xff]
    %v2022 = vld [vmem:[%s1135 + $0x2b9] sm:$0xff]
    %v2023 = vld [vmem:[%s1135 + $0x2c1] sm:$0xff]
    %v2024 = vld [vmem:[%s1135 + $0x2d1] sm:$0xff]
    %v2025 = vld [vmem:[%s1135 + $0x2d9] sm:$0xff]
    %v2026 = vld [vmem:[%s1135 + $0x2e9] sm:$0xff]
    %v2027 = vld [vmem:[%s1135 + $0x2f1] sm:$0xff]
    %v2028 = vld [vmem:[%s1135 + $0x301] sm:$0xff]
    %v2029 = vld [vmem:[%s1135 + $0x309] sm:$0xff]
    %v2030 = vld [vmem:[%s1135 + $0x319] sm:$0xff]
    %v2031 = vld [vmem:[%s1135 + $0x321] sm:$0xff]
    %v2032 = vpack.c.bf16 %v1968, %v1968
    %v2033 = vpack.c.bf16 %v1969, %v1969
    %v2034 = vpack.c.bf16 %v1970, %v1970
    %v2035 = vpack.c.bf16 %v1971, %v1971
    %v2036 = vpack.c.bf16 %v1972, %v1972
    %v2037 = vpack.c.bf16 %v1973, %v1973
    %v2038 = vpack.c.bf16 %v1974, %v1974
    %v2039 = vpack.c.bf16 %v1975, %v1975
    %v2040 = vpack.c.bf16 %v1976, %v1976
    %v2041 = vpack.c.bf16 %v1977, %v1977
    %v2042 = vpack.c.bf16 %v1978, %v1978
    %v2043 = vpack.c.bf16 %v1979, %v1979
    %v2044 = vpack.c.bf16 %v1980, %v1980
    %v2045 = vpack.c.bf16 %v1981, %v1981
    %v2046 = vpack.c.bf16 %v1982, %v1982
    %v2047 = vpack.c.bf16 %v1983, %v1983
    %v2048 = vpack.c.bf16 %v1984, %v1984
    %v2049 = vpack.c.bf16 %v1985, %v1985
    %v2050 = vpack.c.bf16 %v1986, %v1986
    %v2051 = vpack.c.bf16 %v1987, %v1987
    %v2052 = vpack.c.bf16 %v1988, %v1988
    %v2053 = vpack.c.bf16 %v1989, %v1989
    %v2054 = vpack.c.bf16 %v1990, %v1990
    %v2055 = vpack.c.bf16 %v1991, %v1991
    %v2056 = vpack.c.bf16 %v1992, %v1992
    %v2057 = vpack.c.bf16 %v1993, %v1993
    %v2058 = vpack.c.bf16 %v1994, %v1994
    %v2059 = vpack.c.bf16 %v1995, %v1995
    %v2060 = vpack.c.bf16 %v1996, %v1996
    %v2061 = vpack.c.bf16 %v1997, %v1997
    %v2062 = vpack.c.bf16 %v1998, %v1998
    %v2063 = vpack.c.bf16 %v1999, %v1999
    %v2064 = vpack.c.bf16 %v2000, %v2000
    %v2065 = vpack.c.bf16 %v2001, %v2001
    %v2066 = vpack.c.bf16 %v2002, %v2002
    %v2067 = vpack.c.bf16 %v2003, %v2003
    %v2068 = vpack.c.bf16 %v2004, %v2004
    %v2069 = vpack.c.bf16 %v2005, %v2005
    %v2070 = vpack.c.bf16 %v2006, %v2006
    %v2071 = vpack.c.bf16 %v2007, %v2007
    %v2072 = vpack.c.bf16 %v2008, %v2008
    %v2073 = vpack.c.bf16 %v2009, %v2009
    %v2074 = vpack.c.bf16 %v2010, %v2010
    %v2075 = vpack.c.bf16 %v2011, %v2011
    %v2076 = vpack.c.bf16 %v2012, %v2012
    %v2077 = vpack.c.bf16 %v2013, %v2013
    %v2078 = vpack.c.bf16 %v2014, %v2014
    %v2079 = vpack.c.bf16 %v2015, %v2015
    %v2080 = vpack.c.bf16 %v2016, %v2016
    %v2081 = vpack.c.bf16 %v2017, %v2017
    %v2082 = vpack.c.bf16 %v2018, %v2018
    %v2083 = vpack.c.bf16 %v2019, %v2019
    %v2084 = vpack.c.bf16 %v2020, %v2020
    %v2085 = vpack.c.bf16 %v2021, %v2021
    %v2086 = vpack.c.bf16 %v2022, %v2022
    %v2087 = vpack.c.bf16 %v2023, %v2023
    %v2088 = vpack.c.bf16 %v2024, %v2024
    %v2089 = vpack.c.bf16 %v2025, %v2025
    %v2090 = vpack.c.bf16 %v2026, %v2026
    %v2091 = vpack.c.bf16 %v2027, %v2027
    %v2092 = vpack.c.bf16 %v2028, %v2028
    %v2093 = vpack.c.bf16 %v2029, %v2029
    %v2094 = vpack.c.bf16 %v2030, %v2030
    %v2095 = vpack.c.bf16 %v2031, %v2031
    %2096 = vst [vmem:[#allocation3 + $0x10] sm:$0xf] %v2032
    %2097 = vst [vmem:[#allocation3 + $0x34] sm:$0xf] %v2033
    %2098 = vst [vmem:[#allocation3 + $0x58] sm:$0xf] %v2034
    %2099 = vst [vmem:[#allocation3 + $0x7c] sm:$0xf] %v2035
    %2100 = vst [vmem:[#allocation3 + $0xa0] sm:$0xf] %v2036
    %2101 = vst [vmem:[#allocation3 + $0xc4] sm:$0xf] %v2037
    %2102 = vst [vmem:[#allocation3 + $0xe8] sm:$0xf] %v2038
    %2103 = vst [vmem:[#allocation3 + $0x10c] sm:$0xf] %v2039
    %2104 = vst [vmem:[#allocation3 + $0x130] sm:$0xf] %v2040
    %2105 = vst [vmem:[#allocation3 + $0x154] sm:$0xf] %v2041
    %2106 = vst [vmem:[#allocation3 + $0x178] sm:$0xf] %v2042
    %2107 = vst [vmem:[#allocation3 + $0x19c] sm:$0xf] %v2043
    %2108 = vst [vmem:[#allocation3 + $0x1c0] sm:$0xf] %v2044
    %2109 = vst [vmem:[#allocation3 + $0x1e4] sm:$0xf] %v2045
    %2110 = vst [vmem:[#allocation3 + $0x208] sm:$0xf] %v2046
    %2111 = vst [vmem:[#allocation3 + $0x22c] sm:$0xf] %v2047
    %2112 = vst [vmem:[#allocation3 + $0x250] sm:$0xf] %v2048
    %2113 = vst [vmem:[#allocation3 + $0x274] sm:$0xf] %v2049
    %2114 = vst [vmem:[#allocation3 + $0x298] sm:$0xf] %v2050
    %2115 = vst [vmem:[#allocation3 + $0x2bc] sm:$0xf] %v2051
    %2116 = vst [vmem:[#allocation3 + $0x2e0] sm:$0xf] %v2052
    %2117 = vst [vmem:[#allocation3 + $0x304] sm:$0xf] %v2053
    %2118 = vst [vmem:[#allocation3 + $0x328] sm:$0xf] %v2054
    %2119 = vst [vmem:[#allocation3 + $0x34c] sm:$0xf] %v2055
    %2120 = vst [vmem:[#allocation3 + $0x370] sm:$0xf] %v2056
    %2121 = vst [vmem:[#allocation3 + $0x394] sm:$0xf] %v2057
    %2122 = vst [vmem:[#allocation3 + $0x3b8] sm:$0xf] %v2058
    %2123 = vst [vmem:[#allocation3 + $0x3dc] sm:$0xf] %v2059
    %2124 = vst [vmem:[#allocation3 + $0x400] sm:$0xf] %v2060
    %2125 = vst [vmem:[#allocation3 + $0x424] sm:$0xf] %v2061
    %2126 = vst [vmem:[#allocation3 + $0x448] sm:$0xf] %v2062
    %2127 = vst [vmem:[#allocation3 + $0x46c] sm:$0xf] %v2063
    %2128 = vst [vmem:[#allocation3 + $0x490] sm:$0xf] %v2064
    %2129 = vst [vmem:[#allocation3 + $0x4b4] sm:$0xf] %v2065
    %2130 = vst [vmem:[#allocation3 + $0x4d8] sm:$0xf] %v2066
    %2131 = vst [vmem:[#allocation3 + $0x4fc] sm:$0xf] %v2067
    %2132 = vst [vmem:[#allocation3 + $0x520] sm:$0xf] %v2068
    %2133 = vst [vmem:[#allocation3 + $0x544] sm:$0xf] %v2069
    %2134 = vst [vmem:[#allocation3 + $0x568] sm:$0xf] %v2070
    %2135 = vst [vmem:[#allocation3 + $0x58c] sm:$0xf] %v2071
    %2136 = vst [vmem:[#allocation3 + $0x5b0] sm:$0xf] %v2072
    %2137 = vst [vmem:[#allocation3 + $0x5d4] sm:$0xf] %v2073
    %2138 = vst [vmem:[#allocation3 + $0x5f8] sm:$0xf] %v2074
    %2139 = vst [vmem:[#allocation3 + $0x61c] sm:$0xf] %v2075
    %2140 = vst [vmem:[#allocation3 + $0x640] sm:$0xf] %v2076
    %2141 = vst [vmem:[#allocation3 + $0x664] sm:$0xf] %v2077
    %2142 = vst [vmem:[#allocation3 + $0x688] sm:$0xf] %v2078
    %2143 = vst [vmem:[#allocation3 + $0x6ac] sm:$0xf] %v2079
    %2144 = vst [vmem:[#allocation3 + $0x6d0] sm:$0xf] %v2080
    %2145 = vst [vmem:[#allocation3 + $0x6f4] sm:$0xf] %v2081
    %2146 = vst [vmem:[#allocation3 + $0x718] sm:$0xf] %v2082
    %2147 = vst [vmem:[#allocation3 + $0x73c] sm:$0xf] %v2083
    %2148 = vst [vmem:[#allocation3 + $0x760] sm:$0xf] %v2084
    %2149 = vst [vmem:[#allocation3 + $0x784] sm:$0xf] %v2085
    %2150 = vst [vmem:[#allocation3 + $0x7a8] sm:$0xf] %v2086
    %2151 = vst [vmem:[#allocation3 + $0x7cc] sm:$0xf] %v2087
    %2152 = vst [vmem:[#allocation3 + $0x7f0] sm:$0xf] %v2088
    %2153 = vst [vmem:[#allocation3 + $0x814] sm:$0xf] %v2089
    %2154 = vst [vmem:[#allocation3 + $0x838] sm:$0xf] %v2090
    %2155 = vst [vmem:[#allocation3 + $0x85c] sm:$0xf] %v2091
    %2156 = vst [vmem:[#allocation3 + $0x880] sm:$0xf] %v2092
    %2157 = vst [vmem:[#allocation3 + $0x8a4] sm:$0xf] %v2093
    %2158 = vst [vmem:[#allocation3 + $0x8c8] sm:$0xf] %v2094
    %2159 = vst [vmem:[#allocation3 + $0x8ec] sm:$0xf] %v2095
    %v2160 = vld [vmem:[%s1135 + $0x2] sm:$0xff]
    %v2161 = vld [vmem:[%s1135 + $0xa] sm:$0xff]
    %v2162 = vld [vmem:[%s1135 + $0x1a] sm:$0xff]
    %v2163 = vld [vmem:[%s1135 + $0x22] sm:$0xff]
    %v2164 = vld [vmem:[%s1135 + $0x32] sm:$0xff]
    %v2165 = vld [vmem:[%s1135 + $0x3a] sm:$0xff]
    %v2166 = vld [vmem:[%s1135 + $0x4a] sm:$0xff]
    %v2167 = vld [vmem:[%s1135 + $0x52] sm:$0xff]
    %v2168 = vld [vmem:[%s1135 + $0x62] sm:$0xff]
    %v2169 = vld [vmem:[%s1135 + $0x6a] sm:$0xff]
    %v2170 = vld [vmem:[%s1135 + $0x7a] sm:$0xff]
    %v2171 = vld [vmem:[%s1135 + $0x82] sm:$0xff]
    %v2172 = vld [vmem:[%s1135 + $0x92] sm:$0xff]
    %v2173 = vld [vmem:[%s1135 + $0x9a] sm:$0xff]
    %v2174 = vld [vmem:[%s1135 + $0xaa] sm:$0xff]
    %v2175 = vld [vmem:[%s1135 + $0xb2] sm:$0xff]
    %v2176 = vld [vmem:[%s1135 + $0xc2] sm:$0xff]
    %v2177 = vld [vmem:[%s1135 + $0xca] sm:$0xff]
    %v2178 = vld [vmem:[%s1135 + $0xda] sm:$0xff]
    %v2179 = vld [vmem:[%s1135 + $0xe2] sm:$0xff]
    %v2180 = vld [vmem:[%s1135 + $0xf2] sm:$0xff]
    %v2181 = vld [vmem:[%s1135 + $0xfa] sm:$0xff]
    %v2182 = vld [vmem:[%s1135 + $0x10a] sm:$0xff]
    %v2183 = vld [vmem:[%s1135 + $0x112] sm:$0xff]
    %v2184 = vld [vmem:[%s1135 + $0x122] sm:$0xff]
    %v2185 = vld [vmem:[%s1135 + $0x12a] sm:$0xff]
    %v2186 = vld [vmem:[%s1135 + $0x13a] sm:$0xff]
    %v2187 = vld [vmem:[%s1135 + $0x142] sm:$0xff]
    %v2188 = vld [vmem:[%s1135 + $0x152] sm:$0xff]
    %v2189 = vld [vmem:[%s1135 + $0x15a] sm:$0xff]
    %v2190 = vld [vmem:[%s1135 + $0x16a] sm:$0xff]
    %v2191 = vld [vmem:[%s1135 + $0x172] sm:$0xff]
    %v2192 = vld [vmem:[%s1135 + $0x1b2] sm:$0xff]
    %v2193 = vld [vmem:[%s1135 + $0x1ba] sm:$0xff]
    %v2194 = vld [vmem:[%s1135 + $0x1ca] sm:$0xff]
    %v2195 = vld [vmem:[%s1135 + $0x1d2] sm:$0xff]
    %v2196 = vld [vmem:[%s1135 + $0x1e2] sm:$0xff]
    %v2197 = vld [vmem:[%s1135 + $0x1ea] sm:$0xff]
    %v2198 = vld [vmem:[%s1135 + $0x1fa] sm:$0xff]
    %v2199 = vld [vmem:[%s1135 + $0x202] sm:$0xff]
    %v2200 = vld [vmem:[%s1135 + $0x212] sm:$0xff]
    %v2201 = vld [vmem:[%s1135 + $0x21a] sm:$0xff]
    %v2202 = vld [vmem:[%s1135 + $0x22a] sm:$0xff]
    %v2203 = vld [vmem:[%s1135 + $0x232] sm:$0xff]
    %v2204 = vld [vmem:[%s1135 + $0x242] sm:$0xff]
    %v2205 = vld [vmem:[%s1135 + $0x24a] sm:$0xff]
    %v2206 = vld [vmem:[%s1135 + $0x25a] sm:$0xff]
    %v2207 = vld [vmem:[%s1135 + $0x262] sm:$0xff]
    %v2208 = vld [vmem:[%s1135 + $0x272] sm:$0xff]
    %v2209 = vld [vmem:[%s1135 + $0x27a] sm:$0xff]
    %v2210 = vld [vmem:[%s1135 + $0x28a] sm:$0xff]
    %v2211 = vld [vmem:[%s1135 + $0x292] sm:$0xff]
    %v2212 = vld [vmem:[%s1135 + $0x2a2] sm:$0xff]
    %v2213 = vld [vmem:[%s1135 + $0x2aa] sm:$0xff]
    %v2214 = vld [vmem:[%s1135 + $0x2ba] sm:$0xff]
    %v2215 = vld [vmem:[%s1135 + $0x2c2] sm:$0xff]
    %v2216 = vld [vmem:[%s1135 + $0x2d2] sm:$0xff]
    %v2217 = vld [vmem:[%s1135 + $0x2da] sm:$0xff]
    %v2218 = vld [vmem:[%s1135 + $0x2ea] sm:$0xff]
    %v2219 = vld [vmem:[%s1135 + $0x2f2] sm:$0xff]
    %v2220 = vld [vmem:[%s1135 + $0x302] sm:$0xff]
    %v2221 = vld [vmem:[%s1135 + $0x30a] sm:$0xff]
    %v2222 = vld [vmem:[%s1135 + $0x31a] sm:$0xff]
    %v2223 = vld [vmem:[%s1135 + $0x322] sm:$0xff]
    %v2224 = vpack.c.bf16 %v2160, %v2160
    %v2225 = vpack.c.bf16 %v2161, %v2161
    %v2226 = vpack.c.bf16 %v2162, %v2162
    %v2227 = vpack.c.bf16 %v2163, %v2163
    %v2228 = vpack.c.bf16 %v2164, %v2164
    %v2229 = vpack.c.bf16 %v2165, %v2165
    %v2230 = vpack.c.bf16 %v2166, %v2166
    %v2231 = vpack.c.bf16 %v2167, %v2167
    %v2232 = vpack.c.bf16 %v2168, %v2168
    %v2233 = vpack.c.bf16 %v2169, %v2169
    %v2234 = vpack.c.bf16 %v2170, %v2170
    %v2235 = vpack.c.bf16 %v2171, %v2171
    %v2236 = vpack.c.bf16 %v2172, %v2172
    %v2237 = vpack.c.bf16 %v2173, %v2173
    %v2238 = vpack.c.bf16 %v2174, %v2174
    %v2239 = vpack.c.bf16 %v2175, %v2175
    %v2240 = vpack.c.bf16 %v2176, %v2176
    %v2241 = vpack.c.bf16 %v2177, %v2177
    %v2242 = vpack.c.bf16 %v2178, %v2178
    %v2243 = vpack.c.bf16 %v2179, %v2179
    %v2244 = vpack.c.bf16 %v2180, %v2180
    %v2245 = vpack.c.bf16 %v2181, %v2181
    %v2246 = vpack.c.bf16 %v2182, %v2182
    %v2247 = vpack.c.bf16 %v2183, %v2183
    %v2248 = vpack.c.bf16 %v2184, %v2184
    %v2249 = vpack.c.bf16 %v2185, %v2185
    %v2250 = vpack.c.bf16 %v2186, %v2186
    %v2251 = vpack.c.bf16 %v2187, %v2187
    %v2252 = vpack.c.bf16 %v2188, %v2188
    %v2253 = vpack.c.bf16 %v2189, %v2189
    %v2254 = vpack.c.bf16 %v2190, %v2190
    %v2255 = vpack.c.bf16 %v2191, %v2191
    %v2256 = vpack.c.bf16 %v2192, %v2192
    %v2257 = vpack.c.bf16 %v2193, %v2193
    %v2258 = vpack.c.bf16 %v2194, %v2194
    %v2259 = vpack.c.bf16 %v2195, %v2195
    %v2260 = vpack.c.bf16 %v2196, %v2196
    %v2261 = vpack.c.bf16 %v2197, %v2197
    %v2262 = vpack.c.bf16 %v2198, %v2198
    %v2263 = vpack.c.bf16 %v2199, %v2199
    %v2264 = vpack.c.bf16 %v2200, %v2200
    %v2265 = vpack.c.bf16 %v2201, %v2201
    %v2266 = vpack.c.bf16 %v2202, %v2202
    %v2267 = vpack.c.bf16 %v2203, %v2203
    %v2268 = vpack.c.bf16 %v2204, %v2204
    %v2269 = vpack.c.bf16 %v2205, %v2205
    %v2270 = vpack.c.bf16 %v2206, %v2206
    %v2271 = vpack.c.bf16 %v2207, %v2207
    %v2272 = vpack.c.bf16 %v2208, %v2208
    %v2273 = vpack.c.bf16 %v2209, %v2209
    %v2274 = vpack.c.bf16 %v2210, %v2210
    %v2275 = vpack.c.bf16 %v2211, %v2211
    %v2276 = vpack.c.bf16 %v2212, %v2212
    %v2277 = vpack.c.bf16 %v2213, %v2213
    %v2278 = vpack.c.bf16 %v2214, %v2214
    %v2279 = vpack.c.bf16 %v2215, %v2215
    %v2280 = vpack.c.bf16 %v2216, %v2216
    %v2281 = vpack.c.bf16 %v2217, %v2217
    %v2282 = vpack.c.bf16 %v2218, %v2218
    %v2283 = vpack.c.bf16 %v2219, %v2219
    %v2284 = vpack.c.bf16 %v2220, %v2220
    %v2285 = vpack.c.bf16 %v2221, %v2221
    %v2286 = vpack.c.bf16 %v2222, %v2222
    %v2287 = vpack.c.bf16 %v2223, %v2223
    %2288 = vst [vmem:[#allocation3 + $0x14] sm:$0xf] %v2224
    %2289 = vst [vmem:[#allocation3 + $0x38] sm:$0xf] %v2225
    %2290 = vst [vmem:[#allocation3 + $0x5c] sm:$0xf] %v2226
    %2291 = vst [vmem:[#allocation3 + $0x80] sm:$0xf] %v2227
    %2292 = vst [vmem:[#allocation3 + $0xa4] sm:$0xf] %v2228
    %2293 = vst [vmem:[#allocation3 + $0xc8] sm:$0xf] %v2229
    %2294 = vst [vmem:[#allocation3 + $0xec] sm:$0xf] %v2230
    %2295 = vst [vmem:[#allocation3 + $0x110] sm:$0xf] %v2231
    %2296 = vst [vmem:[#allocation3 + $0x134] sm:$0xf] %v2232
    %2297 = vst [vmem:[#allocation3 + $0x158] sm:$0xf] %v2233
    %2298 = vst [vmem:[#allocation3 + $0x17c] sm:$0xf] %v2234
    %2299 = vst [vmem:[#allocation3 + $0x1a0] sm:$0xf] %v2235
    %2300 = vst [vmem:[#allocation3 + $0x1c4] sm:$0xf] %v2236
    %2301 = vst [vmem:[#allocation3 + $0x1e8] sm:$0xf] %v2237
    %2302 = vst [vmem:[#allocation3 + $0x20c] sm:$0xf] %v2238
    %2303 = vst [vmem:[#allocation3 + $0x230] sm:$0xf] %v2239
    %2304 = vst [vmem:[#allocation3 + $0x254] sm:$0xf] %v2240
    %2305 = vst [vmem:[#allocation3 + $0x278] sm:$0xf] %v2241
    %2306 = vst [vmem:[#allocation3 + $0x29c] sm:$0xf] %v2242
    %2307 = vst [vmem:[#allocation3 + $0x2c0] sm:$0xf] %v2243
    %2308 = vst [vmem:[#allocation3 + $0x2e4] sm:$0xf] %v2244
    %2309 = vst [vmem:[#allocation3 + $0x308] sm:$0xf] %v2245
    %2310 = vst [vmem:[#allocation3 + $0x32c] sm:$0xf] %v2246
    %2311 = vst [vmem:[#allocation3 + $0x350] sm:$0xf] %v2247
    %2312 = vst [vmem:[#allocation3 + $0x374] sm:$0xf] %v2248
    %2313 = vst [vmem:[#allocation3 + $0x398] sm:$0xf] %v2249
    %2314 = vst [vmem:[#allocation3 + $0x3bc] sm:$0xf] %v2250
    %2315 = vst [vmem:[#allocation3 + $0x3e0] sm:$0xf] %v2251
    %2316 = vst [vmem:[#allocation3 + $0x404] sm:$0xf] %v2252
    %2317 = vst [vmem:[#allocation3 + $0x428] sm:$0xf] %v2253
    %2318 = vst [vmem:[#allocation3 + $0x44c] sm:$0xf] %v2254
    %2319 = vst [vmem:[#allocation3 + $0x470] sm:$0xf] %v2255
    %2320 = vst [vmem:[#allocation3 + $0x494] sm:$0xf] %v2256
    %2321 = vst [vmem:[#allocation3 + $0x4b8] sm:$0xf] %v2257
    %2322 = vst [vmem:[#allocation3 + $0x4dc] sm:$0xf] %v2258
    %2323 = vst [vmem:[#allocation3 + $0x500] sm:$0xf] %v2259
    %2324 = vst [vmem:[#allocation3 + $0x524] sm:$0xf] %v2260
    %2325 = vst [vmem:[#allocation3 + $0x548] sm:$0xf] %v2261
    %2326 = vst [vmem:[#allocation3 + $0x56c] sm:$0xf] %v2262
    %2327 = vst [vmem:[#allocation3 + $0x590] sm:$0xf] %v2263
    %2328 = vst [vmem:[#allocation3 + $0x5b4] sm:$0xf] %v2264
    %2329 = vst [vmem:[#allocation3 + $0x5d8] sm:$0xf] %v2265
    %2330 = vst [vmem:[#allocation3 + $0x5fc] sm:$0xf] %v2266
    %2331 = vst [vmem:[#allocation3 + $0x620] sm:$0xf] %v2267
    %2332 = vst [vmem:[#allocation3 + $0x644] sm:$0xf] %v2268
    %2333 = vst [vmem:[#allocation3 + $0x668] sm:$0xf] %v2269
    %2334 = vst [vmem:[#allocation3 + $0x68c] sm:$0xf] %v2270
    %2335 = vst [vmem:[#allocation3 + $0x6b0] sm:$0xf] %v2271
    %2336 = vst [vmem:[#allocation3 + $0x6d4] sm:$0xf] %v2272
    %2337 = vst [vmem:[#allocation3 + $0x6f8] sm:$0xf] %v2273
    %2338 = vst [vmem:[#allocation3 + $0x71c] sm:$0xf] %v2274
    %2339 = vst [vmem:[#allocation3 + $0x740] sm:$0xf] %v2275
    %2340 = vst [vmem:[#allocation3 + $0x764] sm:$0xf] %v2276
    %2341 = vst [vmem:[#allocation3 + $0x788] sm:$0xf] %v2277
    %2342 = vst [vmem:[#allocation3 + $0x7ac] sm:$0xf] %v2278
    %2343 = vst [vmem:[#allocation3 + $0x7d0] sm:$0xf] %v2279
    %2344 = vst [vmem:[#allocation3 + $0x7f4] sm:$0xf] %v2280
    %2345 = vst [vmem:[#allocation3 + $0x818] sm:$0xf] %v2281
    %2346 = vst [vmem:[#allocation3 + $0x83c] sm:$0xf] %v2282
    %2347 = vst [vmem:[#allocation3 + $0x860] sm:$0xf] %v2283
    %2348 = vst [vmem:[#allocation3 + $0x884] sm:$0xf] %v2284
    %2349 = vst [vmem:[#allocation3 + $0x8a8] sm:$0xf] %v2285
    %2350 = vst [vmem:[#allocation3 + $0x8cc] sm:$0xf] %v2286
    %2351 = vst [vmem:[#allocation3 + $0x8f0] sm:$0xf] %v2287
    %s2352 = scalar_lea.vmem [#allocation2], 48
    %v2353 = vld [vmem:[%s2352] sm:$0xff]
    %v2354 = vld [vmem:[%s2352 + $0x8] sm:$0xff]
    %v2355 = vld [vmem:[%s2352 + $0x18] sm:$0xff]
    %v2356 = vld [vmem:[%s2352 + $0x20] sm:$0xff]
    %v2357 = vld [vmem:[%s2352 + $0x30] sm:$0xff]
    %v2358 = vld [vmem:[%s2352 + $0x38] sm:$0xff]
    %v2359 = vld [vmem:[%s2352 + $0x48] sm:$0xff]
    %v2360 = vld [vmem:[%s2352 + $0x50] sm:$0xff]
    %v2361 = vld [vmem:[%s2352 + $0x60] sm:$0xff]
    %v2362 = vld [vmem:[%s2352 + $0x68] sm:$0xff]
    %v2363 = vld [vmem:[%s2352 + $0x78] sm:$0xff]
    %v2364 = vld [vmem:[%s2352 + $0x80] sm:$0xff]
    %v2365 = vld [vmem:[%s2352 + $0x90] sm:$0xff]
    %v2366 = vld [vmem:[%s2352 + $0x98] sm:$0xff]
    %v2367 = vld [vmem:[%s2352 + $0xa8] sm:$0xff]
    %v2368 = vld [vmem:[%s2352 + $0xb0] sm:$0xff]
    %v2369 = vld [vmem:[%s2352 + $0xc0] sm:$0xff]
    %v2370 = vld [vmem:[%s2352 + $0xc8] sm:$0xff]
    %v2371 = vld [vmem:[%s2352 + $0xd8] sm:$0xff]
    %v2372 = vld [vmem:[%s2352 + $0xe0] sm:$0xff]
    %v2373 = vld [vmem:[%s2352 + $0xf0] sm:$0xff]
    %v2374 = vld [vmem:[%s2352 + $0xf8] sm:$0xff]
    %v2375 = vld [vmem:[%s2352 + $0x108] sm:$0xff]
    %v2376 = vld [vmem:[%s2352 + $0x110] sm:$0xff]
    %v2377 = vld [vmem:[%s2352 + $0x120] sm:$0xff]
    %v2378 = vld [vmem:[%s2352 + $0x128] sm:$0xff]
    %v2379 = vld [vmem:[%s2352 + $0x138] sm:$0xff]
    %v2380 = vld [vmem:[%s2352 + $0x140] sm:$0xff]
    %v2381 = vld [vmem:[%s2352 + $0x150] sm:$0xff]
    %v2382 = vld [vmem:[%s2352 + $0x158] sm:$0xff]
    %v2383 = vld [vmem:[%s2352 + $0x168] sm:$0xff]
    %v2384 = vld [vmem:[%s2352 + $0x170] sm:$0xff]
    %v2385 = vld [vmem:[%s2352 + $0x1b0] sm:$0xff]
    %v2386 = vld [vmem:[%s2352 + $0x1b8] sm:$0xff]
    %v2387 = vld [vmem:[%s2352 + $0x1c8] sm:$0xff]
    %v2388 = vld [vmem:[%s2352 + $0x1d0] sm:$0xff]
    %v2389 = vld [vmem:[%s2352 + $0x1e0] sm:$0xff]
    %v2390 = vld [vmem:[%s2352 + $0x1e8] sm:$0xff]
    %v2391 = vld [vmem:[%s2352 + $0x1f8] sm:$0xff]
    %v2392 = vld [vmem:[%s2352 + $0x200] sm:$0xff]
    %v2393 = vld [vmem:[%s2352 + $0x210] sm:$0xff]
    %v2394 = vld [vmem:[%s2352 + $0x218] sm:$0xff]
    %v2395 = vld [vmem:[%s2352 + $0x228] sm:$0xff]
    %v2396 = vld [vmem:[%s2352 + $0x230] sm:$0xff]
    %v2397 = vld [vmem:[%s2352 + $0x240] sm:$0xff]
    %v2398 = vld [vmem:[%s2352 + $0x248] sm:$0xff]
    %v2399 = vld [vmem:[%s2352 + $0x258] sm:$0xff]
    %v2400 = vld [vmem:[%s2352 + $0x260] sm:$0xff]
    %v2401 = vld [vmem:[%s2352 + $0x270] sm:$0xff]
    %v2402 = vld [vmem:[%s2352 + $0x278] sm:$0xff]
    %v2403 = vld [vmem:[%s2352 + $0x288] sm:$0xff]
    %v2404 = vld [vmem:[%s2352 + $0x290] sm:$0xff]
    %v2405 = vld [vmem:[%s2352 + $0x2a0] sm:$0xff]
    %v2406 = vld [vmem:[%s2352 + $0x2a8] sm:$0xff]
    %v2407 = vld [vmem:[%s2352 + $0x2b8] sm:$0xff]
    %v2408 = vld [vmem:[%s2352 + $0x2c0] sm:$0xff]
    %v2409 = vld [vmem:[%s2352 + $0x2d0] sm:$0xff]
    %v2410 = vld [vmem:[%s2352 + $0x2d8] sm:$0xff]
    %v2411 = vld [vmem:[%s2352 + $0x2e8] sm:$0xff]
    %v2412 = vld [vmem:[%s2352 + $0x2f0] sm:$0xff]
    %v2413 = vld [vmem:[%s2352 + $0x300] sm:$0xff]
    %v2414 = vld [vmem:[%s2352 + $0x308] sm:$0xff]
    %v2415 = vld [vmem:[%s2352 + $0x318] sm:$0xff]
    %v2416 = vld [vmem:[%s2352 + $0x320] sm:$0xff]
    %v2417 = vpack.c.bf16 %v2353, %v2353
    %v2418 = vpack.c.bf16 %v2354, %v2354
    %v2419 = vpack.c.bf16 %v2355, %v2355
    %v2420 = vpack.c.bf16 %v2356, %v2356
    %v2421 = vpack.c.bf16 %v2357, %v2357
    %v2422 = vpack.c.bf16 %v2358, %v2358
    %v2423 = vpack.c.bf16 %v2359, %v2359
    %v2424 = vpack.c.bf16 %v2360, %v2360
    %v2425 = vpack.c.bf16 %v2361, %v2361
    %v2426 = vpack.c.bf16 %v2362, %v2362
    %v2427 = vpack.c.bf16 %v2363, %v2363
    %v2428 = vpack.c.bf16 %v2364, %v2364
    %v2429 = vpack.c.bf16 %v2365, %v2365
    %v2430 = vpack.c.bf16 %v2366, %v2366
    %v2431 = vpack.c.bf16 %v2367, %v2367
    %v2432 = vpack.c.bf16 %v2368, %v2368
    %v2433 = vpack.c.bf16 %v2369, %v2369
    %v2434 = vpack.c.bf16 %v2370, %v2370
    %v2435 = vpack.c.bf16 %v2371, %v2371
    %v2436 = vpack.c.bf16 %v2372, %v2372
    %v2437 = vpack.c.bf16 %v2373, %v2373
    %v2438 = vpack.c.bf16 %v2374, %v2374
    %v2439 = vpack.c.bf16 %v2375, %v2375
    %v2440 = vpack.c.bf16 %v2376, %v2376
    %v2441 = vpack.c.bf16 %v2377, %v2377
    %v2442 = vpack.c.bf16 %v2378, %v2378
    %v2443 = vpack.c.bf16 %v2379, %v2379
    %v2444 = vpack.c.bf16 %v2380, %v2380
    %v2445 = vpack.c.bf16 %v2381, %v2381
    %v2446 = vpack.c.bf16 %v2382, %v2382
    %v2447 = vpack.c.bf16 %v2383, %v2383
    %v2448 = vpack.c.bf16 %v2384, %v2384
    %v2449 = vpack.c.bf16 %v2385, %v2385
    %v2450 = vpack.c.bf16 %v2386, %v2386
    %v2451 = vpack.c.bf16 %v2387, %v2387
    %v2452 = vpack.c.bf16 %v2388, %v2388
    %v2453 = vpack.c.bf16 %v2389, %v2389
    %v2454 = vpack.c.bf16 %v2390, %v2390
    %v2455 = vpack.c.bf16 %v2391, %v2391
    %v2456 = vpack.c.bf16 %v2392, %v2392
    %v2457 = vpack.c.bf16 %v2393, %v2393
    %v2458 = vpack.c.bf16 %v2394, %v2394
    %v2459 = vpack.c.bf16 %v2395, %v2395
    %v2460 = vpack.c.bf16 %v2396, %v2396
    %v2461 = vpack.c.bf16 %v2397, %v2397
    %v2462 = vpack.c.bf16 %v2398, %v2398
    %v2463 = vpack.c.bf16 %v2399, %v2399
    %v2464 = vpack.c.bf16 %v2400, %v2400
    %v2465 = vpack.c.bf16 %v2401, %v2401
    %v2466 = vpack.c.bf16 %v2402, %v2402
    %v2467 = vpack.c.bf16 %v2403, %v2403
    %v2468 = vpack.c.bf16 %v2404, %v2404
    %v2469 = vpack.c.bf16 %v2405, %v2405
    %v2470 = vpack.c.bf16 %v2406, %v2406
    %v2471 = vpack.c.bf16 %v2407, %v2407
    %v2472 = vpack.c.bf16 %v2408, %v2408
    %v2473 = vpack.c.bf16 %v2409, %v2409
    %v2474 = vpack.c.bf16 %v2410, %v2410
    %v2475 = vpack.c.bf16 %v2411, %v2411
    %v2476 = vpack.c.bf16 %v2412, %v2412
    %v2477 = vpack.c.bf16 %v2413, %v2413
    %v2478 = vpack.c.bf16 %v2414, %v2414
    %v2479 = vpack.c.bf16 %v2415, %v2415
    %v2480 = vpack.c.bf16 %v2416, %v2416
    %2481 = vst [vmem:[#allocation3 + $0x18] sm:$0xf] %v2417
    %2482 = vst [vmem:[#allocation3 + $0x3c] sm:$0xf] %v2418
    %2483 = vst [vmem:[#allocation3 + $0x60] sm:$0xf] %v2419
    %2484 = vst [vmem:[#allocation3 + $0x84] sm:$0xf] %v2420
    %2485 = vst [vmem:[#allocation3 + $0xa8] sm:$0xf] %v2421
    %2486 = vst [vmem:[#allocation3 + $0xcc] sm:$0xf] %v2422
    %2487 = vst [vmem:[#allocation3 + $0xf0] sm:$0xf] %v2423
    %2488 = vst [vmem:[#allocation3 + $0x114] sm:$0xf] %v2424
    %2489 = vst [vmem:[#allocation3 + $0x138] sm:$0xf] %v2425
    %2490 = vst [vmem:[#allocation3 + $0x15c] sm:$0xf] %v2426
    %2491 = vst [vmem:[#allocation3 + $0x180] sm:$0xf] %v2427
    %2492 = vst [vmem:[#allocation3 + $0x1a4] sm:$0xf] %v2428
    %2493 = vst [vmem:[#allocation3 + $0x1c8] sm:$0xf] %v2429
    %2494 = vst [vmem:[#allocation3 + $0x1ec] sm:$0xf] %v2430
    %2495 = vst [vmem:[#allocation3 + $0x210] sm:$0xf] %v2431
    %2496 = vst [vmem:[#allocation3 + $0x234] sm:$0xf] %v2432
    %2497 = vst [vmem:[#allocation3 + $0x258] sm:$0xf] %v2433
    %2498 = vst [vmem:[#allocation3 + $0x27c] sm:$0xf] %v2434
    %2499 = vst [vmem:[#allocation3 + $0x2a0] sm:$0xf] %v2435
    %2500 = vst [vmem:[#allocation3 + $0x2c4] sm:$0xf] %v2436
    %2501 = vst [vmem:[#allocation3 + $0x2e8] sm:$0xf] %v2437
    %2502 = vst [vmem:[#allocation3 + $0x30c] sm:$0xf] %v2438
    %2503 = vst [vmem:[#allocation3 + $0x330] sm:$0xf] %v2439
    %2504 = vst [vmem:[#allocation3 + $0x354] sm:$0xf] %v2440
    %2505 = vst [vmem:[#allocation3 + $0x378] sm:$0xf] %v2441
    %2506 = vst [vmem:[#allocation3 + $0x39c] sm:$0xf] %v2442
    %2507 = vst [vmem:[#allocation3 + $0x3c0] sm:$0xf] %v2443
    %2508 = vst [vmem:[#allocation3 + $0x3e4] sm:$0xf] %v2444
    %2509 = vst [vmem:[#allocation3 + $0x408] sm:$0xf] %v2445
    %2510 = vst [vmem:[#allocation3 + $0x42c] sm:$0xf] %v2446
    %2511 = vst [vmem:[#allocation3 + $0x450] sm:$0xf] %v2447
    %2512 = vst [vmem:[#allocation3 + $0x474] sm:$0xf] %v2448
    %2513 = vst [vmem:[#allocation3 + $0x498] sm:$0xf] %v2449
    %2514 = vst [vmem:[#allocation3 + $0x4bc] sm:$0xf] %v2450
    %2515 = vst [vmem:[#allocation3 + $0x4e0] sm:$0xf] %v2451
    %2516 = vst [vmem:[#allocation3 + $0x504] sm:$0xf] %v2452
    %2517 = vst [vmem:[#allocation3 + $0x528] sm:$0xf] %v2453
    %2518 = vst [vmem:[#allocation3 + $0x54c] sm:$0xf] %v2454
    %2519 = vst [vmem:[#allocation3 + $0x570] sm:$0xf] %v2455
    %2520 = vst [vmem:[#allocation3 + $0x594] sm:$0xf] %v2456
    %2521 = vst [vmem:[#allocation3 + $0x5b8] sm:$0xf] %v2457
    %2522 = vst [vmem:[#allocation3 + $0x5dc] sm:$0xf] %v2458
    %2523 = vst [vmem:[#allocation3 + $0x600] sm:$0xf] %v2459
    %2524 = vst [vmem:[#allocation3 + $0x624] sm:$0xf] %v2460
    %2525 = vst [vmem:[#allocation3 + $0x648] sm:$0xf] %v2461
    %2526 = vst [vmem:[#allocation3 + $0x66c] sm:$0xf] %v2462
    %2527 = vst [vmem:[#allocation3 + $0x690] sm:$0xf] %v2463
    %2528 = vst [vmem:[#allocation3 + $0x6b4] sm:$0xf] %v2464
    %2529 = vst [vmem:[#allocation3 + $0x6d8] sm:$0xf] %v2465
    %2530 = vst [vmem:[#allocation3 + $0x6fc] sm:$0xf] %v2466
    %2531 = vst [vmem:[#allocation3 + $0x720] sm:$0xf] %v2467
    %2532 = vst [vmem:[#allocation3 + $0x744] sm:$0xf] %v2468
    %2533 = vst [vmem:[#allocation3 + $0x768] sm:$0xf] %v2469
    %2534 = vst [vmem:[#allocation3 + $0x78c] sm:$0xf] %v2470
    %2535 = vst [vmem:[#allocation3 + $0x7b0] sm:$0xf] %v2471
    %2536 = vst [vmem:[#allocation3 + $0x7d4] sm:$0xf] %v2472
    %2537 = vst [vmem:[#allocation3 + $0x7f8] sm:$0xf] %v2473
    %2538 = vst [vmem:[#allocation3 + $0x81c] sm:$0xf] %v2474
    %2539 = vst [vmem:[#allocation3 + $0x840] sm:$0xf] %v2475
    %2540 = vst [vmem:[#allocation3 + $0x864] sm:$0xf] %v2476
    %2541 = vst [vmem:[#allocation3 + $0x888] sm:$0xf] %v2477
    %2542 = vst [vmem:[#allocation3 + $0x8ac] sm:$0xf] %v2478
    %2543 = vst [vmem:[#allocation3 + $0x8d0] sm:$0xf] %v2479
    %2544 = vst [vmem:[#allocation3 + $0x8f4] sm:$0xf] %v2480
    %v2545 = vld [vmem:[%s2352 + $0x1] sm:$0xff]
    %v2546 = vld [vmem:[%s2352 + $0x9] sm:$0xff]
    %v2547 = vld [vmem:[%s2352 + $0x19] sm:$0xff]
    %v2548 = vld [vmem:[%s2352 + $0x21] sm:$0xff]
    %v2549 = vld [vmem:[%s2352 + $0x31] sm:$0xff]
    %v2550 = vld [vmem:[%s2352 + $0x39] sm:$0xff]
    %v2551 = vld [vmem:[%s2352 + $0x49] sm:$0xff]
    %v2552 = vld [vmem:[%s2352 + $0x51] sm:$0xff]
    %v2553 = vld [vmem:[%s2352 + $0x61] sm:$0xff]
    %v2554 = vld [vmem:[%s2352 + $0x69] sm:$0xff]
    %v2555 = vld [vmem:[%s2352 + $0x79] sm:$0xff]
    %v2556 = vld [vmem:[%s2352 + $0x81] sm:$0xff]
    %v2557 = vld [vmem:[%s2352 + $0x91] sm:$0xff]
    %v2558 = vld [vmem:[%s2352 + $0x99] sm:$0xff]
    %v2559 = vld [vmem:[%s2352 + $0xa9] sm:$0xff]
    %v2560 = vld [vmem:[%s2352 + $0xb1] sm:$0xff]
    %v2561 = vld [vmem:[%s2352 + $0xc1] sm:$0xff]
    %v2562 = vld [vmem:[%s2352 + $0xc9] sm:$0xff]
    %v2563 = vld [vmem:[%s2352 + $0xd9] sm:$0xff]
    %v2564 = vld [vmem:[%s2352 + $0xe1] sm:$0xff]
    %v2565 = vld [vmem:[%s2352 + $0xf1] sm:$0xff]
    %v2566 = vld [vmem:[%s2352 + $0xf9] sm:$0xff]
    %v2567 = vld [vmem:[%s2352 + $0x109] sm:$0xff]
    %v2568 = vld [vmem:[%s2352 + $0x111] sm:$0xff]
    %v2569 = vld [vmem:[%s2352 + $0x121] sm:$0xff]
    %v2570 = vld [vmem:[%s2352 + $0x129] sm:$0xff]
    %v2571 = vld [vmem:[%s2352 + $0x139] sm:$0xff]
    %v2572 = vld [vmem:[%s2352 + $0x141] sm:$0xff]
    %v2573 = vld [vmem:[%s2352 + $0x151] sm:$0xff]
    %v2574 = vld [vmem:[%s2352 + $0x159] sm:$0xff]
    %v2575 = vld [vmem:[%s2352 + $0x169] sm:$0xff]
    %v2576 = vld [vmem:[%s2352 + $0x171] sm:$0xff]
    %v2577 = vld [vmem:[%s2352 + $0x1b1] sm:$0xff]
    %v2578 = vld [vmem:[%s2352 + $0x1b9] sm:$0xff]
    %v2579 = vld [vmem:[%s2352 + $0x1c9] sm:$0xff]
    %v2580 = vld [vmem:[%s2352 + $0x1d1] sm:$0xff]
    %v2581 = vld [vmem:[%s2352 + $0x1e1] sm:$0xff]
    %v2582 = vld [vmem:[%s2352 + $0x1e9] sm:$0xff]
    %v2583 = vld [vmem:[%s2352 + $0x1f9] sm:$0xff]
    %v2584 = vld [vmem:[%s2352 + $0x201] sm:$0xff]
    %v2585 = vld [vmem:[%s2352 + $0x211] sm:$0xff]
    %v2586 = vld [vmem:[%s2352 + $0x219] sm:$0xff]
    %v2587 = vld [vmem:[%s2352 + $0x229] sm:$0xff]
    %v2588 = vld [vmem:[%s2352 + $0x231] sm:$0xff]
    %v2589 = vld [vmem:[%s2352 + $0x241] sm:$0xff]
    %v2590 = vld [vmem:[%s2352 + $0x249] sm:$0xff]
    %v2591 = vld [vmem:[%s2352 + $0x259] sm:$0xff]
    %v2592 = vld [vmem:[%s2352 + $0x261] sm:$0xff]
    %v2593 = vld [vmem:[%s2352 + $0x271] sm:$0xff]
    %v2594 = vld [vmem:[%s2352 + $0x279] sm:$0xff]
    %v2595 = vld [vmem:[%s2352 + $0x289] sm:$0xff]
    %v2596 = vld [vmem:[%s2352 + $0x291] sm:$0xff]
    %v2597 = vld [vmem:[%s2352 + $0x2a1] sm:$0xff]
    %v2598 = vld [vmem:[%s2352 + $0x2a9] sm:$0xff]
    %v2599 = vld [vmem:[%s2352 + $0x2b9] sm:$0xff]
    %v2600 = vld [vmem:[%s2352 + $0x2c1] sm:$0xff]
    %v2601 = vld [vmem:[%s2352 + $0x2d1] sm:$0xff]
    %v2602 = vld [vmem:[%s2352 + $0x2d9] sm:$0xff]
    %v2603 = vld [vmem:[%s2352 + $0x2e9] sm:$0xff]
    %v2604 = vld [vmem:[%s2352 + $0x2f1] sm:$0xff]
    %v2605 = vld [vmem:[%s2352 + $0x301] sm:$0xff]
    %v2606 = vld [vmem:[%s2352 + $0x309] sm:$0xff]
    %v2607 = vld [vmem:[%s2352 + $0x319] sm:$0xff]
    %v2608 = vld [vmem:[%s2352 + $0x321] sm:$0xff]
    %v2609 = vpack.c.bf16 %v2545, %v2545
    %v2610 = vpack.c.bf16 %v2546, %v2546
    %v2611 = vpack.c.bf16 %v2547, %v2547
    %v2612 = vpack.c.bf16 %v2548, %v2548
    %v2613 = vpack.c.bf16 %v2549, %v2549
    %v2614 = vpack.c.bf16 %v2550, %v2550
    %v2615 = vpack.c.bf16 %v2551, %v2551
    %v2616 = vpack.c.bf16 %v2552, %v2552
    %v2617 = vpack.c.bf16 %v2553, %v2553
    %v2618 = vpack.c.bf16 %v2554, %v2554
    %v2619 = vpack.c.bf16 %v2555, %v2555
    %v2620 = vpack.c.bf16 %v2556, %v2556
    %v2621 = vpack.c.bf16 %v2557, %v2557
    %v2622 = vpack.c.bf16 %v2558, %v2558
    %v2623 = vpack.c.bf16 %v2559, %v2559
    %v2624 = vpack.c.bf16 %v2560, %v2560
    %v2625 = vpack.c.bf16 %v2561, %v2561
    %v2626 = vpack.c.bf16 %v2562, %v2562
    %v2627 = vpack.c.bf16 %v2563, %v2563
    %v2628 = vpack.c.bf16 %v2564, %v2564
    %v2629 = vpack.c.bf16 %v2565, %v2565
    %v2630 = vpack.c.bf16 %v2566, %v2566
    %v2631 = vpack.c.bf16 %v2567, %v2567
    %v2632 = vpack.c.bf16 %v2568, %v2568
    %v2633 = vpack.c.bf16 %v2569, %v2569
    %v2634 = vpack.c.bf16 %v2570, %v2570
    %v2635 = vpack.c.bf16 %v2571, %v2571
    %v2636 = vpack.c.bf16 %v2572, %v2572
    %v2637 = vpack.c.bf16 %v2573, %v2573
    %v2638 = vpack.c.bf16 %v2574, %v2574
    %v2639 = vpack.c.bf16 %v2575, %v2575
    %v2640 = vpack.c.bf16 %v2576, %v2576
    %v2641 = vpack.c.bf16 %v2577, %v2577
    %v2642 = vpack.c.bf16 %v2578, %v2578
    %v2643 = vpack.c.bf16 %v2579, %v2579
    %v2644 = vpack.c.bf16 %v2580, %v2580
    %v2645 = vpack.c.bf16 %v2581, %v2581
    %v2646 = vpack.c.bf16 %v2582, %v2582
    %v2647 = vpack.c.bf16 %v2583, %v2583
    %v2648 = vpack.c.bf16 %v2584, %v2584
    %v2649 = vpack.c.bf16 %v2585, %v2585
    %v2650 = vpack.c.bf16 %v2586, %v2586
    %v2651 = vpack.c.bf16 %v2587, %v2587
    %v2652 = vpack.c.bf16 %v2588, %v2588
    %v2653 = vpack.c.bf16 %v2589, %v2589
    %v2654 = vpack.c.bf16 %v2590, %v2590
    %v2655 = vpack.c.bf16 %v2591, %v2591
    %v2656 = vpack.c.bf16 %v2592, %v2592
    %v2657 = vpack.c.bf16 %v2593, %v2593
    %v2658 = vpack.c.bf16 %v2594, %v2594
    %v2659 = vpack.c.bf16 %v2595, %v2595
    %v2660 = vpack.c.bf16 %v2596, %v2596
    %v2661 = vpack.c.bf16 %v2597, %v2597
    %v2662 = vpack.c.bf16 %v2598, %v2598
    %v2663 = vpack.c.bf16 %v2599, %v2599
    %v2664 = vpack.c.bf16 %v2600, %v2600
    %v2665 = vpack.c.bf16 %v2601, %v2601
    %v2666 = vpack.c.bf16 %v2602, %v2602
    %v2667 = vpack.c.bf16 %v2603, %v2603
    %v2668 = vpack.c.bf16 %v2604, %v2604
    %v2669 = vpack.c.bf16 %v2605, %v2605
    %v2670 = vpack.c.bf16 %v2606, %v2606
    %v2671 = vpack.c.bf16 %v2607, %v2607
    %v2672 = vpack.c.bf16 %v2608, %v2608
    %2673 = vst [vmem:[#allocation3 + $0x1c] sm:$0xf] %v2609
    %2674 = vst [vmem:[#allocation3 + $0x40] sm:$0xf] %v2610
    %2675 = vst [vmem:[#allocation3 + $0x64] sm:$0xf] %v2611
    %2676 = vst [vmem:[#allocation3 + $0x88] sm:$0xf] %v2612
    %2677 = vst [vmem:[#allocation3 + $0xac] sm:$0xf] %v2613
    %2678 = vst [vmem:[#allocation3 + $0xd0] sm:$0xf] %v2614
    %2679 = vst [vmem:[#allocation3 + $0xf4] sm:$0xf] %v2615
    %2680 = vst [vmem:[#allocation3 + $0x118] sm:$0xf] %v2616
    %2681 = vst [vmem:[#allocation3 + $0x13c] sm:$0xf] %v2617
    %2682 = vst [vmem:[#allocation3 + $0x160] sm:$0xf] %v2618
    %2683 = vst [vmem:[#allocation3 + $0x184] sm:$0xf] %v2619
    %2684 = vst [vmem:[#allocation3 + $0x1a8] sm:$0xf] %v2620
    %2685 = vst [vmem:[#allocation3 + $0x1cc] sm:$0xf] %v2621
    %2686 = vst [vmem:[#allocation3 + $0x1f0] sm:$0xf] %v2622
    %2687 = vst [vmem:[#allocation3 + $0x214] sm:$0xf] %v2623
    %2688 = vst [vmem:[#allocation3 + $0x238] sm:$0xf] %v2624
    %2689 = vst [vmem:[#allocation3 + $0x25c] sm:$0xf] %v2625
    %2690 = vst [vmem:[#allocation3 + $0x280] sm:$0xf] %v2626
    %2691 = vst [vmem:[#allocation3 + $0x2a4] sm:$0xf] %v2627
    %2692 = vst [vmem:[#allocation3 + $0x2c8] sm:$0xf] %v2628
    %2693 = vst [vmem:[#allocation3 + $0x2ec] sm:$0xf] %v2629
    %2694 = vst [vmem:[#allocation3 + $0x310] sm:$0xf] %v2630
    %2695 = vst [vmem:[#allocation3 + $0x334] sm:$0xf] %v2631
    %2696 = vst [vmem:[#allocation3 + $0x358] sm:$0xf] %v2632
    %2697 = vst [vmem:[#allocation3 + $0x37c] sm:$0xf] %v2633
    %2698 = vst [vmem:[#allocation3 + $0x3a0] sm:$0xf] %v2634
    %2699 = vst [vmem:[#allocation3 + $0x3c4] sm:$0xf] %v2635
    %2700 = vst [vmem:[#allocation3 + $0x3e8] sm:$0xf] %v2636
    %2701 = vst [vmem:[#allocation3 + $0x40c] sm:$0xf] %v2637
    %2702 = vst [vmem:[#allocation3 + $0x430] sm:$0xf] %v2638
    %2703 = vst [vmem:[#allocation3 + $0x454] sm:$0xf] %v2639
    %2704 = vst [vmem:[#allocation3 + $0x478] sm:$0xf] %v2640
    %2705 = vst [vmem:[#allocation3 + $0x49c] sm:$0xf] %v2641
    %2706 = vst [vmem:[#allocation3 + $0x4c0] sm:$0xf] %v2642
    %2707 = vst [vmem:[#allocation3 + $0x4e4] sm:$0xf] %v2643
    %2708 = vst [vmem:[#allocation3 + $0x508] sm:$0xf] %v2644
    %2709 = vst [vmem:[#allocation3 + $0x52c] sm:$0xf] %v2645
    %2710 = vst [vmem:[#allocation3 + $0x550] sm:$0xf] %v2646
    %2711 = vst [vmem:[#allocation3 + $0x574] sm:$0xf] %v2647
    %2712 = vst [vmem:[#allocation3 + $0x598] sm:$0xf] %v2648
    %2713 = vst [vmem:[#allocation3 + $0x5bc] sm:$0xf] %v2649
    %2714 = vst [vmem:[#allocation3 + $0x5e0] sm:$0xf] %v2650
    %2715 = vst [vmem:[#allocation3 + $0x604] sm:$0xf] %v2651
    %2716 = vst [vmem:[#allocation3 + $0x628] sm:$0xf] %v2652
    %2717 = vst [vmem:[#allocation3 + $0x64c] sm:$0xf] %v2653
    %2718 = vst [vmem:[#allocation3 + $0x670] sm:$0xf] %v2654
    %2719 = vst [vmem:[#allocation3 + $0x694] sm:$0xf] %v2655
    %2720 = vst [vmem:[#allocation3 + $0x6b8] sm:$0xf] %v2656
    %2721 = vst [vmem:[#allocation3 + $0x6dc] sm:$0xf] %v2657
    %2722 = vst [vmem:[#allocation3 + $0x700] sm:$0xf] %v2658
    %2723 = vst [vmem:[#allocation3 + $0x724] sm:$0xf] %v2659
    %2724 = vst [vmem:[#allocation3 + $0x748] sm:$0xf] %v2660
    %2725 = vst [vmem:[#allocation3 + $0x76c] sm:$0xf] %v2661
    %2726 = vst [vmem:[#allocation3 + $0x790] sm:$0xf] %v2662
    %2727 = vst [vmem:[#allocation3 + $0x7b4] sm:$0xf] %v2663
    %2728 = vst [vmem:[#allocation3 + $0x7d8] sm:$0xf] %v2664
    %2729 = vst [vmem:[#allocation3 + $0x7fc] sm:$0xf] %v2665
    %2730 = vst [vmem:[#allocation3 + $0x820] sm:$0xf] %v2666
    %2731 = vst [vmem:[#allocation3 + $0x844] sm:$0xf] %v2667
    %2732 = vst [vmem:[#allocation3 + $0x868] sm:$0xf] %v2668
    %2733 = vst [vmem:[#allocation3 + $0x88c] sm:$0xf] %v2669
    %2734 = vst [vmem:[#allocation3 + $0x8b0] sm:$0xf] %v2670
    %2735 = vst [vmem:[#allocation3 + $0x8d4] sm:$0xf] %v2671
    %2736 = vst [vmem:[#allocation3 + $0x8f8] sm:$0xf] %v2672
    %v2737 = vld [vmem:[%s2352 + $0x2] sm:$0xff]
    %v2738 = vld [vmem:[%s2352 + $0xa] sm:$0xff]
    %v2739 = vld [vmem:[%s2352 + $0x1a] sm:$0xff]
    %v2740 = vld [vmem:[%s2352 + $0x22] sm:$0xff]
    %v2741 = vld [vmem:[%s2352 + $0x32] sm:$0xff]
    %v2742 = vld [vmem:[%s2352 + $0x3a] sm:$0xff]
    %v2743 = vld [vmem:[%s2352 + $0x4a] sm:$0xff]
    %v2744 = vld [vmem:[%s2352 + $0x52] sm:$0xff]
    %v2745 = vld [vmem:[%s2352 + $0x62] sm:$0xff]
    %v2746 = vld [vmem:[%s2352 + $0x6a] sm:$0xff]
    %v2747 = vld [vmem:[%s2352 + $0x7a] sm:$0xff]
    %v2748 = vld [vmem:[%s2352 + $0x82] sm:$0xff]
    %v2749 = vld [vmem:[%s2352 + $0x92] sm:$0xff]
    %v2750 = vld [vmem:[%s2352 + $0x9a] sm:$0xff]
    %v2751 = vld [vmem:[%s2352 + $0xaa] sm:$0xff]
    %v2752 = vld [vmem:[%s2352 + $0xb2] sm:$0xff]
    %v2753 = vld [vmem:[%s2352 + $0xc2] sm:$0xff]
    %v2754 = vld [vmem:[%s2352 + $0xca] sm:$0xff]
    %v2755 = vld [vmem:[%s2352 + $0xda] sm:$0xff]
    %v2756 = vld [vmem:[%s2352 + $0xe2] sm:$0xff]
    %v2757 = vld [vmem:[%s2352 + $0xf2] sm:$0xff]
    %v2758 = vld [vmem:[%s2352 + $0xfa] sm:$0xff]
    %v2759 = vld [vmem:[%s2352 + $0x10a] sm:$0xff]
    %v2760 = vld [vmem:[%s2352 + $0x112] sm:$0xff]
    %v2761 = vld [vmem:[%s2352 + $0x122] sm:$0xff]
    %v2762 = vld [vmem:[%s2352 + $0x12a] sm:$0xff]
    %v2763 = vld [vmem:[%s2352 + $0x13a] sm:$0xff]
    %v2764 = vld [vmem:[%s2352 + $0x142] sm:$0xff]
    %v2765 = vld [vmem:[%s2352 + $0x152] sm:$0xff]
    %v2766 = vld [vmem:[%s2352 + $0x15a] sm:$0xff]
    %v2767 = vld [vmem:[%s2352 + $0x16a] sm:$0xff]
    %v2768 = vld [vmem:[%s2352 + $0x172] sm:$0xff]
    %v2769 = vld [vmem:[%s2352 + $0x1b2] sm:$0xff]
    %v2770 = vld [vmem:[%s2352 + $0x1ba] sm:$0xff]
    %v2771 = vld [vmem:[%s2352 + $0x1ca] sm:$0xff]
    %v2772 = vld [vmem:[%s2352 + $0x1d2] sm:$0xff]
    %v2773 = vld [vmem:[%s2352 + $0x1e2] sm:$0xff]
    %v2774 = vld [vmem:[%s2352 + $0x1ea] sm:$0xff]
    %v2775 = vld [vmem:[%s2352 + $0x1fa] sm:$0xff]
    %v2776 = vld [vmem:[%s2352 + $0x202] sm:$0xff]
    %v2777 = vld [vmem:[%s2352 + $0x212] sm:$0xff]
    %v2778 = vld [vmem:[%s2352 + $0x21a] sm:$0xff]
    %v2779 = vld [vmem:[%s2352 + $0x22a] sm:$0xff]
    %v2780 = vld [vmem:[%s2352 + $0x232] sm:$0xff]
    %v2781 = vld [vmem:[%s2352 + $0x242] sm:$0xff]
    %v2782 = vld [vmem:[%s2352 + $0x24a] sm:$0xff]
    %v2783 = vld [vmem:[%s2352 + $0x25a] sm:$0xff]
    %v2784 = vld [vmem:[%s2352 + $0x262] sm:$0xff]
    %v2785 = vld [vmem:[%s2352 + $0x272] sm:$0xff]
    %v2786 = vld [vmem:[%s2352 + $0x27a] sm:$0xff]
    %v2787 = vld [vmem:[%s2352 + $0x28a] sm:$0xff]
    %v2788 = vld [vmem:[%s2352 + $0x292] sm:$0xff]
    %v2789 = vld [vmem:[%s2352 + $0x2a2] sm:$0xff]
    %v2790 = vld [vmem:[%s2352 + $0x2aa] sm:$0xff]
    %v2791 = vld [vmem:[%s2352 + $0x2ba] sm:$0xff]
    %v2792 = vld [vmem:[%s2352 + $0x2c2] sm:$0xff]
    %v2793 = vld [vmem:[%s2352 + $0x2d2] sm:$0xff]
    %v2794 = vld [vmem:[%s2352 + $0x2da] sm:$0xff]
    %v2795 = vld [vmem:[%s2352 + $0x2ea] sm:$0xff]
    %v2796 = vld [vmem:[%s2352 + $0x2f2] sm:$0xff]
    %v2797 = vld [vmem:[%s2352 + $0x302] sm:$0xff]
    %v2798 = vld [vmem:[%s2352 + $0x30a] sm:$0xff]
    %v2799 = vld [vmem:[%s2352 + $0x31a] sm:$0xff]
    %v2800 = vld [vmem:[%s2352 + $0x322] sm:$0xff]
    %v2801 = vpack.c.bf16 %v2737, %v2737
    %v2802 = vpack.c.bf16 %v2738, %v2738
    %v2803 = vpack.c.bf16 %v2739, %v2739
    %v2804 = vpack.c.bf16 %v2740, %v2740
    %v2805 = vpack.c.bf16 %v2741, %v2741
    %v2806 = vpack.c.bf16 %v2742, %v2742
    %v2807 = vpack.c.bf16 %v2743, %v2743
    %v2808 = vpack.c.bf16 %v2744, %v2744
    %v2809 = vpack.c.bf16 %v2745, %v2745
    %v2810 = vpack.c.bf16 %v2746, %v2746
    %v2811 = vpack.c.bf16 %v2747, %v2747
    %v2812 = vpack.c.bf16 %v2748, %v2748
    %v2813 = vpack.c.bf16 %v2749, %v2749
    %v2814 = vpack.c.bf16 %v2750, %v2750
    %v2815 = vpack.c.bf16 %v2751, %v2751
    %v2816 = vpack.c.bf16 %v2752, %v2752
    %v2817 = vpack.c.bf16 %v2753, %v2753
    %v2818 = vpack.c.bf16 %v2754, %v2754
    %v2819 = vpack.c.bf16 %v2755, %v2755
    %v2820 = vpack.c.bf16 %v2756, %v2756
    %v2821 = vpack.c.bf16 %v2757, %v2757
    %v2822 = vpack.c.bf16 %v2758, %v2758
    %v2823 = vpack.c.bf16 %v2759, %v2759
    %v2824 = vpack.c.bf16 %v2760, %v2760
    %v2825 = vpack.c.bf16 %v2761, %v2761
    %v2826 = vpack.c.bf16 %v2762, %v2762
    %v2827 = vpack.c.bf16 %v2763, %v2763
    %v2828 = vpack.c.bf16 %v2764, %v2764
    %v2829 = vpack.c.bf16 %v2765, %v2765
    %v2830 = vpack.c.bf16 %v2766, %v2766
    %v2831 = vpack.c.bf16 %v2767, %v2767
    %v2832 = vpack.c.bf16 %v2768, %v2768
    %v2833 = vpack.c.bf16 %v2769, %v2769
    %v2834 = vpack.c.bf16 %v2770, %v2770
    %v2835 = vpack.c.bf16 %v2771, %v2771
    %v2836 = vpack.c.bf16 %v2772, %v2772
    %v2837 = vpack.c.bf16 %v2773, %v2773
    %v2838 = vpack.c.bf16 %v2774, %v2774
    %v2839 = vpack.c.bf16 %v2775, %v2775
    %v2840 = vpack.c.bf16 %v2776, %v2776
    %v2841 = vpack.c.bf16 %v2777, %v2777
    %v2842 = vpack.c.bf16 %v2778, %v2778
    %v2843 = vpack.c.bf16 %v2779, %v2779
    %v2844 = vpack.c.bf16 %v2780, %v2780
    %v2845 = vpack.c.bf16 %v2781, %v2781
    %v2846 = vpack.c.bf16 %v2782, %v2782
    %v2847 = vpack.c.bf16 %v2783, %v2783
    %v2848 = vpack.c.bf16 %v2784, %v2784
    %v2849 = vpack.c.bf16 %v2785, %v2785
    %v2850 = vpack.c.bf16 %v2786, %v2786
    %v2851 = vpack.c.bf16 %v2787, %v2787
    %v2852 = vpack.c.bf16 %v2788, %v2788
    %v2853 = vpack.c.bf16 %v2789, %v2789
    %v2854 = vpack.c.bf16 %v2790, %v2790
    %v2855 = vpack.c.bf16 %v2791, %v2791
    %v2856 = vpack.c.bf16 %v2792, %v2792
    %v2857 = vpack.c.bf16 %v2793, %v2793
    %v2858 = vpack.c.bf16 %v2794, %v2794
    %v2859 = vpack.c.bf16 %v2795, %v2795
    %v2860 = vpack.c.bf16 %v2796, %v2796
    %v2861 = vpack.c.bf16 %v2797, %v2797
    %v2862 = vpack.c.bf16 %v2798, %v2798
    %v2863 = vpack.c.bf16 %v2799, %v2799
    %v2864 = vpack.c.bf16 %v2800, %v2800
    %2865 = vst [vmem:[#allocation3 + $0x20] sm:$0xf] %v2801
    %2866 = vst [vmem:[#allocation3 + $0x44] sm:$0xf] %v2802
    %2867 = vst [vmem:[#allocation3 + $0x68] sm:$0xf] %v2803
    %2868 = vst [vmem:[#allocation3 + $0x8c] sm:$0xf] %v2804
    %2869 = vst [vmem:[#allocation3 + $0xb0] sm:$0xf] %v2805
    %2870 = vst [vmem:[#allocation3 + $0xd4] sm:$0xf] %v2806
    %2871 = vst [vmem:[#allocation3 + $0xf8] sm:$0xf] %v2807
    %2872 = vst [vmem:[#allocation3 + $0x11c] sm:$0xf] %v2808
    %2873 = vst [vmem:[#allocation3 + $0x140] sm:$0xf] %v2809
    %2874 = vst [vmem:[#allocation3 + $0x164] sm:$0xf] %v2810
    %2875 = vst [vmem:[#allocation3 + $0x188] sm:$0xf] %v2811
    %2876 = vst [vmem:[#allocation3 + $0x1ac] sm:$0xf] %v2812
    %2877 = vst [vmem:[#allocation3 + $0x1d0] sm:$0xf] %v2813
    %2878 = vst [vmem:[#allocation3 + $0x1f4] sm:$0xf] %v2814
    %2879 = vst [vmem:[#allocation3 + $0x218] sm:$0xf] %v2815
    %2880 = vst [vmem:[#allocation3 + $0x23c] sm:$0xf] %v2816
    %2881 = vst [vmem:[#allocation3 + $0x260] sm:$0xf] %v2817
    %2882 = vst [vmem:[#allocation3 + $0x284] sm:$0xf] %v2818
    %2883 = vst [vmem:[#allocation3 + $0x2a8] sm:$0xf] %v2819
    %2884 = vst [vmem:[#allocation3 + $0x2cc] sm:$0xf] %v2820
    %2885 = vst [vmem:[#allocation3 + $0x2f0] sm:$0xf] %v2821
    %2886 = vst [vmem:[#allocation3 + $0x314] sm:$0xf] %v2822
    %2887 = vst [vmem:[#allocation3 + $0x338] sm:$0xf] %v2823
    %2888 = vst [vmem:[#allocation3 + $0x35c] sm:$0xf] %v2824
    %2889 = vst [vmem:[#allocation3 + $0x380] sm:$0xf] %v2825
    %2890 = vst [vmem:[#allocation3 + $0x3a4] sm:$0xf] %v2826
    %2891 = vst [vmem:[#allocation3 + $0x3c8] sm:$0xf] %v2827
    %2892 = vst [vmem:[#allocation3 + $0x3ec] sm:$0xf] %v2828
    %2893 = vst [vmem:[#allocation3 + $0x410] sm:$0xf] %v2829
    %2894 = vst [vmem:[#allocation3 + $0x434] sm:$0xf] %v2830
    %2895 = vst [vmem:[#allocation3 + $0x458] sm:$0xf] %v2831
    %2896 = vst [vmem:[#allocation3 + $0x47c] sm:$0xf] %v2832
    %2897 = vst [vmem:[#allocation3 + $0x4a0] sm:$0xf] %v2833
    %2898 = vst [vmem:[#allocation3 + $0x4c4] sm:$0xf] %v2834
    %2899 = vst [vmem:[#allocation3 + $0x4e8] sm:$0xf] %v2835
    %2900 = vst [vmem:[#allocation3 + $0x50c] sm:$0xf] %v2836
    %2901 = vst [vmem:[#allocation3 + $0x530] sm:$0xf] %v2837
    %2902 = vst [vmem:[#allocation3 + $0x554] sm:$0xf] %v2838
    %2903 = vst [vmem:[#allocation3 + $0x578] sm:$0xf] %v2839
    %2904 = vst [vmem:[#allocation3 + $0x59c] sm:$0xf] %v2840
    %2905 = vst [vmem:[#allocation3 + $0x5c0] sm:$0xf] %v2841
    %2906 = vst [vmem:[#allocation3 + $0x5e4] sm:$0xf] %v2842
    %2907 = vst [vmem:[#allocation3 + $0x608] sm:$0xf] %v2843
    %2908 = vst [vmem:[#allocation3 + $0x62c] sm:$0xf] %v2844
    %2909 = vst [vmem:[#allocation3 + $0x650] sm:$0xf] %v2845
    %2910 = vst [vmem:[#allocation3 + $0x674] sm:$0xf] %v2846
    %2911 = vst [vmem:[#allocation3 + $0x698] sm:$0xf] %v2847
    %2912 = vst [vmem:[#allocation3 + $0x6bc] sm:$0xf] %v2848
    %2913 = vst [vmem:[#allocation3 + $0x6e0] sm:$0xf] %v2849
    %2914 = vst [vmem:[#allocation3 + $0x704] sm:$0xf] %v2850
    %2915 = vst [vmem:[#allocation3 + $0x728] sm:$0xf] %v2851
    %2916 = vst [vmem:[#allocation3 + $0x74c] sm:$0xf] %v2852
    %2917 = vst [vmem:[#allocation3 + $0x770] sm:$0xf] %v2853
    %2918 = vst [vmem:[#allocation3 + $0x794] sm:$0xf] %v2854
    %2919 = vst [vmem:[#allocation3 + $0x7b8] sm:$0xf] %v2855
    %2920 = vst [vmem:[#allocation3 + $0x7dc] sm:$0xf] %v2856
    %2921 = vst [vmem:[#allocation3 + $0x800] sm:$0xf] %v2857
    %2922 = vst [vmem:[#allocation3 + $0x824] sm:$0xf] %v2858
    %2923 = vst [vmem:[#allocation3 + $0x848] sm:$0xf] %v2859
    %2924 = vst [vmem:[#allocation3 + $0x86c] sm:$0xf] %v2860
    %2925 = vst [vmem:[#allocation3 + $0x890] sm:$0xf] %v2861
    %2926 = vst [vmem:[#allocation3 + $0x8b4] sm:$0xf] %v2862
    %2927 = vst [vmem:[#allocation3 + $0x8d8] sm:$0xf] %v2863
    %2928 = vst [vmem:[#allocation3 + $0x8fc] sm:$0xf] %v2864
    %v2929 = vld [vmem:[#allocation3] sm:$0xff]
    %v2930 = vld [vmem:[#allocation3 + $0x8] sm:$0xff]
    %v2931 = vld [vmem:[#allocation3 + $0x10] sm:$0xff]
    %v2932 = vld [vmem:[#allocation3 + $0x18] sm:$0xff]
    %v2933 = vld [vmem:[#allocation3 + $0x20] sm:$0xf]
    %v2934 = vld [vmem:[#allocation3 + $0x24] sm:$0xff]
    %v2935 = vld [vmem:[#allocation3 + $0x2c] sm:$0xff]
    %v2936 = vld [vmem:[#allocation3 + $0x34] sm:$0xff]
    %v2937 = vld [vmem:[#allocation3 + $0x3c] sm:$0xff]
    %v2938 = vld [vmem:[#allocation3 + $0x44] sm:$0xf]
    %v2939 = vld [vmem:[#allocation3 + $0x48] sm:$0xff]
    %v2940 = vld [vmem:[#allocation3 + $0x50] sm:$0xff]
    %v2941 = vld [vmem:[#allocation3 + $0x58] sm:$0xff]
    %v2942 = vld [vmem:[#allocation3 + $0x60] sm:$0xff]
    %v2943 = vld [vmem:[#allocation3 + $0x68] sm:$0xf]
    %v2944 = vld [vmem:[#allocation3 + $0x6c] sm:$0xff]
    %v2945 = vld [vmem:[#allocation3 + $0x74] sm:$0xff]
    %v2946 = vld [vmem:[#allocation3 + $0x7c] sm:$0xff]
    %v2947 = vld [vmem:[#allocation3 + $0x84] sm:$0xff]
    %v2948 = vld [vmem:[#allocation3 + $0x8c] sm:$0xf]
    %v2949 = vld [vmem:[#allocation3 + $0x90] sm:$0xff]
    %v2950 = vld [vmem:[#allocation3 + $0x98] sm:$0xff]
    %v2951 = vld [vmem:[#allocation3 + $0xa0] sm:$0xff]
    %v2952 = vld [vmem:[#allocation3 + $0xa8] sm:$0xff]
    %v2953 = vld [vmem:[#allocation3 + $0xb0] sm:$0xf]
    %v2954 = vld [vmem:[#allocation3 + $0xb4] sm:$0xff]
    %v2955 = vld [vmem:[#allocation3 + $0xbc] sm:$0xff]
    %v2956 = vld [vmem:[#allocation3 + $0xc4] sm:$0xff]
    %v2957 = vld [vmem:[#allocation3 + $0xcc] sm:$0xff]
    %v2958 = vld [vmem:[#allocation3 + $0xd4] sm:$0xf]
    %v2959 = vld [vmem:[#allocation3 + $0xd8] sm:$0xff]
    %v2960 = vld [vmem:[#allocation3 + $0xe0] sm:$0xff]
    %v2961 = vld [vmem:[#allocation3 + $0xe8] sm:$0xff]
    %v2962 = vld [vmem:[#allocation3 + $0xf0] sm:$0xff]
    %v2963 = vld [vmem:[#allocation3 + $0xf8] sm:$0xf]
    %v2964 = vld [vmem:[#allocation3 + $0xfc] sm:$0xff]
    %v2965 = vld [vmem:[#allocation3 + $0x104] sm:$0xff]
    %v2966 = vld [vmem:[#allocation3 + $0x10c] sm:$0xff]
    %v2967 = vld [vmem:[#allocation3 + $0x114] sm:$0xff]
    %v2968 = vld [vmem:[#allocation3 + $0x11c] sm:$0xf]
    %v2969 = vld [vmem:[#allocation3 + $0x120] sm:$0xff]
    %v2970 = vld [vmem:[#allocation3 + $0x128] sm:$0xff]
    %v2971 = vld [vmem:[#allocation3 + $0x130] sm:$0xff]
    %v2972 = vld [vmem:[#allocation3 + $0x138] sm:$0xff]
    %v2973 = vld [vmem:[#allocation3 + $0x140] sm:$0xf]
    %v2974 = vld [vmem:[#allocation3 + $0x144] sm:$0xff]
    %v2975 = vld [vmem:[#allocation3 + $0x14c] sm:$0xff]
    %v2976 = vld [vmem:[#allocation3 + $0x154] sm:$0xff]
    %v2977 = vld [vmem:[#allocation3 + $0x15c] sm:$0xff]
    %v2978 = vld [vmem:[#allocation3 + $0x164] sm:$0xf]
    %v2979 = vld [vmem:[#allocation3 + $0x168] sm:$0xff]
    %v2980 = vld [vmem:[#allocation3 + $0x170] sm:$0xff]
    %v2981 = vld [vmem:[#allocation3 + $0x178] sm:$0xff]
    %v2982 = vld [vmem:[#allocation3 + $0x180] sm:$0xff]
    %v2983 = vld [vmem:[#allocation3 + $0x188] sm:$0xf]
    %v2984 = vld [vmem:[#allocation3 + $0x18c] sm:$0xff]
    %v2985 = vld [vmem:[#allocation3 + $0x194] sm:$0xff]
    %v2986 = vld [vmem:[#allocation3 + $0x19c] sm:$0xff]
    %v2987 = vld [vmem:[#allocation3 + $0x1a4] sm:$0xff]
    %v2988 = vld [vmem:[#allocation3 + $0x1ac] sm:$0xf]
    %v2989 = vld [vmem:[#allocation3 + $0x1b0] sm:$0xff]
    %v2990 = vld [vmem:[#allocation3 + $0x1b8] sm:$0xff]
    %v2991 = vld [vmem:[#allocation3 + $0x1c0] sm:$0xff]
    %v2992 = vld [vmem:[#allocation3 + $0x1c8] sm:$0xff]
    %v2993 = vld [vmem:[#allocation3 + $0x1d0] sm:$0xf]
    %v2994 = vld [vmem:[#allocation3 + $0x1d4] sm:$0xff]
    %v2995 = vld [vmem:[#allocation3 + $0x1dc] sm:$0xff]
    %v2996 = vld [vmem:[#allocation3 + $0x1e4] sm:$0xff]
    %v2997 = vld [vmem:[#allocation3 + $0x1ec] sm:$0xff]
    %v2998 = vld [vmem:[#allocation3 + $0x1f4] sm:$0xf]
    %v2999 = vld [vmem:[#allocation3 + $0x1f8] sm:$0xff]
    %v3000 = vld [vmem:[#allocation3 + $0x200] sm:$0xff]
    %v3001 = vld [vmem:[#allocation3 + $0x208] sm:$0xff]
    %v3002 = vld [vmem:[#allocation3 + $0x210] sm:$0xff]
    %v3003 = vld [vmem:[#allocation3 + $0x218] sm:$0xf]
    %v3004 = vld [vmem:[#allocation3 + $0x21c] sm:$0xff]
    %v3005 = vld [vmem:[#allocation3 + $0x224] sm:$0xff]
    %v3006 = vld [vmem:[#allocation3 + $0x22c] sm:$0xff]
    %v3007 = vld [vmem:[#allocation3 + $0x234] sm:$0xff]
    %v3008 = vld [vmem:[#allocation3 + $0x23c] sm:$0xf]
    %v3009 = vld [vmem:[#allocation3 + $0x240] sm:$0xff]
    %v3010 = vld [vmem:[#allocation3 + $0x248] sm:$0xff]
    %v3011 = vld [vmem:[#allocation3 + $0x250] sm:$0xff]
    %v3012 = vld [vmem:[#allocation3 + $0x258] sm:$0xff]
    %v3013 = vld [vmem:[#allocation3 + $0x260] sm:$0xf]
    %v3014 = vld [vmem:[#allocation3 + $0x264] sm:$0xff]
    %v3015 = vld [vmem:[#allocation3 + $0x26c] sm:$0xff]
    %v3016 = vld [vmem:[#allocation3 + $0x274] sm:$0xff]
    %v3017 = vld [vmem:[#allocation3 + $0x27c] sm:$0xff]
    %v3018 = vld [vmem:[#allocation3 + $0x284] sm:$0xf]
    %v3019 = vld [vmem:[#allocation3 + $0x288] sm:$0xff]
    %v3020 = vld [vmem:[#allocation3 + $0x290] sm:$0xff]
    %v3021 = vld [vmem:[#allocation3 + $0x298] sm:$0xff]
    %v3022 = vld [vmem:[#allocation3 + $0x2a0] sm:$0xff]
    %v3023 = vld [vmem:[#allocation3 + $0x2a8] sm:$0xf]
    %v3024 = vld [vmem:[#allocation3 + $0x2ac] sm:$0xff]
    %v3025 = vld [vmem:[#allocation3 + $0x2b4] sm:$0xff]
    %v3026 = vld [vmem:[#allocation3 + $0x2bc] sm:$0xff]
    %v3027 = vld [vmem:[#allocation3 + $0x2c4] sm:$0xff]
    %v3028 = vld [vmem:[#allocation3 + $0x2cc] sm:$0xf]
    %v3029 = vld [vmem:[#allocation3 + $0x2d0] sm:$0xff]
    %v3030 = vld [vmem:[#allocation3 + $0x2d8] sm:$0xff]
    %v3031 = vld [vmem:[#allocation3 + $0x2e0] sm:$0xff]
    %v3032 = vld [vmem:[#allocation3 + $0x2e8] sm:$0xff]
    %v3033 = vld [vmem:[#allocation3 + $0x2f0] sm:$0xf]
    %v3034 = vld [vmem:[#allocation3 + $0x2f4] sm:$0xff]
    %v3035 = vld [vmem:[#allocation3 + $0x2fc] sm:$0xff]
    %v3036 = vld [vmem:[#allocation3 + $0x304] sm:$0xff]
    %v3037 = vld [vmem:[#allocation3 + $0x30c] sm:$0xff]
    %v3038 = vld [vmem:[#allocation3 + $0x314] sm:$0xf]
    %v3039 = vld [vmem:[#allocation3 + $0x318] sm:$0xff]
    %v3040 = vld [vmem:[#allocation3 + $0x320] sm:$0xff]
    %v3041 = vld [vmem:[#allocation3 + $0x328] sm:$0xff]
    %v3042 = vld [vmem:[#allocation3 + $0x330] sm:$0xff]
    %v3043 = vld [vmem:[#allocation3 + $0x338] sm:$0xf]
    %v3044 = vld [vmem:[#allocation3 + $0x33c] sm:$0xff]
    %v3045 = vld [vmem:[#allocation3 + $0x344] sm:$0xff]
    %v3046 = vld [vmem:[#allocation3 + $0x34c] sm:$0xff]
    %v3047 = vld [vmem:[#allocation3 + $0x354] sm:$0xff]
    %v3048 = vld [vmem:[#allocation3 + $0x35c] sm:$0xf]
    %v3049 = vld [vmem:[#allocation3 + $0x360] sm:$0xff]
    %v3050 = vld [vmem:[#allocation3 + $0x368] sm:$0xff]
    %v3051 = vld [vmem:[#allocation3 + $0x370] sm:$0xff]
    %v3052 = vld [vmem:[#allocation3 + $0x378] sm:$0xff]
    %v3053 = vld [vmem:[#allocation3 + $0x380] sm:$0xf]
    %v3054 = vld [vmem:[#allocation3 + $0x384] sm:$0xff]
    %v3055 = vld [vmem:[#allocation3 + $0x38c] sm:$0xff]
    %v3056 = vld [vmem:[#allocation3 + $0x394] sm:$0xff]
    %v3057 = vld [vmem:[#allocation3 + $0x39c] sm:$0xff]
    %v3058 = vld [vmem:[#allocation3 + $0x3a4] sm:$0xf]
    %v3059 = vld [vmem:[#allocation3 + $0x3a8] sm:$0xff]
    %v3060 = vld [vmem:[#allocation3 + $0x3b0] sm:$0xff]
    %v3061 = vld [vmem:[#allocation3 + $0x3b8] sm:$0xff]
    %v3062 = vld [vmem:[#allocation3 + $0x3c0] sm:$0xff]
    %v3063 = vld [vmem:[#allocation3 + $0x3c8] sm:$0xf]
    %v3064 = vld [vmem:[#allocation3 + $0x3cc] sm:$0xff]
    %v3065 = vld [vmem:[#allocation3 + $0x3d4] sm:$0xff]
    %v3066 = vld [vmem:[#allocation3 + $0x3dc] sm:$0xff]
    %v3067 = vld [vmem:[#allocation3 + $0x3e4] sm:$0xff]
    %v3068 = vld [vmem:[#allocation3 + $0x3ec] sm:$0xf]
    %v3069 = vld [vmem:[#allocation3 + $0x3f0] sm:$0xff]
    %v3070 = vld [vmem:[#allocation3 + $0x3f8] sm:$0xff]
    %v3071 = vld [vmem:[#allocation3 + $0x400] sm:$0xff]
    %v3072 = vld [vmem:[#allocation3 + $0x408] sm:$0xff]
    %v3073 = vld [vmem:[#allocation3 + $0x410] sm:$0xf]
    %v3074 = vld [vmem:[#allocation3 + $0x414] sm:$0xff]
    %v3075 = vld [vmem:[#allocation3 + $0x41c] sm:$0xff]
    %v3076 = vld [vmem:[#allocation3 + $0x424] sm:$0xff]
    %v3077 = vld [vmem:[#allocation3 + $0x42c] sm:$0xff]
    %v3078 = vld [vmem:[#allocation3 + $0x434] sm:$0xf]
    %v3079 = vld [vmem:[#allocation3 + $0x438] sm:$0xff]
    %v3080 = vld [vmem:[#allocation3 + $0x440] sm:$0xff]
    %v3081 = vld [vmem:[#allocation3 + $0x448] sm:$0xff]
    %v3082 = vld [vmem:[#allocation3 + $0x450] sm:$0xff]
    %v3083 = vld [vmem:[#allocation3 + $0x458] sm:$0xf]
    %v3084 = vld [vmem:[#allocation3 + $0x45c] sm:$0xff]
    %v3085 = vld [vmem:[#allocation3 + $0x464] sm:$0xff]
    %v3086 = vld [vmem:[#allocation3 + $0x46c] sm:$0xff]
    %v3087 = vld [vmem:[#allocation3 + $0x474] sm:$0xff]
    %v3088 = vld [vmem:[#allocation3 + $0x47c] sm:$0xf]
    %v3089 = vld [vmem:[#allocation3 + $0x480] sm:$0xff]
    %v3090 = vld [vmem:[#allocation3 + $0x488] sm:$0xff]
    %v3091 = vld [vmem:[#allocation3 + $0x490] sm:$0xff]
    %v3092 = vld [vmem:[#allocation3 + $0x498] sm:$0xff]
    %v3093 = vld [vmem:[#allocation3 + $0x4a0] sm:$0xf]
    %v3094 = vld [vmem:[#allocation3 + $0x4a4] sm:$0xff]
    %v3095 = vld [vmem:[#allocation3 + $0x4ac] sm:$0xff]
    %v3096 = vld [vmem:[#allocation3 + $0x4b4] sm:$0xff]
    %v3097 = vld [vmem:[#allocation3 + $0x4bc] sm:$0xff]
    %v3098 = vld [vmem:[#allocation3 + $0x4c4] sm:$0xf]
    %v3099 = vld [vmem:[#allocation3 + $0x4c8] sm:$0xff]
    %v3100 = vld [vmem:[#allocation3 + $0x4d0] sm:$0xff]
    %v3101 = vld [vmem:[#allocation3 + $0x4d8] sm:$0xff]
    %v3102 = vld [vmem:[#allocation3 + $0x4e0] sm:$0xff]
    %v3103 = vld [vmem:[#allocation3 + $0x4e8] sm:$0xf]
    %v3104 = vld [vmem:[#allocation3 + $0x4ec] sm:$0xff]
    %v3105 = vld [vmem:[#allocation3 + $0x4f4] sm:$0xff]
    %v3106 = vld [vmem:[#allocation3 + $0x4fc] sm:$0xff]
    %v3107 = vld [vmem:[#allocation3 + $0x504] sm:$0xff]
    %v3108 = vld [vmem:[#allocation3 + $0x50c] sm:$0xf]
    %v3109 = vld [vmem:[#allocation3 + $0x510] sm:$0xff]
    %v3110 = vld [vmem:[#allocation3 + $0x518] sm:$0xff]
    %v3111 = vld [vmem:[#allocation3 + $0x520] sm:$0xff]
    %v3112 = vld [vmem:[#allocation3 + $0x528] sm:$0xff]
    %v3113 = vld [vmem:[#allocation3 + $0x530] sm:$0xf]
    %v3114 = vld [vmem:[#allocation3 + $0x534] sm:$0xff]
    %v3115 = vld [vmem:[#allocation3 + $0x53c] sm:$0xff]
    %v3116 = vld [vmem:[#allocation3 + $0x544] sm:$0xff]
    %v3117 = vld [vmem:[#allocation3 + $0x54c] sm:$0xff]
    %v3118 = vld [vmem:[#allocation3 + $0x554] sm:$0xf]
    %v3119 = vld [vmem:[#allocation3 + $0x558] sm:$0xff]
    %v3120 = vld [vmem:[#allocation3 + $0x560] sm:$0xff]
    %v3121 = vld [vmem:[#allocation3 + $0x568] sm:$0xff]
    %v3122 = vld [vmem:[#allocation3 + $0x570] sm:$0xff]
    %v3123 = vld [vmem:[#allocation3 + $0x578] sm:$0xf]
    %v3124 = vld [vmem:[#allocation3 + $0x57c] sm:$0xff]
    %v3125 = vld [vmem:[#allocation3 + $0x584] sm:$0xff]
    %v3126 = vld [vmem:[#allocation3 + $0x58c] sm:$0xff]
    %v3127 = vld [vmem:[#allocation3 + $0x594] sm:$0xff]
    %v3128 = vld [vmem:[#allocation3 + $0x59c] sm:$0xf]
    %v3129 = vld [vmem:[#allocation3 + $0x5a0] sm:$0xff]
    %v3130 = vld [vmem:[#allocation3 + $0x5a8] sm:$0xff]
    %v3131 = vld [vmem:[#allocation3 + $0x5b0] sm:$0xff]
    %v3132 = vld [vmem:[#allocation3 + $0x5b8] sm:$0xff]
    %v3133 = vld [vmem:[#allocation3 + $0x5c0] sm:$0xf]
    %v3134 = vld [vmem:[#allocation3 + $0x5c4] sm:$0xff]
    %v3135 = vld [vmem:[#allocation3 + $0x5cc] sm:$0xff]
    %v3136 = vld [vmem:[#allocation3 + $0x5d4] sm:$0xff]
    %v3137 = vld [vmem:[#allocation3 + $0x5dc] sm:$0xff]
    %v3138 = vld [vmem:[#allocation3 + $0x5e4] sm:$0xf]
    %v3139 = vld [vmem:[#allocation3 + $0x5e8] sm:$0xff]
    %v3140 = vld [vmem:[#allocation3 + $0x5f0] sm:$0xff]
    %v3141 = vld [vmem:[#allocation3 + $0x5f8] sm:$0xff]
    %v3142 = vld [vmem:[#allocation3 + $0x600] sm:$0xff]
    %v3143 = vld [vmem:[#allocation3 + $0x608] sm:$0xf]
    %v3144 = vld [vmem:[#allocation3 + $0x60c] sm:$0xff]
    %v3145 = vld [vmem:[#allocation3 + $0x614] sm:$0xff]
    %v3146 = vld [vmem:[#allocation3 + $0x61c] sm:$0xff]
    %v3147 = vld [vmem:[#allocation3 + $0x624] sm:$0xff]
    %v3148 = vld [vmem:[#allocation3 + $0x62c] sm:$0xf]
    %v3149 = vld [vmem:[#allocation3 + $0x630] sm:$0xff]
    %v3150 = vld [vmem:[#allocation3 + $0x638] sm:$0xff]
    %v3151 = vld [vmem:[#allocation3 + $0x640] sm:$0xff]
    %v3152 = vld [vmem:[#allocation3 + $0x648] sm:$0xff]
    %v3153 = vld [vmem:[#allocation3 + $0x650] sm:$0xf]
    %v3154 = vld [vmem:[#allocation3 + $0x654] sm:$0xff]
    %v3155 = vld [vmem:[#allocation3 + $0x65c] sm:$0xff]
    %v3156 = vld [vmem:[#allocation3 + $0x664] sm:$0xff]
    %v3157 = vld [vmem:[#allocation3 + $0x66c] sm:$0xff]
    %v3158 = vld [vmem:[#allocation3 + $0x674] sm:$0xf]
    %v3159 = vld [vmem:[#allocation3 + $0x678] sm:$0xff]
    %v3160 = vld [vmem:[#allocation3 + $0x680] sm:$0xff]
    %v3161 = vld [vmem:[#allocation3 + $0x688] sm:$0xff]
    %v3162 = vld [vmem:[#allocation3 + $0x690] sm:$0xff]
    %v3163 = vld [vmem:[#allocation3 + $0x698] sm:$0xf]
    %v3164 = vld [vmem:[#allocation3 + $0x69c] sm:$0xff]
    %v3165 = vld [vmem:[#allocation3 + $0x6a4] sm:$0xff]
    %v3166 = vld [vmem:[#allocation3 + $0x6ac] sm:$0xff]
    %v3167 = vld [vmem:[#allocation3 + $0x6b4] sm:$0xff]
    %v3168 = vld [vmem:[#allocation3 + $0x6bc] sm:$0xf]
    %v3169 = vld [vmem:[#allocation3 + $0x6c0] sm:$0xff]
    %v3170 = vld [vmem:[#allocation3 + $0x6c8] sm:$0xff]
    %v3171 = vld [vmem:[#allocation3 + $0x6d0] sm:$0xff]
    %v3172 = vld [vmem:[#allocation3 + $0x6d8] sm:$0xff]
    %v3173 = vld [vmem:[#allocation3 + $0x6e0] sm:$0xf]
    %v3174 = vld [vmem:[#allocation3 + $0x6e4] sm:$0xff]
    %v3175 = vld [vmem:[#allocation3 + $0x6ec] sm:$0xff]
    %v3176 = vld [vmem:[#allocation3 + $0x6f4] sm:$0xff]
    %v3177 = vld [vmem:[#allocation3 + $0x6fc] sm:$0xff]
    %v3178 = vld [vmem:[#allocation3 + $0x704] sm:$0xf]
    %v3179 = vld [vmem:[#allocation3 + $0x708] sm:$0xff]
    %v3180 = vld [vmem:[#allocation3 + $0x710] sm:$0xff]
    %v3181 = vld [vmem:[#allocation3 + $0x718] sm:$0xff]
    %v3182 = vld [vmem:[#allocation3 + $0x720] sm:$0xff]
    %v3183 = vld [vmem:[#allocation3 + $0x728] sm:$0xf]
    %v3184 = vld [vmem:[#allocation3 + $0x72c] sm:$0xff]
    %v3185 = vld [vmem:[#allocation3 + $0x734] sm:$0xff]
    %v3186 = vld [vmem:[#allocation3 + $0x73c] sm:$0xff]
    %v3187 = vld [vmem:[#allocation3 + $0x744] sm:$0xff]
    %v3188 = vld [vmem:[#allocation3 + $0x74c] sm:$0xf]
    %v3189 = vld [vmem:[#allocation3 + $0x750] sm:$0xff]
    %v3190 = vld [vmem:[#allocation3 + $0x758] sm:$0xff]
    %v3191 = vld [vmem:[#allocation3 + $0x760] sm:$0xff]
    %v3192 = vld [vmem:[#allocation3 + $0x768] sm:$0xff]
    %v3193 = vld [vmem:[#allocation3 + $0x770] sm:$0xf]
    %v3194 = vld [vmem:[#allocation3 + $0x774] sm:$0xff]
    %v3195 = vld [vmem:[#allocation3 + $0x77c] sm:$0xff]
    %v3196 = vld [vmem:[#allocation3 + $0x784] sm:$0xff]
    %v3197 = vld [vmem:[#allocation3 + $0x78c] sm:$0xff]
    %v3198 = vld [vmem:[#allocation3 + $0x794] sm:$0xf]
    %v3199 = vld [vmem:[#allocation3 + $0x798] sm:$0xff]
    %v3200 = vld [vmem:[#allocation3 + $0x7a0] sm:$0xff]
    %v3201 = vld [vmem:[#allocation3 + $0x7a8] sm:$0xff]
    %v3202 = vld [vmem:[#allocation3 + $0x7b0] sm:$0xff]
    %v3203 = vld [vmem:[#allocation3 + $0x7b8] sm:$0xf]
    %v3204 = vld [vmem:[#allocation3 + $0x7bc] sm:$0xff]
    %v3205 = vld [vmem:[#allocation3 + $0x7c4] sm:$0xff]
    %v3206 = vld [vmem:[#allocation3 + $0x7cc] sm:$0xff]
    %v3207 = vld [vmem:[#allocation3 + $0x7d4] sm:$0xff]
    %v3208 = vld [vmem:[#allocation3 + $0x7dc] sm:$0xf]
    %v3209 = vld [vmem:[#allocation3 + $0x7e0] sm:$0xff]
    %v3210 = vld [vmem:[#allocation3 + $0x7e8] sm:$0xff]
    %v3211 = vld [vmem:[#allocation3 + $0x7f0] sm:$0xff]
    %v3212 = vld [vmem:[#allocation3 + $0x7f8] sm:$0xff]
    %v3213 = vld [vmem:[#allocation3 + $0x800] sm:$0xf]
    %v3214 = vld [vmem:[#allocation3 + $0x804] sm:$0xff]
    %v3215 = vld [vmem:[#allocation3 + $0x80c] sm:$0xff]
    %v3216 = vld [vmem:[#allocation3 + $0x814] sm:$0xff]
    %v3217 = vld [vmem:[#allocation3 + $0x81c] sm:$0xff]
    %v3218 = vld [vmem:[#allocation3 + $0x824] sm:$0xf]
    %v3219 = vld [vmem:[#allocation3 + $0x828] sm:$0xff]
    %v3220 = vld [vmem:[#allocation3 + $0x830] sm:$0xff]
    %v3221 = vld [vmem:[#allocation3 + $0x838] sm:$0xff]
    %v3222 = vld [vmem:[#allocation3 + $0x840] sm:$0xff]
    %v3223 = vld [vmem:[#allocation3 + $0x848] sm:$0xf]
    %v3224 = vld [vmem:[#allocation3 + $0x84c] sm:$0xff]
    %v3225 = vld [vmem:[#allocation3 + $0x854] sm:$0xff]
    %v3226 = vld [vmem:[#allocation3 + $0x85c] sm:$0xff]
    %v3227 = vld [vmem:[#allocation3 + $0x864] sm:$0xff]
    %v3228 = vld [vmem:[#allocation3 + $0x86c] sm:$0xf]
    %v3229 = vld [vmem:[#allocation3 + $0x870] sm:$0xff]
    %v3230 = vld [vmem:[#allocation3 + $0x878] sm:$0xff]
    %v3231 = vld [vmem:[#allocation3 + $0x880] sm:$0xff]
    %v3232 = vld [vmem:[#allocation3 + $0x888] sm:$0xff]
    %v3233 = vld [vmem:[#allocation3 + $0x890] sm:$0xf]
    %v3234 = vld [vmem:[#allocation3 + $0x894] sm:$0xff]
    %v3235 = vld [vmem:[#allocation3 + $0x89c] sm:$0xff]
    %v3236 = vld [vmem:[#allocation3 + $0x8a4] sm:$0xff]
    %v3237 = vld [vmem:[#allocation3 + $0x8ac] sm:$0xff]
    %v3238 = vld [vmem:[#allocation3 + $0x8b4] sm:$0xf]
    %v3239 = vld [vmem:[#allocation3 + $0x8b8] sm:$0xff]
    %v3240 = vld [vmem:[#allocation3 + $0x8c0] sm:$0xff]
    %v3241 = vld [vmem:[#allocation3 + $0x8c8] sm:$0xff]
    %v3242 = vld [vmem:[#allocation3 + $0x8d0] sm:$0xff]
    %v3243 = vld [vmem:[#allocation3 + $0x8d8] sm:$0xf]
    %v3244 = vld [vmem:[#allocation3 + $0x8dc] sm:$0xff]
    %v3245 = vld [vmem:[#allocation3 + $0x8e4] sm:$0xff]
    %v3246 = vld [vmem:[#allocation3 + $0x8ec] sm:$0xff]
    %v3247 = vld [vmem:[#allocation3 + $0x8f4] sm:$0xff]
    %v3248 = vld [vmem:[#allocation3 + $0x8fc] sm:$0xf]
    %v3249 = vld [vmem:[%s5] sm:$0xf]
    %v3250 = vld [vmem:[%s5 + $0x4] sm:$0xf]
    %v3251 = vld [vmem:[%s5 + $0x8] sm:$0xf]
    %v3252 = vld [vmem:[%s5 + $0xc] sm:$0xf]
    %v3253 = vld [vmem:[%s5 + $0x10] sm:$0xf]
    %v3254 = vld [vmem:[%s5 + $0x14] sm:$0xf]
    %v3255 = vld [vmem:[%s5 + $0x18] sm:$0xf]
    %v3256 = vld [vmem:[%s5 + $0x1c] sm:$0xf]
    %v3257 = vld [vmem:[%s5 + $0x20] sm:$0xf]
    %v3258 = vld [vmem:[%s5 + $0x24] sm:$0xf]
    %v3259 = vld [vmem:[%s5 + $0x28] sm:$0xf]
    %v3260 = vld [vmem:[%s5 + $0x2c] sm:$0xf]
    %v3261 = vld [vmem:[%s5 + $0x30] sm:$0xf]
    %v3262 = vld [vmem:[%s5 + $0x34] sm:$0xf]
    %v3263 = vld [vmem:[%s5 + $0x38] sm:$0xf]
    %v3264 = vld [vmem:[%s5 + $0x3c] sm:$0xf]
    %v3265 = vld [vmem:[%s5 + $0x40] sm:$0xf]
    %v3266 = vld [vmem:[%s5 + $0x44] sm:$0xf]
    %v3267 = vld [vmem:[%s5 + $0x48] sm:$0xf]
    %v3268 = vld [vmem:[%s5 + $0x4c] sm:$0xf]
    %v3269 = vld [vmem:[%s5 + $0x50] sm:$0xf]
    %v3270 = vld [vmem:[%s5 + $0x54] sm:$0xf]
    %v3271 = vld [vmem:[%s5 + $0x58] sm:$0xf]
    %v3272 = vld [vmem:[%s5 + $0x5c] sm:$0xf]
    %v3273 = vld [vmem:[%s5 + $0x60] sm:$0xf]
    %v3274 = vld [vmem:[%s5 + $0x64] sm:$0xf]
    %v3275 = vld [vmem:[%s5 + $0x68] sm:$0xf]
    %v3276 = vld [vmem:[%s5 + $0x6c] sm:$0xf]
    %v3277 = vld [vmem:[%s5 + $0x70] sm:$0xf]
    %v3278 = vld [vmem:[%s5 + $0x74] sm:$0xf]
    %v3279 = vld [vmem:[%s5 + $0x78] sm:$0xf]
    %v3280 = vld [vmem:[%s5 + $0x7c] sm:$0xf]
    %v3281 = vld [vmem:[%s5 + $0x80] sm:$0xf]
    %v3282 = vld [vmem:[%s5 + $0x84] sm:$0xf]
    %v3283 = vld [vmem:[%s5 + $0x88] sm:$0xf]
    %v3284 = vld [vmem:[%s5 + $0x8c] sm:$0xf]
    %v3285 = vld [vmem:[%s5 + $0x90] sm:$0xf]
    %v3286 = vld [vmem:[%s5 + $0x94] sm:$0xf]
    %v3287 = vld [vmem:[%s5 + $0x98] sm:$0xf]
    %v3288 = vld [vmem:[%s5 + $0x9c] sm:$0xf]
    %v3289 = vld [vmem:[%s5 + $0xa0] sm:$0xf]
    %v3290 = vld [vmem:[%s5 + $0xa4] sm:$0xf]
    %v3291 = vld [vmem:[%s5 + $0xa8] sm:$0xf]
    %v3292 = vld [vmem:[%s5 + $0xac] sm:$0xf]
    %v3293 = vld [vmem:[%s5 + $0xb0] sm:$0xf]
    %v3294 = vld [vmem:[%s5 + $0xb4] sm:$0xf]
    %v3295 = vld [vmem:[%s5 + $0xb8] sm:$0xf]
    %v3296 = vld [vmem:[%s5 + $0xbc] sm:$0xf]
    %v3297 = vld [vmem:[%s5 + $0xc0] sm:$0xf]
    %v3298 = vld [vmem:[%s5 + $0xc4] sm:$0xf]
    %v3299 = vld [vmem:[%s5 + $0xc8] sm:$0xf]
    %v3300 = vld [vmem:[%s5 + $0xcc] sm:$0xf]
    %v3301 = vld [vmem:[%s5 + $0xd0] sm:$0xf]
    %v3302 = vld [vmem:[%s5 + $0xd4] sm:$0xf]
    %v3303 = vld [vmem:[%s5 + $0xd8] sm:$0xf]
    %v3304 = vld [vmem:[%s5 + $0xdc] sm:$0xf]
    %v3305 = vld [vmem:[%s5 + $0xe0] sm:$0xf]
    %v3306 = vld [vmem:[%s5 + $0xe4] sm:$0xf]
    %v3307 = vld [vmem:[%s5 + $0xe8] sm:$0xf]
    %v3308 = vld [vmem:[%s5 + $0xec] sm:$0xf]
    %v3309 = vld [vmem:[%s5 + $0xf0] sm:$0xf]
    %v3310 = vld [vmem:[%s5 + $0xf4] sm:$0xf]
    %v3311 = vld [vmem:[%s5 + $0xf8] sm:$0xf]
    %v3312 = vld [vmem:[%s5 + $0xfc] sm:$0xf]
    %v3313 = vld [vmem:[%s5 + $0x100] sm:$0xf]
    %v3314 = vld [vmem:[%s5 + $0x104] sm:$0xf]
    %v3315 = vld [vmem:[%s5 + $0x108] sm:$0xf]
    %v3316 = vld [vmem:[%s5 + $0x10c] sm:$0xf]
    %v3317 = vld [vmem:[%s5 + $0x110] sm:$0xf]
    %v3318 = vld [vmem:[%s5 + $0x114] sm:$0xf]
    %v3319 = vld [vmem:[%s5 + $0x118] sm:$0xf]
    %v3320 = vld [vmem:[%s5 + $0x11c] sm:$0xf]
    %v3321 = vld [vmem:[%s5 + $0x120] sm:$0xf]
    %v3322 = vld [vmem:[%s5 + $0x124] sm:$0xf]
    %v3323 = vld [vmem:[%s5 + $0x128] sm:$0xf]
    %v3324 = vld [vmem:[%s5 + $0x12c] sm:$0xf]
    %v3325 = vld [vmem:[%s5 + $0x130] sm:$0xf]
    %v3326 = vld [vmem:[%s5 + $0x134] sm:$0xf]
    %v3327 = vld [vmem:[%s5 + $0x138] sm:$0xf]
    %v3328 = vld [vmem:[%s5 + $0x13c] sm:$0xf]
    %v3329 = vld [vmem:[%s5 + $0x140] sm:$0xf]
    %v3330 = vld [vmem:[%s5 + $0x144] sm:$0xf]
    %v3331 = vld [vmem:[%s5 + $0x148] sm:$0xf]
    %v3332 = vld [vmem:[%s5 + $0x14c] sm:$0xf]
    %v3333 = vld [vmem:[%s5 + $0x150] sm:$0xf]
    %v3334 = vld [vmem:[%s5 + $0x154] sm:$0xf]
    %v3335 = vld [vmem:[%s5 + $0x158] sm:$0xf]
    %v3336 = vld [vmem:[%s5 + $0x15c] sm:$0xf]
    %v3337 = vld [vmem:[%s5 + $0x160] sm:$0xf]
    %v3338 = vld [vmem:[%s5 + $0x164] sm:$0xf]
    %v3339 = vld [vmem:[%s5 + $0x168] sm:$0xf]
    %v3340 = vld [vmem:[%s5 + $0x16c] sm:$0xf]
    %v3341 = vld [vmem:[%s5 + $0x170] sm:$0xf]
    %v3342 = vld [vmem:[%s5 + $0x174] sm:$0xf]
    %v3343 = vld [vmem:[%s5 + $0x178] sm:$0xf]
    %v3344 = vld [vmem:[%s5 + $0x17c] sm:$0xf]
    %v3345 = vld [vmem:[%s5 + $0x180] sm:$0xf]
    %v3346 = vld [vmem:[%s5 + $0x184] sm:$0xf]
    %v3347 = vld [vmem:[%s5 + $0x188] sm:$0xf]
    %v3348 = vld [vmem:[%s5 + $0x18c] sm:$0xf]
    %v3349 = vld [vmem:[%s5 + $0x190] sm:$0xf]
    %v3350 = vld [vmem:[%s5 + $0x194] sm:$0xf]
    %v3351 = vld [vmem:[%s5 + $0x198] sm:$0xf]
    %v3352 = vld [vmem:[%s5 + $0x19c] sm:$0xf]
    %v3353 = vld [vmem:[%s5 + $0x1a0] sm:$0xf]
    %v3354 = vld [vmem:[%s5 + $0x1a4] sm:$0xf]
    %v3355 = vld [vmem:[%s5 + $0x1a8] sm:$0xf]
    %v3356 = vld [vmem:[%s5 + $0x1ac] sm:$0xf]
    %v3357 = vld [vmem:[%s5 + $0x1b0] sm:$0xf]
    %v3358 = vld [vmem:[%s5 + $0x1b4] sm:$0xf]
    %v3359 = vld [vmem:[%s5 + $0x1b8] sm:$0xf]
    %v3360 = vld [vmem:[%s5 + $0x1bc] sm:$0xf]
    %v3361 = vld [vmem:[%s5 + $0x1c0] sm:$0xf]
    %v3362 = vld [vmem:[%s5 + $0x1c4] sm:$0xf]
    %v3363 = vld [vmem:[%s5 + $0x1c8] sm:$0xf]
    %v3364 = vld [vmem:[%s5 + $0x1cc] sm:$0xf]
    %v3365 = vld [vmem:[%s5 + $0x1d0] sm:$0xf]
    %v3366 = vld [vmem:[%s5 + $0x1d4] sm:$0xf]
    %v3367 = vld [vmem:[%s5 + $0x1d8] sm:$0xf]
    %v3368 = vld [vmem:[%s5 + $0x1dc] sm:$0xf]
    %v3369 = vld [vmem:[%s5 + $0x1e0] sm:$0xf]
    %v3370 = vld [vmem:[%s5 + $0x1e4] sm:$0xf]
    %v3371 = vld [vmem:[%s5 + $0x1e8] sm:$0xf]
    %v3372 = vld [vmem:[%s5 + $0x1ec] sm:$0xf]
    %v3373 = vld [vmem:[%s5 + $0x1f0] sm:$0xf]
    %v3374 = vld [vmem:[%s5 + $0x1f4] sm:$0xf]
    %v3375 = vld [vmem:[%s5 + $0x1f8] sm:$0xf]
    %v3376 = vld [vmem:[%s5 + $0x1fc] sm:$0xf]
    %v3377 = vld [vmem:[%s5 + $0x200] sm:$0xf]
    %v3378 = vld [vmem:[%s5 + $0x204] sm:$0xf]
    %v3379 = vld [vmem:[%s5 + $0x208] sm:$0xf]
    %v3380 = vld [vmem:[%s5 + $0x20c] sm:$0xf]
    %v3381 = vld [vmem:[%s5 + $0x210] sm:$0xf]
    %v3382 = vld [vmem:[%s5 + $0x214] sm:$0xf]
    %v3383 = vld [vmem:[%s5 + $0x218] sm:$0xf]
    %v3384 = vld [vmem:[%s5 + $0x21c] sm:$0xf]
    %v3385 = vld [vmem:[%s5 + $0x220] sm:$0xf]
    %v3386 = vld [vmem:[%s5 + $0x224] sm:$0xf]
    %v3387 = vld [vmem:[%s5 + $0x228] sm:$0xf]
    %v3388 = vld [vmem:[%s5 + $0x22c] sm:$0xf]
    %v3389 = vld [vmem:[%s5 + $0x230] sm:$0xf]
    %v3390 = vld [vmem:[%s5 + $0x234] sm:$0xf]
    %v3391 = vld [vmem:[%s5 + $0x238] sm:$0xf]
    %v3392 = vld [vmem:[%s5 + $0x23c] sm:$0xf]
    %v3713 = vunpack.c.l.b16 %v2929
    %v3714 = vunpack.c.h.b16 %v2929
    %v3715 = vunpack.c.l.b16 %v2930
    %v3716 = vunpack.c.h.b16 %v2930
    %v3717 = vunpack.c.l.b16 %v2931
    %v3718 = vunpack.c.h.b16 %v2931
    %v3719 = vunpack.c.l.b16 %v2932
    %v3720 = vunpack.c.h.b16 %v2932
    %v3721 = vunpack.c.l.b16 %v2933
    %v3722 = vunpack.c.l.b16 %v2934
    %v3723 = vunpack.c.h.b16 %v2934
    %v3724 = vunpack.c.l.b16 %v2935
    %v3725 = vunpack.c.h.b16 %v2935
    %v3726 = vunpack.c.l.b16 %v2936
    %v3727 = vunpack.c.h.b16 %v2936
    %v3728 = vunpack.c.l.b16 %v2937
    %v3729 = vunpack.c.h.b16 %v2937
    %v3730 = vunpack.c.l.b16 %v2938
    %v3731 = vunpack.c.l.b16 %v2939
    %v3732 = vunpack.c.h.b16 %v2939
    %v3733 = vunpack.c.l.b16 %v2940
    %v3734 = vunpack.c.h.b16 %v2940
    %v3735 = vunpack.c.l.b16 %v2941
    %v3736 = vunpack.c.h.b16 %v2941
    %v3737 = vunpack.c.l.b16 %v2942
    %v3738 = vunpack.c.h.b16 %v2942
    %v3739 = vunpack.c.l.b16 %v2943
    %v3740 = vunpack.c.l.b16 %v2944
    %v3741 = vunpack.c.h.b16 %v2944
    %v3742 = vunpack.c.l.b16 %v2945
    %v3743 = vunpack.c.h.b16 %v2945
    %v3744 = vunpack.c.l.b16 %v2946
    %v3745 = vunpack.c.h.b16 %v2946
    %v3746 = vunpack.c.l.b16 %v2947
    %v3747 = vunpack.c.h.b16 %v2947
    %v3748 = vunpack.c.l.b16 %v2948
    %v3749 = vunpack.c.l.b16 %v2949
    %v3750 = vunpack.c.h.b16 %v2949
    %v3751 = vunpack.c.l.b16 %v2950
    %v3752 = vunpack.c.h.b16 %v2950
    %v3753 = vunpack.c.l.b16 %v2951
    %v3754 = vunpack.c.h.b16 %v2951
    %v3755 = vunpack.c.l.b16 %v2952
    %v3756 = vunpack.c.h.b16 %v2952
    %v3757 = vunpack.c.l.b16 %v2953
    %v3758 = vunpack.c.l.b16 %v2954
    %v3759 = vunpack.c.h.b16 %v2954
    %v3760 = vunpack.c.l.b16 %v2955
    %v3761 = vunpack.c.h.b16 %v2955
    %v3762 = vunpack.c.l.b16 %v2956
    %v3763 = vunpack.c.h.b16 %v2956
    %v3764 = vunpack.c.l.b16 %v2957
    %v3765 = vunpack.c.h.b16 %v2957
    %v3766 = vunpack.c.l.b16 %v2958
    %v3767 = vunpack.c.l.b16 %v2959
    %v3768 = vunpack.c.h.b16 %v2959
    %v3769 = vunpack.c.l.b16 %v2960
    %v3770 = vunpack.c.h.b16 %v2960
    %v3771 = vunpack.c.l.b16 %v2961
    %v3772 = vunpack.c.h.b16 %v2961
    %v3773 = vunpack.c.l.b16 %v2962
    %v3774 = vunpack.c.h.b16 %v2962
    %v3775 = vunpack.c.l.b16 %v2963
    %v3776 = vunpack.c.l.b16 %v2964
    %v3777 = vunpack.c.h.b16 %v2964
    %v3778 = vunpack.c.l.b16 %v2965
    %v3779 = vunpack.c.h.b16 %v2965
    %v3780 = vunpack.c.l.b16 %v2966
    %v3781 = vunpack.c.h.b16 %v2966
    %v3782 = vunpack.c.l.b16 %v2967
    %v3783 = vunpack.c.h.b16 %v2967
    %v3784 = vunpack.c.l.b16 %v2968
    %v3785 = vunpack.c.l.b16 %v2969
    %v3786 = vunpack.c.h.b16 %v2969
    %v3787 = vunpack.c.l.b16 %v2970
    %v3788 = vunpack.c.h.b16 %v2970
    %v3789 = vunpack.c.l.b16 %v2971
    %v3790 = vunpack.c.h.b16 %v2971
    %v3791 = vunpack.c.l.b16 %v2972
    %v3792 = vunpack.c.h.b16 %v2972
    %v3793 = vunpack.c.l.b16 %v2973
    %v3794 = vunpack.c.l.b16 %v2974
    %v3795 = vunpack.c.h.b16 %v2974
    %v3796 = vunpack.c.l.b16 %v2975
    %v3797 = vunpack.c.h.b16 %v2975
    %v3798 = vunpack.c.l.b16 %v2976
    %v3799 = vunpack.c.h.b16 %v2976
    %v3800 = vunpack.c.l.b16 %v2977
    %v3801 = vunpack.c.h.b16 %v2977
    %v3802 = vunpack.c.l.b16 %v2978
    %v3803 = vunpack.c.l.b16 %v2979
    %v3804 = vunpack.c.h.b16 %v2979
    %v3805 = vunpack.c.l.b16 %v2980
    %v3806 = vunpack.c.h.b16 %v2980
    %v3807 = vunpack.c.l.b16 %v2981
    %v3808 = vunpack.c.h.b16 %v2981
    %v3809 = vunpack.c.l.b16 %v2982
    %v3810 = vunpack.c.h.b16 %v2982
    %v3811 = vunpack.c.l.b16 %v2983
    %v3812 = vunpack.c.l.b16 %v2984
    %v3813 = vunpack.c.h.b16 %v2984
    %v3814 = vunpack.c.l.b16 %v2985
    %v3815 = vunpack.c.h.b16 %v2985
    %v3816 = vunpack.c.l.b16 %v2986
    %v3817 = vunpack.c.h.b16 %v2986
    %v3818 = vunpack.c.l.b16 %v2987
    %v3819 = vunpack.c.h.b16 %v2987
    %v3820 = vunpack.c.l.b16 %v2988
    %v3821 = vunpack.c.l.b16 %v2989
    %v3822 = vunpack.c.h.b16 %v2989
    %v3823 = vunpack.c.l.b16 %v2990
    %v3824 = vunpack.c.h.b16 %v2990
    %v3825 = vunpack.c.l.b16 %v2991
    %v3826 = vunpack.c.h.b16 %v2991
    %v3827 = vunpack.c.l.b16 %v2992
    %v3828 = vunpack.c.h.b16 %v2992
    %v3829 = vunpack.c.l.b16 %v2993
    %v3830 = vunpack.c.l.b16 %v2994
    %v3831 = vunpack.c.h.b16 %v2994
    %v3832 = vunpack.c.l.b16 %v2995
    %v3833 = vunpack.c.h.b16 %v2995
    %v3834 = vunpack.c.l.b16 %v2996
    %v3835 = vunpack.c.h.b16 %v2996
    %v3836 = vunpack.c.l.b16 %v2997
    %v3837 = vunpack.c.h.b16 %v2997
    %v3838 = vunpack.c.l.b16 %v2998
    %v3839 = vunpack.c.l.b16 %v2999
    %v3840 = vunpack.c.h.b16 %v2999
    %v3841 = vunpack.c.l.b16 %v3000
    %v3842 = vunpack.c.h.b16 %v3000
    %v3843 = vunpack.c.l.b16 %v3001
    %v3844 = vunpack.c.h.b16 %v3001
    %v3845 = vunpack.c.l.b16 %v3002
    %v3846 = vunpack.c.h.b16 %v3002
    %v3847 = vunpack.c.l.b16 %v3003
    %v3848 = vunpack.c.l.b16 %v3004
    %v3849 = vunpack.c.h.b16 %v3004
    %v3850 = vunpack.c.l.b16 %v3005
    %v3851 = vunpack.c.h.b16 %v3005
    %v3852 = vunpack.c.l.b16 %v3006
    %v3853 = vunpack.c.h.b16 %v3006
    %v3854 = vunpack.c.l.b16 %v3007
    %v3855 = vunpack.c.h.b16 %v3007
    %v3856 = vunpack.c.l.b16 %v3008
    %v3857 = vunpack.c.l.b16 %v3009
    %v3858 = vunpack.c.h.b16 %v3009
    %v3859 = vunpack.c.l.b16 %v3010
    %v3860 = vunpack.c.h.b16 %v3010
    %v3861 = vunpack.c.l.b16 %v3011
    %v3862 = vunpack.c.h.b16 %v3011
    %v3863 = vunpack.c.l.b16 %v3012
    %v3864 = vunpack.c.h.b16 %v3012
    %v3865 = vunpack.c.l.b16 %v3013
    %v3866 = vunpack.c.l.b16 %v3014
    %v3867 = vunpack.c.h.b16 %v3014
    %v3868 = vunpack.c.l.b16 %v3015
    %v3869 = vunpack.c.h.b16 %v3015
    %v3870 = vunpack.c.l.b16 %v3016
    %v3871 = vunpack.c.h.b16 %v3016
    %v3872 = vunpack.c.l.b16 %v3017
    %v3873 = vunpack.c.h.b16 %v3017
    %v3874 = vunpack.c.l.b16 %v3018
    %v3875 = vunpack.c.l.b16 %v3019
    %v3876 = vunpack.c.h.b16 %v3019
    %v3877 = vunpack.c.l.b16 %v3020
    %v3878 = vunpack.c.h.b16 %v3020
    %v3879 = vunpack.c.l.b16 %v3021
    %v3880 = vunpack.c.h.b16 %v3021
    %v3881 = vunpack.c.l.b16 %v3022
    %v3882 = vunpack.c.h.b16 %v3022
    %v3883 = vunpack.c.l.b16 %v3023
    %v3884 = vunpack.c.l.b16 %v3024
    %v3885 = vunpack.c.h.b16 %v3024
    %v3886 = vunpack.c.l.b16 %v3025
    %v3887 = vunpack.c.h.b16 %v3025
    %v3888 = vunpack.c.l.b16 %v3026
    %v3889 = vunpack.c.h.b16 %v3026
    %v3890 = vunpack.c.l.b16 %v3027
    %v3891 = vunpack.c.h.b16 %v3027
    %v3892 = vunpack.c.l.b16 %v3028
    %v3893 = vunpack.c.l.b16 %v3029
    %v3894 = vunpack.c.h.b16 %v3029
    %v3895 = vunpack.c.l.b16 %v3030
    %v3896 = vunpack.c.h.b16 %v3030
    %v3897 = vunpack.c.l.b16 %v3031
    %v3898 = vunpack.c.h.b16 %v3031
    %v3899 = vunpack.c.l.b16 %v3032
    %v3900 = vunpack.c.h.b16 %v3032
    %v3901 = vunpack.c.l.b16 %v3033
    %v3902 = vunpack.c.l.b16 %v3034
    %v3903 = vunpack.c.h.b16 %v3034
    %v3904 = vunpack.c.l.b16 %v3035
    %v3905 = vunpack.c.h.b16 %v3035
    %v3906 = vunpack.c.l.b16 %v3036
    %v3907 = vunpack.c.h.b16 %v3036
    %v3908 = vunpack.c.l.b16 %v3037
    %v3909 = vunpack.c.h.b16 %v3037
    %v3910 = vunpack.c.l.b16 %v3038
    %v3911 = vunpack.c.l.b16 %v3039
    %v3912 = vunpack.c.h.b16 %v3039
    %v3913 = vunpack.c.l.b16 %v3040
    %v3914 = vunpack.c.h.b16 %v3040
    %v3915 = vunpack.c.l.b16 %v3041
    %v3916 = vunpack.c.h.b16 %v3041
    %v3917 = vunpack.c.l.b16 %v3042
    %v3918 = vunpack.c.h.b16 %v3042
    %v3919 = vunpack.c.l.b16 %v3043
    %v3920 = vunpack.c.l.b16 %v3044
    %v3921 = vunpack.c.h.b16 %v3044
    %v3922 = vunpack.c.l.b16 %v3045
    %v3923 = vunpack.c.h.b16 %v3045
    %v3924 = vunpack.c.l.b16 %v3046
    %v3925 = vunpack.c.h.b16 %v3046
    %v3926 = vunpack.c.l.b16 %v3047
    %v3927 = vunpack.c.h.b16 %v3047
    %v3928 = vunpack.c.l.b16 %v3048
    %v3929 = vunpack.c.l.b16 %v3049
    %v3930 = vunpack.c.h.b16 %v3049
    %v3931 = vunpack.c.l.b16 %v3050
    %v3932 = vunpack.c.h.b16 %v3050
    %v3933 = vunpack.c.l.b16 %v3051
    %v3934 = vunpack.c.h.b16 %v3051
    %v3935 = vunpack.c.l.b16 %v3052
    %v3936 = vunpack.c.h.b16 %v3052
    %v3937 = vunpack.c.l.b16 %v3053
    %v3938 = vunpack.c.l.b16 %v3054
    %v3939 = vunpack.c.h.b16 %v3054
    %v3940 = vunpack.c.l.b16 %v3055
    %v3941 = vunpack.c.h.b16 %v3055
    %v3942 = vunpack.c.l.b16 %v3056
    %v3943 = vunpack.c.h.b16 %v3056
    %v3944 = vunpack.c.l.b16 %v3057
    %v3945 = vunpack.c.h.b16 %v3057
    %v3946 = vunpack.c.l.b16 %v3058
    %v3947 = vunpack.c.l.b16 %v3059
    %v3948 = vunpack.c.h.b16 %v3059
    %v3949 = vunpack.c.l.b16 %v3060
    %v3950 = vunpack.c.h.b16 %v3060
    %v3951 = vunpack.c.l.b16 %v3061
    %v3952 = vunpack.c.h.b16 %v3061
    %v3953 = vunpack.c.l.b16 %v3062
    %v3954 = vunpack.c.h.b16 %v3062
    %v3955 = vunpack.c.l.b16 %v3063
    %v3956 = vunpack.c.l.b16 %v3064
    %v3957 = vunpack.c.h.b16 %v3064
    %v3958 = vunpack.c.l.b16 %v3065
    %v3959 = vunpack.c.h.b16 %v3065
    %v3960 = vunpack.c.l.b16 %v3066
    %v3961 = vunpack.c.h.b16 %v3066
    %v3962 = vunpack.c.l.b16 %v3067
    %v3963 = vunpack.c.h.b16 %v3067
    %v3964 = vunpack.c.l.b16 %v3068
    %v3965 = vunpack.c.l.b16 %v3069
    %v3966 = vunpack.c.h.b16 %v3069
    %v3967 = vunpack.c.l.b16 %v3070
    %v3968 = vunpack.c.h.b16 %v3070
    %v3969 = vunpack.c.l.b16 %v3071
    %v3970 = vunpack.c.h.b16 %v3071
    %v3971 = vunpack.c.l.b16 %v3072
    %v3972 = vunpack.c.h.b16 %v3072
    %v3973 = vunpack.c.l.b16 %v3073
    %v3974 = vunpack.c.l.b16 %v3074
    %v3975 = vunpack.c.h.b16 %v3074
    %v3976 = vunpack.c.l.b16 %v3075
    %v3977 = vunpack.c.h.b16 %v3075
    %v3978 = vunpack.c.l.b16 %v3076
    %v3979 = vunpack.c.h.b16 %v3076
    %v3980 = vunpack.c.l.b16 %v3077
    %v3981 = vunpack.c.h.b16 %v3077
    %v3982 = vunpack.c.l.b16 %v3078
    %v3983 = vunpack.c.l.b16 %v3079
    %v3984 = vunpack.c.h.b16 %v3079
    %v3985 = vunpack.c.l.b16 %v3080
    %v3986 = vunpack.c.h.b16 %v3080
    %v3987 = vunpack.c.l.b16 %v3081
    %v3988 = vunpack.c.h.b16 %v3081
    %v3989 = vunpack.c.l.b16 %v3082
    %v3990 = vunpack.c.h.b16 %v3082
    %v3991 = vunpack.c.l.b16 %v3083
    %v3992 = vunpack.c.l.b16 %v3084
    %v3993 = vunpack.c.h.b16 %v3084
    %v3994 = vunpack.c.l.b16 %v3085
    %v3995 = vunpack.c.h.b16 %v3085
    %v3996 = vunpack.c.l.b16 %v3086
    %v3997 = vunpack.c.h.b16 %v3086
    %v3998 = vunpack.c.l.b16 %v3087
    %v3999 = vunpack.c.h.b16 %v3087
    %v4000 = vunpack.c.l.b16 %v3088
    %v4001 = vunpack.c.l.b16 %v3089
    %v4002 = vunpack.c.h.b16 %v3089
    %v4003 = vunpack.c.l.b16 %v3090
    %v4004 = vunpack.c.h.b16 %v3090
    %v4005 = vunpack.c.l.b16 %v3091
    %v4006 = vunpack.c.h.b16 %v3091
    %v4007 = vunpack.c.l.b16 %v3092
    %v4008 = vunpack.c.h.b16 %v3092
    %v4009 = vunpack.c.l.b16 %v3093
    %v4010 = vunpack.c.l.b16 %v3094
    %v4011 = vunpack.c.h.b16 %v3094
    %v4012 = vunpack.c.l.b16 %v3095
    %v4013 = vunpack.c.h.b16 %v3095
    %v4014 = vunpack.c.l.b16 %v3096
    %v4015 = vunpack.c.h.b16 %v3096
    %v4016 = vunpack.c.l.b16 %v3097
    %v4017 = vunpack.c.h.b16 %v3097
    %v4018 = vunpack.c.l.b16 %v3098
    %v4019 = vunpack.c.l.b16 %v3099
    %v4020 = vunpack.c.h.b16 %v3099
    %v4021 = vunpack.c.l.b16 %v3100
    %v4022 = vunpack.c.h.b16 %v3100
    %v4023 = vunpack.c.l.b16 %v3101
    %v4024 = vunpack.c.h.b16 %v3101
    %v4025 = vunpack.c.l.b16 %v3102
    %v4026 = vunpack.c.h.b16 %v3102
    %v4027 = vunpack.c.l.b16 %v3103
    %v4028 = vunpack.c.l.b16 %v3104
    %v4029 = vunpack.c.h.b16 %v3104
    %v4030 = vunpack.c.l.b16 %v3105
    %v4031 = vunpack.c.h.b16 %v3105
    %v4032 = vunpack.c.l.b16 %v3106
    %v4033 = vunpack.c.h.b16 %v3106
    %v4034 = vunpack.c.l.b16 %v3107
    %v4035 = vunpack.c.h.b16 %v3107
    %v4036 = vunpack.c.l.b16 %v3108
    %v4037 = vunpack.c.l.b16 %v3109
    %v4038 = vunpack.c.h.b16 %v3109
    %v4039 = vunpack.c.l.b16 %v3110
    %v4040 = vunpack.c.h.b16 %v3110
    %v4041 = vunpack.c.l.b16 %v3111
    %v4042 = vunpack.c.h.b16 %v3111
    %v4043 = vunpack.c.l.b16 %v3112
    %v4044 = vunpack.c.h.b16 %v3112
    %v4045 = vunpack.c.l.b16 %v3113
    %v4046 = vunpack.c.l.b16 %v3114
    %v4047 = vunpack.c.h.b16 %v3114
    %v4048 = vunpack.c.l.b16 %v3115
    %v4049 = vunpack.c.h.b16 %v3115
    %v4050 = vunpack.c.l.b16 %v3116
    %v4051 = vunpack.c.h.b16 %v3116
    %v4052 = vunpack.c.l.b16 %v3117
    %v4053 = vunpack.c.h.b16 %v3117
    %v4054 = vunpack.c.l.b16 %v3118
    %v4055 = vunpack.c.l.b16 %v3119
    %v4056 = vunpack.c.h.b16 %v3119
    %v4057 = vunpack.c.l.b16 %v3120
    %v4058 = vunpack.c.h.b16 %v3120
    %v4059 = vunpack.c.l.b16 %v3121
    %v4060 = vunpack.c.h.b16 %v3121
    %v4061 = vunpack.c.l.b16 %v3122
    %v4062 = vunpack.c.h.b16 %v3122
    %v4063 = vunpack.c.l.b16 %v3123
    %v4064 = vunpack.c.l.b16 %v3124
    %v4065 = vunpack.c.h.b16 %v3124
    %v4066 = vunpack.c.l.b16 %v3125
    %v4067 = vunpack.c.h.b16 %v3125
    %v4068 = vunpack.c.l.b16 %v3126
    %v4069 = vunpack.c.h.b16 %v3126
    %v4070 = vunpack.c.l.b16 %v3127
    %v4071 = vunpack.c.h.b16 %v3127
    %v4072 = vunpack.c.l.b16 %v3128
    %v4073 = vunpack.c.l.b16 %v3129
    %v4074 = vunpack.c.h.b16 %v3129
    %v4075 = vunpack.c.l.b16 %v3130
    %v4076 = vunpack.c.h.b16 %v3130
    %v4077 = vunpack.c.l.b16 %v3131
    %v4078 = vunpack.c.h.b16 %v3131
    %v4079 = vunpack.c.l.b16 %v3132
    %v4080 = vunpack.c.h.b16 %v3132
    %v4081 = vunpack.c.l.b16 %v3133
    %v4082 = vunpack.c.l.b16 %v3134
    %v4083 = vunpack.c.h.b16 %v3134
    %v4084 = vunpack.c.l.b16 %v3135
    %v4085 = vunpack.c.h.b16 %v3135
    %v4086 = vunpack.c.l.b16 %v3136
    %v4087 = vunpack.c.h.b16 %v3136
    %v4088 = vunpack.c.l.b16 %v3137
    %v4089 = vunpack.c.h.b16 %v3137
    %v4090 = vunpack.c.l.b16 %v3138
    %v4091 = vunpack.c.l.b16 %v3139
    %v4092 = vunpack.c.h.b16 %v3139
    %v4093 = vunpack.c.l.b16 %v3140
    %v4094 = vunpack.c.h.b16 %v3140
    %v4095 = vunpack.c.l.b16 %v3141
    %v4096 = vunpack.c.h.b16 %v3141
    %v4097 = vunpack.c.l.b16 %v3142
    %v4098 = vunpack.c.h.b16 %v3142
    %v4099 = vunpack.c.l.b16 %v3143
    %v4100 = vunpack.c.l.b16 %v3144
    %v4101 = vunpack.c.h.b16 %v3144
    %v4102 = vunpack.c.l.b16 %v3145
    %v4103 = vunpack.c.h.b16 %v3145
    %v4104 = vunpack.c.l.b16 %v3146
    %v4105 = vunpack.c.h.b16 %v3146
    %v4106 = vunpack.c.l.b16 %v3147
    %v4107 = vunpack.c.h.b16 %v3147
    %v4108 = vunpack.c.l.b16 %v3148
    %v4109 = vunpack.c.l.b16 %v3149
    %v4110 = vunpack.c.h.b16 %v3149
    %v4111 = vunpack.c.l.b16 %v3150
    %v4112 = vunpack.c.h.b16 %v3150
    %v4113 = vunpack.c.l.b16 %v3151
    %v4114 = vunpack.c.h.b16 %v3151
    %v4115 = vunpack.c.l.b16 %v3152
    %v4116 = vunpack.c.h.b16 %v3152
    %v4117 = vunpack.c.l.b16 %v3153
    %v4118 = vunpack.c.l.b16 %v3154
    %v4119 = vunpack.c.h.b16 %v3154
    %v4120 = vunpack.c.l.b16 %v3155
    %v4121 = vunpack.c.h.b16 %v3155
    %v4122 = vunpack.c.l.b16 %v3156
    %v4123 = vunpack.c.h.b16 %v3156
    %v4124 = vunpack.c.l.b16 %v3157
    %v4125 = vunpack.c.h.b16 %v3157
    %v4126 = vunpack.c.l.b16 %v3158
    %v4127 = vunpack.c.l.b16 %v3159
    %v4128 = vunpack.c.h.b16 %v3159
    %v4129 = vunpack.c.l.b16 %v3160
    %v4130 = vunpack.c.h.b16 %v3160
    %v4131 = vunpack.c.l.b16 %v3161
    %v4132 = vunpack.c.h.b16 %v3161
    %v4133 = vunpack.c.l.b16 %v3162
    %v4134 = vunpack.c.h.b16 %v3162
    %v4135 = vunpack.c.l.b16 %v3163
    %v4136 = vunpack.c.l.b16 %v3164
    %v4137 = vunpack.c.h.b16 %v3164
    %v4138 = vunpack.c.l.b16 %v3165
    %v4139 = vunpack.c.h.b16 %v3165
    %v4140 = vunpack.c.l.b16 %v3166
    %v4141 = vunpack.c.h.b16 %v3166
    %v4142 = vunpack.c.l.b16 %v3167
    %v4143 = vunpack.c.h.b16 %v3167
    %v4144 = vunpack.c.l.b16 %v3168
    %v4145 = vunpack.c.l.b16 %v3169
    %v4146 = vunpack.c.h.b16 %v3169
    %v4147 = vunpack.c.l.b16 %v3170
    %v4148 = vunpack.c.h.b16 %v3170
    %v4149 = vunpack.c.l.b16 %v3171
    %v4150 = vunpack.c.h.b16 %v3171
    %v4151 = vunpack.c.l.b16 %v3172
    %v4152 = vunpack.c.h.b16 %v3172
    %v4153 = vunpack.c.l.b16 %v3173
    %v4154 = vunpack.c.l.b16 %v3174
    %v4155 = vunpack.c.h.b16 %v3174
    %v4156 = vunpack.c.l.b16 %v3175
    %v4157 = vunpack.c.h.b16 %v3175
    %v4158 = vunpack.c.l.b16 %v3176
    %v4159 = vunpack.c.h.b16 %v3176
    %v4160 = vunpack.c.l.b16 %v3177
    %v4161 = vunpack.c.h.b16 %v3177
    %v4162 = vunpack.c.l.b16 %v3178
    %v4163 = vunpack.c.l.b16 %v3179
    %v4164 = vunpack.c.h.b16 %v3179
    %v4165 = vunpack.c.l.b16 %v3180
    %v4166 = vunpack.c.h.b16 %v3180
    %v4167 = vunpack.c.l.b16 %v3181
    %v4168 = vunpack.c.h.b16 %v3181
    %v4169 = vunpack.c.l.b16 %v3182
    %v4170 = vunpack.c.h.b16 %v3182
    %v4171 = vunpack.c.l.b16 %v3183
    %v4172 = vunpack.c.l.b16 %v3184
    %v4173 = vunpack.c.h.b16 %v3184
    %v4174 = vunpack.c.l.b16 %v3185
    %v4175 = vunpack.c.h.b16 %v3185
    %v4176 = vunpack.c.l.b16 %v3186
    %v4177 = vunpack.c.h.b16 %v3186
    %v4178 = vunpack.c.l.b16 %v3187
    %v4179 = vunpack.c.h.b16 %v3187
    %v4180 = vunpack.c.l.b16 %v3188
    %v4181 = vunpack.c.l.b16 %v3189
    %v4182 = vunpack.c.h.b16 %v3189
    %v4183 = vunpack.c.l.b16 %v3190
    %v4184 = vunpack.c.h.b16 %v3190
    %v4185 = vunpack.c.l.b16 %v3191
    %v4186 = vunpack.c.h.b16 %v3191
    %v4187 = vunpack.c.l.b16 %v3192
    %v4188 = vunpack.c.h.b16 %v3192
    %v4189 = vunpack.c.l.b16 %v3193
    %v4190 = vunpack.c.l.b16 %v3194
    %v4191 = vunpack.c.h.b16 %v3194
    %v4192 = vunpack.c.l.b16 %v3195
    %v4193 = vunpack.c.h.b16 %v3195
    %v4194 = vunpack.c.l.b16 %v3196
    %v4195 = vunpack.c.h.b16 %v3196
    %v4196 = vunpack.c.l.b16 %v3197
    %v4197 = vunpack.c.h.b16 %v3197
    %v4198 = vunpack.c.l.b16 %v3198
    %v4199 = vunpack.c.l.b16 %v3199
    %v4200 = vunpack.c.h.b16 %v3199
    %v4201 = vunpack.c.l.b16 %v3200
    %v4202 = vunpack.c.h.b16 %v3200
    %v4203 = vunpack.c.l.b16 %v3201
    %v4204 = vunpack.c.h.b16 %v3201
    %v4205 = vunpack.c.l.b16 %v3202
    %v4206 = vunpack.c.h.b16 %v3202
    %v4207 = vunpack.c.l.b16 %v3203
    %v4208 = vunpack.c.l.b16 %v3204
    %v4209 = vunpack.c.h.b16 %v3204
    %v4210 = vunpack.c.l.b16 %v3205
    %v4211 = vunpack.c.h.b16 %v3205
    %v4212 = vunpack.c.l.b16 %v3206
    %v4213 = vunpack.c.h.b16 %v3206
    %v4214 = vunpack.c.l.b16 %v3207
    %v4215 = vunpack.c.h.b16 %v3207
    %v4216 = vunpack.c.l.b16 %v3208
    %v4217 = vunpack.c.l.b16 %v3209
    %v4218 = vunpack.c.h.b16 %v3209
    %v4219 = vunpack.c.l.b16 %v3210
    %v4220 = vunpack.c.h.b16 %v3210
    %v4221 = vunpack.c.l.b16 %v3211
    %v4222 = vunpack.c.h.b16 %v3211
    %v4223 = vunpack.c.l.b16 %v3212
    %v4224 = vunpack.c.h.b16 %v3212
    %v4225 = vunpack.c.l.b16 %v3213
    %v4226 = vunpack.c.l.b16 %v3214
    %v4227 = vunpack.c.h.b16 %v3214
    %v4228 = vunpack.c.l.b16 %v3215
    %v4229 = vunpack.c.h.b16 %v3215
    %v4230 = vunpack.c.l.b16 %v3216
    %v4231 = vunpack.c.h.b16 %v3216
    %v4232 = vunpack.c.l.b16 %v3217
    %v4233 = vunpack.c.h.b16 %v3217
    %v4234 = vunpack.c.l.b16 %v3218
    %v4235 = vunpack.c.l.b16 %v3219
    %v4236 = vunpack.c.h.b16 %v3219
    %v4237 = vunpack.c.l.b16 %v3220
    %v4238 = vunpack.c.h.b16 %v3220
    %v4239 = vunpack.c.l.b16 %v3221
    %v4240 = vunpack.c.h.b16 %v3221
    %v4241 = vunpack.c.l.b16 %v3222
    %v4242 = vunpack.c.h.b16 %v3222
    %v4243 = vunpack.c.l.b16 %v3223
    %v4244 = vunpack.c.l.b16 %v3224
    %v4245 = vunpack.c.h.b16 %v3224
    %v4246 = vunpack.c.l.b16 %v3225
    %v4247 = vunpack.c.h.b16 %v3225
    %v4248 = vunpack.c.l.b16 %v3226
    %v4249 = vunpack.c.h.b16 %v3226
    %v4250 = vunpack.c.l.b16 %v3227
    %v4251 = vunpack.c.h.b16 %v3227
    %v4252 = vunpack.c.l.b16 %v3228
    %v4253 = vunpack.c.l.b16 %v3229
    %v4254 = vunpack.c.h.b16 %v3229
    %v4255 = vunpack.c.l.b16 %v3230
    %v4256 = vunpack.c.h.b16 %v3230
    %v4257 = vunpack.c.l.b16 %v3231
    %v4258 = vunpack.c.h.b16 %v3231
    %v4259 = vunpack.c.l.b16 %v3232
    %v4260 = vunpack.c.h.b16 %v3232
    %v4261 = vunpack.c.l.b16 %v3233
    %v4262 = vunpack.c.l.b16 %v3234
    %v4263 = vunpack.c.h.b16 %v3234
    %v4264 = vunpack.c.l.b16 %v3235
    %v4265 = vunpack.c.h.b16 %v3235
    %v4266 = vunpack.c.l.b16 %v3236
    %v4267 = vunpack.c.h.b16 %v3236
    %v4268 = vunpack.c.l.b16 %v3237
    %v4269 = vunpack.c.h.b16 %v3237
    %v4270 = vunpack.c.l.b16 %v3238
    %v4271 = vunpack.c.l.b16 %v3239
    %v4272 = vunpack.c.h.b16 %v3239
    %v4273 = vunpack.c.l.b16 %v3240
    %v4274 = vunpack.c.h.b16 %v3240
    %v4275 = vunpack.c.l.b16 %v3241
    %v4276 = vunpack.c.h.b16 %v3241
    %v4277 = vunpack.c.l.b16 %v3242
    %v4278 = vunpack.c.h.b16 %v3242
    %v4279 = vunpack.c.l.b16 %v3243
    %v4280 = vunpack.c.l.b16 %v3244
    %v4281 = vunpack.c.h.b16 %v3244
    %v4282 = vunpack.c.l.b16 %v3245
    %v4283 = vunpack.c.h.b16 %v3245
    %v4284 = vunpack.c.l.b16 %v3246
    %v4285 = vunpack.c.h.b16 %v3246
    %v4286 = vunpack.c.l.b16 %v3247
    %v4287 = vunpack.c.h.b16 %v3247
    %v4288 = vunpack.c.l.b16 %v3248
    %v4289 = vpack.c.b16 %v3722, %v3713
    %v4290 = vpack.c.b16 %v3723, %v3714
    %v4291 = vpack.c.b16 %v3724, %v3715
    %v4292 = vpack.c.b16 %v3725, %v3716
    %v4293 = vpack.c.b16 %v3726, %v3717
    %v4294 = vpack.c.b16 %v3727, %v3718
    %v4295 = vpack.c.b16 %v3728, %v3719
    %v4296 = vpack.c.b16 %v3729, %v3720
    %v4297 = vpack.c.b16 %v3730, %v3721
    %v4298 = vpack.c.b16 %v3740, %v3731
    %v4299 = vpack.c.b16 %v3741, %v3732
    %v4300 = vpack.c.b16 %v3742, %v3733
    %v4301 = vpack.c.b16 %v3743, %v3734
    %v4302 = vpack.c.b16 %v3744, %v3735
    %v4303 = vpack.c.b16 %v3745, %v3736
    %v4304 = vpack.c.b16 %v3746, %v3737
    %v4305 = vpack.c.b16 %v3747, %v3738
    %v4306 = vpack.c.b16 %v3748, %v3739
    %v4307 = vpack.c.b16 %v3758, %v3749
    %v4308 = vpack.c.b16 %v3759, %v3750
    %v4309 = vpack.c.b16 %v3760, %v3751
    %v4310 = vpack.c.b16 %v3761, %v3752
    %v4311 = vpack.c.b16 %v3762, %v3753
    %v4312 = vpack.c.b16 %v3763, %v3754
    %v4313 = vpack.c.b16 %v3764, %v3755
    %v4314 = vpack.c.b16 %v3765, %v3756
    %v4315 = vpack.c.b16 %v3766, %v3757
    %v4316 = vpack.c.b16 %v3776, %v3767
    %v4317 = vpack.c.b16 %v3777, %v3768
    %v4318 = vpack.c.b16 %v3778, %v3769
    %v4319 = vpack.c.b16 %v3779, %v3770
    %v4320 = vpack.c.b16 %v3780, %v3771
    %v4321 = vpack.c.b16 %v3781, %v3772
    %v4322 = vpack.c.b16 %v3782, %v3773
    %v4323 = vpack.c.b16 %v3783, %v3774
    %v4324 = vpack.c.b16 %v3784, %v3775
    %v4325 = vpack.c.b16 %v3794, %v3785
    %v4326 = vpack.c.b16 %v3795, %v3786
    %v4327 = vpack.c.b16 %v3796, %v3787
    %v4328 = vpack.c.b16 %v3797, %v3788
    %v4329 = vpack.c.b16 %v3798, %v3789
    %v4330 = vpack.c.b16 %v3799, %v3790
    %v4331 = vpack.c.b16 %v3800, %v3791
    %v4332 = vpack.c.b16 %v3801, %v3792
    %v4333 = vpack.c.b16 %v3802, %v3793
    %v4334 = vpack.c.b16 %v3812, %v3803
    %v4335 = vpack.c.b16 %v3813, %v3804
    %v4336 = vpack.c.b16 %v3814, %v3805
    %v4337 = vpack.c.b16 %v3815, %v3806
    %v4338 = vpack.c.b16 %v3816, %v3807
    %v4339 = vpack.c.b16 %v3817, %v3808
    %v4340 = vpack.c.b16 %v3818, %v3809
    %v4341 = vpack.c.b16 %v3819, %v3810
    %v4342 = vpack.c.b16 %v3820, %v3811
    %v4343 = vpack.c.b16 %v3830, %v3821
    %v4344 = vpack.c.b16 %v3831, %v3822
    %v4345 = vpack.c.b16 %v3832, %v3823
    %v4346 = vpack.c.b16 %v3833, %v3824
    %v4347 = vpack.c.b16 %v3834, %v3825
    %v4348 = vpack.c.b16 %v3835, %v3826
    %v4349 = vpack.c.b16 %v3836, %v3827
    %v4350 = vpack.c.b16 %v3837, %v3828
    %v4351 = vpack.c.b16 %v3838, %v3829
    %v4352 = vpack.c.b16 %v3848, %v3839
    %v4353 = vpack.c.b16 %v3849, %v3840
    %v4354 = vpack.c.b16 %v3850, %v3841
    %v4355 = vpack.c.b16 %v3851, %v3842
    %v4356 = vpack.c.b16 %v3852, %v3843
    %v4357 = vpack.c.b16 %v3853, %v3844
    %v4358 = vpack.c.b16 %v3854, %v3845
    %v4359 = vpack.c.b16 %v3855, %v3846
    %v4360 = vpack.c.b16 %v3856, %v3847
    %v4361 = vpack.c.b16 %v3866, %v3857
    %v4362 = vpack.c.b16 %v3867, %v3858
    %v4363 = vpack.c.b16 %v3868, %v3859
    %v4364 = vpack.c.b16 %v3869, %v3860
    %v4365 = vpack.c.b16 %v3870, %v3861
    %v4366 = vpack.c.b16 %v3871, %v3862
    %v4367 = vpack.c.b16 %v3872, %v3863
    %v4368 = vpack.c.b16 %v3873, %v3864
    %v4369 = vpack.c.b16 %v3874, %v3865
    %v4370 = vpack.c.b16 %v3884, %v3875
    %v4371 = vpack.c.b16 %v3885, %v3876
    %v4372 = vpack.c.b16 %v3886, %v3877
    %v4373 = vpack.c.b16 %v3887, %v3878
    %v4374 = vpack.c.b16 %v3888, %v3879
    %v4375 = vpack.c.b16 %v3889, %v3880
    %v4376 = vpack.c.b16 %v3890, %v3881
    %v4377 = vpack.c.b16 %v3891, %v3882
    %v4378 = vpack.c.b16 %v3892, %v3883
    %v4379 = vpack.c.b16 %v3902, %v3893
    %v4380 = vpack.c.b16 %v3903, %v3894
    %v4381 = vpack.c.b16 %v3904, %v3895
    %v4382 = vpack.c.b16 %v3905, %v3896
    %v4383 = vpack.c.b16 %v3906, %v3897
    %v4384 = vpack.c.b16 %v3907, %v3898
    %v4385 = vpack.c.b16 %v3908, %v3899
    %v4386 = vpack.c.b16 %v3909, %v3900
    %v4387 = vpack.c.b16 %v3910, %v3901
    %v4388 = vpack.c.b16 %v3920, %v3911
    %v4389 = vpack.c.b16 %v3921, %v3912
    %v4390 = vpack.c.b16 %v3922, %v3913
    %v4391 = vpack.c.b16 %v3923, %v3914
    %v4392 = vpack.c.b16 %v3924, %v3915
    %v4393 = vpack.c.b16 %v3925, %v3916
    %v4394 = vpack.c.b16 %v3926, %v3917
    %v4395 = vpack.c.b16 %v3927, %v3918
    %v4396 = vpack.c.b16 %v3928, %v3919
    %v4397 = vpack.c.b16 %v3938, %v3929
    %v4398 = vpack.c.b16 %v3939, %v3930
    %v4399 = vpack.c.b16 %v3940, %v3931
    %v4400 = vpack.c.b16 %v3941, %v3932
    %v4401 = vpack.c.b16 %v3942, %v3933
    %v4402 = vpack.c.b16 %v3943, %v3934
    %v4403 = vpack.c.b16 %v3944, %v3935
    %v4404 = vpack.c.b16 %v3945, %v3936
    %v4405 = vpack.c.b16 %v3946, %v3937
    %v4406 = vpack.c.b16 %v3956, %v3947
    %v4407 = vpack.c.b16 %v3957, %v3948
    %v4408 = vpack.c.b16 %v3958, %v3949
    %v4409 = vpack.c.b16 %v3959, %v3950
    %v4410 = vpack.c.b16 %v3960, %v3951
    %v4411 = vpack.c.b16 %v3961, %v3952
    %v4412 = vpack.c.b16 %v3962, %v3953
    %v4413 = vpack.c.b16 %v3963, %v3954
    %v4414 = vpack.c.b16 %v3964, %v3955
    %v4415 = vpack.c.b16 %v3974, %v3965
    %v4416 = vpack.c.b16 %v3975, %v3966
    %v4417 = vpack.c.b16 %v3976, %v3967
    %v4418 = vpack.c.b16 %v3977, %v3968
    %v4419 = vpack.c.b16 %v3978, %v3969
    %v4420 = vpack.c.b16 %v3979, %v3970
    %v4421 = vpack.c.b16 %v3980, %v3971
    %v4422 = vpack.c.b16 %v3981, %v3972
    %v4423 = vpack.c.b16 %v3982, %v3973
    %v4424 = vpack.c.b16 %v3992, %v3983
    %v4425 = vpack.c.b16 %v3993, %v3984
    %v4426 = vpack.c.b16 %v3994, %v3985
    %v4427 = vpack.c.b16 %v3995, %v3986
    %v4428 = vpack.c.b16 %v3996, %v3987
    %v4429 = vpack.c.b16 %v3997, %v3988
    %v4430 = vpack.c.b16 %v3998, %v3989
    %v4431 = vpack.c.b16 %v3999, %v3990
    %v4432 = vpack.c.b16 %v4000, %v3991
    %v4433 = vpack.c.b16 %v4010, %v4001
    %v4434 = vpack.c.b16 %v4011, %v4002
    %v4435 = vpack.c.b16 %v4012, %v4003
    %v4436 = vpack.c.b16 %v4013, %v4004
    %v4437 = vpack.c.b16 %v4014, %v4005
    %v4438 = vpack.c.b16 %v4015, %v4006
    %v4439 = vpack.c.b16 %v4016, %v4007
    %v4440 = vpack.c.b16 %v4017, %v4008
    %v4441 = vpack.c.b16 %v4018, %v4009
    %v4442 = vpack.c.b16 %v4028, %v4019
    %v4443 = vpack.c.b16 %v4029, %v4020
    %v4444 = vpack.c.b16 %v4030, %v4021
    %v4445 = vpack.c.b16 %v4031, %v4022
    %v4446 = vpack.c.b16 %v4032, %v4023
    %v4447 = vpack.c.b16 %v4033, %v4024
    %v4448 = vpack.c.b16 %v4034, %v4025
    %v4449 = vpack.c.b16 %v4035, %v4026
    %v4450 = vpack.c.b16 %v4036, %v4027
    %v4451 = vpack.c.b16 %v4046, %v4037
    %v4452 = vpack.c.b16 %v4047, %v4038
    %v4453 = vpack.c.b16 %v4048, %v4039
    %v4454 = vpack.c.b16 %v4049, %v4040
    %v4455 = vpack.c.b16 %v4050, %v4041
    %v4456 = vpack.c.b16 %v4051, %v4042
    %v4457 = vpack.c.b16 %v4052, %v4043
    %v4458 = vpack.c.b16 %v4053, %v4044
    %v4459 = vpack.c.b16 %v4054, %v4045
    %v4460 = vpack.c.b16 %v4064, %v4055
    %v4461 = vpack.c.b16 %v4065, %v4056
    %v4462 = vpack.c.b16 %v4066, %v4057
    %v4463 = vpack.c.b16 %v4067, %v4058
    %v4464 = vpack.c.b16 %v4068, %v4059
    %v4465 = vpack.c.b16 %v4069, %v4060
    %v4466 = vpack.c.b16 %v4070, %v4061
    %v4467 = vpack.c.b16 %v4071, %v4062
    %v4468 = vpack.c.b16 %v4072, %v4063
    %v4469 = vpack.c.b16 %v4082, %v4073
    %v4470 = vpack.c.b16 %v4083, %v4074
    %v4471 = vpack.c.b16 %v4084, %v4075
    %v4472 = vpack.c.b16 %v4085, %v4076
    %v4473 = vpack.c.b16 %v4086, %v4077
    %v4474 = vpack.c.b16 %v4087, %v4078
    %v4475 = vpack.c.b16 %v4088, %v4079
    %v4476 = vpack.c.b16 %v4089, %v4080
    %v4477 = vpack.c.b16 %v4090, %v4081
    %v4478 = vpack.c.b16 %v4100, %v4091
    %v4479 = vpack.c.b16 %v4101, %v4092
    %v4480 = vpack.c.b16 %v4102, %v4093
    %v4481 = vpack.c.b16 %v4103, %v4094
    %v4482 = vpack.c.b16 %v4104, %v4095
    %v4483 = vpack.c.b16 %v4105, %v4096
    %v4484 = vpack.c.b16 %v4106, %v4097
    %v4485 = vpack.c.b16 %v4107, %v4098
    %v4486 = vpack.c.b16 %v4108, %v4099
    %v4487 = vpack.c.b16 %v4118, %v4109
    %v4488 = vpack.c.b16 %v4119, %v4110
    %v4489 = vpack.c.b16 %v4120, %v4111
    %v4490 = vpack.c.b16 %v4121, %v4112
    %v4491 = vpack.c.b16 %v4122, %v4113
    %v4492 = vpack.c.b16 %v4123, %v4114
    %v4493 = vpack.c.b16 %v4124, %v4115
    %v4494 = vpack.c.b16 %v4125, %v4116
    %v4495 = vpack.c.b16 %v4126, %v4117
    %v4496 = vpack.c.b16 %v4136, %v4127
    %v4497 = vpack.c.b16 %v4137, %v4128
    %v4498 = vpack.c.b16 %v4138, %v4129
    %v4499 = vpack.c.b16 %v4139, %v4130
    %v4500 = vpack.c.b16 %v4140, %v4131
    %v4501 = vpack.c.b16 %v4141, %v4132
    %v4502 = vpack.c.b16 %v4142, %v4133
    %v4503 = vpack.c.b16 %v4143, %v4134
    %v4504 = vpack.c.b16 %v4144, %v4135
    %v4505 = vpack.c.b16 %v4154, %v4145
    %v4506 = vpack.c.b16 %v4155, %v4146
    %v4507 = vpack.c.b16 %v4156, %v4147
    %v4508 = vpack.c.b16 %v4157, %v4148
    %v4509 = vpack.c.b16 %v4158, %v4149
    %v4510 = vpack.c.b16 %v4159, %v4150
    %v4511 = vpack.c.b16 %v4160, %v4151
    %v4512 = vpack.c.b16 %v4161, %v4152
    %v4513 = vpack.c.b16 %v4162, %v4153
    %v4514 = vpack.c.b16 %v4172, %v4163
    %v4515 = vpack.c.b16 %v4173, %v4164
    %v4516 = vpack.c.b16 %v4174, %v4165
    %v4517 = vpack.c.b16 %v4175, %v4166
    %v4518 = vpack.c.b16 %v4176, %v4167
    %v4519 = vpack.c.b16 %v4177, %v4168
    %v4520 = vpack.c.b16 %v4178, %v4169
    %v4521 = vpack.c.b16 %v4179, %v4170
    %v4522 = vpack.c.b16 %v4180, %v4171
    %v4523 = vpack.c.b16 %v4190, %v4181
    %v4524 = vpack.c.b16 %v4191, %v4182
    %v4525 = vpack.c.b16 %v4192, %v4183
    %v4526 = vpack.c.b16 %v4193, %v4184
    %v4527 = vpack.c.b16 %v4194, %v4185
    %v4528 = vpack.c.b16 %v4195, %v4186
    %v4529 = vpack.c.b16 %v4196, %v4187
    %v4530 = vpack.c.b16 %v4197, %v4188
    %v4531 = vpack.c.b16 %v4198, %v4189
    %v4532 = vpack.c.b16 %v4208, %v4199
    %v4533 = vpack.c.b16 %v4209, %v4200
    %v4534 = vpack.c.b16 %v4210, %v4201
    %v4535 = vpack.c.b16 %v4211, %v4202
    %v4536 = vpack.c.b16 %v4212, %v4203
    %v4537 = vpack.c.b16 %v4213, %v4204
    %v4538 = vpack.c.b16 %v4214, %v4205
    %v4539 = vpack.c.b16 %v4215, %v4206
    %v4540 = vpack.c.b16 %v4216, %v4207
    %v4541 = vpack.c.b16 %v4226, %v4217
    %v4542 = vpack.c.b16 %v4227, %v4218
    %v4543 = vpack.c.b16 %v4228, %v4219
    %v4544 = vpack.c.b16 %v4229, %v4220
    %v4545 = vpack.c.b16 %v4230, %v4221
    %v4546 = vpack.c.b16 %v4231, %v4222
    %v4547 = vpack.c.b16 %v4232, %v4223
    %v4548 = vpack.c.b16 %v4233, %v4224
    %v4549 = vpack.c.b16 %v4234, %v4225
    %v4550 = vpack.c.b16 %v4244, %v4235
    %v4551 = vpack.c.b16 %v4245, %v4236
    %v4552 = vpack.c.b16 %v4246, %v4237
    %v4553 = vpack.c.b16 %v4247, %v4238
    %v4554 = vpack.c.b16 %v4248, %v4239
    %v4555 = vpack.c.b16 %v4249, %v4240
    %v4556 = vpack.c.b16 %v4250, %v4241
    %v4557 = vpack.c.b16 %v4251, %v4242
    %v4558 = vpack.c.b16 %v4252, %v4243
    %v4559 = vpack.c.b16 %v4262, %v4253
    %v4560 = vpack.c.b16 %v4263, %v4254
    %v4561 = vpack.c.b16 %v4264, %v4255
    %v4562 = vpack.c.b16 %v4265, %v4256
    %v4563 = vpack.c.b16 %v4266, %v4257
    %v4564 = vpack.c.b16 %v4267, %v4258
    %v4565 = vpack.c.b16 %v4268, %v4259
    %v4566 = vpack.c.b16 %v4269, %v4260
    %v4567 = vpack.c.b16 %v4270, %v4261
    %v4568 = vpack.c.b16 %v4280, %v4271
    %v4569 = vpack.c.b16 %v4281, %v4272
    %v4570 = vpack.c.b16 %v4282, %v4273
    %v4571 = vpack.c.b16 %v4283, %v4274
    %v4572 = vpack.c.b16 %v4284, %v4275
    %v4573 = vpack.c.b16 %v4285, %v4276
    %v4574 = vpack.c.b16 %v4286, %v4277
    %v4575 = vpack.c.b16 %v4287, %v4278
    %v4576 = vpack.c.b16 %v4288, %v4279
    %v5009 = vunpack.c.l.b16 %v3249
    %v5010 = vunpack.c.l.b16 %v3250
    %v5011 = vunpack.c.l.b16 %v3251
    %v5012 = vunpack.c.l.b16 %v3252
    %v5013 = vunpack.c.l.b16 %v3253
    %v5014 = vunpack.c.l.b16 %v3254
    %v5015 = vunpack.c.l.b16 %v3255
    %v5016 = vunpack.c.l.b16 %v3256
    %v5017 = vunpack.c.l.b16 %v3257
    %v5018 = vunpack.c.l.b16 %v3258
    %v5019 = vunpack.c.l.b16 %v3259
    %v5020 = vunpack.c.l.b16 %v3260
    %v5021 = vunpack.c.l.b16 %v3261
    %v5022 = vunpack.c.l.b16 %v3262
    %v5023 = vunpack.c.l.b16 %v3263
    %v5024 = vunpack.c.l.b16 %v3264
    %v5025 = vunpack.c.l.b16 %v3265
    %v5026 = vunpack.c.l.b16 %v3266
    %v5027 = vunpack.c.l.b16 %v3267
    %v5028 = vunpack.c.l.b16 %v3268
    %v5029 = vunpack.c.l.b16 %v3269
    %v5030 = vunpack.c.l.b16 %v3270
    %v5031 = vunpack.c.l.b16 %v3271
    %v5032 = vunpack.c.l.b16 %v3272
    %v5033 = vunpack.c.l.b16 %v3273
    %v5034 = vunpack.c.l.b16 %v3274
    %v5035 = vunpack.c.l.b16 %v3275
    %v5036 = vunpack.c.l.b16 %v3276
    %v5037 = vunpack.c.l.b16 %v3277
    %v5038 = vunpack.c.l.b16 %v3278
    %v5039 = vunpack.c.l.b16 %v3279
    %v5040 = vunpack.c.l.b16 %v3280
    %v5041 = vunpack.c.l.b16 %v3281
    %v5042 = vunpack.c.l.b16 %v3282
    %v5043 = vunpack.c.l.b16 %v3283
    %v5044 = vunpack.c.l.b16 %v3284
    %v5045 = vunpack.c.l.b16 %v3285
    %v5046 = vunpack.c.l.b16 %v3286
    %v5047 = vunpack.c.l.b16 %v3287
    %v5048 = vunpack.c.l.b16 %v3288
    %v5049 = vunpack.c.l.b16 %v3289
    %v5050 = vunpack.c.l.b16 %v3290
    %v5051 = vunpack.c.l.b16 %v3291
    %v5052 = vunpack.c.l.b16 %v3292
    %v5053 = vunpack.c.l.b16 %v3293
    %v5054 = vunpack.c.l.b16 %v3294
    %v5055 = vunpack.c.l.b16 %v3295
    %v5056 = vunpack.c.l.b16 %v3296
    %v5057 = vunpack.c.l.b16 %v3297
    %v5058 = vunpack.c.l.b16 %v3298
    %v5059 = vunpack.c.l.b16 %v3299
    %v5060 = vunpack.c.l.b16 %v3300
    %v5061 = vunpack.c.l.b16 %v3301
    %v5062 = vunpack.c.l.b16 %v3302
    %v5063 = vunpack.c.l.b16 %v3303
    %v5064 = vunpack.c.l.b16 %v3304
    %v5065 = vunpack.c.l.b16 %v3305
    %v5066 = vunpack.c.l.b16 %v3306
    %v5067 = vunpack.c.l.b16 %v3307
    %v5068 = vunpack.c.l.b16 %v3308
    %v5069 = vunpack.c.l.b16 %v3309
    %v5070 = vunpack.c.l.b16 %v3310
    %v5071 = vunpack.c.l.b16 %v3311
    %v5072 = vunpack.c.l.b16 %v3312
    %v5073 = vunpack.c.l.b16 %v3313
    %v5074 = vunpack.c.l.b16 %v3314
    %v5075 = vunpack.c.l.b16 %v3315
    %v5076 = vunpack.c.l.b16 %v3316
    %v5077 = vunpack.c.l.b16 %v3317
    %v5078 = vunpack.c.l.b16 %v3318
    %v5079 = vunpack.c.l.b16 %v3319
    %v5080 = vunpack.c.l.b16 %v3320
    %v5081 = vunpack.c.l.b16 %v3321
    %v5082 = vunpack.c.l.b16 %v3322
    %v5083 = vunpack.c.l.b16 %v3323
    %v5084 = vunpack.c.l.b16 %v3324
    %v5085 = vunpack.c.l.b16 %v3325
    %v5086 = vunpack.c.l.b16 %v3326
    %v5087 = vunpack.c.l.b16 %v3327
    %v5088 = vunpack.c.l.b16 %v3328
    %v5089 = vunpack.c.l.b16 %v3329
    %v5090 = vunpack.c.l.b16 %v3330
    %v5091 = vunpack.c.l.b16 %v3331
    %v5092 = vunpack.c.l.b16 %v3332
    %v5093 = vunpack.c.l.b16 %v3333
    %v5094 = vunpack.c.l.b16 %v3334
    %v5095 = vunpack.c.l.b16 %v3335
    %v5096 = vunpack.c.l.b16 %v3336
    %v5097 = vunpack.c.l.b16 %v3337
    %v5098 = vunpack.c.l.b16 %v3338
    %v5099 = vunpack.c.l.b16 %v3339
    %v5100 = vunpack.c.l.b16 %v3340
    %v5101 = vunpack.c.l.b16 %v3341
    %v5102 = vunpack.c.l.b16 %v3342
    %v5103 = vunpack.c.l.b16 %v3343
    %v5104 = vunpack.c.l.b16 %v3344
    %v5105 = vunpack.c.l.b16 %v3345
    %v5106 = vunpack.c.l.b16 %v3346
    %v5107 = vunpack.c.l.b16 %v3347
    %v5108 = vunpack.c.l.b16 %v3348
    %v5109 = vunpack.c.l.b16 %v3349
    %v5110 = vunpack.c.l.b16 %v3350
    %v5111 = vunpack.c.l.b16 %v3351
    %v5112 = vunpack.c.l.b16 %v3352
    %v5113 = vunpack.c.l.b16 %v3353
    %v5114 = vunpack.c.l.b16 %v3354
    %v5115 = vunpack.c.l.b16 %v3355
    %v5116 = vunpack.c.l.b16 %v3356
    %v5117 = vunpack.c.l.b16 %v3357
    %v5118 = vunpack.c.l.b16 %v3358
    %v5119 = vunpack.c.l.b16 %v3359
    %v5120 = vunpack.c.l.b16 %v3360
    %v5121 = vunpack.c.l.b16 %v3361
    %v5122 = vunpack.c.l.b16 %v3362
    %v5123 = vunpack.c.l.b16 %v3363
    %v5124 = vunpack.c.l.b16 %v3364
    %v5125 = vunpack.c.l.b16 %v3365
    %v5126 = vunpack.c.l.b16 %v3366
    %v5127 = vunpack.c.l.b16 %v3367
    %v5128 = vunpack.c.l.b16 %v3368
    %v5129 = vunpack.c.l.b16 %v3369
    %v5130 = vunpack.c.l.b16 %v3370
    %v5131 = vunpack.c.l.b16 %v3371
    %v5132 = vunpack.c.l.b16 %v3372
    %v5133 = vunpack.c.l.b16 %v3373
    %v5134 = vunpack.c.l.b16 %v3374
    %v5135 = vunpack.c.l.b16 %v3375
    %v5136 = vunpack.c.l.b16 %v3376
    %v5137 = vunpack.c.l.b16 %v3377
    %v5138 = vunpack.c.l.b16 %v3378
    %v5139 = vunpack.c.l.b16 %v3379
    %v5140 = vunpack.c.l.b16 %v3380
    %v5141 = vunpack.c.l.b16 %v3381
    %v5142 = vunpack.c.l.b16 %v3382
    %v5143 = vunpack.c.l.b16 %v3383
    %v5144 = vunpack.c.l.b16 %v3384
    %v5145 = vunpack.c.l.b16 %v3385
    %v5146 = vunpack.c.l.b16 %v3386
    %v5147 = vunpack.c.l.b16 %v3387
    %v5148 = vunpack.c.l.b16 %v3388
    %v5149 = vunpack.c.l.b16 %v3389
    %v5150 = vunpack.c.l.b16 %v3390
    %v5151 = vunpack.c.l.b16 %v3391
    %v5152 = vunpack.c.l.b16 %v3392
    %v5153 = vpack.c.b16 %v5010, %v5009
    %v5154 = vpack.c.b16 %v5012, %v5011
    %v5155 = vpack.c.b16 %v5014, %v5013
    %v5156 = vpack.c.b16 %v5016, %v5015
    %v5157 = vpack.c.b16 %v5018, %v5017
    %v5158 = vpack.c.b16 %v5020, %v5019
    %v5159 = vpack.c.b16 %v5022, %v5021
    %v5160 = vpack.c.b16 %v5024, %v5023
    %v5161 = vpack.c.b16 %v5026, %v5025
    %v5162 = vpack.c.b16 %v5028, %v5027
    %v5163 = vpack.c.b16 %v5030, %v5029
    %v5164 = vpack.c.b16 %v5032, %v5031
    %v5165 = vpack.c.b16 %v5034, %v5033
    %v5166 = vpack.c.b16 %v5036, %v5035
    %v5167 = vpack.c.b16 %v5038, %v5037
    %v5168 = vpack.c.b16 %v5040, %v5039
    %v5169 = vpack.c.b16 %v5042, %v5041
    %v5170 = vpack.c.b16 %v5044, %v5043
    %v5171 = vpack.c.b16 %v5046, %v5045
    %v5172 = vpack.c.b16 %v5048, %v5047
    %v5173 = vpack.c.b16 %v5050, %v5049
    %v5174 = vpack.c.b16 %v5052, %v5051
    %v5175 = vpack.c.b16 %v5054, %v5053
    %v5176 = vpack.c.b16 %v5056, %v5055
    %v5177 = vpack.c.b16 %v5058, %v5057
    %v5178 = vpack.c.b16 %v5060, %v5059
    %v5179 = vpack.c.b16 %v5062, %v5061
    %v5180 = vpack.c.b16 %v5064, %v5063
    %v5181 = vpack.c.b16 %v5066, %v5065
    %v5182 = vpack.c.b16 %v5068, %v5067
    %v5183 = vpack.c.b16 %v5070, %v5069
    %v5184 = vpack.c.b16 %v5072, %v5071
    %v5185 = vpack.c.b16 %v5074, %v5073
    %v5186 = vpack.c.b16 %v5076, %v5075
    %v5187 = vpack.c.b16 %v5078, %v5077
    %v5188 = vpack.c.b16 %v5080, %v5079
    %v5189 = vpack.c.b16 %v5082, %v5081
    %v5190 = vpack.c.b16 %v5084, %v5083
    %v5191 = vpack.c.b16 %v5086, %v5085
    %v5192 = vpack.c.b16 %v5088, %v5087
    %v5193 = vpack.c.b16 %v5090, %v5089
    %v5194 = vpack.c.b16 %v5092, %v5091
    %v5195 = vpack.c.b16 %v5094, %v5093
    %v5196 = vpack.c.b16 %v5096, %v5095
    %v5197 = vpack.c.b16 %v5098, %v5097
    %v5198 = vpack.c.b16 %v5100, %v5099
    %v5199 = vpack.c.b16 %v5102, %v5101
    %v5200 = vpack.c.b16 %v5104, %v5103
    %v5201 = vpack.c.b16 %v5106, %v5105
    %v5202 = vpack.c.b16 %v5108, %v5107
    %v5203 = vpack.c.b16 %v5110, %v5109
    %v5204 = vpack.c.b16 %v5112, %v5111
    %v5205 = vpack.c.b16 %v5114, %v5113
    %v5206 = vpack.c.b16 %v5116, %v5115
    %v5207 = vpack.c.b16 %v5118, %v5117
    %v5208 = vpack.c.b16 %v5120, %v5119
    %v5209 = vpack.c.b16 %v5122, %v5121
    %v5210 = vpack.c.b16 %v5124, %v5123
    %v5211 = vpack.c.b16 %v5126, %v5125
    %v5212 = vpack.c.b16 %v5128, %v5127
    %v5213 = vpack.c.b16 %v5130, %v5129
    %v5214 = vpack.c.b16 %v5132, %v5131
    %v5215 = vpack.c.b16 %v5134, %v5133
    %v5216 = vpack.c.b16 %v5136, %v5135
    %v5217 = vpack.c.b16 %v5138, %v5137
    %v5218 = vpack.c.b16 %v5140, %v5139
    %v5219 = vpack.c.b16 %v5142, %v5141
    %v5220 = vpack.c.b16 %v5144, %v5143
    %v5221 = vpack.c.b16 %v5146, %v5145
    %v5222 = vpack.c.b16 %v5148, %v5147
    %v5223 = vpack.c.b16 %v5150, %v5149
    %v5224 = vpack.c.b16 %v5152, %v5151
    %5297 = vmatpush.bf16.msra.mxu0 %v5160
    %5298 = vmatpush.bf16.msra.mxu0 %v5159
    %5299 = vmatpush.bf16.msra.mxu0 %v5158
    %5300 = vmatpush.bf16.msra.mxu0 %v5157
    %5301 = vmatpush.bf16.msra.mxu0 %v5156
    %5302 = vmatpush.bf16.msra.mxu0 %v5155
    %5303 = vmatpush.bf16.msra.mxu0 %v5154
    %5304 = vmatpush.bf16.msra.mxu0 %v5153
    %5305 = vmatmul.bf16.gmra.mxu0 %v4289
    %v5306 = vpop.f32.mrf.mxu0
    %v5307 = vadd.f32 0.0, %v5306
    %v5308 = vpop.f32.mrf.mxu0
    %v5309 = vadd.f32 0.0, %v5308
    %5310 = vmatmul.bf16.gmra.mxu0 %v4298
    %v5311 = vpop.f32.mrf.mxu0
    %v5312 = vadd.f32 0.0, %v5311
    %v5313 = vpop.f32.mrf.mxu0
    %v5314 = vadd.f32 0.0, %v5313
    %5315 = vmatmul.bf16.gmra.mxu0 %v4307
    %v5316 = vpop.f32.mrf.mxu0
    %v5317 = vadd.f32 0.0, %v5316
    %v5318 = vpop.f32.mrf.mxu0
    %v5319 = vadd.f32 0.0, %v5318
    %5320 = vmatmul.bf16.gmra.mxu0 %v4316
    %v5321 = vpop.f32.mrf.mxu0
    %v5322 = vadd.f32 0.0, %v5321
    %v5323 = vpop.f32.mrf.mxu0
    %v5324 = vadd.f32 0.0, %v5323
    %5325 = vmatmul.bf16.gmra.mxu0 %v4325
    %v5326 = vpop.f32.mrf.mxu0
    %v5327 = vadd.f32 0.0, %v5326
    %v5328 = vpop.f32.mrf.mxu0
    %v5329 = vadd.f32 0.0, %v5328
    %5330 = vmatmul.bf16.gmra.mxu0 %v4334
    %v5331 = vpop.f32.mrf.mxu0
    %v5332 = vadd.f32 0.0, %v5331
    %v5333 = vpop.f32.mrf.mxu0
    %v5334 = vadd.f32 0.0, %v5333
    %5335 = vmatmul.bf16.gmra.mxu0 %v4343
    %v5336 = vpop.f32.mrf.mxu0
    %v5337 = vadd.f32 0.0, %v5336
    %v5338 = vpop.f32.mrf.mxu0
    %v5339 = vadd.f32 0.0, %v5338
    %5340 = vmatmul.bf16.gmra.mxu0 %v4352
    %v5341 = vpop.f32.mrf.mxu0
    %v5342 = vadd.f32 0.0, %v5341
    %v5343 = vpop.f32.mrf.mxu0
    %v5344 = vadd.f32 0.0, %v5343
    %5345 = vmatmul.bf16.gmra.mxu0 %v4361
    %v5346 = vpop.f32.mrf.mxu0
    %v5347 = vadd.f32 0.0, %v5346
    %v5348 = vpop.f32.mrf.mxu0
    %v5349 = vadd.f32 0.0, %v5348
    %5350 = vmatmul.bf16.gmra.mxu0 %v4370
    %v5351 = vpop.f32.mrf.mxu0
    %v5352 = vadd.f32 0.0, %v5351
    %v5353 = vpop.f32.mrf.mxu0
    %v5354 = vadd.f32 0.0, %v5353
    %5355 = vmatmul.bf16.gmra.mxu0 %v4379
    %v5356 = vpop.f32.mrf.mxu0
    %v5357 = vadd.f32 0.0, %v5356
    %v5358 = vpop.f32.mrf.mxu0
    %v5359 = vadd.f32 0.0, %v5358
    %5360 = vmatmul.bf16.gmra.mxu0 %v4388
    %v5361 = vpop.f32.mrf.mxu0
    %v5362 = vadd.f32 0.0, %v5361
    %v5363 = vpop.f32.mrf.mxu0
    %v5364 = vadd.f32 0.0, %v5363
    %5365 = vmatmul.bf16.gmra.mxu0 %v4397
    %v5366 = vpop.f32.mrf.mxu0
    %v5367 = vadd.f32 0.0, %v5366
    %v5368 = vpop.f32.mrf.mxu0
    %v5369 = vadd.f32 0.0, %v5368
    %5370 = vmatmul.bf16.gmra.mxu0 %v4406
    %v5371 = vpop.f32.mrf.mxu0
    %v5372 = vadd.f32 0.0, %v5371
    %v5373 = vpop.f32.mrf.mxu0
    %v5374 = vadd.f32 0.0, %v5373
    %5375 = vmatmul.bf16.gmra.mxu0 %v4415
    %v5376 = vpop.f32.mrf.mxu0
    %v5377 = vadd.f32 0.0, %v5376
    %v5378 = vpop.f32.mrf.mxu0
    %v5379 = vadd.f32 0.0, %v5378
    %5380 = vmatmul.bf16.gmra.mxu0 %v4424
    %v5381 = vpop.f32.mrf.mxu0
    %v5382 = vadd.f32 0.0, %v5381
    %v5383 = vpop.f32.mrf.mxu0
    %v5384 = vadd.f32 0.0, %v5383
    %5385 = vmatmul.bf16.gmra.mxu0 %v4433
    %v5386 = vpop.f32.mrf.mxu0
    %v5387 = vadd.f32 0.0, %v5386
    %v5388 = vpop.f32.mrf.mxu0
    %v5389 = vadd.f32 0.0, %v5388
    %5390 = vmatmul.bf16.gmra.mxu0 %v4442
    %v5391 = vpop.f32.mrf.mxu0
    %v5392 = vadd.f32 0.0, %v5391
    %v5393 = vpop.f32.mrf.mxu0
    %v5394 = vadd.f32 0.0, %v5393
    %5395 = vmatmul.bf16.gmra.mxu0 %v4451
    %v5396 = vpop.f32.mrf.mxu0
    %v5397 = vadd.f32 0.0, %v5396
    %v5398 = vpop.f32.mrf.mxu0
    %v5399 = vadd.f32 0.0, %v5398
    %5400 = vmatmul.bf16.gmra.mxu0 %v4460
    %v5401 = vpop.f32.mrf.mxu0
    %v5402 = vadd.f32 0.0, %v5401
    %v5403 = vpop.f32.mrf.mxu0
    %v5404 = vadd.f32 0.0, %v5403
    %5405 = vmatmul.bf16.gmra.mxu0 %v4469
    %v5406 = vpop.f32.mrf.mxu0
    %v5407 = vadd.f32 0.0, %v5406
    %v5408 = vpop.f32.mrf.mxu0
    %v5409 = vadd.f32 0.0, %v5408
    %5410 = vmatmul.bf16.gmra.mxu0 %v4478
    %v5411 = vpop.f32.mrf.mxu0
    %v5412 = vadd.f32 0.0, %v5411
    %v5413 = vpop.f32.mrf.mxu0
    %v5414 = vadd.f32 0.0, %v5413
    %5415 = vmatmul.bf16.gmra.mxu0 %v4487
    %v5416 = vpop.f32.mrf.mxu0
    %v5417 = vadd.f32 0.0, %v5416
    %v5418 = vpop.f32.mrf.mxu0
    %v5419 = vadd.f32 0.0, %v5418
    %5420 = vmatmul.bf16.gmra.mxu0 %v4496
    %v5421 = vpop.f32.mrf.mxu0
    %v5422 = vadd.f32 0.0, %v5421
    %v5423 = vpop.f32.mrf.mxu0
    %v5424 = vadd.f32 0.0, %v5423
    %5425 = vmatmul.bf16.gmra.mxu0 %v4505
    %v5426 = vpop.f32.mrf.mxu0
    %v5427 = vadd.f32 0.0, %v5426
    %v5428 = vpop.f32.mrf.mxu0
    %v5429 = vadd.f32 0.0, %v5428
    %5430 = vmatmul.bf16.gmra.mxu0 %v4514
    %v5431 = vpop.f32.mrf.mxu0
    %v5432 = vadd.f32 0.0, %v5431
    %v5433 = vpop.f32.mrf.mxu0
    %v5434 = vadd.f32 0.0, %v5433
    %5435 = vmatmul.bf16.gmra.mxu0 %v4523
    %v5436 = vpop.f32.mrf.mxu0
    %v5437 = vadd.f32 0.0, %v5436
    %v5438 = vpop.f32.mrf.mxu0
    %v5439 = vadd.f32 0.0, %v5438
    %5440 = vmatmul.bf16.gmra.mxu0 %v4532
    %v5441 = vpop.f32.mrf.mxu0
    %v5442 = vadd.f32 0.0, %v5441
    %v5443 = vpop.f32.mrf.mxu0
    %v5444 = vadd.f32 0.0, %v5443
    %5445 = vmatmul.bf16.gmra.mxu0 %v4541
    %v5446 = vpop.f32.mrf.mxu0
    %v5447 = vadd.f32 0.0, %v5446
    %v5448 = vpop.f32.mrf.mxu0
    %v5449 = vadd.f32 0.0, %v5448
    %5450 = vmatmul.bf16.gmra.mxu0 %v4550
    %v5451 = vpop.f32.mrf.mxu0
    %v5452 = vadd.f32 0.0, %v5451
    %v5453 = vpop.f32.mrf.mxu0
    %v5454 = vadd.f32 0.0, %v5453
    %5455 = vmatmul.bf16.gmra.mxu0 %v4559
    %v5456 = vpop.f32.mrf.mxu0
    %v5457 = vadd.f32 0.0, %v5456
    %v5458 = vpop.f32.mrf.mxu0
    %v5459 = vadd.f32 0.0, %v5458
    %5460 = vmatmul.bf16.gmra.mxu0 %v4568
    %v5461 = vpop.f32.mrf.mxu0
    %v5462 = vadd.f32 0.0, %v5461
    %v5463 = vpop.f32.mrf.mxu0
    %v5464 = vadd.f32 0.0, %v5463
    %5465 = vdwg.mxu0
    %5466 = vmatpush.bf16.msra.mxu0 %v5168
    %5467 = vmatpush.bf16.msra.mxu0 %v5167
    %5468 = vmatpush.bf16.msra.mxu0 %v5166
    %5469 = vmatpush.bf16.msra.mxu0 %v5165
    %5470 = vmatpush.bf16.msra.mxu0 %v5164
    %5471 = vmatpush.bf16.msra.mxu0 %v5163
    %5472 = vmatpush.bf16.msra.mxu0 %v5162
    %5473 = vmatpush.bf16.msra.mxu0 %v5161
    %5474 = vmatmul.bf16.gmra.mxu0 %v4290
    %v5475 = vpop.f32.mrf.mxu0
    %v5476 = vadd.f32 %v5307, %v5475
    %v5477 = vpop.f32.mrf.mxu0
    %v5478 = vadd.f32 %v5309, %v5477
    %5479 = vmatmul.bf16.gmra.mxu0 %v4299
    %v5480 = vpop.f32.mrf.mxu0
    %v5481 = vadd.f32 %v5312, %v5480
    %v5482 = vpop.f32.mrf.mxu0
    %v5483 = vadd.f32 %v5314, %v5482
    %5484 = vmatmul.bf16.gmra.mxu0 %v4308
    %v5485 = vpop.f32.mrf.mxu0
    %v5486 = vadd.f32 %v5317, %v5485
    %v5487 = vpop.f32.mrf.mxu0
    %v5488 = vadd.f32 %v5319, %v5487
    %5489 = vmatmul.bf16.gmra.mxu0 %v4317
    %v5490 = vpop.f32.mrf.mxu0
    %v5491 = vadd.f32 %v5322, %v5490
    %v5492 = vpop.f32.mrf.mxu0
    %v5493 = vadd.f32 %v5324, %v5492
    %5494 = vmatmul.bf16.gmra.mxu0 %v4326
    %v5495 = vpop.f32.mrf.mxu0
    %v5496 = vadd.f32 %v5327, %v5495
    %v5497 = vpop.f32.mrf.mxu0
    %v5498 = vadd.f32 %v5329, %v5497
    %5499 = vmatmul.bf16.gmra.mxu0 %v4335
    %v5500 = vpop.f32.mrf.mxu0
    %v5501 = vadd.f32 %v5332, %v5500
    %v5502 = vpop.f32.mrf.mxu0
    %v5503 = vadd.f32 %v5334, %v5502
    %5504 = vmatmul.bf16.gmra.mxu0 %v4344
    %v5505 = vpop.f32.mrf.mxu0
    %v5506 = vadd.f32 %v5337, %v5505
    %v5507 = vpop.f32.mrf.mxu0
    %v5508 = vadd.f32 %v5339, %v5507
    %5509 = vmatmul.bf16.gmra.mxu0 %v4353
    %v5510 = vpop.f32.mrf.mxu0
    %v5511 = vadd.f32 %v5342, %v5510
    %v5512 = vpop.f32.mrf.mxu0
    %v5513 = vadd.f32 %v5344, %v5512
    %5514 = vmatmul.bf16.gmra.mxu0 %v4362
    %v5515 = vpop.f32.mrf.mxu0
    %v5516 = vadd.f32 %v5347, %v5515
    %v5517 = vpop.f32.mrf.mxu0
    %v5518 = vadd.f32 %v5349, %v5517
    %5519 = vmatmul.bf16.gmra.mxu0 %v4371
    %v5520 = vpop.f32.mrf.mxu0
    %v5521 = vadd.f32 %v5352, %v5520
    %v5522 = vpop.f32.mrf.mxu0
    %v5523 = vadd.f32 %v5354, %v5522
    %5524 = vmatmul.bf16.gmra.mxu0 %v4380
    %v5525 = vpop.f32.mrf.mxu0
    %v5526 = vadd.f32 %v5357, %v5525
    %v5527 = vpop.f32.mrf.mxu0
    %v5528 = vadd.f32 %v5359, %v5527
    %5529 = vmatmul.bf16.gmra.mxu0 %v4389
    %v5530 = vpop.f32.mrf.mxu0
    %v5531 = vadd.f32 %v5362, %v5530
    %v5532 = vpop.f32.mrf.mxu0
    %v5533 = vadd.f32 %v5364, %v5532
    %5534 = vmatmul.bf16.gmra.mxu0 %v4398
    %v5535 = vpop.f32.mrf.mxu0
    %v5536 = vadd.f32 %v5367, %v5535
    %v5537 = vpop.f32.mrf.mxu0
    %v5538 = vadd.f32 %v5369, %v5537
    %5539 = vmatmul.bf16.gmra.mxu0 %v4407
    %v5540 = vpop.f32.mrf.mxu0
    %v5541 = vadd.f32 %v5372, %v5540
    %v5542 = vpop.f32.mrf.mxu0
    %v5543 = vadd.f32 %v5374, %v5542
    %5544 = vmatmul.bf16.gmra.mxu0 %v4416
    %v5545 = vpop.f32.mrf.mxu0
    %v5546 = vadd.f32 %v5377, %v5545
    %v5547 = vpop.f32.mrf.mxu0
    %v5548 = vadd.f32 %v5379, %v5547
    %5549 = vmatmul.bf16.gmra.mxu0 %v4425
    %v5550 = vpop.f32.mrf.mxu0
    %v5551 = vadd.f32 %v5382, %v5550
    %v5552 = vpop.f32.mrf.mxu0
    %v5553 = vadd.f32 %v5384, %v5552
    %5554 = vmatmul.bf16.gmra.mxu0 %v4434
    %v5555 = vpop.f32.mrf.mxu0
    %v5556 = vadd.f32 %v5387, %v5555
    %v5557 = vpop.f32.mrf.mxu0
    %v5558 = vadd.f32 %v5389, %v5557
    %5559 = vmatmul.bf16.gmra.mxu0 %v4443
    %v5560 = vpop.f32.mrf.mxu0
    %v5561 = vadd.f32 %v5392, %v5560
    %v5562 = vpop.f32.mrf.mxu0
    %v5563 = vadd.f32 %v5394, %v5562
    %5564 = vmatmul.bf16.gmra.mxu0 %v4452
    %v5565 = vpop.f32.mrf.mxu0
    %v5566 = vadd.f32 %v5397, %v5565
    %v5567 = vpop.f32.mrf.mxu0
    %v5568 = vadd.f32 %v5399, %v5567
    %5569 = vmatmul.bf16.gmra.mxu0 %v4461
    %v5570 = vpop.f32.mrf.mxu0
    %v5571 = vadd.f32 %v5402, %v5570
    %v5572 = vpop.f32.mrf.mxu0
    %v5573 = vadd.f32 %v5404, %v5572
    %5574 = vmatmul.bf16.gmra.mxu0 %v4470
    %v5575 = vpop.f32.mrf.mxu0
    %v5576 = vadd.f32 %v5407, %v5575
    %v5577 = vpop.f32.mrf.mxu0
    %v5578 = vadd.f32 %v5409, %v5577
    %5579 = vmatmul.bf16.gmra.mxu0 %v4479
    %v5580 = vpop.f32.mrf.mxu0
    %v5581 = vadd.f32 %v5412, %v5580
    %v5582 = vpop.f32.mrf.mxu0
    %v5583 = vadd.f32 %v5414, %v5582
    %5584 = vmatmul.bf16.gmra.mxu0 %v4488
    %v5585 = vpop.f32.mrf.mxu0
    %v5586 = vadd.f32 %v5417, %v5585
    %v5587 = vpop.f32.mrf.mxu0
    %v5588 = vadd.f32 %v5419, %v5587
    %5589 = vmatmul.bf16.gmra.mxu0 %v4497
    %v5590 = vpop.f32.mrf.mxu0
    %v5591 = vadd.f32 %v5422, %v5590
    %v5592 = vpop.f32.mrf.mxu0
    %v5593 = vadd.f32 %v5424, %v5592
    %5594 = vmatmul.bf16.gmra.mxu0 %v4506
    %v5595 = vpop.f32.mrf.mxu0
    %v5596 = vadd.f32 %v5427, %v5595
    %v5597 = vpop.f32.mrf.mxu0
    %v5598 = vadd.f32 %v5429, %v5597
    %5599 = vmatmul.bf16.gmra.mxu0 %v4515
    %v5600 = vpop.f32.mrf.mxu0
    %v5601 = vadd.f32 %v5432, %v5600
    %v5602 = vpop.f32.mrf.mxu0
    %v5603 = vadd.f32 %v5434, %v5602
    %5604 = vmatmul.bf16.gmra.mxu0 %v4524
    %v5605 = vpop.f32.mrf.mxu0
    %v5606 = vadd.f32 %v5437, %v5605
    %v5607 = vpop.f32.mrf.mxu0
    %v5608 = vadd.f32 %v5439, %v5607
    %5609 = vmatmul.bf16.gmra.mxu0 %v4533
    %v5610 = vpop.f32.mrf.mxu0
    %v5611 = vadd.f32 %v5442, %v5610
    %v5612 = vpop.f32.mrf.mxu0
    %v5613 = vadd.f32 %v5444, %v5612
    %5614 = vmatmul.bf16.gmra.mxu0 %v4542
    %v5615 = vpop.f32.mrf.mxu0
    %v5616 = vadd.f32 %v5447, %v5615
    %v5617 = vpop.f32.mrf.mxu0
    %v5618 = vadd.f32 %v5449, %v5617
    %5619 = vmatmul.bf16.gmra.mxu0 %v4551
    %v5620 = vpop.f32.mrf.mxu0
    %v5621 = vadd.f32 %v5452, %v5620
    %v5622 = vpop.f32.mrf.mxu0
    %v5623 = vadd.f32 %v5454, %v5622
    %5624 = vmatmul.bf16.gmra.mxu0 %v4560
    %v5625 = vpop.f32.mrf.mxu0
    %v5626 = vadd.f32 %v5457, %v5625
    %v5627 = vpop.f32.mrf.mxu0
    %v5628 = vadd.f32 %v5459, %v5627
    %5629 = vmatmul.bf16.gmra.mxu0 %v4569
    %v5630 = vpop.f32.mrf.mxu0
    %v5631 = vadd.f32 %v5462, %v5630
    %v5632 = vpop.f32.mrf.mxu0
    %v5633 = vadd.f32 %v5464, %v5632
    %5634 = vdwg.mxu0
    %5635 = vmatpush.bf16.msra.mxu0 %v5176
    %5636 = vmatpush.bf16.msra.mxu0 %v5175
    %5637 = vmatpush.bf16.msra.mxu0 %v5174
    %5638 = vmatpush.bf16.msra.mxu0 %v5173
    %5639 = vmatpush.bf16.msra.mxu0 %v5172
    %5640 = vmatpush.bf16.msra.mxu0 %v5171
    %5641 = vmatpush.bf16.msra.mxu0 %v5170
    %5642 = vmatpush.bf16.msra.mxu0 %v5169
    %5643 = vmatmul.bf16.gmra.mxu0 %v4291
    %v5644 = vpop.f32.mrf.mxu0
    %v5645 = vadd.f32 %v5476, %v5644
    %v5646 = vpop.f32.mrf.mxu0
    %v5647 = vadd.f32 %v5478, %v5646
    %5648 = vmatmul.bf16.gmra.mxu0 %v4300
    %v5649 = vpop.f32.mrf.mxu0
    %v5650 = vadd.f32 %v5481, %v5649
    %v5651 = vpop.f32.mrf.mxu0
    %v5652 = vadd.f32 %v5483, %v5651
    %5653 = vmatmul.bf16.gmra.mxu0 %v4309
    %v5654 = vpop.f32.mrf.mxu0
    %v5655 = vadd.f32 %v5486, %v5654
    %v5656 = vpop.f32.mrf.mxu0
    %v5657 = vadd.f32 %v5488, %v5656
    %5658 = vmatmul.bf16.gmra.mxu0 %v4318
    %v5659 = vpop.f32.mrf.mxu0
    %v5660 = vadd.f32 %v5491, %v5659
    %v5661 = vpop.f32.mrf.mxu0
    %v5662 = vadd.f32 %v5493, %v5661
    %5663 = vmatmul.bf16.gmra.mxu0 %v4327
    %v5664 = vpop.f32.mrf.mxu0
    %v5665 = vadd.f32 %v5496, %v5664
    %v5666 = vpop.f32.mrf.mxu0
    %v5667 = vadd.f32 %v5498, %v5666
    %5668 = vmatmul.bf16.gmra.mxu0 %v4336
    %v5669 = vpop.f32.mrf.mxu0
    %v5670 = vadd.f32 %v5501, %v5669
    %v5671 = vpop.f32.mrf.mxu0
    %v5672 = vadd.f32 %v5503, %v5671
    %5673 = vmatmul.bf16.gmra.mxu0 %v4345
    %v5674 = vpop.f32.mrf.mxu0
    %v5675 = vadd.f32 %v5506, %v5674
    %v5676 = vpop.f32.mrf.mxu0
    %v5677 = vadd.f32 %v5508, %v5676
    %5678 = vmatmul.bf16.gmra.mxu0 %v4354
    %v5679 = vpop.f32.mrf.mxu0
    %v5680 = vadd.f32 %v5511, %v5679
    %v5681 = vpop.f32.mrf.mxu0
    %v5682 = vadd.f32 %v5513, %v5681
    %5683 = vmatmul.bf16.gmra.mxu0 %v4363
    %v5684 = vpop.f32.mrf.mxu0
    %v5685 = vadd.f32 %v5516, %v5684
    %v5686 = vpop.f32.mrf.mxu0
    %v5687 = vadd.f32 %v5518, %v5686
    %5688 = vmatmul.bf16.gmra.mxu0 %v4372
    %v5689 = vpop.f32.mrf.mxu0
    %v5690 = vadd.f32 %v5521, %v5689
    %v5691 = vpop.f32.mrf.mxu0
    %v5692 = vadd.f32 %v5523, %v5691
    %5693 = vmatmul.bf16.gmra.mxu0 %v4381
    %v5694 = vpop.f32.mrf.mxu0
    %v5695 = vadd.f32 %v5526, %v5694
    %v5696 = vpop.f32.mrf.mxu0
    %v5697 = vadd.f32 %v5528, %v5696
    %5698 = vmatmul.bf16.gmra.mxu0 %v4390
    %v5699 = vpop.f32.mrf.mxu0
    %v5700 = vadd.f32 %v5531, %v5699
    %v5701 = vpop.f32.mrf.mxu0
    %v5702 = vadd.f32 %v5533, %v5701
    %5703 = vmatmul.bf16.gmra.mxu0 %v4399
    %v5704 = vpop.f32.mrf.mxu0
    %v5705 = vadd.f32 %v5536, %v5704
    %v5706 = vpop.f32.mrf.mxu0
    %v5707 = vadd.f32 %v5538, %v5706
    %5708 = vmatmul.bf16.gmra.mxu0 %v4408
    %v5709 = vpop.f32.mrf.mxu0
    %v5710 = vadd.f32 %v5541, %v5709
    %v5711 = vpop.f32.mrf.mxu0
    %v5712 = vadd.f32 %v5543, %v5711
    %5713 = vmatmul.bf16.gmra.mxu0 %v4417
    %v5714 = vpop.f32.mrf.mxu0
    %v5715 = vadd.f32 %v5546, %v5714
    %v5716 = vpop.f32.mrf.mxu0
    %v5717 = vadd.f32 %v5548, %v5716
    %5718 = vmatmul.bf16.gmra.mxu0 %v4426
    %v5719 = vpop.f32.mrf.mxu0
    %v5720 = vadd.f32 %v5551, %v5719
    %v5721 = vpop.f32.mrf.mxu0
    %v5722 = vadd.f32 %v5553, %v5721
    %5723 = vmatmul.bf16.gmra.mxu0 %v4435
    %v5724 = vpop.f32.mrf.mxu0
    %v5725 = vadd.f32 %v5556, %v5724
    %v5726 = vpop.f32.mrf.mxu0
    %v5727 = vadd.f32 %v5558, %v5726
    %5728 = vmatmul.bf16.gmra.mxu0 %v4444
    %v5729 = vpop.f32.mrf.mxu0
    %v5730 = vadd.f32 %v5561, %v5729
    %v5731 = vpop.f32.mrf.mxu0
    %v5732 = vadd.f32 %v5563, %v5731
    %5733 = vmatmul.bf16.gmra.mxu0 %v4453
    %v5734 = vpop.f32.mrf.mxu0
    %v5735 = vadd.f32 %v5566, %v5734
    %v5736 = vpop.f32.mrf.mxu0
    %v5737 = vadd.f32 %v5568, %v5736
    %5738 = vmatmul.bf16.gmra.mxu0 %v4462
    %v5739 = vpop.f32.mrf.mxu0
    %v5740 = vadd.f32 %v5571, %v5739
    %v5741 = vpop.f32.mrf.mxu0
    %v5742 = vadd.f32 %v5573, %v5741
    %5743 = vmatmul.bf16.gmra.mxu0 %v4471
    %v5744 = vpop.f32.mrf.mxu0
    %v5745 = vadd.f32 %v5576, %v5744
    %v5746 = vpop.f32.mrf.mxu0
    %v5747 = vadd.f32 %v5578, %v5746
    %5748 = vmatmul.bf16.gmra.mxu0 %v4480
    %v5749 = vpop.f32.mrf.mxu0
    %v5750 = vadd.f32 %v5581, %v5749
    %v5751 = vpop.f32.mrf.mxu0
    %v5752 = vadd.f32 %v5583, %v5751
    %5753 = vmatmul.bf16.gmra.mxu0 %v4489
    %v5754 = vpop.f32.mrf.mxu0
    %v5755 = vadd.f32 %v5586, %v5754
    %v5756 = vpop.f32.mrf.mxu0
    %v5757 = vadd.f32 %v5588, %v5756
    %5758 = vmatmul.bf16.gmra.mxu0 %v4498
    %v5759 = vpop.f32.mrf.mxu0
    %v5760 = vadd.f32 %v5591, %v5759
    %v5761 = vpop.f32.mrf.mxu0
    %v5762 = vadd.f32 %v5593, %v5761
    %5763 = vmatmul.bf16.gmra.mxu0 %v4507
    %v5764 = vpop.f32.mrf.mxu0
    %v5765 = vadd.f32 %v5596, %v5764
    %v5766 = vpop.f32.mrf.mxu0
    %v5767 = vadd.f32 %v5598, %v5766
    %5768 = vmatmul.bf16.gmra.mxu0 %v4516
    %v5769 = vpop.f32.mrf.mxu0
    %v5770 = vadd.f32 %v5601, %v5769
    %v5771 = vpop.f32.mrf.mxu0
    %v5772 = vadd.f32 %v5603, %v5771
    %5773 = vmatmul.bf16.gmra.mxu0 %v4525
    %v5774 = vpop.f32.mrf.mxu0
    %v5775 = vadd.f32 %v5606, %v5774
    %v5776 = vpop.f32.mrf.mxu0
    %v5777 = vadd.f32 %v5608, %v5776
    %5778 = vmatmul.bf16.gmra.mxu0 %v4534
    %v5779 = vpop.f32.mrf.mxu0
    %v5780 = vadd.f32 %v5611, %v5779
    %v5781 = vpop.f32.mrf.mxu0
    %v5782 = vadd.f32 %v5613, %v5781
    %5783 = vmatmul.bf16.gmra.mxu0 %v4543
    %v5784 = vpop.f32.mrf.mxu0
    %v5785 = vadd.f32 %v5616, %v5784
    %v5786 = vpop.f32.mrf.mxu0
    %v5787 = vadd.f32 %v5618, %v5786
    %5788 = vmatmul.bf16.gmra.mxu0 %v4552
    %v5789 = vpop.f32.mrf.mxu0
    %v5790 = vadd.f32 %v5621, %v5789
    %v5791 = vpop.f32.mrf.mxu0
    %v5792 = vadd.f32 %v5623, %v5791
    %5793 = vmatmul.bf16.gmra.mxu0 %v4561
    %v5794 = vpop.f32.mrf.mxu0
    %v5795 = vadd.f32 %v5626, %v5794
    %v5796 = vpop.f32.mrf.mxu0
    %v5797 = vadd.f32 %v5628, %v5796
    %5798 = vmatmul.bf16.gmra.mxu0 %v4570
    %v5799 = vpop.f32.mrf.mxu0
    %v5800 = vadd.f32 %v5631, %v5799
    %v5801 = vpop.f32.mrf.mxu0
    %v5802 = vadd.f32 %v5633, %v5801
    %5803 = vdwg.mxu0
    %5804 = vmatpush.bf16.msra.mxu0 %v5184
    %5805 = vmatpush.bf16.msra.mxu0 %v5183
    %5806 = vmatpush.bf16.msra.mxu0 %v5182
    %5807 = vmatpush.bf16.msra.mxu0 %v5181
    %5808 = vmatpush.bf16.msra.mxu0 %v5180
    %5809 = vmatpush.bf16.msra.mxu0 %v5179
    %5810 = vmatpush.bf16.msra.mxu0 %v5178
    %5811 = vmatpush.bf16.msra.mxu0 %v5177
    %5812 = vmatmul.bf16.gmra.mxu0 %v4292
    %v5813 = vpop.f32.mrf.mxu0
    %v5814 = vadd.f32 %v5645, %v5813
    %v5815 = vpop.f32.mrf.mxu0
    %v5816 = vadd.f32 %v5647, %v5815
    %5817 = vmatmul.bf16.gmra.mxu0 %v4301
    %v5818 = vpop.f32.mrf.mxu0
    %v5819 = vadd.f32 %v5650, %v5818
    %v5820 = vpop.f32.mrf.mxu0
    %v5821 = vadd.f32 %v5652, %v5820
    %5822 = vmatmul.bf16.gmra.mxu0 %v4310
    %v5823 = vpop.f32.mrf.mxu0
    %v5824 = vadd.f32 %v5655, %v5823
    %v5825 = vpop.f32.mrf.mxu0
    %v5826 = vadd.f32 %v5657, %v5825
    %5827 = vmatmul.bf16.gmra.mxu0 %v4319
    %v5828 = vpop.f32.mrf.mxu0
    %v5829 = vadd.f32 %v5660, %v5828
    %v5830 = vpop.f32.mrf.mxu0
    %v5831 = vadd.f32 %v5662, %v5830
    %5832 = vmatmul.bf16.gmra.mxu0 %v4328
    %v5833 = vpop.f32.mrf.mxu0
    %v5834 = vadd.f32 %v5665, %v5833
    %v5835 = vpop.f32.mrf.mxu0
    %v5836 = vadd.f32 %v5667, %v5835
    %5837 = vmatmul.bf16.gmra.mxu0 %v4337
    %v5838 = vpop.f32.mrf.mxu0
    %v5839 = vadd.f32 %v5670, %v5838
    %v5840 = vpop.f32.mrf.mxu0
    %v5841 = vadd.f32 %v5672, %v5840
    %5842 = vmatmul.bf16.gmra.mxu0 %v4346
    %v5843 = vpop.f32.mrf.mxu0
    %v5844 = vadd.f32 %v5675, %v5843
    %v5845 = vpop.f32.mrf.mxu0
    %v5846 = vadd.f32 %v5677, %v5845
    %5847 = vmatmul.bf16.gmra.mxu0 %v4355
    %v5848 = vpop.f32.mrf.mxu0
    %v5849 = vadd.f32 %v5680, %v5848
    %v5850 = vpop.f32.mrf.mxu0
    %v5851 = vadd.f32 %v5682, %v5850
    %5852 = vmatmul.bf16.gmra.mxu0 %v4364
    %v5853 = vpop.f32.mrf.mxu0
    %v5854 = vadd.f32 %v5685, %v5853
    %v5855 = vpop.f32.mrf.mxu0
    %v5856 = vadd.f32 %v5687, %v5855
    %5857 = vmatmul.bf16.gmra.mxu0 %v4373
    %v5858 = vpop.f32.mrf.mxu0
    %v5859 = vadd.f32 %v5690, %v5858
    %v5860 = vpop.f32.mrf.mxu0
    %v5861 = vadd.f32 %v5692, %v5860
    %5862 = vmatmul.bf16.gmra.mxu0 %v4382
    %v5863 = vpop.f32.mrf.mxu0
    %v5864 = vadd.f32 %v5695, %v5863
    %v5865 = vpop.f32.mrf.mxu0
    %v5866 = vadd.f32 %v5697, %v5865
    %5867 = vmatmul.bf16.gmra.mxu0 %v4391
    %v5868 = vpop.f32.mrf.mxu0
    %v5869 = vadd.f32 %v5700, %v5868
    %v5870 = vpop.f32.mrf.mxu0
    %v5871 = vadd.f32 %v5702, %v5870
    %5872 = vmatmul.bf16.gmra.mxu0 %v4400
    %v5873 = vpop.f32.mrf.mxu0
    %v5874 = vadd.f32 %v5705, %v5873
    %v5875 = vpop.f32.mrf.mxu0
    %v5876 = vadd.f32 %v5707, %v5875
    %5877 = vmatmul.bf16.gmra.mxu0 %v4409
    %v5878 = vpop.f32.mrf.mxu0
    %v5879 = vadd.f32 %v5710, %v5878
    %v5880 = vpop.f32.mrf.mxu0
    %v5881 = vadd.f32 %v5712, %v5880
    %5882 = vmatmul.bf16.gmra.mxu0 %v4418
    %v5883 = vpop.f32.mrf.mxu0
    %v5884 = vadd.f32 %v5715, %v5883
    %v5885 = vpop.f32.mrf.mxu0
    %v5886 = vadd.f32 %v5717, %v5885
    %5887 = vmatmul.bf16.gmra.mxu0 %v4427
    %v5888 = vpop.f32.mrf.mxu0
    %v5889 = vadd.f32 %v5720, %v5888
    %v5890 = vpop.f32.mrf.mxu0
    %v5891 = vadd.f32 %v5722, %v5890
    %5892 = vmatmul.bf16.gmra.mxu0 %v4436
    %v5893 = vpop.f32.mrf.mxu0
    %v5894 = vadd.f32 %v5725, %v5893
    %v5895 = vpop.f32.mrf.mxu0
    %v5896 = vadd.f32 %v5727, %v5895
    %5897 = vmatmul.bf16.gmra.mxu0 %v4445
    %v5898 = vpop.f32.mrf.mxu0
    %v5899 = vadd.f32 %v5730, %v5898
    %v5900 = vpop.f32.mrf.mxu0
    %v5901 = vadd.f32 %v5732, %v5900
    %5902 = vmatmul.bf16.gmra.mxu0 %v4454
    %v5903 = vpop.f32.mrf.mxu0
    %v5904 = vadd.f32 %v5735, %v5903
    %v5905 = vpop.f32.mrf.mxu0
    %v5906 = vadd.f32 %v5737, %v5905
    %5907 = vmatmul.bf16.gmra.mxu0 %v4463
    %v5908 = vpop.f32.mrf.mxu0
    %v5909 = vadd.f32 %v5740, %v5908
    %v5910 = vpop.f32.mrf.mxu0
    %v5911 = vadd.f32 %v5742, %v5910
    %5912 = vmatmul.bf16.gmra.mxu0 %v4472
    %v5913 = vpop.f32.mrf.mxu0
    %v5914 = vadd.f32 %v5745, %v5913
    %v5915 = vpop.f32.mrf.mxu0
    %v5916 = vadd.f32 %v5747, %v5915
    %5917 = vmatmul.bf16.gmra.mxu0 %v4481
    %v5918 = vpop.f32.mrf.mxu0
    %v5919 = vadd.f32 %v5750, %v5918
    %v5920 = vpop.f32.mrf.mxu0
    %v5921 = vadd.f32 %v5752, %v5920
    %5922 = vmatmul.bf16.gmra.mxu0 %v4490
    %v5923 = vpop.f32.mrf.mxu0
    %v5924 = vadd.f32 %v5755, %v5923
    %v5925 = vpop.f32.mrf.mxu0
    %v5926 = vadd.f32 %v5757, %v5925
    %5927 = vmatmul.bf16.gmra.mxu0 %v4499
    %v5928 = vpop.f32.mrf.mxu0
    %v5929 = vadd.f32 %v5760, %v5928
    %v5930 = vpop.f32.mrf.mxu0
    %v5931 = vadd.f32 %v5762, %v5930
    %5932 = vmatmul.bf16.gmra.mxu0 %v4508
    %v5933 = vpop.f32.mrf.mxu0
    %v5934 = vadd.f32 %v5765, %v5933
    %v5935 = vpop.f32.mrf.mxu0
    %v5936 = vadd.f32 %v5767, %v5935
    %5937 = vmatmul.bf16.gmra.mxu0 %v4517
    %v5938 = vpop.f32.mrf.mxu0
    %v5939 = vadd.f32 %v5770, %v5938
    %v5940 = vpop.f32.mrf.mxu0
    %v5941 = vadd.f32 %v5772, %v5940
    %5942 = vmatmul.bf16.gmra.mxu0 %v4526
    %v5943 = vpop.f32.mrf.mxu0
    %v5944 = vadd.f32 %v5775, %v5943
    %v5945 = vpop.f32.mrf.mxu0
    %v5946 = vadd.f32 %v5777, %v5945
    %5947 = vmatmul.bf16.gmra.mxu0 %v4535
    %v5948 = vpop.f32.mrf.mxu0
    %v5949 = vadd.f32 %v5780, %v5948
    %v5950 = vpop.f32.mrf.mxu0
    %v5951 = vadd.f32 %v5782, %v5950
    %5952 = vmatmul.bf16.gmra.mxu0 %v4544
    %v5953 = vpop.f32.mrf.mxu0
    %v5954 = vadd.f32 %v5785, %v5953
    %v5955 = vpop.f32.mrf.mxu0
    %v5956 = vadd.f32 %v5787, %v5955
    %5957 = vmatmul.bf16.gmra.mxu0 %v4553
    %v5958 = vpop.f32.mrf.mxu0
    %v5959 = vadd.f32 %v5790, %v5958
    %v5960 = vpop.f32.mrf.mxu0
    %v5961 = vadd.f32 %v5792, %v5960
    %5962 = vmatmul.bf16.gmra.mxu0 %v4562
    %v5963 = vpop.f32.mrf.mxu0
    %v5964 = vadd.f32 %v5795, %v5963
    %v5965 = vpop.f32.mrf.mxu0
    %v5966 = vadd.f32 %v5797, %v5965
    %5967 = vmatmul.bf16.gmra.mxu0 %v4571
    %v5968 = vpop.f32.mrf.mxu0
    %v5969 = vadd.f32 %v5800, %v5968
    %v5970 = vpop.f32.mrf.mxu0
    %v5971 = vadd.f32 %v5802, %v5970
    %5972 = vdwg.mxu0
    %5973 = vmatpush.bf16.msra.mxu0 %v5192
    %5974 = vmatpush.bf16.msra.mxu0 %v5191
    %5975 = vmatpush.bf16.msra.mxu0 %v5190
    %5976 = vmatpush.bf16.msra.mxu0 %v5189
    %5977 = vmatpush.bf16.msra.mxu0 %v5188
    %5978 = vmatpush.bf16.msra.mxu0 %v5187
    %5979 = vmatpush.bf16.msra.mxu0 %v5186
    %5980 = vmatpush.bf16.msra.mxu0 %v5185
    %5981 = vmatmul.bf16.gmra.mxu0 %v4293
    %v5982 = vpop.f32.mrf.mxu0
    %v5983 = vadd.f32 %v5814, %v5982
    %v5984 = vpop.f32.mrf.mxu0
    %v5985 = vadd.f32 %v5816, %v5984
    %5986 = vmatmul.bf16.gmra.mxu0 %v4302
    %v5987 = vpop.f32.mrf.mxu0
    %v5988 = vadd.f32 %v5819, %v5987
    %v5989 = vpop.f32.mrf.mxu0
    %v5990 = vadd.f32 %v5821, %v5989
    %5991 = vmatmul.bf16.gmra.mxu0 %v4311
    %v5992 = vpop.f32.mrf.mxu0
    %v5993 = vadd.f32 %v5824, %v5992
    %v5994 = vpop.f32.mrf.mxu0
    %v5995 = vadd.f32 %v5826, %v5994
    %5996 = vmatmul.bf16.gmra.mxu0 %v4320
    %v5997 = vpop.f32.mrf.mxu0
    %v5998 = vadd.f32 %v5829, %v5997
    %v5999 = vpop.f32.mrf.mxu0
    %v6000 = vadd.f32 %v5831, %v5999
    %6001 = vmatmul.bf16.gmra.mxu0 %v4329
    %v6002 = vpop.f32.mrf.mxu0
    %v6003 = vadd.f32 %v5834, %v6002
    %v6004 = vpop.f32.mrf.mxu0
    %v6005 = vadd.f32 %v5836, %v6004
    %6006 = vmatmul.bf16.gmra.mxu0 %v4338
    %v6007 = vpop.f32.mrf.mxu0
    %v6008 = vadd.f32 %v5839, %v6007
    %v6009 = vpop.f32.mrf.mxu0
    %v6010 = vadd.f32 %v5841, %v6009
    %6011 = vmatmul.bf16.gmra.mxu0 %v4347
    %v6012 = vpop.f32.mrf.mxu0
    %v6013 = vadd.f32 %v5844, %v6012
    %v6014 = vpop.f32.mrf.mxu0
    %v6015 = vadd.f32 %v5846, %v6014
    %6016 = vmatmul.bf16.gmra.mxu0 %v4356
    %v6017 = vpop.f32.mrf.mxu0
    %v6018 = vadd.f32 %v5849, %v6017
    %v6019 = vpop.f32.mrf.mxu0
    %v6020 = vadd.f32 %v5851, %v6019
    %6021 = vmatmul.bf16.gmra.mxu0 %v4365
    %v6022 = vpop.f32.mrf.mxu0
    %v6023 = vadd.f32 %v5854, %v6022
    %v6024 = vpop.f32.mrf.mxu0
    %v6025 = vadd.f32 %v5856, %v6024
    %6026 = vmatmul.bf16.gmra.mxu0 %v4374
    %v6027 = vpop.f32.mrf.mxu0
    %v6028 = vadd.f32 %v5859, %v6027
    %v6029 = vpop.f32.mrf.mxu0
    %v6030 = vadd.f32 %v5861, %v6029
    %6031 = vmatmul.bf16.gmra.mxu0 %v4383
    %v6032 = vpop.f32.mrf.mxu0
    %v6033 = vadd.f32 %v5864, %v6032
    %v6034 = vpop.f32.mrf.mxu0
    %v6035 = vadd.f32 %v5866, %v6034
    %6036 = vmatmul.bf16.gmra.mxu0 %v4392
    %v6037 = vpop.f32.mrf.mxu0
    %v6038 = vadd.f32 %v5869, %v6037
    %v6039 = vpop.f32.mrf.mxu0
    %v6040 = vadd.f32 %v5871, %v6039
    %6041 = vmatmul.bf16.gmra.mxu0 %v4401
    %v6042 = vpop.f32.mrf.mxu0
    %v6043 = vadd.f32 %v5874, %v6042
    %v6044 = vpop.f32.mrf.mxu0
    %v6045 = vadd.f32 %v5876, %v6044
    %6046 = vmatmul.bf16.gmra.mxu0 %v4410
    %v6047 = vpop.f32.mrf.mxu0
    %v6048 = vadd.f32 %v5879, %v6047
    %v6049 = vpop.f32.mrf.mxu0
    %v6050 = vadd.f32 %v5881, %v6049
    %6051 = vmatmul.bf16.gmra.mxu0 %v4419
    %v6052 = vpop.f32.mrf.mxu0
    %v6053 = vadd.f32 %v5884, %v6052
    %v6054 = vpop.f32.mrf.mxu0
    %v6055 = vadd.f32 %v5886, %v6054
    %6056 = vmatmul.bf16.gmra.mxu0 %v4428
    %v6057 = vpop.f32.mrf.mxu0
    %v6058 = vadd.f32 %v5889, %v6057
    %v6059 = vpop.f32.mrf.mxu0
    %v6060 = vadd.f32 %v5891, %v6059
    %6061 = vmatmul.bf16.gmra.mxu0 %v4437
    %v6062 = vpop.f32.mrf.mxu0
    %v6063 = vadd.f32 %v5894, %v6062
    %v6064 = vpop.f32.mrf.mxu0
    %v6065 = vadd.f32 %v5896, %v6064
    %6066 = vmatmul.bf16.gmra.mxu0 %v4446
    %v6067 = vpop.f32.mrf.mxu0
    %v6068 = vadd.f32 %v5899, %v6067
    %v6069 = vpop.f32.mrf.mxu0
    %v6070 = vadd.f32 %v5901, %v6069
    %6071 = vmatmul.bf16.gmra.mxu0 %v4455
    %v6072 = vpop.f32.mrf.mxu0
    %v6073 = vadd.f32 %v5904, %v6072
    %v6074 = vpop.f32.mrf.mxu0
    %v6075 = vadd.f32 %v5906, %v6074
    %6076 = vmatmul.bf16.gmra.mxu0 %v4464
    %v6077 = vpop.f32.mrf.mxu0
    %v6078 = vadd.f32 %v5909, %v6077
    %v6079 = vpop.f32.mrf.mxu0
    %v6080 = vadd.f32 %v5911, %v6079
    %6081 = vmatmul.bf16.gmra.mxu0 %v4473
    %v6082 = vpop.f32.mrf.mxu0
    %v6083 = vadd.f32 %v5914, %v6082
    %v6084 = vpop.f32.mrf.mxu0
    %v6085 = vadd.f32 %v5916, %v6084
    %6086 = vmatmul.bf16.gmra.mxu0 %v4482
    %v6087 = vpop.f32.mrf.mxu0
    %v6088 = vadd.f32 %v5919, %v6087
    %v6089 = vpop.f32.mrf.mxu0
    %v6090 = vadd.f32 %v5921, %v6089
    %6091 = vmatmul.bf16.gmra.mxu0 %v4491
    %v6092 = vpop.f32.mrf.mxu0
    %v6093 = vadd.f32 %v5924, %v6092
    %v6094 = vpop.f32.mrf.mxu0
    %v6095 = vadd.f32 %v5926, %v6094
    %6096 = vmatmul.bf16.gmra.mxu0 %v4500
    %v6097 = vpop.f32.mrf.mxu0
    %v6098 = vadd.f32 %v5929, %v6097
    %v6099 = vpop.f32.mrf.mxu0
    %v6100 = vadd.f32 %v5931, %v6099
    %6101 = vmatmul.bf16.gmra.mxu0 %v4509
    %v6102 = vpop.f32.mrf.mxu0
    %v6103 = vadd.f32 %v5934, %v6102
    %v6104 = vpop.f32.mrf.mxu0
    %v6105 = vadd.f32 %v5936, %v6104
    %6106 = vmatmul.bf16.gmra.mxu0 %v4518
    %v6107 = vpop.f32.mrf.mxu0
    %v6108 = vadd.f32 %v5939, %v6107
    %v6109 = vpop.f32.mrf.mxu0
    %v6110 = vadd.f32 %v5941, %v6109
    %6111 = vmatmul.bf16.gmra.mxu0 %v4527
    %v6112 = vpop.f32.mrf.mxu0
    %v6113 = vadd.f32 %v5944, %v6112
    %v6114 = vpop.f32.mrf.mxu0
    %v6115 = vadd.f32 %v5946, %v6114
    %6116 = vmatmul.bf16.gmra.mxu0 %v4536
    %v6117 = vpop.f32.mrf.mxu0
    %v6118 = vadd.f32 %v5949, %v6117
    %v6119 = vpop.f32.mrf.mxu0
    %v6120 = vadd.f32 %v5951, %v6119
    %6121 = vmatmul.bf16.gmra.mxu0 %v4545
    %v6122 = vpop.f32.mrf.mxu0
    %v6123 = vadd.f32 %v5954, %v6122
    %v6124 = vpop.f32.mrf.mxu0
    %v6125 = vadd.f32 %v5956, %v6124
    %6126 = vmatmul.bf16.gmra.mxu0 %v4554
    %v6127 = vpop.f32.mrf.mxu0
    %v6128 = vadd.f32 %v5959, %v6127
    %v6129 = vpop.f32.mrf.mxu0
    %v6130 = vadd.f32 %v5961, %v6129
    %6131 = vmatmul.bf16.gmra.mxu0 %v4563
    %v6132 = vpop.f32.mrf.mxu0
    %v6133 = vadd.f32 %v5964, %v6132
    %v6134 = vpop.f32.mrf.mxu0
    %v6135 = vadd.f32 %v5966, %v6134
    %6136 = vmatmul.bf16.gmra.mxu0 %v4572
    %v6137 = vpop.f32.mrf.mxu0
    %v6138 = vadd.f32 %v5969, %v6137
    %v6139 = vpop.f32.mrf.mxu0
    %v6140 = vadd.f32 %v5971, %v6139
    %6141 = vdwg.mxu0
    %6142 = vmatpush.bf16.msra.mxu0 %v5200
    %6143 = vmatpush.bf16.msra.mxu0 %v5199
    %6144 = vmatpush.bf16.msra.mxu0 %v5198
    %6145 = vmatpush.bf16.msra.mxu0 %v5197
    %6146 = vmatpush.bf16.msra.mxu0 %v5196
    %6147 = vmatpush.bf16.msra.mxu0 %v5195
    %6148 = vmatpush.bf16.msra.mxu0 %v5194
    %6149 = vmatpush.bf16.msra.mxu0 %v5193
    %6150 = vmatmul.bf16.gmra.mxu0 %v4294
    %v6151 = vpop.f32.mrf.mxu0
    %v6152 = vadd.f32 %v5983, %v6151
    %v6153 = vpop.f32.mrf.mxu0
    %v6154 = vadd.f32 %v5985, %v6153
    %6155 = vmatmul.bf16.gmra.mxu0 %v4303
    %v6156 = vpop.f32.mrf.mxu0
    %v6157 = vadd.f32 %v5988, %v6156
    %v6158 = vpop.f32.mrf.mxu0
    %v6159 = vadd.f32 %v5990, %v6158
    %6160 = vmatmul.bf16.gmra.mxu0 %v4312
    %v6161 = vpop.f32.mrf.mxu0
    %v6162 = vadd.f32 %v5993, %v6161
    %v6163 = vpop.f32.mrf.mxu0
    %v6164 = vadd.f32 %v5995, %v6163
    %6165 = vmatmul.bf16.gmra.mxu0 %v4321
    %v6166 = vpop.f32.mrf.mxu0
    %v6167 = vadd.f32 %v5998, %v6166
    %v6168 = vpop.f32.mrf.mxu0
    %v6169 = vadd.f32 %v6000, %v6168
    %6170 = vmatmul.bf16.gmra.mxu0 %v4330
    %v6171 = vpop.f32.mrf.mxu0
    %v6172 = vadd.f32 %v6003, %v6171
    %v6173 = vpop.f32.mrf.mxu0
    %v6174 = vadd.f32 %v6005, %v6173
    %6175 = vmatmul.bf16.gmra.mxu0 %v4339
    %v6176 = vpop.f32.mrf.mxu0
    %v6177 = vadd.f32 %v6008, %v6176
    %v6178 = vpop.f32.mrf.mxu0
    %v6179 = vadd.f32 %v6010, %v6178
    %6180 = vmatmul.bf16.gmra.mxu0 %v4348
    %v6181 = vpop.f32.mrf.mxu0
    %v6182 = vadd.f32 %v6013, %v6181
    %v6183 = vpop.f32.mrf.mxu0
    %v6184 = vadd.f32 %v6015, %v6183
    %6185 = vmatmul.bf16.gmra.mxu0 %v4357
    %v6186 = vpop.f32.mrf.mxu0
    %v6187 = vadd.f32 %v6018, %v6186
    %v6188 = vpop.f32.mrf.mxu0
    %v6189 = vadd.f32 %v6020, %v6188
    %6190 = vmatmul.bf16.gmra.mxu0 %v4366
    %v6191 = vpop.f32.mrf.mxu0
    %v6192 = vadd.f32 %v6023, %v6191
    %v6193 = vpop.f32.mrf.mxu0
    %v6194 = vadd.f32 %v6025, %v6193
    %6195 = vmatmul.bf16.gmra.mxu0 %v4375
    %v6196 = vpop.f32.mrf.mxu0
    %v6197 = vadd.f32 %v6028, %v6196
    %v6198 = vpop.f32.mrf.mxu0
    %v6199 = vadd.f32 %v6030, %v6198
    %6200 = vmatmul.bf16.gmra.mxu0 %v4384
    %v6201 = vpop.f32.mrf.mxu0
    %v6202 = vadd.f32 %v6033, %v6201
    %v6203 = vpop.f32.mrf.mxu0
    %v6204 = vadd.f32 %v6035, %v6203
    %6205 = vmatmul.bf16.gmra.mxu0 %v4393
    %v6206 = vpop.f32.mrf.mxu0
    %v6207 = vadd.f32 %v6038, %v6206
    %v6208 = vpop.f32.mrf.mxu0
    %v6209 = vadd.f32 %v6040, %v6208
    %6210 = vmatmul.bf16.gmra.mxu0 %v4402
    %v6211 = vpop.f32.mrf.mxu0
    %v6212 = vadd.f32 %v6043, %v6211
    %v6213 = vpop.f32.mrf.mxu0
    %v6214 = vadd.f32 %v6045, %v6213
    %6215 = vmatmul.bf16.gmra.mxu0 %v4411
    %v6216 = vpop.f32.mrf.mxu0
    %v6217 = vadd.f32 %v6048, %v6216
    %v6218 = vpop.f32.mrf.mxu0
    %v6219 = vadd.f32 %v6050, %v6218
    %6220 = vmatmul.bf16.gmra.mxu0 %v4420
    %v6221 = vpop.f32.mrf.mxu0
    %v6222 = vadd.f32 %v6053, %v6221
    %v6223 = vpop.f32.mrf.mxu0
    %v6224 = vadd.f32 %v6055, %v6223
    %6225 = vmatmul.bf16.gmra.mxu0 %v4429
    %v6226 = vpop.f32.mrf.mxu0
    %v6227 = vadd.f32 %v6058, %v6226
    %v6228 = vpop.f32.mrf.mxu0
    %v6229 = vadd.f32 %v6060, %v6228
    %6230 = vmatmul.bf16.gmra.mxu0 %v4438
    %v6231 = vpop.f32.mrf.mxu0
    %v6232 = vadd.f32 %v6063, %v6231
    %v6233 = vpop.f32.mrf.mxu0
    %v6234 = vadd.f32 %v6065, %v6233
    %6235 = vmatmul.bf16.gmra.mxu0 %v4447
    %v6236 = vpop.f32.mrf.mxu0
    %v6237 = vadd.f32 %v6068, %v6236
    %v6238 = vpop.f32.mrf.mxu0
    %v6239 = vadd.f32 %v6070, %v6238
    %6240 = vmatmul.bf16.gmra.mxu0 %v4456
    %v6241 = vpop.f32.mrf.mxu0
    %v6242 = vadd.f32 %v6073, %v6241
    %v6243 = vpop.f32.mrf.mxu0
    %v6244 = vadd.f32 %v6075, %v6243
    %6245 = vmatmul.bf16.gmra.mxu0 %v4465
    %v6246 = vpop.f32.mrf.mxu0
    %v6247 = vadd.f32 %v6078, %v6246
    %v6248 = vpop.f32.mrf.mxu0
    %v6249 = vadd.f32 %v6080, %v6248
    %6250 = vmatmul.bf16.gmra.mxu0 %v4474
    %v6251 = vpop.f32.mrf.mxu0
    %v6252 = vadd.f32 %v6083, %v6251
    %v6253 = vpop.f32.mrf.mxu0
    %v6254 = vadd.f32 %v6085, %v6253
    %6255 = vmatmul.bf16.gmra.mxu0 %v4483
    %v6256 = vpop.f32.mrf.mxu0
    %v6257 = vadd.f32 %v6088, %v6256
    %v6258 = vpop.f32.mrf.mxu0
    %v6259 = vadd.f32 %v6090, %v6258
    %6260 = vmatmul.bf16.gmra.mxu0 %v4492
    %v6261 = vpop.f32.mrf.mxu0
    %v6262 = vadd.f32 %v6093, %v6261
    %v6263 = vpop.f32.mrf.mxu0
    %v6264 = vadd.f32 %v6095, %v6263
    %6265 = vmatmul.bf16.gmra.mxu0 %v4501
    %v6266 = vpop.f32.mrf.mxu0
    %v6267 = vadd.f32 %v6098, %v6266
    %v6268 = vpop.f32.mrf.mxu0
    %v6269 = vadd.f32 %v6100, %v6268
    %6270 = vmatmul.bf16.gmra.mxu0 %v4510
    %v6271 = vpop.f32.mrf.mxu0
    %v6272 = vadd.f32 %v6103, %v6271
    %v6273 = vpop.f32.mrf.mxu0
    %v6274 = vadd.f32 %v6105, %v6273
    %6275 = vmatmul.bf16.gmra.mxu0 %v4519
    %v6276 = vpop.f32.mrf.mxu0
    %v6277 = vadd.f32 %v6108, %v6276
    %v6278 = vpop.f32.mrf.mxu0
    %v6279 = vadd.f32 %v6110, %v6278
    %6280 = vmatmul.bf16.gmra.mxu0 %v4528
    %v6281 = vpop.f32.mrf.mxu0
    %v6282 = vadd.f32 %v6113, %v6281
    %v6283 = vpop.f32.mrf.mxu0
    %v6284 = vadd.f32 %v6115, %v6283
    %6285 = vmatmul.bf16.gmra.mxu0 %v4537
    %v6286 = vpop.f32.mrf.mxu0
    %v6287 = vadd.f32 %v6118, %v6286
    %v6288 = vpop.f32.mrf.mxu0
    %v6289 = vadd.f32 %v6120, %v6288
    %6290 = vmatmul.bf16.gmra.mxu0 %v4546
    %v6291 = vpop.f32.mrf.mxu0
    %v6292 = vadd.f32 %v6123, %v6291
    %v6293 = vpop.f32.mrf.mxu0
    %v6294 = vadd.f32 %v6125, %v6293
    %6295 = vmatmul.bf16.gmra.mxu0 %v4555
    %v6296 = vpop.f32.mrf.mxu0
    %v6297 = vadd.f32 %v6128, %v6296
    %v6298 = vpop.f32.mrf.mxu0
    %v6299 = vadd.f32 %v6130, %v6298
    %6300 = vmatmul.bf16.gmra.mxu0 %v4564
    %v6301 = vpop.f32.mrf.mxu0
    %v6302 = vadd.f32 %v6133, %v6301
    %v6303 = vpop.f32.mrf.mxu0
    %v6304 = vadd.f32 %v6135, %v6303
    %6305 = vmatmul.bf16.gmra.mxu0 %v4573
    %v6306 = vpop.f32.mrf.mxu0
    %v6307 = vadd.f32 %v6138, %v6306
    %v6308 = vpop.f32.mrf.mxu0
    %v6309 = vadd.f32 %v6140, %v6308
    %6310 = vdwg.mxu0
    %6311 = vmatpush.bf16.msra.mxu0 %v5208
    %6312 = vmatpush.bf16.msra.mxu0 %v5207
    %6313 = vmatpush.bf16.msra.mxu0 %v5206
    %6314 = vmatpush.bf16.msra.mxu0 %v5205
    %6315 = vmatpush.bf16.msra.mxu0 %v5204
    %6316 = vmatpush.bf16.msra.mxu0 %v5203
    %6317 = vmatpush.bf16.msra.mxu0 %v5202
    %6318 = vmatpush.bf16.msra.mxu0 %v5201
    %6319 = vmatmul.bf16.gmra.mxu0 %v4295
    %v6320 = vpop.f32.mrf.mxu0
    %v6321 = vadd.f32 %v6152, %v6320
    %v6322 = vpop.f32.mrf.mxu0
    %v6323 = vadd.f32 %v6154, %v6322
    %6324 = vmatmul.bf16.gmra.mxu0 %v4304
    %v6325 = vpop.f32.mrf.mxu0
    %v6326 = vadd.f32 %v6157, %v6325
    %v6327 = vpop.f32.mrf.mxu0
    %v6328 = vadd.f32 %v6159, %v6327
    %6329 = vmatmul.bf16.gmra.mxu0 %v4313
    %v6330 = vpop.f32.mrf.mxu0
    %v6331 = vadd.f32 %v6162, %v6330
    %v6332 = vpop.f32.mrf.mxu0
    %v6333 = vadd.f32 %v6164, %v6332
    %6334 = vmatmul.bf16.gmra.mxu0 %v4322
    %v6335 = vpop.f32.mrf.mxu0
    %v6336 = vadd.f32 %v6167, %v6335
    %v6337 = vpop.f32.mrf.mxu0
    %v6338 = vadd.f32 %v6169, %v6337
    %6339 = vmatmul.bf16.gmra.mxu0 %v4331
    %v6340 = vpop.f32.mrf.mxu0
    %v6341 = vadd.f32 %v6172, %v6340
    %v6342 = vpop.f32.mrf.mxu0
    %v6343 = vadd.f32 %v6174, %v6342
    %6344 = vmatmul.bf16.gmra.mxu0 %v4340
    %v6345 = vpop.f32.mrf.mxu0
    %v6346 = vadd.f32 %v6177, %v6345
    %v6347 = vpop.f32.mrf.mxu0
    %v6348 = vadd.f32 %v6179, %v6347
    %6349 = vmatmul.bf16.gmra.mxu0 %v4349
    %v6350 = vpop.f32.mrf.mxu0
    %v6351 = vadd.f32 %v6182, %v6350
    %v6352 = vpop.f32.mrf.mxu0
    %v6353 = vadd.f32 %v6184, %v6352
    %6354 = vmatmul.bf16.gmra.mxu0 %v4358
    %v6355 = vpop.f32.mrf.mxu0
    %v6356 = vadd.f32 %v6187, %v6355
    %v6357 = vpop.f32.mrf.mxu0
    %v6358 = vadd.f32 %v6189, %v6357
    %6359 = vmatmul.bf16.gmra.mxu0 %v4367
    %v6360 = vpop.f32.mrf.mxu0
    %v6361 = vadd.f32 %v6192, %v6360
    %v6362 = vpop.f32.mrf.mxu0
    %v6363 = vadd.f32 %v6194, %v6362
    %6364 = vmatmul.bf16.gmra.mxu0 %v4376
    %v6365 = vpop.f32.mrf.mxu0
    %v6366 = vadd.f32 %v6197, %v6365
    %v6367 = vpop.f32.mrf.mxu0
    %v6368 = vadd.f32 %v6199, %v6367
    %6369 = vmatmul.bf16.gmra.mxu0 %v4385
    %v6370 = vpop.f32.mrf.mxu0
    %v6371 = vadd.f32 %v6202, %v6370
    %v6372 = vpop.f32.mrf.mxu0
    %v6373 = vadd.f32 %v6204, %v6372
    %6374 = vmatmul.bf16.gmra.mxu0 %v4394
    %v6375 = vpop.f32.mrf.mxu0
    %v6376 = vadd.f32 %v6207, %v6375
    %v6377 = vpop.f32.mrf.mxu0
    %v6378 = vadd.f32 %v6209, %v6377
    %6379 = vmatmul.bf16.gmra.mxu0 %v4403
    %v6380 = vpop.f32.mrf.mxu0
    %v6381 = vadd.f32 %v6212, %v6380
    %v6382 = vpop.f32.mrf.mxu0
    %v6383 = vadd.f32 %v6214, %v6382
    %6384 = vmatmul.bf16.gmra.mxu0 %v4412
    %v6385 = vpop.f32.mrf.mxu0
    %v6386 = vadd.f32 %v6217, %v6385
    %v6387 = vpop.f32.mrf.mxu0
    %v6388 = vadd.f32 %v6219, %v6387
    %6389 = vmatmul.bf16.gmra.mxu0 %v4421
    %v6390 = vpop.f32.mrf.mxu0
    %v6391 = vadd.f32 %v6222, %v6390
    %v6392 = vpop.f32.mrf.mxu0
    %v6393 = vadd.f32 %v6224, %v6392
    %6394 = vmatmul.bf16.gmra.mxu0 %v4430
    %v6395 = vpop.f32.mrf.mxu0
    %v6396 = vadd.f32 %v6227, %v6395
    %v6397 = vpop.f32.mrf.mxu0
    %v6398 = vadd.f32 %v6229, %v6397
    %6399 = vmatmul.bf16.gmra.mxu0 %v4439
    %v6400 = vpop.f32.mrf.mxu0
    %v6401 = vadd.f32 %v6232, %v6400
    %v6402 = vpop.f32.mrf.mxu0
    %v6403 = vadd.f32 %v6234, %v6402
    %6404 = vmatmul.bf16.gmra.mxu0 %v4448
    %v6405 = vpop.f32.mrf.mxu0
    %v6406 = vadd.f32 %v6237, %v6405
    %v6407 = vpop.f32.mrf.mxu0
    %v6408 = vadd.f32 %v6239, %v6407
    %6409 = vmatmul.bf16.gmra.mxu0 %v4457
    %v6410 = vpop.f32.mrf.mxu0
    %v6411 = vadd.f32 %v6242, %v6410
    %v6412 = vpop.f32.mrf.mxu0
    %v6413 = vadd.f32 %v6244, %v6412
    %6414 = vmatmul.bf16.gmra.mxu0 %v4466
    %v6415 = vpop.f32.mrf.mxu0
    %v6416 = vadd.f32 %v6247, %v6415
    %v6417 = vpop.f32.mrf.mxu0
    %v6418 = vadd.f32 %v6249, %v6417
    %6419 = vmatmul.bf16.gmra.mxu0 %v4475
    %v6420 = vpop.f32.mrf.mxu0
    %v6421 = vadd.f32 %v6252, %v6420
    %v6422 = vpop.f32.mrf.mxu0
    %v6423 = vadd.f32 %v6254, %v6422
    %6424 = vmatmul.bf16.gmra.mxu0 %v4484
    %v6425 = vpop.f32.mrf.mxu0
    %v6426 = vadd.f32 %v6257, %v6425
    %v6427 = vpop.f32.mrf.mxu0
    %v6428 = vadd.f32 %v6259, %v6427
    %6429 = vmatmul.bf16.gmra.mxu0 %v4493
    %v6430 = vpop.f32.mrf.mxu0
    %v6431 = vadd.f32 %v6262, %v6430
    %v6432 = vpop.f32.mrf.mxu0
    %v6433 = vadd.f32 %v6264, %v6432
    %6434 = vmatmul.bf16.gmra.mxu0 %v4502
    %v6435 = vpop.f32.mrf.mxu0
    %v6436 = vadd.f32 %v6267, %v6435
    %v6437 = vpop.f32.mrf.mxu0
    %v6438 = vadd.f32 %v6269, %v6437
    %6439 = vmatmul.bf16.gmra.mxu0 %v4511
    %v6440 = vpop.f32.mrf.mxu0
    %v6441 = vadd.f32 %v6272, %v6440
    %v6442 = vpop.f32.mrf.mxu0
    %v6443 = vadd.f32 %v6274, %v6442
    %6444 = vmatmul.bf16.gmra.mxu0 %v4520
    %v6445 = vpop.f32.mrf.mxu0
    %v6446 = vadd.f32 %v6277, %v6445
    %v6447 = vpop.f32.mrf.mxu0
    %v6448 = vadd.f32 %v6279, %v6447
    %6449 = vmatmul.bf16.gmra.mxu0 %v4529
    %v6450 = vpop.f32.mrf.mxu0
    %v6451 = vadd.f32 %v6282, %v6450
    %v6452 = vpop.f32.mrf.mxu0
    %v6453 = vadd.f32 %v6284, %v6452
    %6454 = vmatmul.bf16.gmra.mxu0 %v4538
    %v6455 = vpop.f32.mrf.mxu0
    %v6456 = vadd.f32 %v6287, %v6455
    %v6457 = vpop.f32.mrf.mxu0
    %v6458 = vadd.f32 %v6289, %v6457
    %6459 = vmatmul.bf16.gmra.mxu0 %v4547
    %v6460 = vpop.f32.mrf.mxu0
    %v6461 = vadd.f32 %v6292, %v6460
    %v6462 = vpop.f32.mrf.mxu0
    %v6463 = vadd.f32 %v6294, %v6462
    %6464 = vmatmul.bf16.gmra.mxu0 %v4556
    %v6465 = vpop.f32.mrf.mxu0
    %v6466 = vadd.f32 %v6297, %v6465
    %v6467 = vpop.f32.mrf.mxu0
    %v6468 = vadd.f32 %v6299, %v6467
    %6469 = vmatmul.bf16.gmra.mxu0 %v4565
    %v6470 = vpop.f32.mrf.mxu0
    %v6471 = vadd.f32 %v6302, %v6470
    %v6472 = vpop.f32.mrf.mxu0
    %v6473 = vadd.f32 %v6304, %v6472
    %6474 = vmatmul.bf16.gmra.mxu0 %v4574
    %v6475 = vpop.f32.mrf.mxu0
    %v6476 = vadd.f32 %v6307, %v6475
    %v6477 = vpop.f32.mrf.mxu0
    %v6478 = vadd.f32 %v6309, %v6477
    %6479 = vdwg.mxu0
    %6480 = vmatpush.bf16.msra.mxu0 %v5216
    %6481 = vmatpush.bf16.msra.mxu0 %v5215
    %6482 = vmatpush.bf16.msra.mxu0 %v5214
    %6483 = vmatpush.bf16.msra.mxu0 %v5213
    %6484 = vmatpush.bf16.msra.mxu0 %v5212
    %6485 = vmatpush.bf16.msra.mxu0 %v5211
    %6486 = vmatpush.bf16.msra.mxu0 %v5210
    %6487 = vmatpush.bf16.msra.mxu0 %v5209
    %6488 = vmatmul.bf16.gmra.mxu0 %v4296
    %v6489 = vpop.f32.mrf.mxu0
    %v6490 = vadd.f32 %v6321, %v6489
    %v6491 = vpop.f32.mrf.mxu0
    %v6492 = vadd.f32 %v6323, %v6491
    %6493 = vmatmul.bf16.gmra.mxu0 %v4305
    %v6494 = vpop.f32.mrf.mxu0
    %v6495 = vadd.f32 %v6326, %v6494
    %v6496 = vpop.f32.mrf.mxu0
    %v6497 = vadd.f32 %v6328, %v6496
    %6498 = vmatmul.bf16.gmra.mxu0 %v4314
    %v6499 = vpop.f32.mrf.mxu0
    %v6500 = vadd.f32 %v6331, %v6499
    %v6501 = vpop.f32.mrf.mxu0
    %v6502 = vadd.f32 %v6333, %v6501
    %6503 = vmatmul.bf16.gmra.mxu0 %v4323
    %v6504 = vpop.f32.mrf.mxu0
    %v6505 = vadd.f32 %v6336, %v6504
    %v6506 = vpop.f32.mrf.mxu0
    %v6507 = vadd.f32 %v6338, %v6506
    %6508 = vmatmul.bf16.gmra.mxu0 %v4332
    %v6509 = vpop.f32.mrf.mxu0
    %v6510 = vadd.f32 %v6341, %v6509
    %v6511 = vpop.f32.mrf.mxu0
    %v6512 = vadd.f32 %v6343, %v6511
    %6513 = vmatmul.bf16.gmra.mxu0 %v4341
    %v6514 = vpop.f32.mrf.mxu0
    %v6515 = vadd.f32 %v6346, %v6514
    %v6516 = vpop.f32.mrf.mxu0
    %v6517 = vadd.f32 %v6348, %v6516
    %6518 = vmatmul.bf16.gmra.mxu0 %v4350
    %v6519 = vpop.f32.mrf.mxu0
    %v6520 = vadd.f32 %v6351, %v6519
    %v6521 = vpop.f32.mrf.mxu0
    %v6522 = vadd.f32 %v6353, %v6521
    %6523 = vmatmul.bf16.gmra.mxu0 %v4359
    %v6524 = vpop.f32.mrf.mxu0
    %v6525 = vadd.f32 %v6356, %v6524
    %v6526 = vpop.f32.mrf.mxu0
    %v6527 = vadd.f32 %v6358, %v6526
    %6528 = vmatmul.bf16.gmra.mxu0 %v4368
    %v6529 = vpop.f32.mrf.mxu0
    %v6530 = vadd.f32 %v6361, %v6529
    %v6531 = vpop.f32.mrf.mxu0
    %v6532 = vadd.f32 %v6363, %v6531
    %6533 = vmatmul.bf16.gmra.mxu0 %v4377
    %v6534 = vpop.f32.mrf.mxu0
    %v6535 = vadd.f32 %v6366, %v6534
    %v6536 = vpop.f32.mrf.mxu0
    %v6537 = vadd.f32 %v6368, %v6536
    %6538 = vmatmul.bf16.gmra.mxu0 %v4386
    %v6539 = vpop.f32.mrf.mxu0
    %v6540 = vadd.f32 %v6371, %v6539
    %v6541 = vpop.f32.mrf.mxu0
    %v6542 = vadd.f32 %v6373, %v6541
    %6543 = vmatmul.bf16.gmra.mxu0 %v4395
    %v6544 = vpop.f32.mrf.mxu0
    %v6545 = vadd.f32 %v6376, %v6544
    %v6546 = vpop.f32.mrf.mxu0
    %v6547 = vadd.f32 %v6378, %v6546
    %6548 = vmatmul.bf16.gmra.mxu0 %v4404
    %v6549 = vpop.f32.mrf.mxu0
    %v6550 = vadd.f32 %v6381, %v6549
    %v6551 = vpop.f32.mrf.mxu0
    %v6552 = vadd.f32 %v6383, %v6551
    %6553 = vmatmul.bf16.gmra.mxu0 %v4413
    %v6554 = vpop.f32.mrf.mxu0
    %v6555 = vadd.f32 %v6386, %v6554
    %v6556 = vpop.f32.mrf.mxu0
    %v6557 = vadd.f32 %v6388, %v6556
    %6558 = vmatmul.bf16.gmra.mxu0 %v4422
    %v6559 = vpop.f32.mrf.mxu0
    %v6560 = vadd.f32 %v6391, %v6559
    %v6561 = vpop.f32.mrf.mxu0
    %v6562 = vadd.f32 %v6393, %v6561
    %6563 = vmatmul.bf16.gmra.mxu0 %v4431
    %v6564 = vpop.f32.mrf.mxu0
    %v6565 = vadd.f32 %v6396, %v6564
    %v6566 = vpop.f32.mrf.mxu0
    %v6567 = vadd.f32 %v6398, %v6566
    %6568 = vmatmul.bf16.gmra.mxu0 %v4440
    %v6569 = vpop.f32.mrf.mxu0
    %v6570 = vadd.f32 %v6401, %v6569
    %v6571 = vpop.f32.mrf.mxu0
    %v6572 = vadd.f32 %v6403, %v6571
    %6573 = vmatmul.bf16.gmra.mxu0 %v4449
    %v6574 = vpop.f32.mrf.mxu0
    %v6575 = vadd.f32 %v6406, %v6574
    %v6576 = vpop.f32.mrf.mxu0
    %v6577 = vadd.f32 %v6408, %v6576
    %6578 = vmatmul.bf16.gmra.mxu0 %v4458
    %v6579 = vpop.f32.mrf.mxu0
    %v6580 = vadd.f32 %v6411, %v6579
    %v6581 = vpop.f32.mrf.mxu0
    %v6582 = vadd.f32 %v6413, %v6581
    %6583 = vmatmul.bf16.gmra.mxu0 %v4467
    %v6584 = vpop.f32.mrf.mxu0
    %v6585 = vadd.f32 %v6416, %v6584
    %v6586 = vpop.f32.mrf.mxu0
    %v6587 = vadd.f32 %v6418, %v6586
    %6588 = vmatmul.bf16.gmra.mxu0 %v4476
    %v6589 = vpop.f32.mrf.mxu0
    %v6590 = vadd.f32 %v6421, %v6589
    %v6591 = vpop.f32.mrf.mxu0
    %v6592 = vadd.f32 %v6423, %v6591
    %6593 = vmatmul.bf16.gmra.mxu0 %v4485
    %v6594 = vpop.f32.mrf.mxu0
    %v6595 = vadd.f32 %v6426, %v6594
    %v6596 = vpop.f32.mrf.mxu0
    %v6597 = vadd.f32 %v6428, %v6596
    %6598 = vmatmul.bf16.gmra.mxu0 %v4494
    %v6599 = vpop.f32.mrf.mxu0
    %v6600 = vadd.f32 %v6431, %v6599
    %v6601 = vpop.f32.mrf.mxu0
    %v6602 = vadd.f32 %v6433, %v6601
    %6603 = vmatmul.bf16.gmra.mxu0 %v4503
    %v6604 = vpop.f32.mrf.mxu0
    %v6605 = vadd.f32 %v6436, %v6604
    %v6606 = vpop.f32.mrf.mxu0
    %v6607 = vadd.f32 %v6438, %v6606
    %6608 = vmatmul.bf16.gmra.mxu0 %v4512
    %v6609 = vpop.f32.mrf.mxu0
    %v6610 = vadd.f32 %v6441, %v6609
    %v6611 = vpop.f32.mrf.mxu0
    %v6612 = vadd.f32 %v6443, %v6611
    %6613 = vmatmul.bf16.gmra.mxu0 %v4521
    %v6614 = vpop.f32.mrf.mxu0
    %v6615 = vadd.f32 %v6446, %v6614
    %v6616 = vpop.f32.mrf.mxu0
    %v6617 = vadd.f32 %v6448, %v6616
    %6618 = vmatmul.bf16.gmra.mxu0 %v4530
    %v6619 = vpop.f32.mrf.mxu0
    %v6620 = vadd.f32 %v6451, %v6619
    %v6621 = vpop.f32.mrf.mxu0
    %v6622 = vadd.f32 %v6453, %v6621
    %6623 = vmatmul.bf16.gmra.mxu0 %v4539
    %v6624 = vpop.f32.mrf.mxu0
    %v6625 = vadd.f32 %v6456, %v6624
    %v6626 = vpop.f32.mrf.mxu0
    %v6627 = vadd.f32 %v6458, %v6626
    %6628 = vmatmul.bf16.gmra.mxu0 %v4548
    %v6629 = vpop.f32.mrf.mxu0
    %v6630 = vadd.f32 %v6461, %v6629
    %v6631 = vpop.f32.mrf.mxu0
    %v6632 = vadd.f32 %v6463, %v6631
    %6633 = vmatmul.bf16.gmra.mxu0 %v4557
    %v6634 = vpop.f32.mrf.mxu0
    %v6635 = vadd.f32 %v6466, %v6634
    %v6636 = vpop.f32.mrf.mxu0
    %v6637 = vadd.f32 %v6468, %v6636
    %6638 = vmatmul.bf16.gmra.mxu0 %v4566
    %v6639 = vpop.f32.mrf.mxu0
    %v6640 = vadd.f32 %v6471, %v6639
    %v6641 = vpop.f32.mrf.mxu0
    %v6642 = vadd.f32 %v6473, %v6641
    %6643 = vmatmul.bf16.gmra.mxu0 %v4575
    %v6644 = vpop.f32.mrf.mxu0
    %v6645 = vadd.f32 %v6476, %v6644
    %v6646 = vpop.f32.mrf.mxu0
    %v6647 = vadd.f32 %v6478, %v6646
    %6648 = vdwg.mxu0
    %6649 = vmatpush.bf16.msra.mxu0 %v5224
    %6650 = vmatpush.bf16.msra.mxu0 %v5223
    %6651 = vmatpush.bf16.msra.mxu0 %v5222
    %6652 = vmatpush.bf16.msra.mxu0 %v5221
    %6653 = vmatpush.bf16.msra.mxu0 %v5220
    %6654 = vmatpush.bf16.msra.mxu0 %v5219
    %6655 = vmatpush.bf16.msra.mxu0 %v5218
    %6656 = vmatpush.bf16.msra.mxu0 %v5217
    %6657 = vmatmul.bf16.gmra.mxu0 %v4297
    %v6658 = vpop.f32.mrf.mxu0
    %v6659 = vadd.f32 %v6490, %v6658
    %v6660 = vpop.f32.mrf.mxu0
    %v6661 = vadd.f32 %v6492, %v6660
    %6662 = vmatmul.bf16.gmra.mxu0 %v4306
    %v6663 = vpop.f32.mrf.mxu0
    %v6664 = vadd.f32 %v6495, %v6663
    %v6665 = vpop.f32.mrf.mxu0
    %v6666 = vadd.f32 %v6497, %v6665
    %6667 = vmatmul.bf16.gmra.mxu0 %v4315
    %v6668 = vpop.f32.mrf.mxu0
    %v6669 = vadd.f32 %v6500, %v6668
    %v6670 = vpop.f32.mrf.mxu0
    %v6671 = vadd.f32 %v6502, %v6670
    %6672 = vmatmul.bf16.gmra.mxu0 %v4324
    %v6673 = vpop.f32.mrf.mxu0
    %v6674 = vadd.f32 %v6505, %v6673
    %v6675 = vpop.f32.mrf.mxu0
    %v6676 = vadd.f32 %v6507, %v6675
    %6677 = vmatmul.bf16.gmra.mxu0 %v4333
    %v6678 = vpop.f32.mrf.mxu0
    %v6679 = vadd.f32 %v6510, %v6678
    %v6680 = vpop.f32.mrf.mxu0
    %v6681 = vadd.f32 %v6512, %v6680
    %6682 = vmatmul.bf16.gmra.mxu0 %v4342
    %v6683 = vpop.f32.mrf.mxu0
    %v6684 = vadd.f32 %v6515, %v6683
    %v6685 = vpop.f32.mrf.mxu0
    %v6686 = vadd.f32 %v6517, %v6685
    %6687 = vmatmul.bf16.gmra.mxu0 %v4351
    %v6688 = vpop.f32.mrf.mxu0
    %v6689 = vadd.f32 %v6520, %v6688
    %v6690 = vpop.f32.mrf.mxu0
    %v6691 = vadd.f32 %v6522, %v6690
    %6692 = vmatmul.bf16.gmra.mxu0 %v4360
    %v6693 = vpop.f32.mrf.mxu0
    %v6694 = vadd.f32 %v6525, %v6693
    %v6695 = vpop.f32.mrf.mxu0
    %v6696 = vadd.f32 %v6527, %v6695
    %6697 = vmatmul.bf16.gmra.mxu0 %v4369
    %v6698 = vpop.f32.mrf.mxu0
    %v6699 = vadd.f32 %v6530, %v6698
    %v6700 = vpop.f32.mrf.mxu0
    %v6701 = vadd.f32 %v6532, %v6700
    %6702 = vmatmul.bf16.gmra.mxu0 %v4378
    %v6703 = vpop.f32.mrf.mxu0
    %v6704 = vadd.f32 %v6535, %v6703
    %v6705 = vpop.f32.mrf.mxu0
    %v6706 = vadd.f32 %v6537, %v6705
    %6707 = vmatmul.bf16.gmra.mxu0 %v4387
    %v6708 = vpop.f32.mrf.mxu0
    %v6709 = vadd.f32 %v6540, %v6708
    %v6710 = vpop.f32.mrf.mxu0
    %v6711 = vadd.f32 %v6542, %v6710
    %6712 = vmatmul.bf16.gmra.mxu0 %v4396
    %v6713 = vpop.f32.mrf.mxu0
    %v6714 = vadd.f32 %v6545, %v6713
    %v6715 = vpop.f32.mrf.mxu0
    %v6716 = vadd.f32 %v6547, %v6715
    %6717 = vmatmul.bf16.gmra.mxu0 %v4405
    %v6718 = vpop.f32.mrf.mxu0
    %v6719 = vadd.f32 %v6550, %v6718
    %v6720 = vpop.f32.mrf.mxu0
    %v6721 = vadd.f32 %v6552, %v6720
    %6722 = vmatmul.bf16.gmra.mxu0 %v4414
    %v6723 = vpop.f32.mrf.mxu0
    %v6724 = vadd.f32 %v6555, %v6723
    %v6725 = vpop.f32.mrf.mxu0
    %v6726 = vadd.f32 %v6557, %v6725
    %6727 = vmatmul.bf16.gmra.mxu0 %v4423
    %v6728 = vpop.f32.mrf.mxu0
    %v6729 = vadd.f32 %v6560, %v6728
    %v6730 = vpop.f32.mrf.mxu0
    %v6731 = vadd.f32 %v6562, %v6730
    %6732 = vmatmul.bf16.gmra.mxu0 %v4432
    %v6733 = vpop.f32.mrf.mxu0
    %v6734 = vadd.f32 %v6565, %v6733
    %v6735 = vpop.f32.mrf.mxu0
    %v6736 = vadd.f32 %v6567, %v6735
    %6737 = vmatmul.bf16.gmra.mxu0 %v4441
    %v6738 = vpop.f32.mrf.mxu0
    %v6739 = vadd.f32 %v6570, %v6738
    %v6740 = vpop.f32.mrf.mxu0
    %v6741 = vadd.f32 %v6572, %v6740
    %6742 = vmatmul.bf16.gmra.mxu0 %v4450
    %v6743 = vpop.f32.mrf.mxu0
    %v6744 = vadd.f32 %v6575, %v6743
    %v6745 = vpop.f32.mrf.mxu0
    %v6746 = vadd.f32 %v6577, %v6745
    %6747 = vmatmul.bf16.gmra.mxu0 %v4459
    %v6748 = vpop.f32.mrf.mxu0
    %v6749 = vadd.f32 %v6580, %v6748
    %v6750 = vpop.f32.mrf.mxu0
    %v6751 = vadd.f32 %v6582, %v6750
    %6752 = vmatmul.bf16.gmra.mxu0 %v4468
    %v6753 = vpop.f32.mrf.mxu0
    %v6754 = vadd.f32 %v6585, %v6753
    %v6755 = vpop.f32.mrf.mxu0
    %v6756 = vadd.f32 %v6587, %v6755
    %6757 = vmatmul.bf16.gmra.mxu0 %v4477
    %v6758 = vpop.f32.mrf.mxu0
    %v6759 = vadd.f32 %v6590, %v6758
    %v6760 = vpop.f32.mrf.mxu0
    %v6761 = vadd.f32 %v6592, %v6760
    %6762 = vmatmul.bf16.gmra.mxu0 %v4486
    %v6763 = vpop.f32.mrf.mxu0
    %v6764 = vadd.f32 %v6595, %v6763
    %v6765 = vpop.f32.mrf.mxu0
    %v6766 = vadd.f32 %v6597, %v6765
    %6767 = vmatmul.bf16.gmra.mxu0 %v4495
    %v6768 = vpop.f32.mrf.mxu0
    %v6769 = vadd.f32 %v6600, %v6768
    %v6770 = vpop.f32.mrf.mxu0
    %v6771 = vadd.f32 %v6602, %v6770
    %6772 = vmatmul.bf16.gmra.mxu0 %v4504
    %v6773 = vpop.f32.mrf.mxu0
    %v6774 = vadd.f32 %v6605, %v6773
    %v6775 = vpop.f32.mrf.mxu0
    %v6776 = vadd.f32 %v6607, %v6775
    %6777 = vmatmul.bf16.gmra.mxu0 %v4513
    %v6778 = vpop.f32.mrf.mxu0
    %v6779 = vadd.f32 %v6610, %v6778
    %v6780 = vpop.f32.mrf.mxu0
    %v6781 = vadd.f32 %v6612, %v6780
    %6782 = vmatmul.bf16.gmra.mxu0 %v4522
    %v6783 = vpop.f32.mrf.mxu0
    %v6784 = vadd.f32 %v6615, %v6783
    %v6785 = vpop.f32.mrf.mxu0
    %v6786 = vadd.f32 %v6617, %v6785
    %6787 = vmatmul.bf16.gmra.mxu0 %v4531
    %v6788 = vpop.f32.mrf.mxu0
    %v6789 = vadd.f32 %v6620, %v6788
    %v6790 = vpop.f32.mrf.mxu0
    %v6791 = vadd.f32 %v6622, %v6790
    %6792 = vmatmul.bf16.gmra.mxu0 %v4540
    %v6793 = vpop.f32.mrf.mxu0
    %v6794 = vadd.f32 %v6625, %v6793
    %v6795 = vpop.f32.mrf.mxu0
    %v6796 = vadd.f32 %v6627, %v6795
    %6797 = vmatmul.bf16.gmra.mxu0 %v4549
    %v6798 = vpop.f32.mrf.mxu0
    %v6799 = vadd.f32 %v6630, %v6798
    %v6800 = vpop.f32.mrf.mxu0
    %v6801 = vadd.f32 %v6632, %v6800
    %6802 = vmatmul.bf16.gmra.mxu0 %v4558
    %v6803 = vpop.f32.mrf.mxu0
    %v6804 = vadd.f32 %v6635, %v6803
    %v6805 = vpop.f32.mrf.mxu0
    %v6806 = vadd.f32 %v6637, %v6805
    %6807 = vmatmul.bf16.gmra.mxu0 %v4567
    %v6808 = vpop.f32.mrf.mxu0
    %v6809 = vadd.f32 %v6640, %v6808
    %v6810 = vpop.f32.mrf.mxu0
    %v6811 = vadd.f32 %v6642, %v6810
    %6812 = vmatmul.bf16.gmra.mxu0 %v4576
    %v6813 = vpop.f32.mrf.mxu0
    %v6814 = vadd.f32 %v6645, %v6813
    %v6815 = vpop.f32.mrf.mxu0
    %v6816 = vadd.f32 %v6647, %v6815
    %6817 = vdwg.mxu0
    %v6818 = vld [vmem:[%s6] sm:$0x1]
    %v6819 = vld [vmem:[%s7] sm:$0x1]
    %v6820 = vadd.f32 %v6659, %v6661
    %v6821 = vadd.f32 %v6820, %v6664
    %v6822 = vadd.f32 %v6821, %v6666
    %v6823 = vadd.f32 %v6822, %v6669
    %v6824 = vadd.f32 %v6823, %v6671
    %v6825 = vadd.f32 %v6824, %v6674
    %v6826 = vadd.f32 %v6825, %v6676
    %v6827 = vadd.f32 %v6826, %v6679
    %v6828 = vadd.f32 %v6827, %v6681
    %v6829 = vadd.f32 %v6828, %v6684
    %v6830 = vadd.f32 %v6829, %v6686
    %v6831 = vadd.f32 %v6830, %v6689
    %v6832 = vadd.f32 %v6831, %v6691
    %v6833 = vadd.f32 %v6832, %v6694
    %v6834 = vadd.f32 %v6833, %v6696
    %v6835 = vadd.f32 %v6834, %v6699
    %v6836 = vadd.f32 %v6835, %v6701
    %v6837 = vadd.f32 %v6836, %v6704
    %v6838 = vadd.f32 %v6837, %v6706
    %v6839 = vadd.f32 %v6838, %v6709
    %v6840 = vadd.f32 %v6839, %v6711
    %v6841 = vadd.f32 %v6840, %v6714
    %v6842 = vadd.f32 %v6841, %v6716
    %v6843 = vadd.f32 %v6842, %v6719
    %v6844 = vadd.f32 %v6843, %v6721
    %v6845 = vadd.f32 %v6844, %v6724
    %v6846 = vadd.f32 %v6845, %v6726
    %v6847 = vadd.f32 %v6846, %v6729
    %v6848 = vadd.f32 %v6847, %v6731
    %v6849 = vadd.f32 %v6848, %v6734
    %v6850 = vadd.f32 %v6849, %v6736
    %v6851 = vadd.f32 %v6850, %v6739
    %v6852 = vadd.f32 %v6851, %v6741
    %v6853 = vadd.f32 %v6852, %v6744
    %v6854 = vadd.f32 %v6853, %v6746
    %v6855 = vadd.f32 %v6854, %v6749
    %v6856 = vadd.f32 %v6855, %v6751
    %v6857 = vadd.f32 %v6856, %v6754
    %v6858 = vadd.f32 %v6857, %v6756
    %v6859 = vadd.f32 %v6858, %v6759
    %v6860 = vadd.f32 %v6859, %v6761
    %v6861 = vadd.f32 %v6860, %v6764
    %v6862 = vadd.f32 %v6861, %v6766
    %v6863 = vadd.f32 %v6862, %v6769
    %v6864 = vadd.f32 %v6863, %v6771
    %v6865 = vadd.f32 %v6864, %v6774
    %v6866 = vadd.f32 %v6865, %v6776
    %v6867 = vadd.f32 %v6866, %v6779
    %v6868 = vadd.f32 %v6867, %v6781
    %v6869 = vadd.f32 %v6868, %v6784
    %v6870 = vadd.f32 %v6869, %v6786
    %v6871 = vadd.f32 %v6870, %v6789
    %v6872 = vadd.f32 %v6871, %v6791
    %v6873 = vadd.f32 %v6872, %v6794
    %v6874 = vadd.f32 %v6873, %v6796
    %v6875 = vadd.f32 %v6874, %v6799
    %v6876 = vadd.f32 %v6875, %v6801
    %v6877 = vadd.f32 %v6876, %v6804
    %v6878 = vadd.f32 %v6877, %v6806
    %v6879 = vadd.f32 %v6878, %v6809
    %v6880 = vadd.f32 %v6879, %v6811
    %v6881 = vadd.f32 %v6880, %v6814
    %v6882 = vadd.f32 %v6881, %v6816
    %v6883 = vrot.slane %v6882, 4
    %v6884 = vadd.f32 %v6882, %v6883
    %v6885 = vrot.slane %v6884, 2
    %v6886 = vadd.f32 %v6884, %v6885
    %v6887 = vrot.slane %v6886, 1
    %v6888 = vadd.f32 %v6886, %v6887
    %v6889 = vmul.f32 %v6659, %v6659
    %v6890 = vmul.f32 %v6661, %v6661
    %v6891 = vmul.f32 %v6664, %v6664
    %v6892 = vmul.f32 %v6666, %v6666
    %v6893 = vmul.f32 %v6669, %v6669
    %v6894 = vmul.f32 %v6671, %v6671
    %v6895 = vmul.f32 %v6674, %v6674
    %v6896 = vmul.f32 %v6676, %v6676
    %v6897 = vmul.f32 %v6679, %v6679
    %v6898 = vmul.f32 %v6681, %v6681
    %v6899 = vmul.f32 %v6684, %v6684
    %v6900 = vmul.f32 %v6686, %v6686
    %v6901 = vmul.f32 %v6689, %v6689
    %v6902 = vmul.f32 %v6691, %v6691
    %v6903 = vmul.f32 %v6694, %v6694
    %v6904 = vmul.f32 %v6696, %v6696
    %v6905 = vmul.f32 %v6699, %v6699
    %v6906 = vmul.f32 %v6701, %v6701
    %v6907 = vmul.f32 %v6704, %v6704
    %v6908 = vmul.f32 %v6706, %v6706
    %v6909 = vmul.f32 %v6709, %v6709
    %v6910 = vmul.f32 %v6711, %v6711
    %v6911 = vmul.f32 %v6714, %v6714
    %v6912 = vmul.f32 %v6716, %v6716
    %v6913 = vmul.f32 %v6719, %v6719
    %v6914 = vmul.f32 %v6721, %v6721
    %v6915 = vmul.f32 %v6724, %v6724
    %v6916 = vmul.f32 %v6726, %v6726
    %v6917 = vmul.f32 %v6729, %v6729
    %v6918 = vmul.f32 %v6731, %v6731
    %v6919 = vmul.f32 %v6734, %v6734
    %v6920 = vmul.f32 %v6736, %v6736
    %v6921 = vmul.f32 %v6739, %v6739
    %v6922 = vmul.f32 %v6741, %v6741
    %v6923 = vmul.f32 %v6744, %v6744
    %v6924 = vmul.f32 %v6746, %v6746
    %v6925 = vmul.f32 %v6749, %v6749
    %v6926 = vmul.f32 %v6751, %v6751
    %v6927 = vmul.f32 %v6754, %v6754
    %v6928 = vmul.f32 %v6756, %v6756
    %v6929 = vmul.f32 %v6759, %v6759
    %v6930 = vmul.f32 %v6761, %v6761
    %v6931 = vmul.f32 %v6764, %v6764
    %v6932 = vmul.f32 %v6766, %v6766
    %v6933 = vmul.f32 %v6769, %v6769
    %v6934 = vmul.f32 %v6771, %v6771
    %v6935 = vmul.f32 %v6774, %v6774
    %v6936 = vmul.f32 %v6776, %v6776
    %v6937 = vmul.f32 %v6779, %v6779
    %v6938 = vmul.f32 %v6781, %v6781
    %v6939 = vmul.f32 %v6784, %v6784
    %v6940 = vmul.f32 %v6786, %v6786
    %v6941 = vmul.f32 %v6789, %v6789
    %v6942 = vmul.f32 %v6791, %v6791
    %v6943 = vmul.f32 %v6794, %v6794
    %v6944 = vmul.f32 %v6796, %v6796
    %v6945 = vmul.f32 %v6799, %v6799
    %v6946 = vmul.f32 %v6801, %v6801
    %v6947 = vmul.f32 %v6804, %v6804
    %v6948 = vmul.f32 %v6806, %v6806
    %v6949 = vmul.f32 %v6809, %v6809
    %v6950 = vmul.f32 %v6811, %v6811
    %v6951 = vmul.f32 %v6814, %v6814
    %v6952 = vmul.f32 %v6816, %v6816
    %v6953 = vadd.f32 %v6889, %v6890
    %v6954 = vadd.f32 %v6953, %v6891
    %v6955 = vadd.f32 %v6954, %v6892
    %v6956 = vadd.f32 %v6955, %v6893
    %v6957 = vadd.f32 %v6956, %v6894
    %v6958 = vadd.f32 %v6957, %v6895
    %v6959 = vadd.f32 %v6958, %v6896
    %v6960 = vadd.f32 %v6959, %v6897
    %v6961 = vadd.f32 %v6960, %v6898
    %v6962 = vadd.f32 %v6961, %v6899
    %v6963 = vadd.f32 %v6962, %v6900
    %v6964 = vadd.f32 %v6963, %v6901
    %v6965 = vadd.f32 %v6964, %v6902
    %v6966 = vadd.f32 %v6965, %v6903
    %v6967 = vadd.f32 %v6966, %v6904
    %v6968 = vadd.f32 %v6967, %v6905
    %v6969 = vadd.f32 %v6968, %v6906
    %v6970 = vadd.f32 %v6969, %v6907
    %v6971 = vadd.f32 %v6970, %v6908
    %v6972 = vadd.f32 %v6971, %v6909
    %v6973 = vadd.f32 %v6972, %v6910
    %v6974 = vadd.f32 %v6973, %v6911
    %v6975 = vadd.f32 %v6974, %v6912
    %v6976 = vadd.f32 %v6975, %v6913
    %v6977 = vadd.f32 %v6976, %v6914
    %v6978 = vadd.f32 %v6977, %v6915
    %v6979 = vadd.f32 %v6978, %v6916
    %v6980 = vadd.f32 %v6979, %v6917
    %v6981 = vadd.f32 %v6980, %v6918
    %v6982 = vadd.f32 %v6981, %v6919
    %v6983 = vadd.f32 %v6982, %v6920
    %v6984 = vadd.f32 %v6983, %v6921
    %v6985 = vadd.f32 %v6984, %v6922
    %v6986 = vadd.f32 %v6985, %v6923
    %v6987 = vadd.f32 %v6986, %v6924
    %v6988 = vadd.f32 %v6987, %v6925
    %v6989 = vadd.f32 %v6988, %v6926
    %v6990 = vadd.f32 %v6989, %v6927
    %v6991 = vadd.f32 %v6990, %v6928
    %v6992 = vadd.f32 %v6991, %v6929
    %v6993 = vadd.f32 %v6992, %v6930
    %v6994 = vadd.f32 %v6993, %v6931
    %v6995 = vadd.f32 %v6994, %v6932
    %v6996 = vadd.f32 %v6995, %v6933
    %v6997 = vadd.f32 %v6996, %v6934
    %v6998 = vadd.f32 %v6997, %v6935
    %v6999 = vadd.f32 %v6998, %v6936
    %v7000 = vadd.f32 %v6999, %v6937
    %v7001 = vadd.f32 %v7000, %v6938
    %v7002 = vadd.f32 %v7001, %v6939
    %v7003 = vadd.f32 %v7002, %v6940
    %v7004 = vadd.f32 %v7003, %v6941
    %v7005 = vadd.f32 %v7004, %v6942
    %v7006 = vadd.f32 %v7005, %v6943
    %v7007 = vadd.f32 %v7006, %v6944
    %v7008 = vadd.f32 %v7007, %v6945
    %v7009 = vadd.f32 %v7008, %v6946
    %v7010 = vadd.f32 %v7009, %v6947
    %v7011 = vadd.f32 %v7010, %v6948
    %v7012 = vadd.f32 %v7011, %v6949
    %v7013 = vadd.f32 %v7012, %v6950
    %v7014 = vadd.f32 %v7013, %v6951
    %v7015 = vadd.f32 %v7014, %v6952
    %v7016 = vrot.slane %v7015, 4
    %v7017 = vadd.f32 %v7015, %v7016
    %v7018 = vrot.slane %v7017, 2
    %v7019 = vadd.f32 %v7017, %v7018
    %v7020 = vrot.slane %v7019, 1
    %v7021 = vadd.f32 %v7019, %v7020
    %v7022 = vmul.f32 %v6888, 0.001953125
    %v7023 = vmul.f32 %v7021, 0.001953125
    %v7024 = vmul.f32 %v7022, %v7022
    %v7025 = vsub.f32 %v7023, %v7024
    %v7026 = vadd.f32 %v7025, 1e-05
    %v7027 = vrsqrt.pop %v7026
    %v7028 = vmul.f32 %v7027, %v7026
    %v7029 = vmul.f32 %v7028, %v7027
    %v7030 = vmul.f32 0.5, %v7029
    %v7031 = vsub.f32 1.5, %v7030
    %v7032 = vmul.f32 %v7027, %v7031
    %vm7033 = vweird.f32 %v7026
    %vm7034 = vweird.f32 %v7027
    %vm7035 = vmor %vm7033, %vm7034
    %v7036 = vsel %vm7035, %v7027, %v7032
    %v7037 = vsub.f32 %v6659, %v7022
    %v7038 = vsub.f32 %v6661, %v7022
    %v7039 = vsub.f32 %v6664, %v7022
    %v7040 = vsub.f32 %v6666, %v7022
    %v7041 = vsub.f32 %v6669, %v7022
    %v7042 = vsub.f32 %v6671, %v7022
    %v7043 = vsub.f32 %v6674, %v7022
    %v7044 = vsub.f32 %v6676, %v7022
    %v7045 = vsub.f32 %v6679, %v7022
    %v7046 = vsub.f32 %v6681, %v7022
    %v7047 = vsub.f32 %v6684, %v7022
    %v7048 = vsub.f32 %v6686, %v7022
    %v7049 = vsub.f32 %v6689, %v7022
    %v7050 = vsub.f32 %v6691, %v7022
    %v7051 = vsub.f32 %v6694, %v7022
    %v7052 = vsub.f32 %v6696, %v7022
    %v7053 = vsub.f32 %v6699, %v7022
    %v7054 = vsub.f32 %v6701, %v7022
    %v7055 = vsub.f32 %v6704, %v7022
    %v7056 = vsub.f32 %v6706, %v7022
    %v7057 = vsub.f32 %v6709, %v7022
    %v7058 = vsub.f32 %v6711, %v7022
    %v7059 = vsub.f32 %v6714, %v7022
    %v7060 = vsub.f32 %v6716, %v7022
    %v7061 = vsub.f32 %v6719, %v7022
    %v7062 = vsub.f32 %v6721, %v7022
    %v7063 = vsub.f32 %v6724, %v7022
    %v7064 = vsub.f32 %v6726, %v7022
    %v7065 = vsub.f32 %v6729, %v7022
    %v7066 = vsub.f32 %v6731, %v7022
    %v7067 = vsub.f32 %v6734, %v7022
    %v7068 = vsub.f32 %v6736, %v7022
    %v7069 = vsub.f32 %v6739, %v7022
    %v7070 = vsub.f32 %v6741, %v7022
    %v7071 = vsub.f32 %v6744, %v7022
    %v7072 = vsub.f32 %v6746, %v7022
    %v7073 = vsub.f32 %v6749, %v7022
    %v7074 = vsub.f32 %v6751, %v7022
    %v7075 = vsub.f32 %v6754, %v7022
    %v7076 = vsub.f32 %v6756, %v7022
    %v7077 = vsub.f32 %v6759, %v7022
    %v7078 = vsub.f32 %v6761, %v7022
    %v7079 = vsub.f32 %v6764, %v7022
    %v7080 = vsub.f32 %v6766, %v7022
    %v7081 = vsub.f32 %v6769, %v7022
    %v7082 = vsub.f32 %v6771, %v7022
    %v7083 = vsub.f32 %v6774, %v7022
    %v7084 = vsub.f32 %v6776, %v7022
    %v7085 = vsub.f32 %v6779, %v7022
    %v7086 = vsub.f32 %v6781, %v7022
    %v7087 = vsub.f32 %v6784, %v7022
    %v7088 = vsub.f32 %v6786, %v7022
    %v7089 = vsub.f32 %v6789, %v7022
    %v7090 = vsub.f32 %v6791, %v7022
    %v7091 = vsub.f32 %v6794, %v7022
    %v7092 = vsub.f32 %v6796, %v7022
    %v7093 = vsub.f32 %v6799, %v7022
    %v7094 = vsub.f32 %v6801, %v7022
    %v7095 = vsub.f32 %v6804, %v7022
    %v7096 = vsub.f32 %v6806, %v7022
    %v7097 = vsub.f32 %v6809, %v7022
    %v7098 = vsub.f32 %v6811, %v7022
    %v7099 = vsub.f32 %v6814, %v7022
    %v7100 = vsub.f32 %v6816, %v7022
    %v7101 = vmul.f32 %v7036, %v6818
    %v7102 = vperm.slane %v7101, 0
    %v7103 = vmul.f32 %v7037, %v7102
    %v7104 = vmul.f32 %v7038, %v7102
    %v7105 = vmul.f32 %v7039, %v7102
    %v7106 = vmul.f32 %v7040, %v7102
    %v7107 = vmul.f32 %v7041, %v7102
    %v7108 = vmul.f32 %v7042, %v7102
    %v7109 = vmul.f32 %v7043, %v7102
    %v7110 = vmul.f32 %v7044, %v7102
    %v7111 = vmul.f32 %v7045, %v7102
    %v7112 = vmul.f32 %v7046, %v7102
    %v7113 = vmul.f32 %v7047, %v7102
    %v7114 = vmul.f32 %v7048, %v7102
    %v7115 = vmul.f32 %v7049, %v7102
    %v7116 = vmul.f32 %v7050, %v7102
    %v7117 = vmul.f32 %v7051, %v7102
    %v7118 = vmul.f32 %v7052, %v7102
    %v7119 = vmul.f32 %v7053, %v7102
    %v7120 = vmul.f32 %v7054, %v7102
    %v7121 = vmul.f32 %v7055, %v7102
    %v7122 = vmul.f32 %v7056, %v7102
    %v7123 = vmul.f32 %v7057, %v7102
    %v7124 = vmul.f32 %v7058, %v7102
    %v7125 = vmul.f32 %v7059, %v7102
    %v7126 = vmul.f32 %v7060, %v7102
    %v7127 = vmul.f32 %v7061, %v7102
    %v7128 = vmul.f32 %v7062, %v7102
    %v7129 = vmul.f32 %v7063, %v7102
    %v7130 = vmul.f32 %v7064, %v7102
    %v7131 = vmul.f32 %v7065, %v7102
    %v7132 = vmul.f32 %v7066, %v7102
    %v7133 = vmul.f32 %v7067, %v7102
    %v7134 = vmul.f32 %v7068, %v7102
    %v7135 = vmul.f32 %v7069, %v7102
    %v7136 = vmul.f32 %v7070, %v7102
    %v7137 = vmul.f32 %v7071, %v7102
    %v7138 = vmul.f32 %v7072, %v7102
    %v7139 = vmul.f32 %v7073, %v7102
    %v7140 = vmul.f32 %v7074, %v7102
    %v7141 = vmul.f32 %v7075, %v7102
    %v7142 = vmul.f32 %v7076, %v7102
    %v7143 = vmul.f32 %v7077, %v7102
    %v7144 = vmul.f32 %v7078, %v7102
    %v7145 = vmul.f32 %v7079, %v7102
    %v7146 = vmul.f32 %v7080, %v7102
    %v7147 = vmul.f32 %v7081, %v7102
    %v7148 = vmul.f32 %v7082, %v7102
    %v7149 = vmul.f32 %v7083, %v7102
    %v7150 = vmul.f32 %v7084, %v7102
    %v7151 = vmul.f32 %v7085, %v7102
    %v7152 = vmul.f32 %v7086, %v7102
    %v7153 = vmul.f32 %v7087, %v7102
    %v7154 = vmul.f32 %v7088, %v7102
    %v7155 = vmul.f32 %v7089, %v7102
    %v7156 = vmul.f32 %v7090, %v7102
    %v7157 = vmul.f32 %v7091, %v7102
    %v7158 = vmul.f32 %v7092, %v7102
    %v7159 = vmul.f32 %v7093, %v7102
    %v7160 = vmul.f32 %v7094, %v7102
    %v7161 = vmul.f32 %v7095, %v7102
    %v7162 = vmul.f32 %v7096, %v7102
    %v7163 = vmul.f32 %v7097, %v7102
    %v7164 = vmul.f32 %v7098, %v7102
    %v7165 = vmul.f32 %v7099, %v7102
    %v7166 = vmul.f32 %v7100, %v7102
    %v7168 = vperm.slane %v6819, 0
    %v7170 = vadd.f32 %v7103, %v7168
    %v7171 = vadd.f32 %v7104, %v7168
    %v7172 = vadd.f32 %v7105, %v7168
    %v7173 = vadd.f32 %v7106, %v7168
    %v7174 = vadd.f32 %v7107, %v7168
    %v7175 = vadd.f32 %v7108, %v7168
    %v7176 = vadd.f32 %v7109, %v7168
    %v7177 = vadd.f32 %v7110, %v7168
    %v7178 = vadd.f32 %v7111, %v7168
    %v7179 = vadd.f32 %v7112, %v7168
    %v7180 = vadd.f32 %v7113, %v7168
    %v7181 = vadd.f32 %v7114, %v7168
    %v7182 = vadd.f32 %v7115, %v7168
    %v7183 = vadd.f32 %v7116, %v7168
    %v7184 = vadd.f32 %v7117, %v7168
    %v7185 = vadd.f32 %v7118, %v7168
    %v7186 = vadd.f32 %v7119, %v7168
    %v7187 = vadd.f32 %v7120, %v7168
    %v7188 = vadd.f32 %v7121, %v7168
    %v7189 = vadd.f32 %v7122, %v7168
    %v7190 = vadd.f32 %v7123, %v7168
    %v7191 = vadd.f32 %v7124, %v7168
    %v7192 = vadd.f32 %v7125, %v7168
    %v7193 = vadd.f32 %v7126, %v7168
    %v7194 = vadd.f32 %v7127, %v7168
    %v7195 = vadd.f32 %v7128, %v7168
    %v7196 = vadd.f32 %v7129, %v7168
    %v7197 = vadd.f32 %v7130, %v7168
    %v7198 = vadd.f32 %v7131, %v7168
    %v7199 = vadd.f32 %v7132, %v7168
    %v7200 = vadd.f32 %v7133, %v7168
    %v7201 = vadd.f32 %v7134, %v7168
    %v7202 = vadd.f32 %v7135, %v7168
    %v7203 = vadd.f32 %v7136, %v7168
    %v7204 = vadd.f32 %v7137, %v7168
    %v7205 = vadd.f32 %v7138, %v7168
    %v7206 = vadd.f32 %v7139, %v7168
    %v7207 = vadd.f32 %v7140, %v7168
    %v7208 = vadd.f32 %v7141, %v7168
    %v7209 = vadd.f32 %v7142, %v7168
    %v7210 = vadd.f32 %v7143, %v7168
    %v7211 = vadd.f32 %v7144, %v7168
    %v7212 = vadd.f32 %v7145, %v7168
    %v7213 = vadd.f32 %v7146, %v7168
    %v7214 = vadd.f32 %v7147, %v7168
    %v7215 = vadd.f32 %v7148, %v7168
    %v7216 = vadd.f32 %v7149, %v7168
    %v7217 = vadd.f32 %v7150, %v7168
    %v7218 = vadd.f32 %v7151, %v7168
    %v7219 = vadd.f32 %v7152, %v7168
    %v7220 = vadd.f32 %v7153, %v7168
    %v7221 = vadd.f32 %v7154, %v7168
    %v7222 = vadd.f32 %v7155, %v7168
    %v7223 = vadd.f32 %v7156, %v7168
    %v7224 = vadd.f32 %v7157, %v7168
    %v7225 = vadd.f32 %v7158, %v7168
    %v7226 = vadd.f32 %v7159, %v7168
    %v7227 = vadd.f32 %v7160, %v7168
    %v7228 = vadd.f32 %v7161, %v7168
    %v7229 = vadd.f32 %v7162, %v7168
    %v7230 = vadd.f32 %v7163, %v7168
    %v7231 = vadd.f32 %v7164, %v7168
    %v7232 = vadd.f32 %v7165, %v7168
    %v7233 = vadd.f32 %v7166, %v7168
    %v7234 = vld [vmem:[%s1] sm:$0xf]
    %v7235 = vld [vmem:[%s1 + $0x4] sm:$0xf]
    %v7236 = vld [vmem:[%s1 + $0x8] sm:$0xf]
    %v7237 = vld [vmem:[%s1 + $0xc] sm:$0xf]
    %v7238 = vld [vmem:[%s1 + $0x10] sm:$0xf]
    %v7239 = vld [vmem:[%s1 + $0x14] sm:$0xf]
    %v7240 = vld [vmem:[%s1 + $0x18] sm:$0xf]
    %v7241 = vld [vmem:[%s1 + $0x1c] sm:$0xf]
    %v7242 = vld [vmem:[%s1 + $0x20] sm:$0xf]
    %v7243 = vld [vmem:[%s1 + $0x24] sm:$0xf]
    %v7244 = vld [vmem:[%s1 + $0x28] sm:$0xf]
    %v7245 = vld [vmem:[%s1 + $0x2c] sm:$0xf]
    %v7246 = vld [vmem:[%s1 + $0x30] sm:$0xf]
    %v7247 = vld [vmem:[%s1 + $0x34] sm:$0xf]
    %v7248 = vld [vmem:[%s1 + $0x38] sm:$0xf]
    %v7249 = vld [vmem:[%s1 + $0x3c] sm:$0xf]
    %v7250 = vld [vmem:[%s1 + $0x40] sm:$0xf]
    %v7251 = vld [vmem:[%s1 + $0x44] sm:$0xf]
    %v7252 = vld [vmem:[%s1 + $0x48] sm:$0xf]
    %v7253 = vld [vmem:[%s1 + $0x4c] sm:$0xf]
    %v7254 = vld [vmem:[%s1 + $0x50] sm:$0xf]
    %v7255 = vld [vmem:[%s1 + $0x54] sm:$0xf]
    %v7256 = vld [vmem:[%s1 + $0x58] sm:$0xf]
    %v7257 = vld [vmem:[%s1 + $0x5c] sm:$0xf]
    %v7258 = vld [vmem:[%s1 + $0x60] sm:$0xf]
    %v7259 = vld [vmem:[%s1 + $0x64] sm:$0xf]
    %v7260 = vld [vmem:[%s1 + $0x68] sm:$0xf]
    %v7261 = vld [vmem:[%s1 + $0x6c] sm:$0xf]
    %v7262 = vld [vmem:[%s1 + $0x70] sm:$0xf]
    %v7263 = vld [vmem:[%s1 + $0x74] sm:$0xf]
    %v7264 = vld [vmem:[%s1 + $0x78] sm:$0xf]
    %v7265 = vld [vmem:[%s1 + $0x7c] sm:$0xf]
    %v7266 = vld [vmem:[%s1 + $0x80] sm:$0xf]
    %v7267 = vld [vmem:[%s1 + $0x84] sm:$0xf]
    %v7268 = vld [vmem:[%s1 + $0x88] sm:$0xf]
    %v7269 = vld [vmem:[%s1 + $0x8c] sm:$0xf]
    %v7270 = vld [vmem:[%s1 + $0x90] sm:$0xf]
    %v7271 = vld [vmem:[%s1 + $0x94] sm:$0xf]
    %v7272 = vld [vmem:[%s1 + $0x98] sm:$0xf]
    %v7273 = vld [vmem:[%s1 + $0x9c] sm:$0xf]
    %v7274 = vld [vmem:[%s1 + $0xa0] sm:$0xf]
    %v7275 = vld [vmem:[%s1 + $0xa4] sm:$0xf]
    %v7276 = vld [vmem:[%s1 + $0xa8] sm:$0xf]
    %v7277 = vld [vmem:[%s1 + $0xac] sm:$0xf]
    %v7278 = vld [vmem:[%s1 + $0xb0] sm:$0xf]
    %v7279 = vld [vmem:[%s1 + $0xb4] sm:$0xf]
    %v7280 = vld [vmem:[%s1 + $0xb8] sm:$0xf]
    %v7281 = vld [vmem:[%s1 + $0xbc] sm:$0xf]
    %v7282 = vld [vmem:[%s1 + $0xc0] sm:$0xf]
    %v7283 = vld [vmem:[%s1 + $0xc4] sm:$0xf]
    %v7284 = vld [vmem:[%s1 + $0xc8] sm:$0xf]
    %v7285 = vld [vmem:[%s1 + $0xcc] sm:$0xf]
    %v7286 = vld [vmem:[%s1 + $0xd0] sm:$0xf]
    %v7287 = vld [vmem:[%s1 + $0xd4] sm:$0xf]
    %v7288 = vld [vmem:[%s1 + $0xd8] sm:$0xf]
    %v7289 = vld [vmem:[%s1 + $0xdc] sm:$0xf]
    %v7290 = vld [vmem:[%s1 + $0xe0] sm:$0xf]
    %v7291 = vld [vmem:[%s1 + $0xe4] sm:$0xf]
    %v7292 = vld [vmem:[%s1 + $0xe8] sm:$0xf]
    %v7293 = vld [vmem:[%s1 + $0xec] sm:$0xf]
    %v7294 = vld [vmem:[%s1 + $0xf0] sm:$0xf]
    %v7295 = vld [vmem:[%s1 + $0xf4] sm:$0xf]
    %v7296 = vld [vmem:[%s1 + $0xf8] sm:$0xf]
    %v7297 = vld [vmem:[%s1 + $0xfc] sm:$0xf]
    %v7298 = vld [vmem:[%s8] sm:$0x3]
    %v7363 = vunpack.c.l.b16 %v7234
    %v7364 = vunpack.c.l.b16 %v7235
    %v7365 = vunpack.c.l.b16 %v7236
    %v7366 = vunpack.c.l.b16 %v7237
    %v7367 = vunpack.c.l.b16 %v7238
    %v7368 = vunpack.c.l.b16 %v7239
    %v7369 = vunpack.c.l.b16 %v7240
    %v7370 = vunpack.c.l.b16 %v7241
    %v7371 = vunpack.c.l.b16 %v7242
    %v7372 = vunpack.c.l.b16 %v7243
    %v7373 = vunpack.c.l.b16 %v7244
    %v7374 = vunpack.c.l.b16 %v7245
    %v7375 = vunpack.c.l.b16 %v7246
    %v7376 = vunpack.c.l.b16 %v7247
    %v7377 = vunpack.c.l.b16 %v7248
    %v7378 = vunpack.c.l.b16 %v7249
    %v7379 = vunpack.c.l.b16 %v7250
    %v7380 = vunpack.c.l.b16 %v7251
    %v7381 = vunpack.c.l.b16 %v7252
    %v7382 = vunpack.c.l.b16 %v7253
    %v7383 = vunpack.c.l.b16 %v7254
    %v7384 = vunpack.c.l.b16 %v7255
    %v7385 = vunpack.c.l.b16 %v7256
    %v7386 = vunpack.c.l.b16 %v7257
    %v7387 = vunpack.c.l.b16 %v7258
    %v7388 = vunpack.c.l.b16 %v7259
    %v7389 = vunpack.c.l.b16 %v7260
    %v7390 = vunpack.c.l.b16 %v7261
    %v7391 = vunpack.c.l.b16 %v7262
    %v7392 = vunpack.c.l.b16 %v7263
    %v7393 = vunpack.c.l.b16 %v7264
    %v7394 = vunpack.c.l.b16 %v7265
    %v7395 = vunpack.c.l.b16 %v7266
    %v7396 = vunpack.c.l.b16 %v7267
    %v7397 = vunpack.c.l.b16 %v7268
    %v7398 = vunpack.c.l.b16 %v7269
    %v7399 = vunpack.c.l.b16 %v7270
    %v7400 = vunpack.c.l.b16 %v7271
    %v7401 = vunpack.c.l.b16 %v7272
    %v7402 = vunpack.c.l.b16 %v7273
    %v7403 = vunpack.c.l.b16 %v7274
    %v7404 = vunpack.c.l.b16 %v7275
    %v7405 = vunpack.c.l.b16 %v7276
    %v7406 = vunpack.c.l.b16 %v7277
    %v7407 = vunpack.c.l.b16 %v7278
    %v7408 = vunpack.c.l.b16 %v7279
    %v7409 = vunpack.c.l.b16 %v7280
    %v7410 = vunpack.c.l.b16 %v7281
    %v7411 = vunpack.c.l.b16 %v7282
    %v7412 = vunpack.c.l.b16 %v7283
    %v7413 = vunpack.c.l.b16 %v7284
    %v7414 = vunpack.c.l.b16 %v7285
    %v7415 = vunpack.c.l.b16 %v7286
    %v7416 = vunpack.c.l.b16 %v7287
    %v7417 = vunpack.c.l.b16 %v7288
    %v7418 = vunpack.c.l.b16 %v7289
    %v7419 = vunpack.c.l.b16 %v7290
    %v7420 = vunpack.c.l.b16 %v7291
    %v7421 = vunpack.c.l.b16 %v7292
    %v7422 = vunpack.c.l.b16 %v7293
    %v7423 = vunpack.c.l.b16 %v7294
    %v7424 = vunpack.c.l.b16 %v7295
    %v7425 = vunpack.c.l.b16 %v7296
    %v7426 = vunpack.c.l.b16 %v7297
    %v7427 = vpack.c.b16 %v7364, %v7363
    %v7428 = vpack.c.b16 %v7366, %v7365
    %v7429 = vpack.c.b16 %v7368, %v7367
    %v7430 = vpack.c.b16 %v7370, %v7369
    %v7431 = vpack.c.b16 %v7372, %v7371
    %v7432 = vpack.c.b16 %v7374, %v7373
    %v7433 = vpack.c.b16 %v7376, %v7375
    %v7434 = vpack.c.b16 %v7378, %v7377
    %v7435 = vpack.c.b16 %v7380, %v7379
    %v7436 = vpack.c.b16 %v7382, %v7381
    %v7437 = vpack.c.b16 %v7384, %v7383
    %v7438 = vpack.c.b16 %v7386, %v7385
    %v7439 = vpack.c.b16 %v7388, %v7387
    %v7440 = vpack.c.b16 %v7390, %v7389
    %v7441 = vpack.c.b16 %v7392, %v7391
    %v7442 = vpack.c.b16 %v7394, %v7393
    %v7443 = vpack.c.b16 %v7396, %v7395
    %v7444 = vpack.c.b16 %v7398, %v7397
    %v7445 = vpack.c.b16 %v7400, %v7399
    %v7446 = vpack.c.b16 %v7402, %v7401
    %v7447 = vpack.c.b16 %v7404, %v7403
    %v7448 = vpack.c.b16 %v7406, %v7405
    %v7449 = vpack.c.b16 %v7408, %v7407
    %v7450 = vpack.c.b16 %v7410, %v7409
    %v7451 = vpack.c.b16 %v7412, %v7411
    %v7452 = vpack.c.b16 %v7414, %v7413
    %v7453 = vpack.c.b16 %v7416, %v7415
    %v7454 = vpack.c.b16 %v7418, %v7417
    %v7455 = vpack.c.b16 %v7420, %v7419
    %v7456 = vpack.c.b16 %v7422, %v7421
    %v7457 = vpack.c.b16 %v7424, %v7423
    %v7458 = vpack.c.b16 %v7426, %v7425
    %vm7459 = vcmask 31744
    %v7461 = vsel %vm7459, %v7427, 0
    %v7464 = vsel %vm7459, %v7428, 0
    %v7467 = vsel %vm7459, %v7429, 0
    %v7470 = vsel %vm7459, %v7430, 0
    %v7473 = vsel %vm7459, %v7431, 0
    %v7476 = vsel %vm7459, %v7432, 0
    %v7479 = vsel %vm7459, %v7433, 0
    %v7482 = vsel %vm7459, %v7434, 0
    %v7485 = vsel %vm7459, %v7435, 0
    %v7488 = vsel %vm7459, %v7436, 0
    %v7491 = vsel %vm7459, %v7437, 0
    %v7494 = vsel %vm7459, %v7438, 0
    %v7497 = vsel %vm7459, %v7439, 0
    %v7500 = vsel %vm7459, %v7440, 0
    %v7503 = vsel %vm7459, %v7441, 0
    %v7506 = vsel %vm7459, %v7442, 0
    %v7509 = vsel %vm7459, %v7443, 0
    %v7512 = vsel %vm7459, %v7444, 0
    %v7515 = vsel %vm7459, %v7445, 0
    %v7518 = vsel %vm7459, %v7446, 0
    %v7521 = vsel %vm7459, %v7447, 0
    %v7524 = vsel %vm7459, %v7448, 0
    %v7527 = vsel %vm7459, %v7449, 0
    %v7530 = vsel %vm7459, %v7450, 0
    %v7533 = vsel %vm7459, %v7451, 0
    %v7536 = vsel %vm7459, %v7452, 0
    %v7539 = vsel %vm7459, %v7453, 0
    %v7542 = vsel %vm7459, %v7454, 0
    %v7545 = vsel %vm7459, %v7455, 0
    %v7548 = vsel %vm7459, %v7456, 0
    %v7551 = vsel %vm7459, %v7457, 0
    %v7554 = vsel %vm7459, %v7458, 0
    %v7557 = vsel %vm397, %v7298, 0
    %7559 = vmatpush.bf16.msra.mxu0 0
    %7560 = vmatpush.bf16.msra.mxu0 0
    %7561 = vmatpush.bf16.msra.mxu0 0
    %7562 = vmatpush.bf16.msra.mxu0 0
    %7563 = vmatpush.bf16.msra.mxu0 0
    %7564 = vmatpush.bf16.msra.mxu0 0
    %7565 = vmatpush.bf16.msra.mxu0 0
    %7566 = vmatpush.bf16.msra.mxu0 %v7557
    %7567 = vmatmul.bf16.gmra.mxu0 %v7461
    %v7568 = vpop.f32.mrf.mxu0
    %v7569 = vadd.f32 0.0, %v7568
    %v7570 = vpop.f32.mrf.mxu0
    %v7571 = vadd.f32 0.0, %v7570
    %7572 = vmatmul.bf16.gmra.mxu0 %v7464
    %v7573 = vpop.f32.mrf.mxu0
    %v7574 = vadd.f32 0.0, %v7573
    %v7575 = vpop.f32.mrf.mxu0
    %v7576 = vadd.f32 0.0, %v7575
    %7577 = vmatmul.bf16.gmra.mxu0 %v7467
    %v7578 = vpop.f32.mrf.mxu0
    %v7579 = vadd.f32 0.0, %v7578
    %v7580 = vpop.f32.mrf.mxu0
    %v7581 = vadd.f32 0.0, %v7580
    %7582 = vmatmul.bf16.gmra.mxu0 %v7470
    %v7583 = vpop.f32.mrf.mxu0
    %v7584 = vadd.f32 0.0, %v7583
    %v7585 = vpop.f32.mrf.mxu0
    %v7586 = vadd.f32 0.0, %v7585
    %7587 = vmatmul.bf16.gmra.mxu0 %v7473
    %v7588 = vpop.f32.mrf.mxu0
    %v7589 = vadd.f32 0.0, %v7588
    %v7590 = vpop.f32.mrf.mxu0
    %v7591 = vadd.f32 0.0, %v7590
    %7592 = vmatmul.bf16.gmra.mxu0 %v7476
    %v7593 = vpop.f32.mrf.mxu0
    %v7594 = vadd.f32 0.0, %v7593
    %v7595 = vpop.f32.mrf.mxu0
    %v7596 = vadd.f32 0.0, %v7595
    %7597 = vmatmul.bf16.gmra.mxu0 %v7479
    %v7598 = vpop.f32.mrf.mxu0
    %v7599 = vadd.f32 0.0, %v7598
    %v7600 = vpop.f32.mrf.mxu0
    %v7601 = vadd.f32 0.0, %v7600
    %7602 = vmatmul.bf16.gmra.mxu0 %v7482
    %v7603 = vpop.f32.mrf.mxu0
    %v7604 = vadd.f32 0.0, %v7603
    %v7605 = vpop.f32.mrf.mxu0
    %v7606 = vadd.f32 0.0, %v7605
    %7607 = vmatmul.bf16.gmra.mxu0 %v7485
    %v7608 = vpop.f32.mrf.mxu0
    %v7609 = vadd.f32 0.0, %v7608
    %v7610 = vpop.f32.mrf.mxu0
    %v7611 = vadd.f32 0.0, %v7610
    %7612 = vmatmul.bf16.gmra.mxu0 %v7488
    %v7613 = vpop.f32.mrf.mxu0
    %v7614 = vadd.f32 0.0, %v7613
    %v7615 = vpop.f32.mrf.mxu0
    %v7616 = vadd.f32 0.0, %v7615
    %7617 = vmatmul.bf16.gmra.mxu0 %v7491
    %v7618 = vpop.f32.mrf.mxu0
    %v7619 = vadd.f32 0.0, %v7618
    %v7620 = vpop.f32.mrf.mxu0
    %v7621 = vadd.f32 0.0, %v7620
    %7622 = vmatmul.bf16.gmra.mxu0 %v7494
    %v7623 = vpop.f32.mrf.mxu0
    %v7624 = vadd.f32 0.0, %v7623
    %v7625 = vpop.f32.mrf.mxu0
    %v7626 = vadd.f32 0.0, %v7625
    %7627 = vmatmul.bf16.gmra.mxu0 %v7497
    %v7628 = vpop.f32.mrf.mxu0
    %v7629 = vadd.f32 0.0, %v7628
    %v7630 = vpop.f32.mrf.mxu0
    %v7631 = vadd.f32 0.0, %v7630
    %7632 = vmatmul.bf16.gmra.mxu0 %v7500
    %v7633 = vpop.f32.mrf.mxu0
    %v7634 = vadd.f32 0.0, %v7633
    %v7635 = vpop.f32.mrf.mxu0
    %v7636 = vadd.f32 0.0, %v7635
    %7637 = vmatmul.bf16.gmra.mxu0 %v7503
    %v7638 = vpop.f32.mrf.mxu0
    %v7639 = vadd.f32 0.0, %v7638
    %v7640 = vpop.f32.mrf.mxu0
    %v7641 = vadd.f32 0.0, %v7640
    %7642 = vmatmul.bf16.gmra.mxu0 %v7506
    %v7643 = vpop.f32.mrf.mxu0
    %v7644 = vadd.f32 0.0, %v7643
    %v7645 = vpop.f32.mrf.mxu0
    %v7646 = vadd.f32 0.0, %v7645
    %7647 = vmatmul.bf16.gmra.mxu0 %v7509
    %v7648 = vpop.f32.mrf.mxu0
    %v7649 = vadd.f32 0.0, %v7648
    %v7650 = vpop.f32.mrf.mxu0
    %v7651 = vadd.f32 0.0, %v7650
    %7652 = vmatmul.bf16.gmra.mxu0 %v7512
    %v7653 = vpop.f32.mrf.mxu0
    %v7654 = vadd.f32 0.0, %v7653
    %v7655 = vpop.f32.mrf.mxu0
    %v7656 = vadd.f32 0.0, %v7655
    %7657 = vmatmul.bf16.gmra.mxu0 %v7515
    %v7658 = vpop.f32.mrf.mxu0
    %v7659 = vadd.f32 0.0, %v7658
    %v7660 = vpop.f32.mrf.mxu0
    %v7661 = vadd.f32 0.0, %v7660
    %7662 = vmatmul.bf16.gmra.mxu0 %v7518
    %v7663 = vpop.f32.mrf.mxu0
    %v7664 = vadd.f32 0.0, %v7663
    %v7665 = vpop.f32.mrf.mxu0
    %v7666 = vadd.f32 0.0, %v7665
    %7667 = vmatmul.bf16.gmra.mxu0 %v7521
    %v7668 = vpop.f32.mrf.mxu0
    %v7669 = vadd.f32 0.0, %v7668
    %v7670 = vpop.f32.mrf.mxu0
    %v7671 = vadd.f32 0.0, %v7670
    %7672 = vmatmul.bf16.gmra.mxu0 %v7524
    %v7673 = vpop.f32.mrf.mxu0
    %v7674 = vadd.f32 0.0, %v7673
    %v7675 = vpop.f32.mrf.mxu0
    %v7676 = vadd.f32 0.0, %v7675
    %7677 = vmatmul.bf16.gmra.mxu0 %v7527
    %v7678 = vpop.f32.mrf.mxu0
    %v7679 = vadd.f32 0.0, %v7678
    %v7680 = vpop.f32.mrf.mxu0
    %v7681 = vadd.f32 0.0, %v7680
    %7682 = vmatmul.bf16.gmra.mxu0 %v7530
    %v7683 = vpop.f32.mrf.mxu0
    %v7684 = vadd.f32 0.0, %v7683
    %v7685 = vpop.f32.mrf.mxu0
    %v7686 = vadd.f32 0.0, %v7685
    %7687 = vmatmul.bf16.gmra.mxu0 %v7533
    %v7688 = vpop.f32.mrf.mxu0
    %v7689 = vadd.f32 0.0, %v7688
    %v7690 = vpop.f32.mrf.mxu0
    %v7691 = vadd.f32 0.0, %v7690
    %7692 = vmatmul.bf16.gmra.mxu0 %v7536
    %v7693 = vpop.f32.mrf.mxu0
    %v7694 = vadd.f32 0.0, %v7693
    %v7695 = vpop.f32.mrf.mxu0
    %v7696 = vadd.f32 0.0, %v7695
    %7697 = vmatmul.bf16.gmra.mxu0 %v7539
    %v7698 = vpop.f32.mrf.mxu0
    %v7699 = vadd.f32 0.0, %v7698
    %v7700 = vpop.f32.mrf.mxu0
    %v7701 = vadd.f32 0.0, %v7700
    %7702 = vmatmul.bf16.gmra.mxu0 %v7542
    %v7703 = vpop.f32.mrf.mxu0
    %v7704 = vadd.f32 0.0, %v7703
    %v7705 = vpop.f32.mrf.mxu0
    %v7706 = vadd.f32 0.0, %v7705
    %7707 = vmatmul.bf16.gmra.mxu0 %v7545
    %v7708 = vpop.f32.mrf.mxu0
    %v7709 = vadd.f32 0.0, %v7708
    %v7710 = vpop.f32.mrf.mxu0
    %v7711 = vadd.f32 0.0, %v7710
    %7712 = vmatmul.bf16.gmra.mxu0 %v7548
    %v7713 = vpop.f32.mrf.mxu0
    %v7714 = vadd.f32 0.0, %v7713
    %v7715 = vpop.f32.mrf.mxu0
    %v7716 = vadd.f32 0.0, %v7715
    %7717 = vmatmul.bf16.gmra.mxu0 %v7551
    %v7718 = vpop.f32.mrf.mxu0
    %v7719 = vadd.f32 0.0, %v7718
    %v7720 = vpop.f32.mrf.mxu0
    %v7721 = vadd.f32 0.0, %v7720
    %7722 = vmatmul.bf16.gmra.mxu0 %v7554
    %v7723 = vpop.f32.mrf.mxu0
    %v7724 = vadd.f32 0.0, %v7723
    %v7725 = vpop.f32.mrf.mxu0
    %v7726 = vadd.f32 0.0, %v7725
    %7727 = vdwg.mxu0
    %v7728 = vld [vmem:[%s9] sm:$0x1]
    %v7729 = vld [vmem:[%s10] sm:$0x1]
    %v7730 = vadd.f32 %v7569, %v7571
    %v7731 = vadd.f32 %v7730, %v7574
    %v7732 = vadd.f32 %v7731, %v7576
    %v7733 = vadd.f32 %v7732, %v7579
    %v7734 = vadd.f32 %v7733, %v7581
    %v7735 = vadd.f32 %v7734, %v7584
    %v7736 = vadd.f32 %v7735, %v7586
    %v7737 = vadd.f32 %v7736, %v7589
    %v7738 = vadd.f32 %v7737, %v7591
    %v7739 = vadd.f32 %v7738, %v7594
    %v7740 = vadd.f32 %v7739, %v7596
    %v7741 = vadd.f32 %v7740, %v7599
    %v7742 = vadd.f32 %v7741, %v7601
    %v7743 = vadd.f32 %v7742, %v7604
    %v7744 = vadd.f32 %v7743, %v7606
    %v7745 = vadd.f32 %v7744, %v7609
    %v7746 = vadd.f32 %v7745, %v7611
    %v7747 = vadd.f32 %v7746, %v7614
    %v7748 = vadd.f32 %v7747, %v7616
    %v7749 = vadd.f32 %v7748, %v7619
    %v7750 = vadd.f32 %v7749, %v7621
    %v7751 = vadd.f32 %v7750, %v7624
    %v7752 = vadd.f32 %v7751, %v7626
    %v7753 = vadd.f32 %v7752, %v7629
    %v7754 = vadd.f32 %v7753, %v7631
    %v7755 = vadd.f32 %v7754, %v7634
    %v7756 = vadd.f32 %v7755, %v7636
    %v7757 = vadd.f32 %v7756, %v7639
    %v7758 = vadd.f32 %v7757, %v7641
    %v7759 = vadd.f32 %v7758, %v7644
    %v7760 = vadd.f32 %v7759, %v7646
    %v7761 = vadd.f32 %v7760, %v7649
    %v7762 = vadd.f32 %v7761, %v7651
    %v7763 = vadd.f32 %v7762, %v7654
    %v7764 = vadd.f32 %v7763, %v7656
    %v7765 = vadd.f32 %v7764, %v7659
    %v7766 = vadd.f32 %v7765, %v7661
    %v7767 = vadd.f32 %v7766, %v7664
    %v7768 = vadd.f32 %v7767, %v7666
    %v7769 = vadd.f32 %v7768, %v7669
    %v7770 = vadd.f32 %v7769, %v7671
    %v7771 = vadd.f32 %v7770, %v7674
    %v7772 = vadd.f32 %v7771, %v7676
    %v7773 = vadd.f32 %v7772, %v7679
    %v7774 = vadd.f32 %v7773, %v7681
    %v7775 = vadd.f32 %v7774, %v7684
    %v7776 = vadd.f32 %v7775, %v7686
    %v7777 = vadd.f32 %v7776, %v7689
    %v7778 = vadd.f32 %v7777, %v7691
    %v7779 = vadd.f32 %v7778, %v7694
    %v7780 = vadd.f32 %v7779, %v7696
    %v7781 = vadd.f32 %v7780, %v7699
    %v7782 = vadd.f32 %v7781, %v7701
    %v7783 = vadd.f32 %v7782, %v7704
    %v7784 = vadd.f32 %v7783, %v7706
    %v7785 = vadd.f32 %v7784, %v7709
    %v7786 = vadd.f32 %v7785, %v7711
    %v7787 = vadd.f32 %v7786, %v7714
    %v7788 = vadd.f32 %v7787, %v7716
    %v7789 = vadd.f32 %v7788, %v7719
    %v7790 = vadd.f32 %v7789, %v7721
    %v7791 = vadd.f32 %v7790, %v7724
    %v7792 = vadd.f32 %v7791, %v7726
    %v7793 = vrot.slane %v7792, 4
    %v7794 = vadd.f32 %v7792, %v7793
    %v7795 = vrot.slane %v7794, 2
    %v7796 = vadd.f32 %v7794, %v7795
    %v7797 = vrot.slane %v7796, 1
    %v7798 = vadd.f32 %v7796, %v7797
    %v7799 = vmul.f32 %v7569, %v7569
    %v7800 = vmul.f32 %v7571, %v7571
    %v7801 = vmul.f32 %v7574, %v7574
    %v7802 = vmul.f32 %v7576, %v7576
    %v7803 = vmul.f32 %v7579, %v7579
    %v7804 = vmul.f32 %v7581, %v7581
    %v7805 = vmul.f32 %v7584, %v7584
    %v7806 = vmul.f32 %v7586, %v7586
    %v7807 = vmul.f32 %v7589, %v7589
    %v7808 = vmul.f32 %v7591, %v7591
    %v7809 = vmul.f32 %v7594, %v7594
    %v7810 = vmul.f32 %v7596, %v7596
    %v7811 = vmul.f32 %v7599, %v7599
    %v7812 = vmul.f32 %v7601, %v7601
    %v7813 = vmul.f32 %v7604, %v7604
    %v7814 = vmul.f32 %v7606, %v7606
    %v7815 = vmul.f32 %v7609, %v7609
    %v7816 = vmul.f32 %v7611, %v7611
    %v7817 = vmul.f32 %v7614, %v7614
    %v7818 = vmul.f32 %v7616, %v7616
    %v7819 = vmul.f32 %v7619, %v7619
    %v7820 = vmul.f32 %v7621, %v7621
    %v7821 = vmul.f32 %v7624, %v7624
    %v7822 = vmul.f32 %v7626, %v7626
    %v7823 = vmul.f32 %v7629, %v7629
    %v7824 = vmul.f32 %v7631, %v7631
    %v7825 = vmul.f32 %v7634, %v7634
    %v7826 = vmul.f32 %v7636, %v7636
    %v7827 = vmul.f32 %v7639, %v7639
    %v7828 = vmul.f32 %v7641, %v7641
    %v7829 = vmul.f32 %v7644, %v7644
    %v7830 = vmul.f32 %v7646, %v7646
    %v7831 = vmul.f32 %v7649, %v7649
    %v7832 = vmul.f32 %v7651, %v7651
    %v7833 = vmul.f32 %v7654, %v7654
    %v7834 = vmul.f32 %v7656, %v7656
    %v7835 = vmul.f32 %v7659, %v7659
    %v7836 = vmul.f32 %v7661, %v7661
    %v7837 = vmul.f32 %v7664, %v7664
    %v7838 = vmul.f32 %v7666, %v7666
    %v7839 = vmul.f32 %v7669, %v7669
    %v7840 = vmul.f32 %v7671, %v7671
    %v7841 = vmul.f32 %v7674, %v7674
    %v7842 = vmul.f32 %v7676, %v7676
    %v7843 = vmul.f32 %v7679, %v7679
    %v7844 = vmul.f32 %v7681, %v7681
    %v7845 = vmul.f32 %v7684, %v7684
    %v7846 = vmul.f32 %v7686, %v7686
    %v7847 = vmul.f32 %v7689, %v7689
    %v7848 = vmul.f32 %v7691, %v7691
    %v7849 = vmul.f32 %v7694, %v7694
    %v7850 = vmul.f32 %v7696, %v7696
    %v7851 = vmul.f32 %v7699, %v7699
    %v7852 = vmul.f32 %v7701, %v7701
    %v7853 = vmul.f32 %v7704, %v7704
    %v7854 = vmul.f32 %v7706, %v7706
    %v7855 = vmul.f32 %v7709, %v7709
    %v7856 = vmul.f32 %v7711, %v7711
    %v7857 = vmul.f32 %v7714, %v7714
    %v7858 = vmul.f32 %v7716, %v7716
    %v7859 = vmul.f32 %v7719, %v7719
    %v7860 = vmul.f32 %v7721, %v7721
    %v7861 = vmul.f32 %v7724, %v7724
    %v7862 = vmul.f32 %v7726, %v7726
    %v7863 = vadd.f32 %v7799, %v7800
    %v7864 = vadd.f32 %v7863, %v7801
    %v7865 = vadd.f32 %v7864, %v7802
    %v7866 = vadd.f32 %v7865, %v7803
    %v7867 = vadd.f32 %v7866, %v7804
    %v7868 = vadd.f32 %v7867, %v7805
    %v7869 = vadd.f32 %v7868, %v7806
    %v7870 = vadd.f32 %v7869, %v7807
    %v7871 = vadd.f32 %v7870, %v7808
    %v7872 = vadd.f32 %v7871, %v7809
    %v7873 = vadd.f32 %v7872, %v7810
    %v7874 = vadd.f32 %v7873, %v7811
    %v7875 = vadd.f32 %v7874, %v7812
    %v7876 = vadd.f32 %v7875, %v7813
    %v7877 = vadd.f32 %v7876, %v7814
    %v7878 = vadd.f32 %v7877, %v7815
    %v7879 = vadd.f32 %v7878, %v7816
    %v7880 = vadd.f32 %v7879, %v7817
    %v7881 = vadd.f32 %v7880, %v7818
    %v7882 = vadd.f32 %v7881, %v7819
    %v7883 = vadd.f32 %v7882, %v7820
    %v7884 = vadd.f32 %v7883, %v7821
    %v7885 = vadd.f32 %v7884, %v7822
    %v7886 = vadd.f32 %v7885, %v7823
    %v7887 = vadd.f32 %v7886, %v7824
    %v7888 = vadd.f32 %v7887, %v7825
    %v7889 = vadd.f32 %v7888, %v7826
    %v7890 = vadd.f32 %v7889, %v7827
    %v7891 = vadd.f32 %v7890, %v7828
    %v7892 = vadd.f32 %v7891, %v7829
    %v7893 = vadd.f32 %v7892, %v7830
    %v7894 = vadd.f32 %v7893, %v7831
    %v7895 = vadd.f32 %v7894, %v7832
    %v7896 = vadd.f32 %v7895, %v7833
    %v7897 = vadd.f32 %v7896, %v7834
    %v7898 = vadd.f32 %v7897, %v7835
    %v7899 = vadd.f32 %v7898, %v7836
    %v7900 = vadd.f32 %v7899, %v7837
    %v7901 = vadd.f32 %v7900, %v7838
    %v7902 = vadd.f32 %v7901, %v7839
    %v7903 = vadd.f32 %v7902, %v7840
    %v7904 = vadd.f32 %v7903, %v7841
    %v7905 = vadd.f32 %v7904, %v7842
    %v7906 = vadd.f32 %v7905, %v7843
    %v7907 = vadd.f32 %v7906, %v7844
    %v7908 = vadd.f32 %v7907, %v7845
    %v7909 = vadd.f32 %v7908, %v7846
    %v7910 = vadd.f32 %v7909, %v7847
    %v7911 = vadd.f32 %v7910, %v7848
    %v7912 = vadd.f32 %v7911, %v7849
    %v7913 = vadd.f32 %v7912, %v7850
    %v7914 = vadd.f32 %v7913, %v7851
    %v7915 = vadd.f32 %v7914, %v7852
    %v7916 = vadd.f32 %v7915, %v7853
    %v7917 = vadd.f32 %v7916, %v7854
    %v7918 = vadd.f32 %v7917, %v7855
    %v7919 = vadd.f32 %v7918, %v7856
    %v7920 = vadd.f32 %v7919, %v7857
    %v7921 = vadd.f32 %v7920, %v7858
    %v7922 = vadd.f32 %v7921, %v7859
    %v7923 = vadd.f32 %v7922, %v7860
    %v7924 = vadd.f32 %v7923, %v7861
    %v7925 = vadd.f32 %v7924, %v7862
    %v7926 = vrot.slane %v7925, 4
    %v7927 = vadd.f32 %v7925, %v7926
    %v7928 = vrot.slane %v7927, 2
    %v7929 = vadd.f32 %v7927, %v7928
    %v7930 = vrot.slane %v7929, 1
    %v7931 = vadd.f32 %v7929, %v7930
    %v7932 = vmul.f32 %v7798, 0.001953125
    %v7933 = vmul.f32 %v7931, 0.001953125
    %v7934 = vmul.f32 %v7932, %v7932
    %v7935 = vsub.f32 %v7933, %v7934
    %v7936 = vadd.f32 %v7935, 1e-05
    %v7937 = vrsqrt.pop %v7936
    %v7938 = vmul.f32 %v7937, %v7936
    %v7939 = vmul.f32 %v7938, %v7937
    %v7940 = vmul.f32 0.5, %v7939
    %v7941 = vsub.f32 1.5, %v7940
    %v7942 = vmul.f32 %v7937, %v7941
    %vm7943 = vweird.f32 %v7936
    %vm7944 = vweird.f32 %v7937
    %vm7945 = vmor %vm7943, %vm7944
    %v7946 = vsel %vm7945, %v7937, %v7942
    %v7947 = vsub.f32 %v7569, %v7932
    %v7948 = vsub.f32 %v7571, %v7932
    %v7949 = vsub.f32 %v7574, %v7932
    %v7950 = vsub.f32 %v7576, %v7932
    %v7951 = vsub.f32 %v7579, %v7932
    %v7952 = vsub.f32 %v7581, %v7932
    %v7953 = vsub.f32 %v7584, %v7932
    %v7954 = vsub.f32 %v7586, %v7932
    %v7955 = vsub.f32 %v7589, %v7932
    %v7956 = vsub.f32 %v7591, %v7932
    %v7957 = vsub.f32 %v7594, %v7932
    %v7958 = vsub.f32 %v7596, %v7932
    %v7959 = vsub.f32 %v7599, %v7932
    %v7960 = vsub.f32 %v7601, %v7932
    %v7961 = vsub.f32 %v7604, %v7932
    %v7962 = vsub.f32 %v7606, %v7932
    %v7963 = vsub.f32 %v7609, %v7932
    %v7964 = vsub.f32 %v7611, %v7932
    %v7965 = vsub.f32 %v7614, %v7932
    %v7966 = vsub.f32 %v7616, %v7932
    %v7967 = vsub.f32 %v7619, %v7932
    %v7968 = vsub.f32 %v7621, %v7932
    %v7969 = vsub.f32 %v7624, %v7932
    %v7970 = vsub.f32 %v7626, %v7932
    %v7971 = vsub.f32 %v7629, %v7932
    %v7972 = vsub.f32 %v7631, %v7932
    %v7973 = vsub.f32 %v7634, %v7932
    %v7974 = vsub.f32 %v7636, %v7932
    %v7975 = vsub.f32 %v7639, %v7932
    %v7976 = vsub.f32 %v7641, %v7932
    %v7977 = vsub.f32 %v7644, %v7932
    %v7978 = vsub.f32 %v7646, %v7932
    %v7979 = vsub.f32 %v7649, %v7932
    %v7980 = vsub.f32 %v7651, %v7932
    %v7981 = vsub.f32 %v7654, %v7932
    %v7982 = vsub.f32 %v7656, %v7932
    %v7983 = vsub.f32 %v7659, %v7932
    %v7984 = vsub.f32 %v7661, %v7932
    %v7985 = vsub.f32 %v7664, %v7932
    %v7986 = vsub.f32 %v7666, %v7932
    %v7987 = vsub.f32 %v7669, %v7932
    %v7988 = vsub.f32 %v7671, %v7932
    %v7989 = vsub.f32 %v7674, %v7932
    %v7990 = vsub.f32 %v7676, %v7932
    %v7991 = vsub.f32 %v7679, %v7932
    %v7992 = vsub.f32 %v7681, %v7932
    %v7993 = vsub.f32 %v7684, %v7932
    %v7994 = vsub.f32 %v7686, %v7932
    %v7995 = vsub.f32 %v7689, %v7932
    %v7996 = vsub.f32 %v7691, %v7932
    %v7997 = vsub.f32 %v7694, %v7932
    %v7998 = vsub.f32 %v7696, %v7932
    %v7999 = vsub.f32 %v7699, %v7932
    %v8000 = vsub.f32 %v7701, %v7932
    %v8001 = vsub.f32 %v7704, %v7932
    %v8002 = vsub.f32 %v7706, %v7932
    %v8003 = vsub.f32 %v7709, %v7932
    %v8004 = vsub.f32 %v7711, %v7932
    %v8005 = vsub.f32 %v7714, %v7932
    %v8006 = vsub.f32 %v7716, %v7932
    %v8007 = vsub.f32 %v7719, %v7932
    %v8008 = vsub.f32 %v7721, %v7932
    %v8009 = vsub.f32 %v7724, %v7932
    %v8010 = vsub.f32 %v7726, %v7932
    %v8011 = vmul.f32 %v7946, %v7728
    %v8012 = vperm.slane %v8011, 0
    %v8013 = vmul.f32 %v7947, %v8012
    %v8014 = vmul.f32 %v7948, %v8012
    %v8015 = vmul.f32 %v7949, %v8012
    %v8016 = vmul.f32 %v7950, %v8012
    %v8017 = vmul.f32 %v7951, %v8012
    %v8018 = vmul.f32 %v7952, %v8012
    %v8019 = vmul.f32 %v7953, %v8012
    %v8020 = vmul.f32 %v7954, %v8012
    %v8021 = vmul.f32 %v7955, %v8012
    %v8022 = vmul.f32 %v7956, %v8012
    %v8023 = vmul.f32 %v7957, %v8012
    %v8024 = vmul.f32 %v7958, %v8012
    %v8025 = vmul.f32 %v7959, %v8012
    %v8026 = vmul.f32 %v7960, %v8012
    %v8027 = vmul.f32 %v7961, %v8012
    %v8028 = vmul.f32 %v7962, %v8012
    %v8029 = vmul.f32 %v7963, %v8012
    %v8030 = vmul.f32 %v7964, %v8012
    %v8031 = vmul.f32 %v7965, %v8012
    %v8032 = vmul.f32 %v7966, %v8012
    %v8033 = vmul.f32 %v7967, %v8012
    %v8034 = vmul.f32 %v7968, %v8012
    %v8035 = vmul.f32 %v7969, %v8012
    %v8036 = vmul.f32 %v7970, %v8012
    %v8037 = vmul.f32 %v7971, %v8012
    %v8038 = vmul.f32 %v7972, %v8012
    %v8039 = vmul.f32 %v7973, %v8012
    %v8040 = vmul.f32 %v7974, %v8012
    %v8041 = vmul.f32 %v7975, %v8012
    %v8042 = vmul.f32 %v7976, %v8012
    %v8043 = vmul.f32 %v7977, %v8012
    %v8044 = vmul.f32 %v7978, %v8012
    %v8045 = vmul.f32 %v7979, %v8012
    %v8046 = vmul.f32 %v7980, %v8012
    %v8047 = vmul.f32 %v7981, %v8012
    %v8048 = vmul.f32 %v7982, %v8012
    %v8049 = vmul.f32 %v7983, %v8012
    %v8050 = vmul.f32 %v7984, %v8012
    %v8051 = vmul.f32 %v7985, %v8012
    %v8052 = vmul.f32 %v7986, %v8012
    %v8053 = vmul.f32 %v7987, %v8012
    %v8054 = vmul.f32 %v7988, %v8012
    %v8055 = vmul.f32 %v7989, %v8012
    %v8056 = vmul.f32 %v7990, %v8012
    %v8057 = vmul.f32 %v7991, %v8012
    %v8058 = vmul.f32 %v7992, %v8012
    %v8059 = vmul.f32 %v7993, %v8012
    %v8060 = vmul.f32 %v7994, %v8012
    %v8061 = vmul.f32 %v7995, %v8012
    %v8062 = vmul.f32 %v7996, %v8012
    %v8063 = vmul.f32 %v7997, %v8012
    %v8064 = vmul.f32 %v7998, %v8012
    %v8065 = vmul.f32 %v7999, %v8012
    %v8066 = vmul.f32 %v8000, %v8012
    %v8067 = vmul.f32 %v8001, %v8012
    %v8068 = vmul.f32 %v8002, %v8012
    %v8069 = vmul.f32 %v8003, %v8012
    %v8070 = vmul.f32 %v8004, %v8012
    %v8071 = vmul.f32 %v8005, %v8012
    %v8072 = vmul.f32 %v8006, %v8012
    %v8073 = vmul.f32 %v8007, %v8012
    %v8074 = vmul.f32 %v8008, %v8012
    %v8075 = vmul.f32 %v8009, %v8012
    %v8076 = vmul.f32 %v8010, %v8012
    %v8078 = vperm.slane %v7729, 0
    %v8080 = vadd.f32 %v8013, %v8078
    %v8081 = vadd.f32 %v8014, %v8078
    %v8082 = vadd.f32 %v8015, %v8078
    %v8083 = vadd.f32 %v8016, %v8078
    %v8084 = vadd.f32 %v8017, %v8078
    %v8085 = vadd.f32 %v8018, %v8078
    %v8086 = vadd.f32 %v8019, %v8078
    %v8087 = vadd.f32 %v8020, %v8078
    %v8088 = vadd.f32 %v8021, %v8078
    %v8089 = vadd.f32 %v8022, %v8078
    %v8090 = vadd.f32 %v8023, %v8078
    %v8091 = vadd.f32 %v8024, %v8078
    %v8092 = vadd.f32 %v8025, %v8078
    %v8093 = vadd.f32 %v8026, %v8078
    %v8094 = vadd.f32 %v8027, %v8078
    %v8095 = vadd.f32 %v8028, %v8078
    %v8096 = vadd.f32 %v8029, %v8078
    %v8097 = vadd.f32 %v8030, %v8078
    %v8098 = vadd.f32 %v8031, %v8078
    %v8099 = vadd.f32 %v8032, %v8078
    %v8100 = vadd.f32 %v8033, %v8078
    %v8101 = vadd.f32 %v8034, %v8078
    %v8102 = vadd.f32 %v8035, %v8078
    %v8103 = vadd.f32 %v8036, %v8078
    %v8104 = vadd.f32 %v8037, %v8078
    %v8105 = vadd.f32 %v8038, %v8078
    %v8106 = vadd.f32 %v8039, %v8078
    %v8107 = vadd.f32 %v8040, %v8078
    %v8108 = vadd.f32 %v8041, %v8078
    %v8109 = vadd.f32 %v8042, %v8078
    %v8110 = vadd.f32 %v8043, %v8078
    %v8111 = vadd.f32 %v8044, %v8078
    %v8112 = vadd.f32 %v8045, %v8078
    %v8113 = vadd.f32 %v8046, %v8078
    %v8114 = vadd.f32 %v8047, %v8078
    %v8115 = vadd.f32 %v8048, %v8078
    %v8116 = vadd.f32 %v8049, %v8078
    %v8117 = vadd.f32 %v8050, %v8078
    %v8118 = vadd.f32 %v8051, %v8078
    %v8119 = vadd.f32 %v8052, %v8078
    %v8120 = vadd.f32 %v8053, %v8078
    %v8121 = vadd.f32 %v8054, %v8078
    %v8122 = vadd.f32 %v8055, %v8078
    %v8123 = vadd.f32 %v8056, %v8078
    %v8124 = vadd.f32 %v8057, %v8078
    %v8125 = vadd.f32 %v8058, %v8078
    %v8126 = vadd.f32 %v8059, %v8078
    %v8127 = vadd.f32 %v8060, %v8078
    %v8128 = vadd.f32 %v8061, %v8078
    %v8129 = vadd.f32 %v8062, %v8078
    %v8130 = vadd.f32 %v8063, %v8078
    %v8131 = vadd.f32 %v8064, %v8078
    %v8132 = vadd.f32 %v8065, %v8078
    %v8133 = vadd.f32 %v8066, %v8078
    %v8134 = vadd.f32 %v8067, %v8078
    %v8135 = vadd.f32 %v8068, %v8078
    %v8136 = vadd.f32 %v8069, %v8078
    %v8137 = vadd.f32 %v8070, %v8078
    %v8138 = vadd.f32 %v8071, %v8078
    %v8139 = vadd.f32 %v8072, %v8078
    %v8140 = vadd.f32 %v8073, %v8078
    %v8141 = vadd.f32 %v8074, %v8078
    %v8142 = vadd.f32 %v8075, %v8078
    %v8143 = vadd.f32 %v8076, %v8078
    %v8144 = vadd.f32 %v7170, %v8080
    %v8145 = vadd.f32 %v7171, %v8081
    %v8146 = vadd.f32 %v7172, %v8082
    %v8147 = vadd.f32 %v7173, %v8083
    %v8148 = vadd.f32 %v7174, %v8084
    %v8149 = vadd.f32 %v7175, %v8085
    %v8150 = vadd.f32 %v7176, %v8086
    %v8151 = vadd.f32 %v7177, %v8087
    %v8152 = vadd.f32 %v7178, %v8088
    %v8153 = vadd.f32 %v7179, %v8089
    %v8154 = vadd.f32 %v7180, %v8090
    %v8155 = vadd.f32 %v7181, %v8091
    %v8156 = vadd.f32 %v7182, %v8092
    %v8157 = vadd.f32 %v7183, %v8093
    %v8158 = vadd.f32 %v7184, %v8094
    %v8159 = vadd.f32 %v7185, %v8095
    %v8160 = vadd.f32 %v7186, %v8096
    %v8161 = vadd.f32 %v7187, %v8097
    %v8162 = vadd.f32 %v7188, %v8098
    %v8163 = vadd.f32 %v7189, %v8099
    %v8164 = vadd.f32 %v7190, %v8100
    %v8165 = vadd.f32 %v7191, %v8101
    %v8166 = vadd.f32 %v7192, %v8102
    %v8167 = vadd.f32 %v7193, %v8103
    %v8168 = vadd.f32 %v7194, %v8104
    %v8169 = vadd.f32 %v7195, %v8105
    %v8170 = vadd.f32 %v7196, %v8106
    %v8171 = vadd.f32 %v7197, %v8107
    %v8172 = vadd.f32 %v7198, %v8108
    %v8173 = vadd.f32 %v7199, %v8109
    %v8174 = vadd.f32 %v7200, %v8110
    %v8175 = vadd.f32 %v7201, %v8111
    %v8176 = vadd.f32 %v7202, %v8112
    %v8177 = vadd.f32 %v7203, %v8113
    %v8178 = vadd.f32 %v7204, %v8114
    %v8179 = vadd.f32 %v7205, %v8115
    %v8180 = vadd.f32 %v7206, %v8116
    %v8181 = vadd.f32 %v7207, %v8117
    %v8182 = vadd.f32 %v7208, %v8118
    %v8183 = vadd.f32 %v7209, %v8119
    %v8184 = vadd.f32 %v7210, %v8120
    %v8185 = vadd.f32 %v7211, %v8121
    %v8186 = vadd.f32 %v7212, %v8122
    %v8187 = vadd.f32 %v7213, %v8123
    %v8188 = vadd.f32 %v7214, %v8124
    %v8189 = vadd.f32 %v7215, %v8125
    %v8190 = vadd.f32 %v7216, %v8126
    %v8191 = vadd.f32 %v7217, %v8127
    %v8192 = vadd.f32 %v7218, %v8128
    %v8193 = vadd.f32 %v7219, %v8129
    %v8194 = vadd.f32 %v7220, %v8130
    %v8195 = vadd.f32 %v7221, %v8131
    %v8196 = vadd.f32 %v7222, %v8132
    %v8197 = vadd.f32 %v7223, %v8133
    %v8198 = vadd.f32 %v7224, %v8134
    %v8199 = vadd.f32 %v7225, %v8135
    %v8200 = vadd.f32 %v7226, %v8136
    %v8201 = vadd.f32 %v7227, %v8137
    %v8202 = vadd.f32 %v7228, %v8138
    %v8203 = vadd.f32 %v7229, %v8139
    %v8204 = vadd.f32 %v7230, %v8140
    %v8205 = vadd.f32 %v7231, %v8141
    %v8206 = vadd.f32 %v7232, %v8142
    %v8207 = vadd.f32 %v7233, %v8143
    %v8208 = vmax.f32 %v8144, 0.0
    %v8209 = vmax.f32 %v8145, 0.0
    %v8210 = vmax.f32 %v8146, 0.0
    %v8211 = vmax.f32 %v8147, 0.0
    %v8212 = vmax.f32 %v8148, 0.0
    %v8213 = vmax.f32 %v8149, 0.0
    %v8214 = vmax.f32 %v8150, 0.0
    %v8215 = vmax.f32 %v8151, 0.0
    %v8216 = vmax.f32 %v8152, 0.0
    %v8217 = vmax.f32 %v8153, 0.0
    %v8218 = vmax.f32 %v8154, 0.0
    %v8219 = vmax.f32 %v8155, 0.0
    %v8220 = vmax.f32 %v8156, 0.0
    %v8221 = vmax.f32 %v8157, 0.0
    %v8222 = vmax.f32 %v8158, 0.0
    %v8223 = vmax.f32 %v8159, 0.0
    %v8224 = vmax.f32 %v8160, 0.0
    %v8225 = vmax.f32 %v8161, 0.0
    %v8226 = vmax.f32 %v8162, 0.0
    %v8227 = vmax.f32 %v8163, 0.0
    %v8228 = vmax.f32 %v8164, 0.0
    %v8229 = vmax.f32 %v8165, 0.0
    %v8230 = vmax.f32 %v8166, 0.0
    %v8231 = vmax.f32 %v8167, 0.0
    %v8232 = vmax.f32 %v8168, 0.0
    %v8233 = vmax.f32 %v8169, 0.0
    %v8234 = vmax.f32 %v8170, 0.0
    %v8235 = vmax.f32 %v8171, 0.0
    %v8236 = vmax.f32 %v8172, 0.0
    %v8237 = vmax.f32 %v8173, 0.0
    %v8238 = vmax.f32 %v8174, 0.0
    %v8239 = vmax.f32 %v8175, 0.0
    %v8240 = vmax.f32 %v8176, 0.0
    %v8241 = vmax.f32 %v8177, 0.0
    %v8242 = vmax.f32 %v8178, 0.0
    %v8243 = vmax.f32 %v8179, 0.0
    %v8244 = vmax.f32 %v8180, 0.0
    %v8245 = vmax.f32 %v8181, 0.0
    %v8246 = vmax.f32 %v8182, 0.0
    %v8247 = vmax.f32 %v8183, 0.0
    %v8248 = vmax.f32 %v8184, 0.0
    %v8249 = vmax.f32 %v8185, 0.0
    %v8250 = vmax.f32 %v8186, 0.0
    %v8251 = vmax.f32 %v8187, 0.0
    %v8252 = vmax.f32 %v8188, 0.0
    %v8253 = vmax.f32 %v8189, 0.0
    %v8254 = vmax.f32 %v8190, 0.0
    %v8255 = vmax.f32 %v8191, 0.0
    %v8256 = vmax.f32 %v8192, 0.0
    %v8257 = vmax.f32 %v8193, 0.0
    %v8258 = vmax.f32 %v8194, 0.0
    %v8259 = vmax.f32 %v8195, 0.0
    %v8260 = vmax.f32 %v8196, 0.0
    %v8261 = vmax.f32 %v8197, 0.0
    %v8262 = vmax.f32 %v8198, 0.0
    %v8263 = vmax.f32 %v8199, 0.0
    %v8264 = vmax.f32 %v8200, 0.0
    %v8265 = vmax.f32 %v8201, 0.0
    %v8266 = vmax.f32 %v8202, 0.0
    %v8267 = vmax.f32 %v8203, 0.0
    %v8268 = vmax.f32 %v8204, 0.0
    %v8269 = vmax.f32 %v8205, 0.0
    %v8270 = vmax.f32 %v8206, 0.0
    %v8271 = vmax.f32 %v8207, 0.0
    %8272 = vst [vmem:[#allocation7] sm:$0xff] %v8208
    %8273 = vst [vmem:[#allocation7 + $0x8] sm:$0xff] %v8209
    %8274 = vst [vmem:[#allocation7 + $0x10] sm:$0xff] %v8210
    %8275 = vst [vmem:[#allocation7 + $0x18] sm:$0xff] %v8211
    %8276 = vst [vmem:[#allocation7 + $0x20] sm:$0xff] %v8212
    %8277 = vst [vmem:[#allocation7 + $0x28] sm:$0xff] %v8213
    %8278 = vst [vmem:[#allocation7 + $0x30] sm:$0xff] %v8214
    %8279 = vst [vmem:[#allocation7 + $0x38] sm:$0xff] %v8215
    %8280 = vst [vmem:[#allocation7 + $0x40] sm:$0xff] %v8216
    %8281 = vst [vmem:[#allocation7 + $0x48] sm:$0xff] %v8217
    %8282 = vst [vmem:[#allocation7 + $0x50] sm:$0xff] %v8218
    %8283 = vst [vmem:[#allocation7 + $0x58] sm:$0xff] %v8219
    %8284 = vst [vmem:[#allocation7 + $0x60] sm:$0xff] %v8220
    %8285 = vst [vmem:[#allocation7 + $0x68] sm:$0xff] %v8221
    %8286 = vst [vmem:[#allocation7 + $0x70] sm:$0xff] %v8222
    %8287 = vst [vmem:[#allocation7 + $0x78] sm:$0xff] %v8223
    %8288 = vst [vmem:[#allocation7 + $0x80] sm:$0xff] %v8224
    %8289 = vst [vmem:[#allocation7 + $0x88] sm:$0xff] %v8225
    %8290 = vst [vmem:[#allocation7 + $0x90] sm:$0xff] %v8226
    %8291 = vst [vmem:[#allocation7 + $0x98] sm:$0xff] %v8227
    %8292 = vst [vmem:[#allocation7 + $0xa0] sm:$0xff] %v8228
    %8293 = vst [vmem:[#allocation7 + $0xa8] sm:$0xff] %v8229
    %8294 = vst [vmem:[#allocation7 + $0xb0] sm:$0xff] %v8230
    %8295 = vst [vmem:[#allocation7 + $0xb8] sm:$0xff] %v8231
    %8296 = vst [vmem:[#allocation7 + $0xc0] sm:$0xff] %v8232
    %8297 = vst [vmem:[#allocation7 + $0xc8] sm:$0xff] %v8233
    %8298 = vst [vmem:[#allocation7 + $0xd0] sm:$0xff] %v8234
    %8299 = vst [vmem:[#allocation7 + $0xd8] sm:$0xff] %v8235
    %8300 = vst [vmem:[#allocation7 + $0xe0] sm:$0xff] %v8236
    %8301 = vst [vmem:[#allocation7 + $0xe8] sm:$0xff] %v8237
    %8302 = vst [vmem:[#allocation7 + $0xf0] sm:$0xff] %v8238
    %8303 = vst [vmem:[#allocation7 + $0xf8] sm:$0xff] %v8239
    %8304 = vst [vmem:[#allocation7 + $0x100] sm:$0xff] %v8240
    %8305 = vst [vmem:[#allocation7 + $0x108] sm:$0xff] %v8241
    %8306 = vst [vmem:[#allocation7 + $0x110] sm:$0xff] %v8242
    %8307 = vst [vmem:[#allocation7 + $0x118] sm:$0xff] %v8243
    %8308 = vst [vmem:[#allocation7 + $0x120] sm:$0xff] %v8244
    %8309 = vst [vmem:[#allocation7 + $0x128] sm:$0xff] %v8245
    %8310 = vst [vmem:[#allocation7 + $0x130] sm:$0xff] %v8246
    %8311 = vst [vmem:[#allocation7 + $0x138] sm:$0xff] %v8247
    %8312 = vst [vmem:[#allocation7 + $0x140] sm:$0xff] %v8248
    %8313 = vst [vmem:[#allocation7 + $0x148] sm:$0xff] %v8249
    %8314 = vst [vmem:[#allocation7 + $0x150] sm:$0xff] %v8250
    %8315 = vst [vmem:[#allocation7 + $0x158] sm:$0xff] %v8251
    %8316 = vst [vmem:[#allocation7 + $0x160] sm:$0xff] %v8252
    %8317 = vst [vmem:[#allocation7 + $0x168] sm:$0xff] %v8253
    %8318 = vst [vmem:[#allocation7 + $0x170] sm:$0xff] %v8254
    %8319 = vst [vmem:[#allocation7 + $0x178] sm:$0xff] %v8255
    %8320 = vst [vmem:[#allocation7 + $0x180] sm:$0xff] %v8256
    %8321 = vst [vmem:[#allocation7 + $0x188] sm:$0xff] %v8257
    %8322 = vst [vmem:[#allocation7 + $0x190] sm:$0xff] %v8258
    %8323 = vst [vmem:[#allocation7 + $0x198] sm:$0xff] %v8259
    %8324 = vst [vmem:[#allocation7 + $0x1a0] sm:$0xff] %v8260
    %8325 = vst [vmem:[#allocation7 + $0x1a8] sm:$0xff] %v8261
    %8326 = vst [vmem:[#allocation7 + $0x1b0] sm:$0xff] %v8262
    %8327 = vst [vmem:[#allocation7 + $0x1b8] sm:$0xff] %v8263
    %8328 = vst [vmem:[#allocation7 + $0x1c0] sm:$0xff] %v8264
    %8329 = vst [vmem:[#allocation7 + $0x1c8] sm:$0xff] %v8265
    %8330 = vst [vmem:[#allocation7 + $0x1d0] sm:$0xff] %v8266
    %8331 = vst [vmem:[#allocation7 + $0x1d8] sm:$0xff] %v8267
    %8332 = vst [vmem:[#allocation7 + $0x1e0] sm:$0xff] %v8268
    %8333 = vst [vmem:[#allocation7 + $0x1e8] sm:$0xff] %v8269
    %8334 = vst [vmem:[#allocation7 + $0x1f0] sm:$0xff] %v8270
    %8335 = vst [vmem:[#allocation7 + $0x1f8] sm:$0xff] %v8271
    // Predicated region
    $region50: #{tpu_custom_call.1} parent=1 // pred_check
      _
    $region51: #{tpu_custom_call.1} parent=1 // pred_check_branch
      %8337 = sbr.rel (0) target = $region53
    $region52: #{tpu_custom_call.1} parent=1 // pred_region
      %8339 = vsyncadd [#allocation6], 0
      %s8340 = sshll.u32 [#allocation7], 4
      %s8341 = int_to_ptr.vmem [resolvable:$true] %s8340
      %s8342 = sshll.u32 %s11, 4
      %s8343 = int_to_ptr.hbm [resolvable:$true] %s8342
      %8348 = dma.vmem_to_hbm [thread:$0]  %s8341, 8192, %s8343, [#allocation6], 128, 128, 8
    $region53: #{tpu_custom_call.1} parent=1 // pred_fallthru
      _
    // Predicated region
    $region54: #{tpu_custom_call.1} parent=1 // pred_check
      _
    $region55: #{tpu_custom_call.1} parent=1 // pred_check_branch
      %8350 = sbr.rel (0) target = $region57
    $region56: #{tpu_custom_call.1} parent=1 // pred_region
      %8352 = dma.done [#allocation6], 8192
    $region57: #{tpu_custom_call.1} parent=1 // pred_fallthru
      _
    %8353 = vsyncpa [#allocation5], 1
    %8354 = vsyncpa [#allocation6], 1

</llo_original>
